<compile_context>
chip_gen: v7x
topology: tpu7x:2x2x1
jax: 0.10.0
libtpu: 0.0.40
codegen_flags: <defaults>
</compile_context>

<pallas_src>
import jax
import jax.numpy as jnp
from jax import lax
from jax.experimental import pallas as pl
from jax.experimental.pallas import tpu as pltpu

F32 = jnp.float32

# ---- small but shape-consistent hyper-parameters ---------------------------
VOCAB      = 50      # vocab_size
NUM_PIXELS = 16      # P  (num_pixels)
ENC_VIS    = 32      # V  (encoder_visual_dim)
ATTN_DIM   = 24      # A  (ctx_attention_dim)
SEM_EMBED  = 16      # E  (semantic_embed_dim)
HIDDEN     = 32      # H  (hidden_dim)
CTX        = 16      # C  (ctx_dim)
MLC_DIM    = 15      # tag dimension
T_DIM      = 12      # t_dim
STOP_DIM   = 10      # stop_dim
MAX_SENTS  = 4       # max_sents
N_TAGS     = 5       # MLC returns top-5 tag indices

SLAB_LANES = 128     # lane-padded width of the packed parameter slabs
OUT_LANES  = 128     # lane-dense combined output width

_VSPEC = pl.BlockSpec(memory_space=pltpu.MemorySpace.VMEM)


def _pad8(n):
    return ((n + 7) // 8) * 8


# ---- packed-weight-slab layout (static row offsets, 8-row aligned) ---------
_SEG_DEFS = (
    #  name      K (rows)                          N (valid lanes)
    ("mlc",    NUM_PIXELS * ENC_VIS,               MLC_DIM),
    ("eva",    ENC_VIS,                            ATTN_DIM),
    ("hva",    HIDDEN,                             ATTN_DIM),
    ("hsa",    HIDDEN,                             ATTN_DIM),
    ("semsel", MLC_DIM,                            SEM_EMBED + ATTN_DIM),
    ("ctx",    ENC_VIS + SEM_EMBED,                CTX),
    ("gates",  ENC_VIS + SEM_EMBED + HIDDEN,       4 * HIDDEN),
    ("heads",  2 * HIDDEN + CTX,                   STOP_DIM + T_DIM),
    ("s3",     STOP_DIM,                           2),
)
_SEG = {}
_row = 0
for _name, _k, _n in _SEG_DEFS:
    _SEG[_name] = (_row, _k, _n)
    _row += _pad8(_k)
W_ROWS = _pad8(_row)          # 848

# bias slab: one vector per 128-lane row
(ROW_B_MLC, ROW_B_EVA, ROW_B_HVA, ROW_B_HSA, ROW_W_FAV, ROW_B_FAV,
 ROW_W_FAS, ROW_B_FAS, ROW_B_CTX, ROW_B_GATES, ROW_B_HEADS,
 ROW_B_S3) = range(12)
B_ROWS = 16


# ------------------------- the single fused kernel --------------------------
def _fused_kernel(enc_ref, encflat_ref, w_ref, b_ref, out_ref):
    B, P, V = enc_ref.shape
    A, E, H, C, S, M = ATTN_DIM, SEM_EMBED, HIDDEN, CTX, N_TAGS, MLC_DIM

    def wseg(name, r0=0, r1=None):            # static weight-slab slice
        off, k, n = _SEG[name]
        r1 = k if r1 is None else r1
        return w_ref[off + r0:off + r1, :n]

    def brow(row, n):                          # static bias-slab row -> (1, n)
        return b_ref[row:row + 1, :n]

    out_ref[...] = jnp.zeros_like(out_ref)     # keep padding lanes deterministic

    vis = enc_ref[...]                         # (B, P, V)
    x_flat = encflat_ref[...]                  # (B, P*V)

    # ---------------- MLC logits + top-5 tag one-hots ------------------------
    # softmax is monotone per row, so top-5 of the logits == top-5 of
    # softmax(logits) (== torch.sort descending + [:, :5]).
    logits = (jnp.dot(x_flat, wseg("mlc"), preferred_element_type=F32)
              + brow(ROW_B_MLC, M))                                  # (B, M)

    lane = lax.broadcasted_iota(jnp.int32, (B, M), 1).astype(F32)
    avail = jnp.ones((B, M), F32)
    onehots = []
    for _ in range(S):                 # 5 masked-argmax passes (where-masked)
        masked = jnp.where(avail > 0.0, logits, -1e30)
        mx = jnp.max(masked, axis=-1, keepdims=True)
        cand = jnp.where((masked >= mx) & (avail > 0.0), lane, float(M))
        sel = jnp.min(cand, axis=-1, keepdims=True)    # lowest index among ties
        onehot = (lane == sel).astype(F32)             # (B, M)
        onehots.append(onehot)
        avail = avail - onehot
    onehot2d = jnp.concatenate(onehots, axis=0)        # (S*B, M) sublane concat

    # ONE stacked dot against host-precomputed [emb | emb @ W_esa^T + b_esa]
    # (b_esa folds in because every one-hot row sums to exactly 1).
    sem_att = jnp.dot(onehot2d, wseg("semsel"), preferred_element_type=F32)
    sem_list    = [sem_att[k * B:(k + 1) * B, :E] for k in range(S)]       # (B,E)
    att1_s_list = [sem_att[k * B:(k + 1) * B, E:E + A] for k in range(S)]  # (B,A)

    # ---------------- hoisted (h-independent) visual projection --------------
    att1_v = (jnp.dot(vis.reshape(B * P, V), wseg("eva"),
                      preferred_element_type=F32)
              + brow(ROW_B_EVA, A)).reshape(B, P, A)

    w_hva, b_hva = wseg("hva"), brow(ROW_B_HVA, A)
    w_hsa, b_hsa = wseg("hsa"), brow(ROW_B_HSA, A)
    w_fav, b_fav = brow(ROW_W_FAV, A), brow(ROW_B_FAV, 1)
    w_fas, b_fas = brow(ROW_W_FAS, A), brow(ROW_B_FAS, 1)
    b_ctx   = brow(ROW_B_CTX, C)
    b_gates = brow(ROW_B_GATES, 4 * H)
    b_heads = brow(ROW_B_HEADS, STOP_DIM + T_DIM)
    w_s3, b_s3 = wseg("s3"), brow(ROW_B_S3, 2)

    h = jnp.zeros((B, H), F32)
    c = jnp.zeros((B, H), F32)

    for s in range(MAX_SENTS):
        h_prev = h                              # h_last_time_step

        # ------------------ CoAttention --------------------------------------
        att_hv = jnp.dot(h, w_hva, preferred_element_type=F32) + b_hva   # (B,A)
        att_hs = jnp.dot(h, w_hsa, preferred_element_type=F32) + b_hsa   # (B,A)

        # visual branch (kept 3-D; reductions keep dims to avoid relayouts)
        tv = jnp.tanh(att1_v + att_hv[:, None, :])                       # (B,P,A)
        score_v = jnp.sum(tv * w_fav, axis=-1, keepdims=True) + b_fav    # (B,P,1)
        mv = jnp.max(score_v, axis=1, keepdims=True)
        ev = jnp.exp(score_v - mv)
        alpha_v = ev * pl.reciprocal(jnp.sum(ev, axis=1, keepdims=True),
                                     approx=True)                        # (B,P,1)
        v_att = jnp.sum(vis * alpha_v, axis=1)                           # (B,V)

        # semantic branch (S=5, fully 2-D, unrolled softmax over the tags)
        score_cols = []
        for k in range(S):
            ts_k = jnp.tanh(att1_s_list[k] + att_hs)                     # (B,A)
            score_cols.append(jnp.sum(ts_k * w_fas, axis=-1, keepdims=True)
                              + b_fas)                                   # (B,1)
        mx_s = score_cols[0]
        for k in range(1, S):
            mx_s = jnp.maximum(mx_s, score_cols[k])
        e_s = [jnp.exp(col - mx_s) for col in score_cols]
        denom = e_s[0]
        for k in range(1, S):
            denom = denom + e_s[k]
        inv = pl.reciprocal(denom, approx=True)                          # (B,1)
        s_att = (e_s[0] * inv) * sem_list[0]
        for k in range(1, S):
            s_att = s_att + (e_s[k] * inv) * sem_list[k]                 # (B,E)

        # ------------------ LSTMCell, W_ctx folded in (gate order i,f,g,o) ---
        gates = (jnp.dot(v_att, wseg("gates", 0, V), preferred_element_type=F32)
                 + jnp.dot(s_att, wseg("gates", V, V + E),
                           preferred_element_type=F32)
                 + jnp.dot(h, wseg("gates", V + E, V + E + H),
                           preferred_element_type=F32)
                 + b_gates)                                              # (B,4H)
        i_g = jax.nn.sigmoid(gates[:, 0 * H:1 * H])
        f_g = jax.nn.sigmoid(gates[:, 1 * H:2 * H])
        g_g = jnp.tanh(gates[:, 2 * H:3 * H])
        o_g = jax.nn.sigmoid(gates[:, 3 * H:4 * H])
        c = f_g * c + i_g * g_g
        h = o_g * jnp.tanh(c)

        # ------------------ ctx (topic-path only, off the recurrent chain) ---
        ctx = (jnp.dot(v_att, wseg("ctx", 0, V), preferred_element_type=F32)
               + jnp.dot(s_att, wseg("ctx", V, V + E),
                         preferred_element_type=F32)
               + b_ctx)                                                  # (B,C)

        # ------------------ fused stop + topic heads --------------------------
        heads = (jnp.dot(h_prev, wseg("heads", 0, H), preferred_element_type=F32)
                 + jnp.dot(h, wseg("heads", H, 2 * H),
                           preferred_element_type=F32)
                 + jnp.dot(ctx, wseg("heads", 2 * H, 2 * H + C),
                           preferred_element_type=F32)
                 + b_heads)                                              # (B,22)
        s12 = heads[:, :STOP_DIM]
        t = jnp.tanh(heads[:, STOP_DIM:STOP_DIM + T_DIM])                # (B,T)

        stop_logit = jnp.tanh(jnp.dot(s12, w_s3, preferred_element_type=F32)
                              + b_s3)                                    # (B,2)
        sm = jnp.max(stop_logit, axis=-1, keepdims=True)
        se = jnp.exp(stop_logit - sm)
        stop = se / jnp.sum(se, axis=-1, keepdims=True)    # exact softmax (parity)

        # ------------------ direct per-sentence stores ------------------------
        base = s * B
        out_ref[base:base + B, 0:T_DIM] = t
        out_ref[base:base + B, T_DIM:T_DIM + 2] = stop


# ------------------------- parameters ---------------------------------------
def init_params(key):
    def unif(k, shape, a=0.1):
        return jax.random.uniform(k, shape, F32, -a, a)

    keys = iter(jax.random.split(key, 64))
    p = {}
    # MLC (init_weights: bias 0, weight uniform(-0.1, 0.1))
    p["w_mlc"] = unif(next(keys), (MLC_DIM, ENC_VIS * NUM_PIXELS))
    p["b_mlc"] = jnp.zeros((MLC_DIM,), F32)
    # embedding (uniform(-0.1, 0.1))
    p["embedding"] = unif(next(keys), (VOCAB, SEM_EMBED))
    # CoAttention
    p["w_eva"], p["b_eva"] = unif(next(keys), (ATTN_DIM, ENC_VIS)), unif(next(keys), (ATTN_DIM,))
    p["w_esa"], p["b_esa"] = unif(next(keys), (ATTN_DIM, SEM_EMBED)), unif(next(keys), (ATTN_DIM,))
    p["w_hva"], p["b_hva"] = unif(next(keys), (ATTN_DIM, HIDDEN)), unif(next(keys), (ATTN_DIM,))
    p["w_hsa"], p["b_hsa"] = unif(next(keys), (ATTN_DIM, HIDDEN)), unif(next(keys), (ATTN_DIM,))
    p["w_fav"], p["b_fav"] = unif(next(keys), (1, ATTN_DIM)), unif(next(keys), (1,))
    p["w_fas"], p["b_fas"] = unif(next(keys), (1, ATTN_DIM)), unif(next(keys), (1,))
    p["w_fc_ctx"] = unif(next(keys), (CTX, ENC_VIS + SEM_EMBED))
    p["b_fc_ctx"] = unif(next(keys), (CTX,))
    # LSTMCell(ctx_dim -> hidden_dim), PyTorch gate order i, f, g, o
    p["w_ih"], p["b_ih"] = unif(next(keys), (4 * HIDDEN, CTX)), unif(next(keys), (4 * HIDDEN,))
    p["w_hh"], p["b_hh"] = unif(next(keys), (4 * HIDDEN, HIDDEN)), unif(next(keys), (4 * HIDDEN,))
    # topic heads (init_weights: bias 0, weight uniform)
    p["w_ht"], p["b_ht"] = unif(next(keys), (T_DIM, HIDDEN)), jnp.zeros((T_DIM,), F32)
    p["w_ct"], p["b_ct"] = unif(next(keys), (T_DIM, CTX)), jnp.zeros((T_DIM,), F32)
    # stop control
    p["w_s1"], p["b_s1"] = unif(next(keys), (STOP_DIM, HIDDEN)), unif(next(keys), (STOP_DIM,))
    p["w_s2"], p["b_s2"] = unif(next(keys), (STOP_DIM, HIDDEN)), unif(next(keys), (STOP_DIM,))
    p["w_s3"], p["b_s3"] = unif(next(keys), (2, STOP_DIM)), unif(next(keys), (2,))
    return p
    # TODO(synk): MLC.__init__ also instantiates torchvision resnet101
    # avgpool/fc (never used in forward()); they are omitted here.


# ------------------------- host-side ONE-TIME weight packing ----------------
def pack_params(p):
    """Packs/folds all module weights into two lane-padded slabs. Run once."""
    w_ih_t = p["w_ih"].T                      # (C, 4H)
    w_hh_t = p["w_hh"].T                      # (H, 4H)
    w_ctx_t = p["w_fc_ctx"].T                 # (V+E, C)
    emb15 = p["embedding"][:MLC_DIM]          # tag ids in [0, MLC_DIM)

    w = jnp.zeros((W_ROWS, SLAB_LANES), F32)

    def put_w(slab, name, mat):
        off, k, n = _SEG[name]
        assert mat.shape == (k, n), (name, mat.shape, (k, n))
        return slab.at[off:off + k, :n].set(mat.astype(F32))

    w = put_w(w, "mlc", p["w_mlc"].T)
    w = put_w(w, "eva", p["w_eva"].T)
    w = put_w(w, "hva", p["w_hva"].T)
    w = put_w(w, "hsa", p["w_hsa"].T)
    # [tag-emb | tag-emb @ W_esa^T + b_esa]; b_esa folds since one-hots sum to 1
    w = put_w(w, "semsel",
              jnp.concatenate([emb15, emb15 @ p["w_esa"].T + p["b_esa"][None, :]],
                              axis=1))
    w = put_w(w, "ctx", w_ctx_t)
    # ctx folded into LSTM input weights: rows [v | s | h] -> 4H gate columns
    w = put_w(w, "gates", jnp.concatenate([w_ctx_t @ w_ih_t, w_hh_t], axis=0))
    # fused stop/topic block matrix: rows [h_prev | h | ctx], cols [stop | topic]
    heads = jnp.concatenate([
        jnp.concatenate([p["w_s1"].T, jnp.zeros((HIDDEN, T_DIM), F32)], axis=1),
        jnp.concatenate([p["w_s2"].T, p["w_ht"].T], axis=1),
        jnp.concatenate([jnp.zeros((CTX, STOP_DIM), F32), p["w_ct"].T], axis=1),
    ], axis=0)
    w = put_w(w, "heads", heads)
    w = put_w(w, "s3", p["w_s3"].T)

    b = jnp.zeros((B_ROWS, SLAB_LANES), F32)

    def put_b(slab, row, vec):
        vec = jnp.asarray(vec, F32).reshape(-1)
        return slab.at[row, :vec.shape[0]].set(vec)

    b = put_b(b, ROW_B_MLC, p["b_mlc"])
    b = put_b(b, ROW_B_EVA, p["b_eva"])
    b = put_b(b, ROW_B_HVA, p["b_hva"])
    b = put_b(b, ROW_B_HSA, p["b_hsa"])
    b = put_b(b, ROW_W_FAV, p["w_fav"])
    b = put_b(b, ROW_B_FAV, p["b_fav"])
    b = put_b(b, ROW_W_FAS, p["w_fas"])
    b = put_b(b, ROW_B_FAS, p["b_fas"])
    b = put_b(b, ROW_B_CTX, p["b_fc_ctx"])
    b = put_b(b, ROW_B_GATES, p["b_fc_ctx"] @ w_ih_t + p["b_ih"] + p["b_hh"])
    b = put_b(b, ROW_B_HEADS,
              jnp.concatenate([p["b_s1"] + p["b_s2"], p["b_ht"] + p["b_ct"]]))
    b = put_b(b, ROW_B_S3, p["b_s3"])
    return w, b


# ------------------------- forward wrapper ----------------------------------
@jax.jit
def sentence_lstm_decoder_forward(w_slab, b_slab, encoder_out):
    enc = encoder_out.astype(F32)
    B = enc.shape[0]
    enc = enc.reshape(B, NUM_PIXELS, ENC_VIS)       # encoder_out.view(bs,-1,V)
    enc_flat = enc.reshape(B, NUM_PIXELS * ENC_VIS)  # MLC's .view(-1, V*P)
    # TODO(synk): at real batch tiles, drop enc_flat (K-split the MLC matmul
    # over the pixel axis) and add a parallel batch grid axis.

    out = pl.pallas_call(
        _fused_kernel,
        out_shape=jax.ShapeDtypeStruct((MAX_SENTS * B, OUT_LANES), F32),
        in_specs=[_VSPEC, _VSPEC, _VSPEC, _VSPEC],
        out_specs=_VSPEC,
    )(enc, enc_flat, w_slab, b_slab)

    # torch.cat over the per-sentence (B, .) tensors == row-slab layout here
    topic = out[:, :T_DIM]                  # (MAX_SENTS*B, T_DIM)
    stop = out[:, T_DIM:T_DIM + 2]          # (MAX_SENTS*B, 2)
    return topic, stop


if __name__ == "__main__":
    key = jax.random.PRNGKey(0)
    pkey, xkey = jax.random.split(key)
    params = init_params(pkey)
    # One-time packing (NOT inside the per-call jitted forward).
    w_slab, b_slab = pack_params(params)
    w_slab, b_slab = jax.block_until_ready((w_slab, b_slab))

    B = 2
    encoder_out = jax.random.normal(xkey, (B, NUM_PIXELS, ENC_VIS), F32)

    topic_tensor, stop_tensor = sentence_lstm_decoder_forward(
        w_slab, b_slab, encoder_out)
    jax.block_until_ready((topic_tensor, stop_tensor))

    assert topic_tensor.shape == (MAX_SENTS * B, T_DIM)
    assert stop_tensor.shape == (MAX_SENTS * B, 2)
    assert bool(jnp.all(jnp.isfinite(topic_tensor)))
    assert bool(jnp.all(jnp.isfinite(stop_tensor)))
    assert bool(jnp.allclose(jnp.sum(stop_tensor, axis=-1), 1.0, atol=1e-3))
    print("KERNEL_OK")
</pallas_src>

<mosaic_0001>
module attributes {stable_mosaic.version = 11 : i64} {
  func.func @_fused_kernel(%arg0: memref<2x16x32xf32, #tpu.memory_space<vmem>>, %arg1: memref<2x512xf32, #tpu.memory_space<vmem>>, %arg2: memref<848x128xf32, #tpu.memory_space<vmem>>, %arg3: memref<16x128xf32, #tpu.memory_space<vmem>>, %arg4: memref<8x128xf32, #tpu.memory_space<vmem>>) attributes {dimension_semantics = [], scalar_prefetch = 0 : i64, scratch_operands = 0 : i64, tpu.core_type = #tpu.core_type<tc>} {
    %cst = arith.constant 0.000000e+00 : f32
    %0 = vector.broadcast %cst : f32 to vector<8x128xf32>
    %c0 = arith.constant 0 : index
    %c0_0 = arith.constant 0 : index
    %1 = vector.load %arg4[%c0, %c0_0] : memref<8x128xf32, #tpu.memory_space<vmem>>, vector<8x128xf32>
    tpu.vector_store %arg4[%c0, %c0_0], %0 {strides = array<i32>} : memref<8x128xf32, #tpu.memory_space<vmem>>, vector<8x128xf32>,
    %c0_1 = arith.constant 0 : index
    %c0_2 = arith.constant 0 : index
    %c0_3 = arith.constant 0 : index
    %2 = vector.load %arg0[%c0_1, %c0_2, %c0_3] : memref<2x16x32xf32, #tpu.memory_space<vmem>>, vector<2x16x32xf32>
    %c0_4 = arith.constant 0 : index
    %c0_5 = arith.constant 0 : index
    %3 = vector.load %arg1[%c0_4, %c0_5] : memref<2x512xf32, #tpu.memory_space<vmem>>, vector<2x512xf32>
    %c0_6 = arith.constant 0 : index
    %c0_7 = arith.constant 0 : index
    %4 = vector.load %arg2[%c0_6, %c0_7] : memref<848x128xf32, #tpu.memory_space<vmem>>, vector<512x15xf32>
    %cst_8 = arith.constant dense<0.000000e+00> : vector<2x15xf32>
    %5 = tpu.matmul %3, %4, %cst_8 {dimension_numbers = #tpu.dot_dimension_numbers<[1], [0], [0], [1], [0, 0, 1, 1], [], []>} : vector<2x512xf32>, vector<512x15xf32>, vector<2x15xf32> -> vector<2x15xf32>
    %c0_9 = arith.constant 0 : index
    %c0_10 = arith.constant 0 : index
    %6 = vector.load %arg3[%c0_9, %c0_10] : memref<16x128xf32, #tpu.memory_space<vmem>>, vector<1x15xf32>
    %7 = vector.broadcast %6 : vector<1x15xf32> to vector<2x15xf32>
    %8 = arith.addf %5, %7 : vector<2x15xf32>
    %9 = tpu.iota {dimensions = array<i32: 1>} : vector<2x15xi32>
    %10 = arith.sitofp %9 : vector<2x15xi32> to vector<2x15xf32>
    %cst_11 = arith.constant 1.000000e+00 : f32
    %11 = vector.broadcast %cst_11 : f32 to vector<2x15xf32>
    %cst_12 = arith.constant 0.000000e+00 : f32
    %12 = vector.broadcast %cst_12 : f32 to vector<2x15xf32>
    %13 = arith.cmpf ogt, %11, %12 : vector<2x15xf32>
    %cst_13 = arith.constant -1.000000e+30 : f32
    %14 = vector.broadcast %cst_13 : f32 to vector<2x15xf32>
    %15 = arith.select %13, %8, %14 : vector<2x15xi1>, vector<2x15xf32>
    %cst_14 = arith.constant dense<0xFF800000> : vector<2xf32>
    %16 = vector.multi_reduction <maximumf>, %15, %cst_14 [1] : vector<2x15xf32> to vector<2xf32>
    %17 = vector.shape_cast %16 : vector<2xf32> to vector<2x1xf32>
    %18 = vector.broadcast %17 : vector<2x1xf32> to vector<2x15xf32>
    %19 = arith.cmpf oge, %15, %18 : vector<2x15xf32>
    %cst_15 = arith.constant 0.000000e+00 : f32
    %20 = vector.broadcast %cst_15 : f32 to vector<2x15xf32>
    %21 = arith.cmpf ogt, %11, %20 : vector<2x15xf32>
    %22 = arith.andi %19, %21 : vector<2x15xi1>
    %cst_16 = arith.constant 1.500000e+01 : f32
    %23 = vector.broadcast %cst_16 : f32 to vector<2x15xf32>
    %24 = arith.select %22, %10, %23 : vector<2x15xi1>, vector<2x15xf32>
    %cst_17 = arith.constant dense<0x7F800000> : vector<2xf32>
    %25 = vector.multi_reduction <minimumf>, %24, %cst_17 [1] : vector<2x15xf32> to vector<2xf32>
    %26 = vector.shape_cast %25 : vector<2xf32> to vector<2x1xf32>
    %27 = vector.broadcast %26 : vector<2x1xf32> to vector<2x15xf32>
    %28 = arith.cmpf oeq, %10, %27 : vector<2x15xf32>
    %29 = arith.extui %28 : vector<2x15xi1> to vector<2x15xi32>
    %30 = arith.sitofp %29 : vector<2x15xi32> to vector<2x15xf32>
    %31 = arith.subf %11, %30 : vector<2x15xf32>
    %cst_18 = arith.constant 0.000000e+00 : f32
    %32 = vector.broadcast %cst_18 : f32 to vector<2x15xf32>
    %33 = arith.cmpf ogt, %31, %32 : vector<2x15xf32>
    %cst_19 = arith.constant -1.000000e+30 : f32
    %34 = vector.broadcast %cst_19 : f32 to vector<2x15xf32>
    %35 = arith.select %33, %8, %34 : vector<2x15xi1>, vector<2x15xf32>
    %cst_20 = arith.constant dense<0xFF800000> : vector<2xf32>
    %36 = vector.multi_reduction <maximumf>, %35, %cst_20 [1] : vector<2x15xf32> to vector<2xf32>
    %37 = vector.shape_cast %36 : vector<2xf32> to vector<2x1xf32>
    %38 = vector.broadcast %37 : vector<2x1xf32> to vector<2x15xf32>
    %39 = arith.cmpf oge, %35, %38 : vector<2x15xf32>
    %cst_21 = arith.constant 0.000000e+00 : f32
    %40 = vector.broadcast %cst_21 : f32 to vector<2x15xf32>
    %41 = arith.cmpf ogt, %31, %40 : vector<2x15xf32>
    %42 = arith.andi %39, %41 : vector<2x15xi1>
    %cst_22 = arith.constant 1.500000e+01 : f32
    %43 = vector.broadcast %cst_22 : f32 to vector<2x15xf32>
    %44 = arith.select %42, %10, %43 : vector<2x15xi1>, vector<2x15xf32>
    %cst_23 = arith.constant dense<0x7F800000> : vector<2xf32>
    %45 = vector.multi_reduction <minimumf>, %44, %cst_23 [1] : vector<2x15xf32> to vector<2xf32>
    %46 = vector.shape_cast %45 : vector<2xf32> to vector<2x1xf32>
    %47 = vector.broadcast %46 : vector<2x1xf32> to vector<2x15xf32>
    %48 = arith.cmpf oeq, %10, %47 : vector<2x15xf32>
    %49 = arith.extui %48 : vector<2x15xi1> to vector<2x15xi32>
    %50 = arith.sitofp %49 : vector<2x15xi32> to vector<2x15xf32>
    %51 = arith.subf %31, %50 : vector<2x15xf32>
    %cst_24 = arith.constant 0.000000e+00 : f32
    %52 = vector.broadcast %cst_24 : f32 to vector<2x15xf32>
    %53 = arith.cmpf ogt, %51, %52 : vector<2x15xf32>
    %cst_25 = arith.constant -1.000000e+30 : f32
    %54 = vector.broadcast %cst_25 : f32 to vector<2x15xf32>
    %55 = arith.select %53, %8, %54 : vector<2x15xi1>, vector<2x15xf32>
    %cst_26 = arith.constant dense<0xFF800000> : vector<2xf32>
    %56 = vector.multi_reduction <maximumf>, %55, %cst_26 [1] : vector<2x15xf32> to vector<2xf32>
    %57 = vector.shape_cast %56 : vector<2xf32> to vector<2x1xf32>
    %58 = vector.broadcast %57 : vector<2x1xf32> to vector<2x15xf32>
    %59 = arith.cmpf oge, %55, %58 : vector<2x15xf32>
    %cst_27 = arith.constant 0.000000e+00 : f32
    %60 = vector.broadcast %cst_27 : f32 to vector<2x15xf32>
    %61 = arith.cmpf ogt, %51, %60 : vector<2x15xf32>
    %62 = arith.andi %59, %61 : vector<2x15xi1>
    %cst_28 = arith.constant 1.500000e+01 : f32
    %63 = vector.broadcast %cst_28 : f32 to vector<2x15xf32>
    %64 = arith.select %62, %10, %63 : vector<2x15xi1>, vector<2x15xf32>
    %cst_29 = arith.constant dense<0x7F800000> : vector<2xf32>
    %65 = vector.multi_reduction <minimumf>, %64, %cst_29 [1] : vector<2x15xf32> to vector<2xf32>
    %66 = vector.shape_cast %65 : vector<2xf32> to vector<2x1xf32>
    %67 = vector.broadcast %66 : vector<2x1xf32> to vector<2x15xf32>
    %68 = arith.cmpf oeq, %10, %67 : vector<2x15xf32>
    %69 = arith.extui %68 : vector<2x15xi1> to vector<2x15xi32>
    %70 = arith.sitofp %69 : vector<2x15xi32> to vector<2x15xf32>
    %71 = arith.subf %51, %70 : vector<2x15xf32>
    %cst_30 = arith.constant 0.000000e+00 : f32
    %72 = vector.broadcast %cst_30 : f32 to vector<2x15xf32>
    %73 = arith.cmpf ogt, %71, %72 : vector<2x15xf32>
    %cst_31 = arith.constant -1.000000e+30 : f32
    %74 = vector.broadcast %cst_31 : f32 to vector<2x15xf32>
    %75 = arith.select %73, %8, %74 : vector<2x15xi1>, vector<2x15xf32>
    %cst_32 = arith.constant dense<0xFF800000> : vector<2xf32>
    %76 = vector.multi_reduction <maximumf>, %75, %cst_32 [1] : vector<2x15xf32> to vector<2xf32>
    %77 = vector.shape_cast %76 : vector<2xf32> to vector<2x1xf32>
    %78 = vector.broadcast %77 : vector<2x1xf32> to vector<2x15xf32>
    %79 = arith.cmpf oge, %75, %78 : vector<2x15xf32>
    %cst_33 = arith.constant 0.000000e+00 : f32
    %80 = vector.broadcast %cst_33 : f32 to vector<2x15xf32>
    %81 = arith.cmpf ogt, %71, %80 : vector<2x15xf32>
    %82 = arith.andi %79, %81 : vector<2x15xi1>
    %cst_34 = arith.constant 1.500000e+01 : f32
    %83 = vector.broadcast %cst_34 : f32 to vector<2x15xf32>
    %84 = arith.select %82, %10, %83 : vector<2x15xi1>, vector<2x15xf32>
    %cst_35 = arith.constant dense<0x7F800000> : vector<2xf32>
    %85 = vector.multi_reduction <minimumf>, %84, %cst_35 [1] : vector<2x15xf32> to vector<2xf32>
    %86 = vector.shape_cast %85 : vector<2xf32> to vector<2x1xf32>
    %87 = vector.broadcast %86 : vector<2x1xf32> to vector<2x15xf32>
    %88 = arith.cmpf oeq, %10, %87 : vector<2x15xf32>
    %89 = arith.extui %88 : vector<2x15xi1> to vector<2x15xi32>
    %90 = arith.sitofp %89 : vector<2x15xi32> to vector<2x15xf32>
    %91 = arith.subf %71, %90 : vector<2x15xf32>
    %cst_36 = arith.constant 0.000000e+00 : f32
    %92 = vector.broadcast %cst_36 : f32 to vector<2x15xf32>
    %93 = arith.cmpf ogt, %91, %92 : vector<2x15xf32>
    %cst_37 = arith.constant -1.000000e+30 : f32
    %94 = vector.broadcast %cst_37 : f32 to vector<2x15xf32>
    %95 = arith.select %93, %8, %94 : vector<2x15xi1>, vector<2x15xf32>
    %cst_38 = arith.constant dense<0xFF800000> : vector<2xf32>
    %96 = vector.multi_reduction <maximumf>, %95, %cst_38 [1] : vector<2x15xf32> to vector<2xf32>
    %97 = vector.shape_cast %96 : vector<2xf32> to vector<2x1xf32>
    %98 = vector.broadcast %97 : vector<2x1xf32> to vector<2x15xf32>
    %99 = arith.cmpf oge, %95, %98 : vector<2x15xf32>
    %cst_39 = arith.constant 0.000000e+00 : f32
    %100 = vector.broadcast %cst_39 : f32 to vector<2x15xf32>
    %101 = arith.cmpf ogt, %91, %100 : vector<2x15xf32>
    %102 = arith.andi %99, %101 : vector<2x15xi1>
    %cst_40 = arith.constant 1.500000e+01 : f32
    %103 = vector.broadcast %cst_40 : f32 to vector<2x15xf32>
    %104 = arith.select %102, %10, %103 : vector<2x15xi1>, vector<2x15xf32>
    %cst_41 = arith.constant dense<0x7F800000> : vector<2xf32>
    %105 = vector.multi_reduction <minimumf>, %104, %cst_41 [1] : vector<2x15xf32> to vector<2xf32>
    %106 = vector.shape_cast %105 : vector<2xf32> to vector<2x1xf32>
    %107 = vector.broadcast %106 : vector<2x1xf32> to vector<2x15xf32>
    %108 = arith.cmpf oeq, %10, %107 : vector<2x15xf32>
    %109 = arith.extui %108 : vector<2x15xi1> to vector<2x15xi32>
    %110 = arith.sitofp %109 : vector<2x15xi32> to vector<2x15xf32>
    %111 = tpu.concatenate %30, %50, %70, %90, %110 in 0 : vector<2x15xf32>, vector<2x15xf32>, vector<2x15xf32>, vector<2x15xf32>, vector<2x15xf32> -> vector<10x15xf32>
    %c608 = arith.constant 608 : index
    %c0_42 = arith.constant 0 : index
    %112 = vector.load %arg2[%c608, %c0_42] : memref<848x128xf32, #tpu.memory_space<vmem>>, vector<15x40xf32>
    %cst_43 = arith.constant dense<0.000000e+00> : vector<10x40xf32>
    %113 = tpu.matmul %111, %112, %cst_43 {dimension_numbers = #tpu.dot_dimension_numbers<[1], [0], [0], [1], [0, 0, 1, 1], [], []>} : vector<10x15xf32>, vector<15x40xf32>, vector<10x40xf32> -> vector<10x40xf32>
    %114 = vector.extract_strided_slice %113 {offsets = [0, 0], sizes = [2, 16], strides = [1, 1]} : vector<10x40xf32> to vector<2x16xf32>
    %115 = vector.extract_strided_slice %113 {offsets = [2, 0], sizes = [2, 16], strides = [1, 1]} : vector<10x40xf32> to vector<2x16xf32>
    %116 = vector.extract_strided_slice %113 {offsets = [4, 0], sizes = [2, 16], strides = [1, 1]} : vector<10x40xf32> to vector<2x16xf32>
    %117 = vector.extract_strided_slice %113 {offsets = [6, 0], sizes = [2, 16], strides = [1, 1]} : vector<10x40xf32> to vector<2x16xf32>
    %118 = vector.extract_strided_slice %113 {offsets = [8, 0], sizes = [2, 16], strides = [1, 1]} : vector<10x40xf32> to vector<2x16xf32>
    %119 = vector.extract_strided_slice %113 {offsets = [0, 16], sizes = [2, 24], strides = [1, 1]} : vector<10x40xf32> to vector<2x24xf32>
    %120 = vector.extract_strided_slice %113 {offsets = [2, 16], sizes = [2, 24], strides = [1, 1]} : vector<10x40xf32> to vector<2x24xf32>
    %121 = vector.extract_strided_slice %113 {offsets = [4, 16], sizes = [2, 24], strides = [1, 1]} : vector<10x40xf32> to vector<2x24xf32>
    %122 = vector.extract_strided_slice %113 {offsets = [6, 16], sizes = [2, 24], strides = [1, 1]} : vector<10x40xf32> to vector<2x24xf32>
    %123 = vector.extract_strided_slice %113 {offsets = [8, 16], sizes = [2, 24], strides = [1, 1]} : vector<10x40xf32> to vector<2x24xf32>
    %124 = vector.shape_cast %2 : vector<2x16x32xf32> to vector<32x32xf32>
    %c512 = arith.constant 512 : index
    %c0_44 = arith.constant 0 : index
    %125 = vector.load %arg2[%c512, %c0_44] : memref<848x128xf32, #tpu.memory_space<vmem>>, vector<32x24xf32>
    %cst_45 = arith.constant dense<0.000000e+00> : vector<32x24xf32>
    %126 = tpu.matmul %124, %125, %cst_45 {dimension_numbers = #tpu.dot_dimension_numbers<[1], [0], [0], [1], [0, 0, 1, 1], [], []>} : vector<32x32xf32>, vector<32x24xf32>, vector<32x24xf32> -> vector<32x24xf32>
    %c1 = arith.constant 1 : index
    %c0_46 = arith.constant 0 : index
    %127 = vector.load %arg3[%c1, %c0_46] : memref<16x128xf32, #tpu.memory_space<vmem>>, vector<1x24xf32>
    %128 = vector.broadcast %127 : vector<1x24xf32> to vector<32x24xf32>
    %129 = arith.addf %126, %128 : vector<32x24xf32>
    %130 = vector.shape_cast %129 : vector<32x24xf32> to vector<2x16x24xf32>
    %c544 = arith.constant 544 : index
    %c0_47 = arith.constant 0 : index
    %131 = vector.load %arg2[%c544, %c0_47] : memref<848x128xf32, #tpu.memory_space<vmem>>, vector<32x24xf32>
    %c2 = arith.constant 2 : index
    %c0_48 = arith.constant 0 : index
    %132 = vector.load %arg3[%c2, %c0_48] : memref<16x128xf32, #tpu.memory_space<vmem>>, vector<1x24xf32>
    %c576 = arith.constant 576 : index
    %c0_49 = arith.constant 0 : index
    %133 = vector.load %arg2[%c576, %c0_49] : memref<848x128xf32, #tpu.memory_space<vmem>>, vector<32x24xf32>
    %c3 = arith.constant 3 : index
    %c0_50 = arith.constant 0 : index
    %134 = vector.load %arg3[%c3, %c0_50] : memref<16x128xf32, #tpu.memory_space<vmem>>, vector<1x24xf32>
    %c4 = arith.constant 4 : index
    %c0_51 = arith.constant 0 : index
    %135 = vector.load %arg3[%c4, %c0_51] : memref<16x128xf32, #tpu.memory_space<vmem>>, vector<1x24xf32>
    %c5 = arith.constant 5 : index
    %c0_52 = arith.constant 0 : index
    %136 = vector.load %arg3[%c5, %c0_52] : memref<16x128xf32, #tpu.memory_space<vmem>>, vector<1x1xf32>
    %c6 = arith.constant 6 : index
    %c0_53 = arith.constant 0 : index
    %137 = vector.load %arg3[%c6, %c0_53] : memref<16x128xf32, #tpu.memory_space<vmem>>, vector<1x24xf32>
    %c7 = arith.constant 7 : index
    %c0_54 = arith.constant 0 : index
    %138 = vector.load %arg3[%c7, %c0_54] : memref<16x128xf32, #tpu.memory_space<vmem>>, vector<1x1xf32>
    %c8 = arith.constant 8 : index
    %c0_55 = arith.constant 0 : index
    %139 = vector.load %arg3[%c8, %c0_55] : memref<16x128xf32, #tpu.memory_space<vmem>>, vector<1x16xf32>
    %c9 = arith.constant 9 : index
    %c0_56 = arith.constant 0 : index
    %140 = vector.load %arg3[%c9, %c0_56] : memref<16x128xf32, #tpu.memory_space<vmem>>, vector<1x128xf32>
    %c10 = arith.constant 10 : index
    %c0_57 = arith.constant 0 : index
    %141 = vector.load %arg3[%c10, %c0_57] : memref<16x128xf32, #tpu.memory_space<vmem>>, vector<1x22xf32>
    %c832 = arith.constant 832 : index
    %c0_58 = arith.constant 0 : index
    %142 = vector.load %arg2[%c832, %c0_58] : memref<848x128xf32, #tpu.memory_space<vmem>>, vector<10x2xf32>
    %c11 = arith.constant 11 : index
    %c0_59 = arith.constant 0 : index
    %143 = vector.load %arg3[%c11, %c0_59] : memref<16x128xf32, #tpu.memory_space<vmem>>, vector<1x2xf32>
    %cst_60 = arith.constant 0.000000e+00 : f32
    %144 = vector.broadcast %cst_60 : f32 to vector<2x32xf32>
    %cst_61 = arith.constant 0.000000e+00 : f32
    %145 = vector.broadcast %cst_61 : f32 to vector<2x32xf32>
    %cst_62 = arith.constant dense<0.000000e+00> : vector<2x24xf32>
    %146 = tpu.matmul %144, %131, %cst_62 {dimension_numbers = #tpu.dot_dimension_numbers<[1], [0], [0], [1], [0, 0, 1, 1], [], []>} : vector<2x32xf32>, vector<32x24xf32>, vector<2x24xf32> -> vector<2x24xf32>
    %147 = vector.broadcast %132 : vector<1x24xf32> to vector<2x24xf32>
    %148 = arith.addf %146, %147 : vector<2x24xf32>
    %cst_63 = arith.constant dense<0.000000e+00> : vector<2x24xf32>
    %149 = tpu.matmul %144, %133, %cst_63 {dimension_numbers = #tpu.dot_dimension_numbers<[1], [0], [0], [1], [0, 0, 1, 1], [], []>} : vector<2x32xf32>, vector<32x24xf32>, vector<2x24xf32> -> vector<2x24xf32>
    %150 = vector.broadcast %134 : vector<1x24xf32> to vector<2x24xf32>
    %151 = arith.addf %149, %150 : vector<2x24xf32>
    %152 = vector.shape_cast %148 : vector<2x24xf32> to vector<2x1x24xf32>
    %153 = vector.broadcast %152 : vector<2x1x24xf32> to vector<2x16x24xf32>
    %154 = arith.addf %130, %153 : vector<2x16x24xf32>
    %155 = math.tanh %154 : vector<2x16x24xf32>
    %156 = vector.shape_cast %135 : vector<1x24xf32> to vector<1x1x24xf32>
    %157 = vector.broadcast %156 : vector<1x1x24xf32> to vector<2x16x24xf32>
    %158 = arith.mulf %155, %157 : vector<2x16x24xf32>
    %cst_64 = arith.constant dense<0.000000e+00> : vector<2x16xf32>
    %159 = vector.multi_reduction <add>, %158, %cst_64 [2] : vector<2x16x24xf32> to vector<2x16xf32>
    %160 = vector.shape_cast %159 : vector<2x16xf32> to vector<2x16x1xf32>
    %161 = vector.shape_cast %136 : vector<1x1xf32> to vector<1x1x1xf32>
    %162 = vector.broadcast %161 : vector<1x1x1xf32> to vector<2x16x1xf32>
    %163 = arith.addf %160, %162 : vector<2x16x1xf32>
    %cst_65 = arith.constant dense<0xFF800000> : vector<2x1xf32>
    %164 = vector.multi_reduction <maximumf>, %163, %cst_65 [1] : vector<2x16x1xf32> to vector<2x1xf32>
    %165 = vector.shape_cast %164 : vector<2x1xf32> to vector<2x1x1xf32>
    %166 = vector.broadcast %165 : vector<2x1x1xf32> to vector<2x16x1xf32>
    %167 = arith.subf %163, %166 : vector<2x16x1xf32>
    %168 = math.exp %167 : vector<2x16x1xf32>
    %cst_66 = arith.constant dense<0.000000e+00> : vector<2x1xf32>
    %169 = vector.multi_reduction <add>, %168, %cst_66 [1] : vector<2x16x1xf32> to vector<2x1xf32>
    %170 = vector.shape_cast %169 : vector<2x1xf32> to vector<2x1x1xf32>
    %171 = tpu.reciprocal %170 {approx = true} : vector<2x1x1xf32> -> vector<2x1x1xf32>
    %172 = vector.broadcast %171 : vector<2x1x1xf32> to vector<2x16x1xf32>
    %173 = arith.mulf %168, %172 : vector<2x16x1xf32>
    %174 = vector.broadcast %173 : vector<2x16x1xf32> to vector<2x16x32xf32>
    %175 = arith.mulf %2, %174 : vector<2x16x32xf32>
    %cst_67 = arith.constant dense<0.000000e+00> : vector<2x32xf32>
    %176 = vector.multi_reduction <add>, %175, %cst_67 [1] : vector<2x16x32xf32> to vector<2x32xf32>
    %177 = arith.addf %119, %151 : vector<2x24xf32>
    %178 = math.tanh %177 : vector<2x24xf32>
    %179 = vector.broadcast %137 : vector<1x24xf32> to vector<2x24xf32>
    %180 = arith.mulf %178, %179 : vector<2x24xf32>
    %cst_68 = arith.constant dense<0.000000e+00> : vector<2xf32>
    %181 = vector.multi_reduction <add>, %180, %cst_68 [1] : vector<2x24xf32> to vector<2xf32>
    %182 = vector.shape_cast %181 : vector<2xf32> to vector<2x1xf32>
    %183 = vector.broadcast %138 : vector<1x1xf32> to vector<2x1xf32>
    %184 = arith.addf %182, %183 : vector<2x1xf32>
    %185 = arith.addf %120, %151 : vector<2x24xf32>
    %186 = math.tanh %185 : vector<2x24xf32>
    %187 = vector.broadcast %137 : vector<1x24xf32> to vector<2x24xf32>
    %188 = arith.mulf %186, %187 : vector<2x24xf32>
    %cst_69 = arith.constant dense<0.000000e+00> : vector<2xf32>
    %189 = vector.multi_reduction <add>, %188, %cst_69 [1] : vector<2x24xf32> to vector<2xf32>
    %190 = vector.shape_cast %189 : vector<2xf32> to vector<2x1xf32>
    %191 = vector.broadcast %138 : vector<1x1xf32> to vector<2x1xf32>
    %192 = arith.addf %190, %191 : vector<2x1xf32>
    %193 = arith.addf %121, %151 : vector<2x24xf32>
    %194 = math.tanh %193 : vector<2x24xf32>
    %195 = vector.broadcast %137 : vector<1x24xf32> to vector<2x24xf32>
    %196 = arith.mulf %194, %195 : vector<2x24xf32>
    %cst_70 = arith.constant dense<0.000000e+00> : vector<2xf32>
    %197 = vector.multi_reduction <add>, %196, %cst_70 [1] : vector<2x24xf32> to vector<2xf32>
    %198 = vector.shape_cast %197 : vector<2xf32> to vector<2x1xf32>
    %199 = vector.broadcast %138 : vector<1x1xf32> to vector<2x1xf32>
    %200 = arith.addf %198, %199 : vector<2x1xf32>
    %201 = arith.addf %122, %151 : vector<2x24xf32>
    %202 = math.tanh %201 : vector<2x24xf32>
    %203 = vector.broadcast %137 : vector<1x24xf32> to vector<2x24xf32>
    %204 = arith.mulf %202, %203 : vector<2x24xf32>
    %cst_71 = arith.constant dense<0.000000e+00> : vector<2xf32>
    %205 = vector.multi_reduction <add>, %204, %cst_71 [1] : vector<2x24xf32> to vector<2xf32>
    %206 = vector.shape_cast %205 : vector<2xf32> to vector<2x1xf32>
    %207 = vector.broadcast %138 : vector<1x1xf32> to vector<2x1xf32>
    %208 = arith.addf %206, %207 : vector<2x1xf32>
    %209 = arith.addf %123, %151 : vector<2x24xf32>
    %210 = math.tanh %209 : vector<2x24xf32>
    %211 = vector.broadcast %137 : vector<1x24xf32> to vector<2x24xf32>
    %212 = arith.mulf %210, %211 : vector<2x24xf32>
    %cst_72 = arith.constant dense<0.000000e+00> : vector<2xf32>
    %213 = vector.multi_reduction <add>, %212, %cst_72 [1] : vector<2x24xf32> to vector<2xf32>
    %214 = vector.shape_cast %213 : vector<2xf32> to vector<2x1xf32>
    %215 = vector.broadcast %138 : vector<1x1xf32> to vector<2x1xf32>
    %216 = arith.addf %214, %215 : vector<2x1xf32>
    %217 = arith.maximumf %184, %192 : vector<2x1xf32>
    %218 = arith.maximumf %217, %200 : vector<2x1xf32>
    %219 = arith.maximumf %218, %208 : vector<2x1xf32>
    %220 = arith.maximumf %219, %216 : vector<2x1xf32>
    %221 = arith.subf %184, %220 : vector<2x1xf32>
    %222 = math.exp %221 : vector<2x1xf32>
    %223 = arith.subf %192, %220 : vector<2x1xf32>
    %224 = math.exp %223 : vector<2x1xf32>
    %225 = arith.subf %200, %220 : vector<2x1xf32>
    %226 = math.exp %225 : vector<2x1xf32>
    %227 = arith.subf %208, %220 : vector<2x1xf32>
    %228 = math.exp %227 : vector<2x1xf32>
    %229 = arith.subf %216, %220 : vector<2x1xf32>
    %230 = math.exp %229 : vector<2x1xf32>
    %231 = arith.addf %222, %224 : vector<2x1xf32>
    %232 = arith.addf %231, %226 : vector<2x1xf32>
    %233 = arith.addf %232, %228 : vector<2x1xf32>
    %234 = arith.addf %233, %230 : vector<2x1xf32>
    %235 = tpu.reciprocal %234 {approx = true} : vector<2x1xf32> -> vector<2x1xf32>
    %236 = arith.mulf %222, %235 : vector<2x1xf32>
    %237 = vector.broadcast %236 : vector<2x1xf32> to vector<2x16xf32>
    %238 = arith.mulf %237, %114 : vector<2x16xf32>
    %239 = arith.mulf %224, %235 : vector<2x1xf32>
    %240 = vector.broadcast %239 : vector<2x1xf32> to vector<2x16xf32>
    %241 = arith.mulf %240, %115 : vector<2x16xf32>
    %242 = arith.addf %238, %241 : vector<2x16xf32>
    %243 = arith.mulf %226, %235 : vector<2x1xf32>
    %244 = vector.broadcast %243 : vector<2x1xf32> to vector<2x16xf32>
    %245 = arith.mulf %244, %116 : vector<2x16xf32>
    %246 = arith.addf %242, %245 : vector<2x16xf32>
    %247 = arith.mulf %228, %235 : vector<2x1xf32>
    %248 = vector.broadcast %247 : vector<2x1xf32> to vector<2x16xf32>
    %249 = arith.mulf %248, %117 : vector<2x16xf32>
    %250 = arith.addf %246, %249 : vector<2x16xf32>
    %251 = arith.mulf %230, %235 : vector<2x1xf32>
    %252 = vector.broadcast %251 : vector<2x1xf32> to vector<2x16xf32>
    %253 = arith.mulf %252, %118 : vector<2x16xf32>
    %254 = arith.addf %250, %253 : vector<2x16xf32>
    %c672 = arith.constant 672 : index
    %c0_73 = arith.constant 0 : index
    %255 = vector.load %arg2[%c672, %c0_73] : memref<848x128xf32, #tpu.memory_space<vmem>>, vector<32x128xf32>
    %cst_74 = arith.constant dense<0.000000e+00> : vector<2x128xf32>
    %256 = tpu.matmul %176, %255, %cst_74 {dimension_numbers = #tpu.dot_dimension_numbers<[1], [0], [0], [1], [0, 0, 1, 1], [], []>} : vector<2x32xf32>, vector<32x128xf32>, vector<2x128xf32> -> vector<2x128xf32>
    %c704 = arith.constant 704 : index
    %c0_75 = arith.constant 0 : index
    %257 = vector.load %arg2[%c704, %c0_75] : memref<848x128xf32, #tpu.memory_space<vmem>>, vector<16x128xf32>
    %cst_76 = arith.constant dense<0.000000e+00> : vector<2x128xf32>
    %258 = tpu.matmul %254, %257, %cst_76 {dimension_numbers = #tpu.dot_dimension_numbers<[1], [0], [0], [1], [0, 0, 1, 1], [], []>} : vector<2x16xf32>, vector<16x128xf32>, vector<2x128xf32> -> vector<2x128xf32>
    %259 = arith.addf %256, %258 : vector<2x128xf32>
    %c720 = arith.constant 720 : index
    %c0_77 = arith.constant 0 : index
    %260 = vector.load %arg2[%c720, %c0_77] : memref<848x128xf32, #tpu.memory_space<vmem>>, vector<32x128xf32>
    %cst_78 = arith.constant dense<0.000000e+00> : vector<2x128xf32>
    %261 = tpu.matmul %144, %260, %cst_78 {dimension_numbers = #tpu.dot_dimension_numbers<[1], [0], [0], [1], [0, 0, 1, 1], [], []>} : vector<2x32xf32>, vector<32x128xf32>, vector<2x128xf32> -> vector<2x128xf32>
    %262 = arith.addf %259, %261 : vector<2x128xf32>
    %263 = vector.broadcast %140 : vector<1x128xf32> to vector<2x128xf32>
    %264 = arith.addf %262, %263 : vector<2x128xf32>
    %265 = vector.extract_strided_slice %264 {offsets = [0, 0], sizes = [2, 32], strides = [1, 1]} : vector<2x128xf32> to vector<2x32xf32>
    %266 = arith.negf %265 : vector<2x32xf32>
    %267 = math.exp %266 : vector<2x32xf32>
    %cst_79 = arith.constant 1.000000e+00 : f32
    %268 = vector.broadcast %cst_79 : f32 to vector<2x32xf32>
    %269 = arith.addf %268, %267 : vector<2x32xf32>
    %270 = arith.divf %268, %269 : vector<2x32xf32>
    %271 = vector.extract_strided_slice %264 {offsets = [0, 32], sizes = [2, 32], strides = [1, 1]} : vector<2x128xf32> to vector<2x32xf32>
    %272 = arith.negf %271 : vector<2x32xf32>
    %273 = math.exp %272 : vector<2x32xf32>
    %cst_80 = arith.constant 1.000000e+00 : f32
    %274 = vector.broadcast %cst_80 : f32 to vector<2x32xf32>
    %275 = arith.addf %274, %273 : vector<2x32xf32>
    %276 = arith.divf %274, %275 : vector<2x32xf32>
    %277 = vector.extract_strided_slice %264 {offsets = [0, 64], sizes = [2, 32], strides = [1, 1]} : vector<2x128xf32> to vector<2x32xf32>
    %278 = math.tanh %277 : vector<2x32xf32>
    %279 = vector.extract_strided_slice %264 {offsets = [0, 96], sizes = [2, 32], strides = [1, 1]} : vector<2x128xf32> to vector<2x32xf32>
    %280 = arith.negf %279 : vector<2x32xf32>
    %281 = math.exp %280 : vector<2x32xf32>
    %cst_81 = arith.constant 1.000000e+00 : f32
    %282 = vector.broadcast %cst_81 : f32 to vector<2x32xf32>
    %283 = arith.addf %282, %281 : vector<2x32xf32>
    %284 = arith.divf %282, %283 : vector<2x32xf32>
    %285 = arith.mulf %276, %145 : vector<2x32xf32>
    %286 = arith.mulf %270, %278 : vector<2x32xf32>
    %287 = arith.addf %285, %286 : vector<2x32xf32>
    %288 = math.tanh %287 : vector<2x32xf32>
    %289 = arith.mulf %284, %288 : vector<2x32xf32>
    %c624 = arith.constant 624 : index
    %c0_82 = arith.constant 0 : index
    %290 = vector.load %arg2[%c624, %c0_82] : memref<848x128xf32, #tpu.memory_space<vmem>>, vector<32x16xf32>
    %cst_83 = arith.constant dense<0.000000e+00> : vector<2x16xf32>
    %291 = tpu.matmul %176, %290, %cst_83 {dimension_numbers = #tpu.dot_dimension_numbers<[1], [0], [0], [1], [0, 0, 1, 1], [], []>} : vector<2x32xf32>, vector<32x16xf32>, vector<2x16xf32> -> vector<2x16xf32>
    %c656 = arith.constant 656 : index
    %c0_84 = arith.constant 0 : index
    %292 = vector.load %arg2[%c656, %c0_84] : memref<848x128xf32, #tpu.memory_space<vmem>>, vector<16x16xf32>
    %cst_85 = arith.constant dense<0.000000e+00> : vector<2x16xf32>
    %293 = tpu.matmul %254, %292, %cst_85 {dimension_numbers = #tpu.dot_dimension_numbers<[1], [0], [0], [1], [0, 0, 1, 1], [], []>} : vector<2x16xf32>, vector<16x16xf32>, vector<2x16xf32> -> vector<2x16xf32>
    %294 = arith.addf %291, %293 : vector<2x16xf32>
    %295 = vector.broadcast %139 : vector<1x16xf32> to vector<2x16xf32>
    %296 = arith.addf %294, %295 : vector<2x16xf32>
    %c752 = arith.constant 752 : index
    %c0_86 = arith.constant 0 : index
    %297 = vector.load %arg2[%c752, %c0_86] : memref<848x128xf32, #tpu.memory_space<vmem>>, vector<32x22xf32>
    %cst_87 = arith.constant dense<0.000000e+00> : vector<2x22xf32>
    %298 = tpu.matmul %144, %297, %cst_87 {dimension_numbers = #tpu.dot_dimension_numbers<[1], [0], [0], [1], [0, 0, 1, 1], [], []>} : vector<2x32xf32>, vector<32x22xf32>, vector<2x22xf32> -> vector<2x22xf32>
    %c784 = arith.constant 784 : index
    %c0_88 = arith.constant 0 : index
    %299 = vector.load %arg2[%c784, %c0_88] : memref<848x128xf32, #tpu.memory_space<vmem>>, vector<32x22xf32>
    %cst_89 = arith.constant dense<0.000000e+00> : vector<2x22xf32>
    %300 = tpu.matmul %289, %299, %cst_89 {dimension_numbers = #tpu.dot_dimension_numbers<[1], [0], [0], [1], [0, 0, 1, 1], [], []>} : vector<2x32xf32>, vector<32x22xf32>, vector<2x22xf32> -> vector<2x22xf32>
    %301 = arith.addf %298, %300 : vector<2x22xf32>
    %c816 = arith.constant 816 : index
    %c0_90 = arith.constant 0 : index
    %302 = vector.load %arg2[%c816, %c0_90] : memref<848x128xf32, #tpu.memory_space<vmem>>, vector<16x22xf32>
    %cst_91 = arith.constant dense<0.000000e+00> : vector<2x22xf32>
    %303 = tpu.matmul %296, %302, %cst_91 {dimension_numbers = #tpu.dot_dimension_numbers<[1], [0], [0], [1], [0, 0, 1, 1], [], []>} : vector<2x16xf32>, vector<16x22xf32>, vector<2x22xf32> -> vector<2x22xf32>
    %304 = arith.addf %301, %303 : vector<2x22xf32>
    %305 = vector.broadcast %141 : vector<1x22xf32> to vector<2x22xf32>
    %306 = arith.addf %304, %305 : vector<2x22xf32>
    %307 = vector.extract_strided_slice %306 {offsets = [0, 0], sizes = [2, 10], strides = [1, 1]} : vector<2x22xf32> to vector<2x10xf32>
    %308 = vector.extract_strided_slice %306 {offsets = [0, 10], sizes = [2, 12], strides = [1, 1]} : vector<2x22xf32> to vector<2x12xf32>
    %309 = math.tanh %308 : vector<2x12xf32>
    %cst_92 = arith.constant dense<0.000000e+00> : vector<2x2xf32>
    %310 = tpu.matmul %307, %142, %cst_92 {dimension_numbers = #tpu.dot_dimension_numbers<[1], [0], [0], [1], [0, 0, 1, 1], [], []>} : vector<2x10xf32>, vector<10x2xf32>, vector<2x2xf32> -> vector<2x2xf32>
    %311 = vector.broadcast %143 : vector<1x2xf32> to vector<2x2xf32>
    %312 = arith.addf %310, %311 : vector<2x2xf32>
    %313 = math.tanh %312 : vector<2x2xf32>
    %cst_93 = arith.constant dense<0xFF800000> : vector<2xf32>
    %314 = vector.multi_reduction <maximumf>, %313, %cst_93 [1] : vector<2x2xf32> to vector<2xf32>
    %315 = vector.shape_cast %314 : vector<2xf32> to vector<2x1xf32>
    %316 = vector.broadcast %315 : vector<2x1xf32> to vector<2x2xf32>
    %317 = arith.subf %313, %316 : vector<2x2xf32>
    %318 = math.exp %317 : vector<2x2xf32>
    %cst_94 = arith.constant dense<0.000000e+00> : vector<2xf32>
    %319 = vector.multi_reduction <add>, %318, %cst_94 [1] : vector<2x2xf32> to vector<2xf32>
    %320 = vector.shape_cast %319 : vector<2xf32> to vector<2x1xf32>
    %321 = vector.broadcast %320 : vector<2x1xf32> to vector<2x2xf32>
    %322 = arith.divf %318, %321 : vector<2x2xf32>
    %c0_95 = arith.constant 0 : index
    %c0_96 = arith.constant 0 : index
    %323 = vector.load %arg4[%c0_95, %c0_96] : memref<8x128xf32, #tpu.memory_space<vmem>>, vector<2x12xf32>
    tpu.vector_store %arg4[%c0_95, %c0_96], %309 {strides = array<i32>} : memref<8x128xf32, #tpu.memory_space<vmem>>, vector<2x12xf32>,
    %c0_97 = arith.constant 0 : index
    %c12 = arith.constant 12 : index
    %324 = vector.load %arg4[%c0_97, %c12] : memref<8x128xf32, #tpu.memory_space<vmem>>, vector<2x2xf32>
    tpu.vector_store %arg4[%c0_97, %c12], %322 {strides = array<i32>} : memref<8x128xf32, #tpu.memory_space<vmem>>, vector<2x2xf32>,
    %cst_98 = arith.constant dense<0.000000e+00> : vector<2x24xf32>
    %325 = tpu.matmul %289, %131, %cst_98 {dimension_numbers = #tpu.dot_dimension_numbers<[1], [0], [0], [1], [0, 0, 1, 1], [], []>} : vector<2x32xf32>, vector<32x24xf32>, vector<2x24xf32> -> vector<2x24xf32>
    %326 = vector.broadcast %132 : vector<1x24xf32> to vector<2x24xf32>
    %327 = arith.addf %325, %326 : vector<2x24xf32>
    %cst_99 = arith.constant dense<0.000000e+00> : vector<2x24xf32>
    %328 = tpu.matmul %289, %133, %cst_99 {dimension_numbers = #tpu.dot_dimension_numbers<[1], [0], [0], [1], [0, 0, 1, 1], [], []>} : vector<2x32xf32>, vector<32x24xf32>, vector<2x24xf32> -> vector<2x24xf32>
    %329 = vector.broadcast %134 : vector<1x24xf32> to vector<2x24xf32>
    %330 = arith.addf %328, %329 : vector<2x24xf32>
    %331 = vector.shape_cast %327 : vector<2x24xf32> to vector<2x1x24xf32>
    %332 = vector.broadcast %331 : vector<2x1x24xf32> to vector<2x16x24xf32>
    %333 = arith.addf %130, %332 : vector<2x16x24xf32>
    %334 = math.tanh %333 : vector<2x16x24xf32>
    %335 = vector.shape_cast %135 : vector<1x24xf32> to vector<1x1x24xf32>
    %336 = vector.broadcast %335 : vector<1x1x24xf32> to vector<2x16x24xf32>
    %337 = arith.mulf %334, %336 : vector<2x16x24xf32>
    %cst_100 = arith.constant dense<0.000000e+00> : vector<2x16xf32>
    %338 = vector.multi_reduction <add>, %337, %cst_100 [2] : vector<2x16x24xf32> to vector<2x16xf32>
    %339 = vector.shape_cast %338 : vector<2x16xf32> to vector<2x16x1xf32>
    %340 = vector.shape_cast %136 : vector<1x1xf32> to vector<1x1x1xf32>
    %341 = vector.broadcast %340 : vector<1x1x1xf32> to vector<2x16x1xf32>
    %342 = arith.addf %339, %341 : vector<2x16x1xf32>
    %cst_101 = arith.constant dense<0xFF800000> : vector<2x1xf32>
    %343 = vector.multi_reduction <maximumf>, %342, %cst_101 [1] : vector<2x16x1xf32> to vector<2x1xf32>
    %344 = vector.shape_cast %343 : vector<2x1xf32> to vector<2x1x1xf32>
    %345 = vector.broadcast %344 : vector<2x1x1xf32> to vector<2x16x1xf32>
    %346 = arith.subf %342, %345 : vector<2x16x1xf32>
    %347 = math.exp %346 : vector<2x16x1xf32>
    %cst_102 = arith.constant dense<0.000000e+00> : vector<2x1xf32>
    %348 = vector.multi_reduction <add>, %347, %cst_102 [1] : vector<2x16x1xf32> to vector<2x1xf32>
    %349 = vector.shape_cast %348 : vector<2x1xf32> to vector<2x1x1xf32>
    %350 = tpu.reciprocal %349 {approx = true} : vector<2x1x1xf32> -> vector<2x1x1xf32>
    %351 = vector.broadcast %350 : vector<2x1x1xf32> to vector<2x16x1xf32>
    %352 = arith.mulf %347, %351 : vector<2x16x1xf32>
    %353 = vector.broadcast %352 : vector<2x16x1xf32> to vector<2x16x32xf32>
    %354 = arith.mulf %2, %353 : vector<2x16x32xf32>
    %cst_103 = arith.constant dense<0.000000e+00> : vector<2x32xf32>
    %355 = vector.multi_reduction <add>, %354, %cst_103 [1] : vector<2x16x32xf32> to vector<2x32xf32>
    %356 = arith.addf %119, %330 : vector<2x24xf32>
    %357 = math.tanh %356 : vector<2x24xf32>
    %358 = vector.broadcast %137 : vector<1x24xf32> to vector<2x24xf32>
    %359 = arith.mulf %357, %358 : vector<2x24xf32>
    %cst_104 = arith.constant dense<0.000000e+00> : vector<2xf32>
    %360 = vector.multi_reduction <add>, %359, %cst_104 [1] : vector<2x24xf32> to vector<2xf32>
    %361 = vector.shape_cast %360 : vector<2xf32> to vector<2x1xf32>
    %362 = vector.broadcast %138 : vector<1x1xf32> to vector<2x1xf32>
    %363 = arith.addf %361, %362 : vector<2x1xf32>
    %364 = arith.addf %120, %330 : vector<2x24xf32>
    %365 = math.tanh %364 : vector<2x24xf32>
    %366 = vector.broadcast %137 : vector<1x24xf32> to vector<2x24xf32>
    %367 = arith.mulf %365, %366 : vector<2x24xf32>
    %cst_105 = arith.constant dense<0.000000e+00> : vector<2xf32>
    %368 = vector.multi_reduction <add>, %367, %cst_105 [1] : vector<2x24xf32> to vector<2xf32>
    %369 = vector.shape_cast %368 : vector<2xf32> to vector<2x1xf32>
    %370 = vector.broadcast %138 : vector<1x1xf32> to vector<2x1xf32>
    %371 = arith.addf %369, %370 : vector<2x1xf32>
    %372 = arith.addf %121, %330 : vector<2x24xf32>
    %373 = math.tanh %372 : vector<2x24xf32>
    %374 = vector.broadcast %137 : vector<1x24xf32> to vector<2x24xf32>
    %375 = arith.mulf %373, %374 : vector<2x24xf32>
    %cst_106 = arith.constant dense<0.000000e+00> : vector<2xf32>
    %376 = vector.multi_reduction <add>, %375, %cst_106 [1] : vector<2x24xf32> to vector<2xf32>
    %377 = vector.shape_cast %376 : vector<2xf32> to vector<2x1xf32>
    %378 = vector.broadcast %138 : vector<1x1xf32> to vector<2x1xf32>
    %379 = arith.addf %377, %378 : vector<2x1xf32>
    %380 = arith.addf %122, %330 : vector<2x24xf32>
    %381 = math.tanh %380 : vector<2x24xf32>
    %382 = vector.broadcast %137 : vector<1x24xf32> to vector<2x24xf32>
    %383 = arith.mulf %381, %382 : vector<2x24xf32>
    %cst_107 = arith.constant dense<0.000000e+00> : vector<2xf32>
    %384 = vector.multi_reduction <add>, %383, %cst_107 [1] : vector<2x24xf32> to vector<2xf32>
    %385 = vector.shape_cast %384 : vector<2xf32> to vector<2x1xf32>
    %386 = vector.broadcast %138 : vector<1x1xf32> to vector<2x1xf32>
    %387 = arith.addf %385, %386 : vector<2x1xf32>
    %388 = arith.addf %123, %330 : vector<2x24xf32>
    %389 = math.tanh %388 : vector<2x24xf32>
    %390 = vector.broadcast %137 : vector<1x24xf32> to vector<2x24xf32>
    %391 = arith.mulf %389, %390 : vector<2x24xf32>
    %cst_108 = arith.constant dense<0.000000e+00> : vector<2xf32>
    %392 = vector.multi_reduction <add>, %391, %cst_108 [1] : vector<2x24xf32> to vector<2xf32>
    %393 = vector.shape_cast %392 : vector<2xf32> to vector<2x1xf32>
    %394 = vector.broadcast %138 : vector<1x1xf32> to vector<2x1xf32>
    %395 = arith.addf %393, %394 : vector<2x1xf32>
    %396 = arith.maximumf %363, %371 : vector<2x1xf32>
    %397 = arith.maximumf %396, %379 : vector<2x1xf32>
    %398 = arith.maximumf %397, %387 : vector<2x1xf32>
    %399 = arith.maximumf %398, %395 : vector<2x1xf32>
    %400 = arith.subf %363, %399 : vector<2x1xf32>
    %401 = math.exp %400 : vector<2x1xf32>
    %402 = arith.subf %371, %399 : vector<2x1xf32>
    %403 = math.exp %402 : vector<2x1xf32>
    %404 = arith.subf %379, %399 : vector<2x1xf32>
    %405 = math.exp %404 : vector<2x1xf32>
    %406 = arith.subf %387, %399 : vector<2x1xf32>
    %407 = math.exp %406 : vector<2x1xf32>
    %408 = arith.subf %395, %399 : vector<2x1xf32>
    %409 = math.exp %408 : vector<2x1xf32>
    %410 = arith.addf %401, %403 : vector<2x1xf32>
    %411 = arith.addf %410, %405 : vector<2x1xf32>
    %412 = arith.addf %411, %407 : vector<2x1xf32>
    %413 = arith.addf %412, %409 : vector<2x1xf32>
    %414 = tpu.reciprocal %413 {approx = true} : vector<2x1xf32> -> vector<2x1xf32>
    %415 = arith.mulf %401, %414 : vector<2x1xf32>
    %416 = vector.broadcast %415 : vector<2x1xf32> to vector<2x16xf32>
    %417 = arith.mulf %416, %114 : vector<2x16xf32>
    %418 = arith.mulf %403, %414 : vector<2x1xf32>
    %419 = vector.broadcast %418 : vector<2x1xf32> to vector<2x16xf32>
    %420 = arith.mulf %419, %115 : vector<2x16xf32>
    %421 = arith.addf %417, %420 : vector<2x16xf32>
    %422 = arith.mulf %405, %414 : vector<2x1xf32>
    %423 = vector.broadcast %422 : vector<2x1xf32> to vector<2x16xf32>
    %424 = arith.mulf %423, %116 : vector<2x16xf32>
    %425 = arith.addf %421, %424 : vector<2x16xf32>
    %426 = arith.mulf %407, %414 : vector<2x1xf32>
    %427 = vector.broadcast %426 : vector<2x1xf32> to vector<2x16xf32>
    %428 = arith.mulf %427, %117 : vector<2x16xf32>
    %429 = arith.addf %425, %428 : vector<2x16xf32>
    %430 = arith.mulf %409, %414 : vector<2x1xf32>
    %431 = vector.broadcast %430 : vector<2x1xf32> to vector<2x16xf32>
    %432 = arith.mulf %431, %118 : vector<2x16xf32>
    %433 = arith.addf %429, %432 : vector<2x16xf32>
    %c672_109 = arith.constant 672 : index
    %c0_110 = arith.constant 0 : index
    %434 = vector.load %arg2[%c672_109, %c0_110] : memref<848x128xf32, #tpu.memory_space<vmem>>, vector<32x128xf32>
    %cst_111 = arith.constant dense<0.000000e+00> : vector<2x128xf32>
    %435 = tpu.matmul %355, %434, %cst_111 {dimension_numbers = #tpu.dot_dimension_numbers<[1], [0], [0], [1], [0, 0, 1, 1], [], []>} : vector<2x32xf32>, vector<32x128xf32>, vector<2x128xf32> -> vector<2x128xf32>
    %c704_112 = arith.constant 704 : index
    %c0_113 = arith.constant 0 : index
    %436 = vector.load %arg2[%c704_112, %c0_113] : memref<848x128xf32, #tpu.memory_space<vmem>>, vector<16x128xf32>
    %cst_114 = arith.constant dense<0.000000e+00> : vector<2x128xf32>
    %437 = tpu.matmul %433, %436, %cst_114 {dimension_numbers = #tpu.dot_dimension_numbers<[1], [0], [0], [1], [0, 0, 1, 1], [], []>} : vector<2x16xf32>, vector<16x128xf32>, vector<2x128xf32> -> vector<2x128xf32>
    %438 = arith.addf %435, %437 : vector<2x128xf32>
    %c720_115 = arith.constant 720 : index
    %c0_116 = arith.constant 0 : index
    %439 = vector.load %arg2[%c720_115, %c0_116] : memref<848x128xf32, #tpu.memory_space<vmem>>, vector<32x128xf32>
    %cst_117 = arith.constant dense<0.000000e+00> : vector<2x128xf32>
    %440 = tpu.matmul %289, %439, %cst_117 {dimension_numbers = #tpu.dot_dimension_numbers<[1], [0], [0], [1], [0, 0, 1, 1], [], []>} : vector<2x32xf32>, vector<32x128xf32>, vector<2x128xf32> -> vector<2x128xf32>
    %441 = arith.addf %438, %440 : vector<2x128xf32>
    %442 = vector.broadcast %140 : vector<1x128xf32> to vector<2x128xf32>
    %443 = arith.addf %441, %442 : vector<2x128xf32>
    %444 = vector.extract_strided_slice %443 {offsets = [0, 0], sizes = [2, 32], strides = [1, 1]} : vector<2x128xf32> to vector<2x32xf32>
    %445 = arith.negf %444 : vector<2x32xf32>
    %446 = math.exp %445 : vector<2x32xf32>
    %cst_118 = arith.constant 1.000000e+00 : f32
    %447 = vector.broadcast %cst_118 : f32 to vector<2x32xf32>
    %448 = arith.addf %447, %446 : vector<2x32xf32>
    %449 = arith.divf %447, %448 : vector<2x32xf32>
    %450 = vector.extract_strided_slice %443 {offsets = [0, 32], sizes = [2, 32], strides = [1, 1]} : vector<2x128xf32> to vector<2x32xf32>
    %451 = arith.negf %450 : vector<2x32xf32>
    %452 = math.exp %451 : vector<2x32xf32>
    %cst_119 = arith.constant 1.000000e+00 : f32
    %453 = vector.broadcast %cst_119 : f32 to vector<2x32xf32>
    %454 = arith.addf %453, %452 : vector<2x32xf32>
    %455 = arith.divf %453, %454 : vector<2x32xf32>
    %456 = vector.extract_strided_slice %443 {offsets = [0, 64], sizes = [2, 32], strides = [1, 1]} : vector<2x128xf32> to vector<2x32xf32>
    %457 = math.tanh %456 : vector<2x32xf32>
    %458 = vector.extract_strided_slice %443 {offsets = [0, 96], sizes = [2, 32], strides = [1, 1]} : vector<2x128xf32> to vector<2x32xf32>
    %459 = arith.negf %458 : vector<2x32xf32>
    %460 = math.exp %459 : vector<2x32xf32>
    %cst_120 = arith.constant 1.000000e+00 : f32
    %461 = vector.broadcast %cst_120 : f32 to vector<2x32xf32>
    %462 = arith.addf %461, %460 : vector<2x32xf32>
    %463 = arith.divf %461, %462 : vector<2x32xf32>
    %464 = arith.mulf %455, %287 : vector<2x32xf32>
    %465 = arith.mulf %449, %457 : vector<2x32xf32>
    %466 = arith.addf %464, %465 : vector<2x32xf32>
    %467 = math.tanh %466 : vector<2x32xf32>
    %468 = arith.mulf %463, %467 : vector<2x32xf32>
    %c624_121 = arith.constant 624 : index
    %c0_122 = arith.constant 0 : index
    %469 = vector.load %arg2[%c624_121, %c0_122] : memref<848x128xf32, #tpu.memory_space<vmem>>, vector<32x16xf32>
    %cst_123 = arith.constant dense<0.000000e+00> : vector<2x16xf32>
    %470 = tpu.matmul %355, %469, %cst_123 {dimension_numbers = #tpu.dot_dimension_numbers<[1], [0], [0], [1], [0, 0, 1, 1], [], []>} : vector<2x32xf32>, vector<32x16xf32>, vector<2x16xf32> -> vector<2x16xf32>
    %c656_124 = arith.constant 656 : index
    %c0_125 = arith.constant 0 : index
    %471 = vector.load %arg2[%c656_124, %c0_125] : memref<848x128xf32, #tpu.memory_space<vmem>>, vector<16x16xf32>
    %cst_126 = arith.constant dense<0.000000e+00> : vector<2x16xf32>
    %472 = tpu.matmul %433, %471, %cst_126 {dimension_numbers = #tpu.dot_dimension_numbers<[1], [0], [0], [1], [0, 0, 1, 1], [], []>} : vector<2x16xf32>, vector<16x16xf32>, vector<2x16xf32> -> vector<2x16xf32>
    %473 = arith.addf %470, %472 : vector<2x16xf32>
    %474 = vector.broadcast %139 : vector<1x16xf32> to vector<2x16xf32>
    %475 = arith.addf %473, %474 : vector<2x16xf32>
    %c752_127 = arith.constant 752 : index
    %c0_128 = arith.constant 0 : index
    %476 = vector.load %arg2[%c752_127, %c0_128] : memref<848x128xf32, #tpu.memory_space<vmem>>, vector<32x22xf32>
    %cst_129 = arith.constant dense<0.000000e+00> : vector<2x22xf32>
    %477 = tpu.matmul %289, %476, %cst_129 {dimension_numbers = #tpu.dot_dimension_numbers<[1], [0], [0], [1], [0, 0, 1, 1], [], []>} : vector<2x32xf32>, vector<32x22xf32>, vector<2x22xf32> -> vector<2x22xf32>
    %c784_130 = arith.constant 784 : index
    %c0_131 = arith.constant 0 : index
    %478 = vector.load %arg2[%c784_130, %c0_131] : memref<848x128xf32, #tpu.memory_space<vmem>>, vector<32x22xf32>
    %cst_132 = arith.constant dense<0.000000e+00> : vector<2x22xf32>
    %479 = tpu.matmul %468, %478, %cst_132 {dimension_numbers = #tpu.dot_dimension_numbers<[1], [0], [0], [1], [0, 0, 1, 1], [], []>} : vector<2x32xf32>, vector<32x22xf32>, vector<2x22xf32> -> vector<2x22xf32>
    %480 = arith.addf %477, %479 : vector<2x22xf32>
    %c816_133 = arith.constant 816 : index
    %c0_134 = arith.constant 0 : index
    %481 = vector.load %arg2[%c816_133, %c0_134] : memref<848x128xf32, #tpu.memory_space<vmem>>, vector<16x22xf32>
    %cst_135 = arith.constant dense<0.000000e+00> : vector<2x22xf32>
    %482 = tpu.matmul %475, %481, %cst_135 {dimension_numbers = #tpu.dot_dimension_numbers<[1], [0], [0], [1], [0, 0, 1, 1], [], []>} : vector<2x16xf32>, vector<16x22xf32>, vector<2x22xf32> -> vector<2x22xf32>
    %483 = arith.addf %480, %482 : vector<2x22xf32>
    %484 = vector.broadcast %141 : vector<1x22xf32> to vector<2x22xf32>
    %485 = arith.addf %483, %484 : vector<2x22xf32>
    %486 = vector.extract_strided_slice %485 {offsets = [0, 0], sizes = [2, 10], strides = [1, 1]} : vector<2x22xf32> to vector<2x10xf32>
    %487 = vector.extract_strided_slice %485 {offsets = [0, 10], sizes = [2, 12], strides = [1, 1]} : vector<2x22xf32> to vector<2x12xf32>
    %488 = math.tanh %487 : vector<2x12xf32>
    %cst_136 = arith.constant dense<0.000000e+00> : vector<2x2xf32>
    %489 = tpu.matmul %486, %142, %cst_136 {dimension_numbers = #tpu.dot_dimension_numbers<[1], [0], [0], [1], [0, 0, 1, 1], [], []>} : vector<2x10xf32>, vector<10x2xf32>, vector<2x2xf32> -> vector<2x2xf32>
    %490 = vector.broadcast %143 : vector<1x2xf32> to vector<2x2xf32>
    %491 = arith.addf %489, %490 : vector<2x2xf32>
    %492 = math.tanh %491 : vector<2x2xf32>
    %cst_137 = arith.constant dense<0xFF800000> : vector<2xf32>
    %493 = vector.multi_reduction <maximumf>, %492, %cst_137 [1] : vector<2x2xf32> to vector<2xf32>
    %494 = vector.shape_cast %493 : vector<2xf32> to vector<2x1xf32>
    %495 = vector.broadcast %494 : vector<2x1xf32> to vector<2x2xf32>
    %496 = arith.subf %492, %495 : vector<2x2xf32>
    %497 = math.exp %496 : vector<2x2xf32>
    %cst_138 = arith.constant dense<0.000000e+00> : vector<2xf32>
    %498 = vector.multi_reduction <add>, %497, %cst_138 [1] : vector<2x2xf32> to vector<2xf32>
    %499 = vector.shape_cast %498 : vector<2xf32> to vector<2x1xf32>
    %500 = vector.broadcast %499 : vector<2x1xf32> to vector<2x2xf32>
    %501 = arith.divf %497, %500 : vector<2x2xf32>
    %c2_139 = arith.constant 2 : index
    %c0_140 = arith.constant 0 : index
    %502 = vector.load %arg4[%c2_139, %c0_140] : memref<8x128xf32, #tpu.memory_space<vmem>>, vector<2x12xf32>
    tpu.vector_store %arg4[%c2_139, %c0_140], %488 {strides = array<i32>} : memref<8x128xf32, #tpu.memory_space<vmem>>, vector<2x12xf32>,
    %c2_141 = arith.constant 2 : index
    %c12_142 = arith.constant 12 : index
    %503 = vector.load %arg4[%c2_141, %c12_142] : memref<8x128xf32, #tpu.memory_space<vmem>>, vector<2x2xf32>
    tpu.vector_store %arg4[%c2_141, %c12_142], %501 {strides = array<i32>} : memref<8x128xf32, #tpu.memory_space<vmem>>, vector<2x2xf32>,
    %cst_143 = arith.constant dense<0.000000e+00> : vector<2x24xf32>
    %504 = tpu.matmul %468, %131, %cst_143 {dimension_numbers = #tpu.dot_dimension_numbers<[1], [0], [0], [1], [0, 0, 1, 1], [], []>} : vector<2x32xf32>, vector<32x24xf32>, vector<2x24xf32> -> vector<2x24xf32>
    %505 = vector.broadcast %132 : vector<1x24xf32> to vector<2x24xf32>
    %506 = arith.addf %504, %505 : vector<2x24xf32>
    %cst_144 = arith.constant dense<0.000000e+00> : vector<2x24xf32>
    %507 = tpu.matmul %468, %133, %cst_144 {dimension_numbers = #tpu.dot_dimension_numbers<[1], [0], [0], [1], [0, 0, 1, 1], [], []>} : vector<2x32xf32>, vector<32x24xf32>, vector<2x24xf32> -> vector<2x24xf32>
    %508 = vector.broadcast %134 : vector<1x24xf32> to vector<2x24xf32>
    %509 = arith.addf %507, %508 : vector<2x24xf32>
    %510 = vector.shape_cast %506 : vector<2x24xf32> to vector<2x1x24xf32>
    %511 = vector.broadcast %510 : vector<2x1x24xf32> to vector<2x16x24xf32>
    %512 = arith.addf %130, %511 : vector<2x16x24xf32>
    %513 = math.tanh %512 : vector<2x16x24xf32>
    %514 = vector.shape_cast %135 : vector<1x24xf32> to vector<1x1x24xf32>
    %515 = vector.broadcast %514 : vector<1x1x24xf32> to vector<2x16x24xf32>
    %516 = arith.mulf %513, %515 : vector<2x16x24xf32>
    %cst_145 = arith.constant dense<0.000000e+00> : vector<2x16xf32>
    %517 = vector.multi_reduction <add>, %516, %cst_145 [2] : vector<2x16x24xf32> to vector<2x16xf32>
    %518 = vector.shape_cast %517 : vector<2x16xf32> to vector<2x16x1xf32>
    %519 = vector.shape_cast %136 : vector<1x1xf32> to vector<1x1x1xf32>
    %520 = vector.broadcast %519 : vector<1x1x1xf32> to vector<2x16x1xf32>
    %521 = arith.addf %518, %520 : vector<2x16x1xf32>
    %cst_146 = arith.constant dense<0xFF800000> : vector<2x1xf32>
    %522 = vector.multi_reduction <maximumf>, %521, %cst_146 [1] : vector<2x16x1xf32> to vector<2x1xf32>
    %523 = vector.shape_cast %522 : vector<2x1xf32> to vector<2x1x1xf32>
    %524 = vector.broadcast %523 : vector<2x1x1xf32> to vector<2x16x1xf32>
    %525 = arith.subf %521, %524 : vector<2x16x1xf32>
    %526 = math.exp %525 : vector<2x16x1xf32>
    %cst_147 = arith.constant dense<0.000000e+00> : vector<2x1xf32>
    %527 = vector.multi_reduction <add>, %526, %cst_147 [1] : vector<2x16x1xf32> to vector<2x1xf32>
    %528 = vector.shape_cast %527 : vector<2x1xf32> to vector<2x1x1xf32>
    %529 = tpu.reciprocal %528 {approx = true} : vector<2x1x1xf32> -> vector<2x1x1xf32>
    %530 = vector.broadcast %529 : vector<2x1x1xf32> to vector<2x16x1xf32>
    %531 = arith.mulf %526, %530 : vector<2x16x1xf32>
    %532 = vector.broadcast %531 : vector<2x16x1xf32> to vector<2x16x32xf32>
    %533 = arith.mulf %2, %532 : vector<2x16x32xf32>
    %cst_148 = arith.constant dense<0.000000e+00> : vector<2x32xf32>
    %534 = vector.multi_reduction <add>, %533, %cst_148 [1] : vector<2x16x32xf32> to vector<2x32xf32>
    %535 = arith.addf %119, %509 : vector<2x24xf32>
    %536 = math.tanh %535 : vector<2x24xf32>
    %537 = vector.broadcast %137 : vector<1x24xf32> to vector<2x24xf32>
    %538 = arith.mulf %536, %537 : vector<2x24xf32>
    %cst_149 = arith.constant dense<0.000000e+00> : vector<2xf32>
    %539 = vector.multi_reduction <add>, %538, %cst_149 [1] : vector<2x24xf32> to vector<2xf32>
    %540 = vector.shape_cast %539 : vector<2xf32> to vector<2x1xf32>
    %541 = vector.broadcast %138 : vector<1x1xf32> to vector<2x1xf32>
    %542 = arith.addf %540, %541 : vector<2x1xf32>
    %543 = arith.addf %120, %509 : vector<2x24xf32>
    %544 = math.tanh %543 : vector<2x24xf32>
    %545 = vector.broadcast %137 : vector<1x24xf32> to vector<2x24xf32>
    %546 = arith.mulf %544, %545 : vector<2x24xf32>
    %cst_150 = arith.constant dense<0.000000e+00> : vector<2xf32>
    %547 = vector.multi_reduction <add>, %546, %cst_150 [1] : vector<2x24xf32> to vector<2xf32>
    %548 = vector.shape_cast %547 : vector<2xf32> to vector<2x1xf32>
    %549 = vector.broadcast %138 : vector<1x1xf32> to vector<2x1xf32>
    %550 = arith.addf %548, %549 : vector<2x1xf32>
    %551 = arith.addf %121, %509 : vector<2x24xf32>
    %552 = math.tanh %551 : vector<2x24xf32>
    %553 = vector.broadcast %137 : vector<1x24xf32> to vector<2x24xf32>
    %554 = arith.mulf %552, %553 : vector<2x24xf32>
    %cst_151 = arith.constant dense<0.000000e+00> : vector<2xf32>
    %555 = vector.multi_reduction <add>, %554, %cst_151 [1] : vector<2x24xf32> to vector<2xf32>
    %556 = vector.shape_cast %555 : vector<2xf32> to vector<2x1xf32>
    %557 = vector.broadcast %138 : vector<1x1xf32> to vector<2x1xf32>
    %558 = arith.addf %556, %557 : vector<2x1xf32>
    %559 = arith.addf %122, %509 : vector<2x24xf32>
    %560 = math.tanh %559 : vector<2x24xf32>
    %561 = vector.broadcast %137 : vector<1x24xf32> to vector<2x24xf32>
    %562 = arith.mulf %560, %561 : vector<2x24xf32>
    %cst_152 = arith.constant dense<0.000000e+00> : vector<2xf32>
    %563 = vector.multi_reduction <add>, %562, %cst_152 [1] : vector<2x24xf32> to vector<2xf32>
    %564 = vector.shape_cast %563 : vector<2xf32> to vector<2x1xf32>
    %565 = vector.broadcast %138 : vector<1x1xf32> to vector<2x1xf32>
    %566 = arith.addf %564, %565 : vector<2x1xf32>
    %567 = arith.addf %123, %509 : vector<2x24xf32>
    %568 = math.tanh %567 : vector<2x24xf32>
    %569 = vector.broadcast %137 : vector<1x24xf32> to vector<2x24xf32>
    %570 = arith.mulf %568, %569 : vector<2x24xf32>
    %cst_153 = arith.constant dense<0.000000e+00> : vector<2xf32>
    %571 = vector.multi_reduction <add>, %570, %cst_153 [1] : vector<2x24xf32> to vector<2xf32>
    %572 = vector.shape_cast %571 : vector<2xf32> to vector<2x1xf32>
    %573 = vector.broadcast %138 : vector<1x1xf32> to vector<2x1xf32>
    %574 = arith.addf %572, %573 : vector<2x1xf32>
    %575 = arith.maximumf %542, %550 : vector<2x1xf32>
    %576 = arith.maximumf %575, %558 : vector<2x1xf32>
    %577 = arith.maximumf %576, %566 : vector<2x1xf32>
    %578 = arith.maximumf %577, %574 : vector<2x1xf32>
    %579 = arith.subf %542, %578 : vector<2x1xf32>
    %580 = math.exp %579 : vector<2x1xf32>
    %581 = arith.subf %550, %578 : vector<2x1xf32>
    %582 = math.exp %581 : vector<2x1xf32>
    %583 = arith.subf %558, %578 : vector<2x1xf32>
    %584 = math.exp %583 : vector<2x1xf32>
    %585 = arith.subf %566, %578 : vector<2x1xf32>
    %586 = math.exp %585 : vector<2x1xf32>
    %587 = arith.subf %574, %578 : vector<2x1xf32>
    %588 = math.exp %587 : vector<2x1xf32>
    %589 = arith.addf %580, %582 : vector<2x1xf32>
    %590 = arith.addf %589, %584 : vector<2x1xf32>
    %591 = arith.addf %590, %586 : vector<2x1xf32>
    %592 = arith.addf %591, %588 : vector<2x1xf32>
    %593 = tpu.reciprocal %592 {approx = true} : vector<2x1xf32> -> vector<2x1xf32>
    %594 = arith.mulf %580, %593 : vector<2x1xf32>
    %595 = vector.broadcast %594 : vector<2x1xf32> to vector<2x16xf32>
    %596 = arith.mulf %595, %114 : vector<2x16xf32>
    %597 = arith.mulf %582, %593 : vector<2x1xf32>
    %598 = vector.broadcast %597 : vector<2x1xf32> to vector<2x16xf32>
    %599 = arith.mulf %598, %115 : vector<2x16xf32>
    %600 = arith.addf %596, %599 : vector<2x16xf32>
    %601 = arith.mulf %584, %593 : vector<2x1xf32>
    %602 = vector.broadcast %601 : vector<2x1xf32> to vector<2x16xf32>
    %603 = arith.mulf %602, %116 : vector<2x16xf32>
    %604 = arith.addf %600, %603 : vector<2x16xf32>
    %605 = arith.mulf %586, %593 : vector<2x1xf32>
    %606 = vector.broadcast %605 : vector<2x1xf32> to vector<2x16xf32>
    %607 = arith.mulf %606, %117 : vector<2x16xf32>
    %608 = arith.addf %604, %607 : vector<2x16xf32>
    %609 = arith.mulf %588, %593 : vector<2x1xf32>
    %610 = vector.broadcast %609 : vector<2x1xf32> to vector<2x16xf32>
    %611 = arith.mulf %610, %118 : vector<2x16xf32>
    %612 = arith.addf %608, %611 : vector<2x16xf32>
    %c672_154 = arith.constant 672 : index
    %c0_155 = arith.constant 0 : index
    %613 = vector.load %arg2[%c672_154, %c0_155] : memref<848x128xf32, #tpu.memory_space<vmem>>, vector<32x128xf32>
    %cst_156 = arith.constant dense<0.000000e+00> : vector<2x128xf32>
    %614 = tpu.matmul %534, %613, %cst_156 {dimension_numbers = #tpu.dot_dimension_numbers<[1], [0], [0], [1], [0, 0, 1, 1], [], []>} : vector<2x32xf32>, vector<32x128xf32>, vector<2x128xf32> -> vector<2x128xf32>
    %c704_157 = arith.constant 704 : index
    %c0_158 = arith.constant 0 : index
    %615 = vector.load %arg2[%c704_157, %c0_158] : memref<848x128xf32, #tpu.memory_space<vmem>>, vector<16x128xf32>
    %cst_159 = arith.constant dense<0.000000e+00> : vector<2x128xf32>
    %616 = tpu.matmul %612, %615, %cst_159 {dimension_numbers = #tpu.dot_dimension_numbers<[1], [0], [0], [1], [0, 0, 1, 1], [], []>} : vector<2x16xf32>, vector<16x128xf32>, vector<2x128xf32> -> vector<2x128xf32>
    %617 = arith.addf %614, %616 : vector<2x128xf32>
    %c720_160 = arith.constant 720 : index
    %c0_161 = arith.constant 0 : index
    %618 = vector.load %arg2[%c720_160, %c0_161] : memref<848x128xf32, #tpu.memory_space<vmem>>, vector<32x128xf32>
    %cst_162 = arith.constant dense<0.000000e+00> : vector<2x128xf32>
    %619 = tpu.matmul %468, %618, %cst_162 {dimension_numbers = #tpu.dot_dimension_numbers<[1], [0], [0], [1], [0, 0, 1, 1], [], []>} : vector<2x32xf32>, vector<32x128xf32>, vector<2x128xf32> -> vector<2x128xf32>
    %620 = arith.addf %617, %619 : vector<2x128xf32>
    %621 = vector.broadcast %140 : vector<1x128xf32> to vector<2x128xf32>
    %622 = arith.addf %620, %621 : vector<2x128xf32>
    %623 = vector.extract_strided_slice %622 {offsets = [0, 0], sizes = [2, 32], strides = [1, 1]} : vector<2x128xf32> to vector<2x32xf32>
    %624 = arith.negf %623 : vector<2x32xf32>
    %625 = math.exp %624 : vector<2x32xf32>
    %cst_163 = arith.constant 1.000000e+00 : f32
    %626 = vector.broadcast %cst_163 : f32 to vector<2x32xf32>
    %627 = arith.addf %626, %625 : vector<2x32xf32>
    %628 = arith.divf %626, %627 : vector<2x32xf32>
    %629 = vector.extract_strided_slice %622 {offsets = [0, 32], sizes = [2, 32], strides = [1, 1]} : vector<2x128xf32> to vector<2x32xf32>
    %630 = arith.negf %629 : vector<2x32xf32>
    %631 = math.exp %630 : vector<2x32xf32>
    %cst_164 = arith.constant 1.000000e+00 : f32
    %632 = vector.broadcast %cst_164 : f32 to vector<2x32xf32>
    %633 = arith.addf %632, %631 : vector<2x32xf32>
    %634 = arith.divf %632, %633 : vector<2x32xf32>
    %635 = vector.extract_strided_slice %622 {offsets = [0, 64], sizes = [2, 32], strides = [1, 1]} : vector<2x128xf32> to vector<2x32xf32>
    %636 = math.tanh %635 : vector<2x32xf32>
    %637 = vector.extract_strided_slice %622 {offsets = [0, 96], sizes = [2, 32], strides = [1, 1]} : vector<2x128xf32> to vector<2x32xf32>
    %638 = arith.negf %637 : vector<2x32xf32>
    %639 = math.exp %638 : vector<2x32xf32>
    %cst_165 = arith.constant 1.000000e+00 : f32
    %640 = vector.broadcast %cst_165 : f32 to vector<2x32xf32>
    %641 = arith.addf %640, %639 : vector<2x32xf32>
    %642 = arith.divf %640, %641 : vector<2x32xf32>
    %643 = arith.mulf %634, %466 : vector<2x32xf32>
    %644 = arith.mulf %628, %636 : vector<2x32xf32>
    %645 = arith.addf %643, %644 : vector<2x32xf32>
    %646 = math.tanh %645 : vector<2x32xf32>
    %647 = arith.mulf %642, %646 : vector<2x32xf32>
    %c624_166 = arith.constant 624 : index
    %c0_167 = arith.constant 0 : index
    %648 = vector.load %arg2[%c624_166, %c0_167] : memref<848x128xf32, #tpu.memory_space<vmem>>, vector<32x16xf32>
    %cst_168 = arith.constant dense<0.000000e+00> : vector<2x16xf32>
    %649 = tpu.matmul %534, %648, %cst_168 {dimension_numbers = #tpu.dot_dimension_numbers<[1], [0], [0], [1], [0, 0, 1, 1], [], []>} : vector<2x32xf32>, vector<32x16xf32>, vector<2x16xf32> -> vector<2x16xf32>
    %c656_169 = arith.constant 656 : index
    %c0_170 = arith.constant 0 : index
    %650 = vector.load %arg2[%c656_169, %c0_170] : memref<848x128xf32, #tpu.memory_space<vmem>>, vector<16x16xf32>
    %cst_171 = arith.constant dense<0.000000e+00> : vector<2x16xf32>
    %651 = tpu.matmul %612, %650, %cst_171 {dimension_numbers = #tpu.dot_dimension_numbers<[1], [0], [0], [1], [0, 0, 1, 1], [], []>} : vector<2x16xf32>, vector<16x16xf32>, vector<2x16xf32> -> vector<2x16xf32>
    %652 = arith.addf %649, %651 : vector<2x16xf32>
    %653 = vector.broadcast %139 : vector<1x16xf32> to vector<2x16xf32>
    %654 = arith.addf %652, %653 : vector<2x16xf32>
    %c752_172 = arith.constant 752 : index
    %c0_173 = arith.constant 0 : index
    %655 = vector.load %arg2[%c752_172, %c0_173] : memref<848x128xf32, #tpu.memory_space<vmem>>, vector<32x22xf32>
    %cst_174 = arith.constant dense<0.000000e+00> : vector<2x22xf32>
    %656 = tpu.matmul %468, %655, %cst_174 {dimension_numbers = #tpu.dot_dimension_numbers<[1], [0], [0], [1], [0, 0, 1, 1], [], []>} : vector<2x32xf32>, vector<32x22xf32>, vector<2x22xf32> -> vector<2x22xf32>
    %c784_175 = arith.constant 784 : index
    %c0_176 = arith.constant 0 : index
    %657 = vector.load %arg2[%c784_175, %c0_176] : memref<848x128xf32, #tpu.memory_space<vmem>>, vector<32x22xf32>
    %cst_177 = arith.constant dense<0.000000e+00> : vector<2x22xf32>
    %658 = tpu.matmul %647, %657, %cst_177 {dimension_numbers = #tpu.dot_dimension_numbers<[1], [0], [0], [1], [0, 0, 1, 1], [], []>} : vector<2x32xf32>, vector<32x22xf32>, vector<2x22xf32> -> vector<2x22xf32>
    %659 = arith.addf %656, %658 : vector<2x22xf32>
    %c816_178 = arith.constant 816 : index
    %c0_179 = arith.constant 0 : index
    %660 = vector.load %arg2[%c816_178, %c0_179] : memref<848x128xf32, #tpu.memory_space<vmem>>, vector<16x22xf32>
    %cst_180 = arith.constant dense<0.000000e+00> : vector<2x22xf32>
    %661 = tpu.matmul %654, %660, %cst_180 {dimension_numbers = #tpu.dot_dimension_numbers<[1], [0], [0], [1], [0, 0, 1, 1], [], []>} : vector<2x16xf32>, vector<16x22xf32>, vector<2x22xf32> -> vector<2x22xf32>
    %662 = arith.addf %659, %661 : vector<2x22xf32>
    %663 = vector.broadcast %141 : vector<1x22xf32> to vector<2x22xf32>
    %664 = arith.addf %662, %663 : vector<2x22xf32>
    %665 = vector.extract_strided_slice %664 {offsets = [0, 0], sizes = [2, 10], strides = [1, 1]} : vector<2x22xf32> to vector<2x10xf32>
    %666 = vector.extract_strided_slice %664 {offsets = [0, 10], sizes = [2, 12], strides = [1, 1]} : vector<2x22xf32> to vector<2x12xf32>
    %667 = math.tanh %666 : vector<2x12xf32>
    %cst_181 = arith.constant dense<0.000000e+00> : vector<2x2xf32>
    %668 = tpu.matmul %665, %142, %cst_181 {dimension_numbers = #tpu.dot_dimension_numbers<[1], [0], [0], [1], [0, 0, 1, 1], [], []>} : vector<2x10xf32>, vector<10x2xf32>, vector<2x2xf32> -> vector<2x2xf32>
    %669 = vector.broadcast %143 : vector<1x2xf32> to vector<2x2xf32>
    %670 = arith.addf %668, %669 : vector<2x2xf32>
    %671 = math.tanh %670 : vector<2x2xf32>
    %cst_182 = arith.constant dense<0xFF800000> : vector<2xf32>
    %672 = vector.multi_reduction <maximumf>, %671, %cst_182 [1] : vector<2x2xf32> to vector<2xf32>
    %673 = vector.shape_cast %672 : vector<2xf32> to vector<2x1xf32>
    %674 = vector.broadcast %673 : vector<2x1xf32> to vector<2x2xf32>
    %675 = arith.subf %671, %674 : vector<2x2xf32>
    %676 = math.exp %675 : vector<2x2xf32>
    %cst_183 = arith.constant dense<0.000000e+00> : vector<2xf32>
    %677 = vector.multi_reduction <add>, %676, %cst_183 [1] : vector<2x2xf32> to vector<2xf32>
    %678 = vector.shape_cast %677 : vector<2xf32> to vector<2x1xf32>
    %679 = vector.broadcast %678 : vector<2x1xf32> to vector<2x2xf32>
    %680 = arith.divf %676, %679 : vector<2x2xf32>
    %c4_184 = arith.constant 4 : index
    %c0_185 = arith.constant 0 : index
    %681 = vector.load %arg4[%c4_184, %c0_185] : memref<8x128xf32, #tpu.memory_space<vmem>>, vector<2x12xf32>
    tpu.vector_store %arg4[%c4_184, %c0_185], %667 {strides = array<i32>} : memref<8x128xf32, #tpu.memory_space<vmem>>, vector<2x12xf32>,
    %c4_186 = arith.constant 4 : index
    %c12_187 = arith.constant 12 : index
    %682 = vector.load %arg4[%c4_186, %c12_187] : memref<8x128xf32, #tpu.memory_space<vmem>>, vector<2x2xf32>
    tpu.vector_store %arg4[%c4_186, %c12_187], %680 {strides = array<i32>} : memref<8x128xf32, #tpu.memory_space<vmem>>, vector<2x2xf32>,
    %cst_188 = arith.constant dense<0.000000e+00> : vector<2x24xf32>
    %683 = tpu.matmul %647, %131, %cst_188 {dimension_numbers = #tpu.dot_dimension_numbers<[1], [0], [0], [1], [0, 0, 1, 1], [], []>} : vector<2x32xf32>, vector<32x24xf32>, vector<2x24xf32> -> vector<2x24xf32>
    %684 = vector.broadcast %132 : vector<1x24xf32> to vector<2x24xf32>
    %685 = arith.addf %683, %684 : vector<2x24xf32>
    %cst_189 = arith.constant dense<0.000000e+00> : vector<2x24xf32>
    %686 = tpu.matmul %647, %133, %cst_189 {dimension_numbers = #tpu.dot_dimension_numbers<[1], [0], [0], [1], [0, 0, 1, 1], [], []>} : vector<2x32xf32>, vector<32x24xf32>, vector<2x24xf32> -> vector<2x24xf32>
    %687 = vector.broadcast %134 : vector<1x24xf32> to vector<2x24xf32>
    %688 = arith.addf %686, %687 : vector<2x24xf32>
    %689 = vector.shape_cast %685 : vector<2x24xf32> to vector<2x1x24xf32>
    %690 = vector.broadcast %689 : vector<2x1x24xf32> to vector<2x16x24xf32>
    %691 = arith.addf %130, %690 : vector<2x16x24xf32>
    %692 = math.tanh %691 : vector<2x16x24xf32>
    %693 = vector.shape_cast %135 : vector<1x24xf32> to vector<1x1x24xf32>
    %694 = vector.broadcast %693 : vector<1x1x24xf32> to vector<2x16x24xf32>
    %695 = arith.mulf %692, %694 : vector<2x16x24xf32>
    %cst_190 = arith.constant dense<0.000000e+00> : vector<2x16xf32>
    %696 = vector.multi_reduction <add>, %695, %cst_190 [2] : vector<2x16x24xf32> to vector<2x16xf32>
    %697 = vector.shape_cast %696 : vector<2x16xf32> to vector<2x16x1xf32>
    %698 = vector.shape_cast %136 : vector<1x1xf32> to vector<1x1x1xf32>
    %699 = vector.broadcast %698 : vector<1x1x1xf32> to vector<2x16x1xf32>
    %700 = arith.addf %697, %699 : vector<2x16x1xf32>
    %cst_191 = arith.constant dense<0xFF800000> : vector<2x1xf32>
    %701 = vector.multi_reduction <maximumf>, %700, %cst_191 [1] : vector<2x16x1xf32> to vector<2x1xf32>
    %702 = vector.shape_cast %701 : vector<2x1xf32> to vector<2x1x1xf32>
    %703 = vector.broadcast %702 : vector<2x1x1xf32> to vector<2x16x1xf32>
    %704 = arith.subf %700, %703 : vector<2x16x1xf32>
    %705 = math.exp %704 : vector<2x16x1xf32>
    %cst_192 = arith.constant dense<0.000000e+00> : vector<2x1xf32>
    %706 = vector.multi_reduction <add>, %705, %cst_192 [1] : vector<2x16x1xf32> to vector<2x1xf32>
    %707 = vector.shape_cast %706 : vector<2x1xf32> to vector<2x1x1xf32>
    %708 = tpu.reciprocal %707 {approx = true} : vector<2x1x1xf32> -> vector<2x1x1xf32>
    %709 = vector.broadcast %708 : vector<2x1x1xf32> to vector<2x16x1xf32>
    %710 = arith.mulf %705, %709 : vector<2x16x1xf32>
    %711 = vector.broadcast %710 : vector<2x16x1xf32> to vector<2x16x32xf32>
    %712 = arith.mulf %2, %711 : vector<2x16x32xf32>
    %cst_193 = arith.constant dense<0.000000e+00> : vector<2x32xf32>
    %713 = vector.multi_reduction <add>, %712, %cst_193 [1] : vector<2x16x32xf32> to vector<2x32xf32>
    %714 = arith.addf %119, %688 : vector<2x24xf32>
    %715 = math.tanh %714 : vector<2x24xf32>
    %716 = vector.broadcast %137 : vector<1x24xf32> to vector<2x24xf32>
    %717 = arith.mulf %715, %716 : vector<2x24xf32>
    %cst_194 = arith.constant dense<0.000000e+00> : vector<2xf32>
    %718 = vector.multi_reduction <add>, %717, %cst_194 [1] : vector<2x24xf32> to vector<2xf32>
    %719 = vector.shape_cast %718 : vector<2xf32> to vector<2x1xf32>
    %720 = vector.broadcast %138 : vector<1x1xf32> to vector<2x1xf32>
    %721 = arith.addf %719, %720 : vector<2x1xf32>
    %722 = arith.addf %120, %688 : vector<2x24xf32>
    %723 = math.tanh %722 : vector<2x24xf32>
    %724 = vector.broadcast %137 : vector<1x24xf32> to vector<2x24xf32>
    %725 = arith.mulf %723, %724 : vector<2x24xf32>
    %cst_195 = arith.constant dense<0.000000e+00> : vector<2xf32>
    %726 = vector.multi_reduction <add>, %725, %cst_195 [1] : vector<2x24xf32> to vector<2xf32>
    %727 = vector.shape_cast %726 : vector<2xf32> to vector<2x1xf32>
    %728 = vector.broadcast %138 : vector<1x1xf32> to vector<2x1xf32>
    %729 = arith.addf %727, %728 : vector<2x1xf32>
    %730 = arith.addf %121, %688 : vector<2x24xf32>
    %731 = math.tanh %730 : vector<2x24xf32>
    %732 = vector.broadcast %137 : vector<1x24xf32> to vector<2x24xf32>
    %733 = arith.mulf %731, %732 : vector<2x24xf32>
    %cst_196 = arith.constant dense<0.000000e+00> : vector<2xf32>
    %734 = vector.multi_reduction <add>, %733, %cst_196 [1] : vector<2x24xf32> to vector<2xf32>
    %735 = vector.shape_cast %734 : vector<2xf32> to vector<2x1xf32>
    %736 = vector.broadcast %138 : vector<1x1xf32> to vector<2x1xf32>
    %737 = arith.addf %735, %736 : vector<2x1xf32>
    %738 = arith.addf %122, %688 : vector<2x24xf32>
    %739 = math.tanh %738 : vector<2x24xf32>
    %740 = vector.broadcast %137 : vector<1x24xf32> to vector<2x24xf32>
    %741 = arith.mulf %739, %740 : vector<2x24xf32>
    %cst_197 = arith.constant dense<0.000000e+00> : vector<2xf32>
    %742 = vector.multi_reduction <add>, %741, %cst_197 [1] : vector<2x24xf32> to vector<2xf32>
    %743 = vector.shape_cast %742 : vector<2xf32> to vector<2x1xf32>
    %744 = vector.broadcast %138 : vector<1x1xf32> to vector<2x1xf32>
    %745 = arith.addf %743, %744 : vector<2x1xf32>
    %746 = arith.addf %123, %688 : vector<2x24xf32>
    %747 = math.tanh %746 : vector<2x24xf32>
    %748 = vector.broadcast %137 : vector<1x24xf32> to vector<2x24xf32>
    %749 = arith.mulf %747, %748 : vector<2x24xf32>
    %cst_198 = arith.constant dense<0.000000e+00> : vector<2xf32>
    %750 = vector.multi_reduction <add>, %749, %cst_198 [1] : vector<2x24xf32> to vector<2xf32>
    %751 = vector.shape_cast %750 : vector<2xf32> to vector<2x1xf32>
    %752 = vector.broadcast %138 : vector<1x1xf32> to vector<2x1xf32>
    %753 = arith.addf %751, %752 : vector<2x1xf32>
    %754 = arith.maximumf %721, %729 : vector<2x1xf32>
    %755 = arith.maximumf %754, %737 : vector<2x1xf32>
    %756 = arith.maximumf %755, %745 : vector<2x1xf32>
    %757 = arith.maximumf %756, %753 : vector<2x1xf32>
    %758 = arith.subf %721, %757 : vector<2x1xf32>
    %759 = math.exp %758 : vector<2x1xf32>
    %760 = arith.subf %729, %757 : vector<2x1xf32>
    %761 = math.exp %760 : vector<2x1xf32>
    %762 = arith.subf %737, %757 : vector<2x1xf32>
    %763 = math.exp %762 : vector<2x1xf32>
    %764 = arith.subf %745, %757 : vector<2x1xf32>
    %765 = math.exp %764 : vector<2x1xf32>
    %766 = arith.subf %753, %757 : vector<2x1xf32>
    %767 = math.exp %766 : vector<2x1xf32>
    %768 = arith.addf %759, %761 : vector<2x1xf32>
    %769 = arith.addf %768, %763 : vector<2x1xf32>
    %770 = arith.addf %769, %765 : vector<2x1xf32>
    %771 = arith.addf %770, %767 : vector<2x1xf32>
    %772 = tpu.reciprocal %771 {approx = true} : vector<2x1xf32> -> vector<2x1xf32>
    %773 = arith.mulf %759, %772 : vector<2x1xf32>
    %774 = vector.broadcast %773 : vector<2x1xf32> to vector<2x16xf32>
    %775 = arith.mulf %774, %114 : vector<2x16xf32>
    %776 = arith.mulf %761, %772 : vector<2x1xf32>
    %777 = vector.broadcast %776 : vector<2x1xf32> to vector<2x16xf32>
    %778 = arith.mulf %777, %115 : vector<2x16xf32>
    %779 = arith.addf %775, %778 : vector<2x16xf32>
    %780 = arith.mulf %763, %772 : vector<2x1xf32>
    %781 = vector.broadcast %780 : vector<2x1xf32> to vector<2x16xf32>
    %782 = arith.mulf %781, %116 : vector<2x16xf32>
    %783 = arith.addf %779, %782 : vector<2x16xf32>
    %784 = arith.mulf %765, %772 : vector<2x1xf32>
    %785 = vector.broadcast %784 : vector<2x1xf32> to vector<2x16xf32>
    %786 = arith.mulf %785, %117 : vector<2x16xf32>
    %787 = arith.addf %783, %786 : vector<2x16xf32>
    %788 = arith.mulf %767, %772 : vector<2x1xf32>
    %789 = vector.broadcast %788 : vector<2x1xf32> to vector<2x16xf32>
    %790 = arith.mulf %789, %118 : vector<2x16xf32>
    %791 = arith.addf %787, %790 : vector<2x16xf32>
    %c672_199 = arith.constant 672 : index
    %c0_200 = arith.constant 0 : index
    %792 = vector.load %arg2[%c672_199, %c0_200] : memref<848x128xf32, #tpu.memory_space<vmem>>, vector<32x128xf32>
    %cst_201 = arith.constant dense<0.000000e+00> : vector<2x128xf32>
    %793 = tpu.matmul %713, %792, %cst_201 {dimension_numbers = #tpu.dot_dimension_numbers<[1], [0], [0], [1], [0, 0, 1, 1], [], []>} : vector<2x32xf32>, vector<32x128xf32>, vector<2x128xf32> -> vector<2x128xf32>
    %c704_202 = arith.constant 704 : index
    %c0_203 = arith.constant 0 : index
    %794 = vector.load %arg2[%c704_202, %c0_203] : memref<848x128xf32, #tpu.memory_space<vmem>>, vector<16x128xf32>
    %cst_204 = arith.constant dense<0.000000e+00> : vector<2x128xf32>
    %795 = tpu.matmul %791, %794, %cst_204 {dimension_numbers = #tpu.dot_dimension_numbers<[1], [0], [0], [1], [0, 0, 1, 1], [], []>} : vector<2x16xf32>, vector<16x128xf32>, vector<2x128xf32> -> vector<2x128xf32>
    %796 = arith.addf %793, %795 : vector<2x128xf32>
    %c720_205 = arith.constant 720 : index
    %c0_206 = arith.constant 0 : index
    %797 = vector.load %arg2[%c720_205, %c0_206] : memref<848x128xf32, #tpu.memory_space<vmem>>, vector<32x128xf32>
    %cst_207 = arith.constant dense<0.000000e+00> : vector<2x128xf32>
    %798 = tpu.matmul %647, %797, %cst_207 {dimension_numbers = #tpu.dot_dimension_numbers<[1], [0], [0], [1], [0, 0, 1, 1], [], []>} : vector<2x32xf32>, vector<32x128xf32>, vector<2x128xf32> -> vector<2x128xf32>
    %799 = arith.addf %796, %798 : vector<2x128xf32>
    %800 = vector.broadcast %140 : vector<1x128xf32> to vector<2x128xf32>
    %801 = arith.addf %799, %800 : vector<2x128xf32>
    %802 = vector.extract_strided_slice %801 {offsets = [0, 0], sizes = [2, 32], strides = [1, 1]} : vector<2x128xf32> to vector<2x32xf32>
    %803 = arith.negf %802 : vector<2x32xf32>
    %804 = math.exp %803 : vector<2x32xf32>
    %cst_208 = arith.constant 1.000000e+00 : f32
    %805 = vector.broadcast %cst_208 : f32 to vector<2x32xf32>
    %806 = arith.addf %805, %804 : vector<2x32xf32>
    %807 = arith.divf %805, %806 : vector<2x32xf32>
    %808 = vector.extract_strided_slice %801 {offsets = [0, 32], sizes = [2, 32], strides = [1, 1]} : vector<2x128xf32> to vector<2x32xf32>
    %809 = arith.negf %808 : vector<2x32xf32>
    %810 = math.exp %809 : vector<2x32xf32>
    %cst_209 = arith.constant 1.000000e+00 : f32
    %811 = vector.broadcast %cst_209 : f32 to vector<2x32xf32>
    %812 = arith.addf %811, %810 : vector<2x32xf32>
    %813 = arith.divf %811, %812 : vector<2x32xf32>
    %814 = vector.extract_strided_slice %801 {offsets = [0, 64], sizes = [2, 32], strides = [1, 1]} : vector<2x128xf32> to vector<2x32xf32>
    %815 = math.tanh %814 : vector<2x32xf32>
    %816 = vector.extract_strided_slice %801 {offsets = [0, 96], sizes = [2, 32], strides = [1, 1]} : vector<2x128xf32> to vector<2x32xf32>
    %817 = arith.negf %816 : vector<2x32xf32>
    %818 = math.exp %817 : vector<2x32xf32>
    %cst_210 = arith.constant 1.000000e+00 : f32
    %819 = vector.broadcast %cst_210 : f32 to vector<2x32xf32>
    %820 = arith.addf %819, %818 : vector<2x32xf32>
    %821 = arith.divf %819, %820 : vector<2x32xf32>
    %822 = arith.mulf %813, %645 : vector<2x32xf32>
    %823 = arith.mulf %807, %815 : vector<2x32xf32>
    %824 = arith.addf %822, %823 : vector<2x32xf32>
    %825 = math.tanh %824 : vector<2x32xf32>
    %826 = arith.mulf %821, %825 : vector<2x32xf32>
    %c624_211 = arith.constant 624 : index
    %c0_212 = arith.constant 0 : index
    %827 = vector.load %arg2[%c624_211, %c0_212] : memref<848x128xf32, #tpu.memory_space<vmem>>, vector<32x16xf32>
    %cst_213 = arith.constant dense<0.000000e+00> : vector<2x16xf32>
    %828 = tpu.matmul %713, %827, %cst_213 {dimension_numbers = #tpu.dot_dimension_numbers<[1], [0], [0], [1], [0, 0, 1, 1], [], []>} : vector<2x32xf32>, vector<32x16xf32>, vector<2x16xf32> -> vector<2x16xf32>
    %c656_214 = arith.constant 656 : index
    %c0_215 = arith.constant 0 : index
    %829 = vector.load %arg2[%c656_214, %c0_215] : memref<848x128xf32, #tpu.memory_space<vmem>>, vector<16x16xf32>
    %cst_216 = arith.constant dense<0.000000e+00> : vector<2x16xf32>
    %830 = tpu.matmul %791, %829, %cst_216 {dimension_numbers = #tpu.dot_dimension_numbers<[1], [0], [0], [1], [0, 0, 1, 1], [], []>} : vector<2x16xf32>, vector<16x16xf32>, vector<2x16xf32> -> vector<2x16xf32>
    %831 = arith.addf %828, %830 : vector<2x16xf32>
    %832 = vector.broadcast %139 : vector<1x16xf32> to vector<2x16xf32>
    %833 = arith.addf %831, %832 : vector<2x16xf32>
    %c752_217 = arith.constant 752 : index
    %c0_218 = arith.constant 0 : index
    %834 = vector.load %arg2[%c752_217, %c0_218] : memref<848x128xf32, #tpu.memory_space<vmem>>, vector<32x22xf32>
    %cst_219 = arith.constant dense<0.000000e+00> : vector<2x22xf32>
    %835 = tpu.matmul %647, %834, %cst_219 {dimension_numbers = #tpu.dot_dimension_numbers<[1], [0], [0], [1], [0, 0, 1, 1], [], []>} : vector<2x32xf32>, vector<32x22xf32>, vector<2x22xf32> -> vector<2x22xf32>
    %c784_220 = arith.constant 784 : index
    %c0_221 = arith.constant 0 : index
    %836 = vector.load %arg2[%c784_220, %c0_221] : memref<848x128xf32, #tpu.memory_space<vmem>>, vector<32x22xf32>
    %cst_222 = arith.constant dense<0.000000e+00> : vector<2x22xf32>
    %837 = tpu.matmul %826, %836, %cst_222 {dimension_numbers = #tpu.dot_dimension_numbers<[1], [0], [0], [1], [0, 0, 1, 1], [], []>} : vector<2x32xf32>, vector<32x22xf32>, vector<2x22xf32> -> vector<2x22xf32>
    %838 = arith.addf %835, %837 : vector<2x22xf32>
    %c816_223 = arith.constant 816 : index
    %c0_224 = arith.constant 0 : index
    %839 = vector.load %arg2[%c816_223, %c0_224] : memref<848x128xf32, #tpu.memory_space<vmem>>, vector<16x22xf32>
    %cst_225 = arith.constant dense<0.000000e+00> : vector<2x22xf32>
    %840 = tpu.matmul %833, %839, %cst_225 {dimension_numbers = #tpu.dot_dimension_numbers<[1], [0], [0], [1], [0, 0, 1, 1], [], []>} : vector<2x16xf32>, vector<16x22xf32>, vector<2x22xf32> -> vector<2x22xf32>
    %841 = arith.addf %838, %840 : vector<2x22xf32>
    %842 = vector.broadcast %141 : vector<1x22xf32> to vector<2x22xf32>
    %843 = arith.addf %841, %842 : vector<2x22xf32>
    %844 = vector.extract_strided_slice %843 {offsets = [0, 0], sizes = [2, 10], strides = [1, 1]} : vector<2x22xf32> to vector<2x10xf32>
    %845 = vector.extract_strided_slice %843 {offsets = [0, 10], sizes = [2, 12], strides = [1, 1]} : vector<2x22xf32> to vector<2x12xf32>
    %846 = math.tanh %845 : vector<2x12xf32>
    %cst_226 = arith.constant dense<0.000000e+00> : vector<2x2xf32>
    %847 = tpu.matmul %844, %142, %cst_226 {dimension_numbers = #tpu.dot_dimension_numbers<[1], [0], [0], [1], [0, 0, 1, 1], [], []>} : vector<2x10xf32>, vector<10x2xf32>, vector<2x2xf32> -> vector<2x2xf32>
    %848 = vector.broadcast %143 : vector<1x2xf32> to vector<2x2xf32>
    %849 = arith.addf %847, %848 : vector<2x2xf32>
    %850 = math.tanh %849 : vector<2x2xf32>
    %cst_227 = arith.constant dense<0xFF800000> : vector<2xf32>
    %851 = vector.multi_reduction <maximumf>, %850, %cst_227 [1] : vector<2x2xf32> to vector<2xf32>
    %852 = vector.shape_cast %851 : vector<2xf32> to vector<2x1xf32>
    %853 = vector.broadcast %852 : vector<2x1xf32> to vector<2x2xf32>
    %854 = arith.subf %850, %853 : vector<2x2xf32>
    %855 = math.exp %854 : vector<2x2xf32>
    %cst_228 = arith.constant dense<0.000000e+00> : vector<2xf32>
    %856 = vector.multi_reduction <add>, %855, %cst_228 [1] : vector<2x2xf32> to vector<2xf32>
    %857 = vector.shape_cast %856 : vector<2xf32> to vector<2x1xf32>
    %858 = vector.broadcast %857 : vector<2x1xf32> to vector<2x2xf32>
    %859 = arith.divf %855, %858 : vector<2x2xf32>
    %c6_229 = arith.constant 6 : index
    %c0_230 = arith.constant 0 : index
    %860 = vector.load %arg4[%c6_229, %c0_230] : memref<8x128xf32, #tpu.memory_space<vmem>>, vector<2x12xf32>
    tpu.vector_store %arg4[%c6_229, %c0_230], %846 {strides = array<i32>} : memref<8x128xf32, #tpu.memory_space<vmem>>, vector<2x12xf32>,
    %c6_231 = arith.constant 6 : index
    %c12_232 = arith.constant 12 : index
    %861 = vector.load %arg4[%c6_231, %c12_232] : memref<8x128xf32, #tpu.memory_space<vmem>>, vector<2x2xf32>
    tpu.vector_store %arg4[%c6_231, %c12_232], %859 {strides = array<i32>} : memref<8x128xf32, #tpu.memory_space<vmem>>, vector<2x2xf32>,
    return
  }
}

</mosaic_0001>

<llo_original>
// kernel: sentence_lstm_decoder_forward.1
$region0: #{sentence_lstm_decoder_forward.1}
  #allocation0 [shape = 'u32[]', space=smem, size = 0x4, offset = 0x4, fixed_abs, tag = 'smem constant byte address 0x4 - core index']
  #allocation1 [shape = 'u32[144,128]{1,0:T(1,128)}', space=vmem, size = 0x12000, scoped, tag = 'internal scratch']
  %s0 = inlined_call_operand.vmem [shape: f32[2,16,32], index: 0, kind: input, shape index: {}]
  %s1 = inlined_call_operand.vmem [shape: f32[2,512], index: 1, kind: input, shape index: {}]
  %s2 = inlined_call_operand.hbm [shape: f32[848,128], index: 2, kind: input, shape index: {}]
  %s3 = inlined_call_operand.hbm [shape: f32[16,128], index: 3, kind: input, shape index: {}]
  %s4 = inlined_call_operand.vmem [shape: f32[8,128], index: 4, kind: output, shape index: {}]
  %s5 = sld [smem:[#allocation0]]
  $region34: #{sentence_lstm_decoder_forward.1} parent=0
    _
  %s7 = ssub.s32 1, %s5
  %s8 = scalar_select 0, %s7, %s5
  $region1: #{sentence_lstm_decoder_forward.1} parent=0
    #allocation2 [shape = 'u8[434176]{0}', space=vmem, size = 0x6a000, scoped, tag = 'input window, operand 2, single buffered']
    #allocation3 [shape = 's32[1]{0}', space=sflag, size = 0x4, scoped, tag = 'scoped memory for sentence_lstm_decoder_forward.1']
    #allocation4 [shape = 'u8[8192]{0}', space=vmem, size = 0x2000, scoped, tag = 'input window, operand 3, single buffered']
    #allocation5 [shape = 's32[1]{0}', space=sflag, size = 0x4, scoped, tag = 'scoped memory for sentence_lstm_decoder_forward.1']
    %9 = vsyncpa [#allocation3], 0
    %10 = vsyncpa [#allocation5], 0
    // Predicated region
    $region2: #{sentence_lstm_decoder_forward.1} parent=1 // pred_check
      _
    $region3: #{sentence_lstm_decoder_forward.1} parent=1 // pred_check_branch
      %12 = sbr.rel (0) target = $region5
    $region4: #{sentence_lstm_decoder_forward.1} parent=1 // pred_region
      _
    $region5: #{sentence_lstm_decoder_forward.1} parent=1 // pred_fallthru
      _
    // Predicated region
    $region6: #{sentence_lstm_decoder_forward.1} parent=1 // pred_check
      _
    $region7: #{sentence_lstm_decoder_forward.1} parent=1 // pred_check_branch
      %14 = sbr.rel (0) target = $region9
    $region8: #{sentence_lstm_decoder_forward.1} parent=1 // pred_region
      _
    $region9: #{sentence_lstm_decoder_forward.1} parent=1 // pred_fallthru
      _
    // Predicated region
    $region10: #{sentence_lstm_decoder_forward.1} parent=1 // pred_check
      _
    $region11: #{sentence_lstm_decoder_forward.1} parent=1 // pred_check_branch
      %16 = sbr.rel (0) target = $region13
    $region12: #{sentence_lstm_decoder_forward.1} parent=1 // pred_region
      %s18 = ssub.s32 13568, 13568
      %19 = vsyncadd [#allocation3], %s18
      %s20 = sshll.u32 [#allocation2], 4
      %s21 = int_to_ptr.vmem [resolvable:$true] %s20
      %26 = dma.hbm_to_vmem [thread:$0]  %s2, 13568, %s21, [#allocation3], 128, 128, 8
    $region13: #{sentence_lstm_decoder_forward.1} parent=1 // pred_fallthru
      _
    // Predicated region
    $region14: #{sentence_lstm_decoder_forward.1} parent=1 // pred_check
      _
    $region15: #{sentence_lstm_decoder_forward.1} parent=1 // pred_check_branch
      %28 = sbr.rel (0) target = $region17
    $region16: #{sentence_lstm_decoder_forward.1} parent=1 // pred_region
      %s30 = ssub.s32 256, 256
      %31 = vsyncadd [#allocation5], %s30
      %s32 = sshll.u32 [#allocation4], 4
      %s33 = int_to_ptr.vmem [resolvable:$true] %s32
      %38 = dma.hbm_to_vmem [thread:$0]  %s3, 256, %s33, [#allocation5], 128, 128, 8
    $region17: #{sentence_lstm_decoder_forward.1} parent=1 // pred_fallthru
      _
    // Predicated region
    $region18: #{sentence_lstm_decoder_forward.1} parent=1 // pred_check
      _
    $region19: #{sentence_lstm_decoder_forward.1} parent=1 // pred_check_branch
      %40 = sbr.rel (0) target = $region21
    $region20: #{sentence_lstm_decoder_forward.1} parent=1 // pred_region
      %41 = dma.done [#allocation3], 13568
    $region21: #{sentence_lstm_decoder_forward.1} parent=1 // pred_fallthru
      _
    // Predicated region
    $region22: #{sentence_lstm_decoder_forward.1} parent=1 // pred_check
      _
    $region23: #{sentence_lstm_decoder_forward.1} parent=1 // pred_check_branch
      %43 = sbr.rel (0) target = $region25
    $region24: #{sentence_lstm_decoder_forward.1} parent=1 // pred_region
      %44 = dma.done [#allocation5], 256
    $region25: #{sentence_lstm_decoder_forward.1} parent=1 // pred_fallthru
      _
    %45 = vst [vmem:[%s4] sm:$0xff] 0.0
    %v46 = vld [vmem:[%s0] sm:$0xff]
    %v47 = vld [vmem:[%s0 + $0x8] sm:$0xff]
    %v48 = vld [vmem:[%s0 + $0x10] sm:$0xff]
    %v49 = vld [vmem:[%s0 + $0x18] sm:$0xff]
    %v50 = vld [vmem:[%s1] sm:$0xff]
    %v51 = vld [vmem:[#allocation2] sm:$0xff]
    %v52 = vld [vmem:[#allocation2 + $0x8] sm:$0xff]
    %v53 = vld [vmem:[#allocation2 + $0x10] sm:$0xff]
    %v54 = vld [vmem:[#allocation2 + $0x18] sm:$0xff]
    %v55 = vld [vmem:[#allocation2 + $0x20] sm:$0xff]
    %v56 = vld [vmem:[#allocation2 + $0x28] sm:$0xff]
    %v57 = vld [vmem:[#allocation2 + $0x30] sm:$0xff]
    %v58 = vld [vmem:[#allocation2 + $0x38] sm:$0xff]
    %v59 = vld [vmem:[#allocation2 + $0x40] sm:$0xff]
    %v60 = vld [vmem:[#allocation2 + $0x48] sm:$0xff]
    %v61 = vld [vmem:[#allocation2 + $0x50] sm:$0xff]
    %v62 = vld [vmem:[#allocation2 + $0x58] sm:$0xff]
    %v63 = vld [vmem:[#allocation2 + $0x60] sm:$0xff]
    %v64 = vld [vmem:[#allocation2 + $0x68] sm:$0xff]
    %v65 = vld [vmem:[#allocation2 + $0x70] sm:$0xff]
    %v66 = vld [vmem:[#allocation2 + $0x78] sm:$0xff]
    %v67 = vld [vmem:[#allocation2 + $0x80] sm:$0xff]
    %v68 = vld [vmem:[#allocation2 + $0x88] sm:$0xff]
    %v69 = vld [vmem:[#allocation2 + $0x90] sm:$0xff]
    %v70 = vld [vmem:[#allocation2 + $0x98] sm:$0xff]
    %v71 = vld [vmem:[#allocation2 + $0xa0] sm:$0xff]
    %v72 = vld [vmem:[#allocation2 + $0xa8] sm:$0xff]
    %v73 = vld [vmem:[#allocation2 + $0xb0] sm:$0xff]
    %v74 = vld [vmem:[#allocation2 + $0xb8] sm:$0xff]
    %v75 = vld [vmem:[#allocation2 + $0xc0] sm:$0xff]
    %v76 = vld [vmem:[#allocation2 + $0xc8] sm:$0xff]
    %v77 = vld [vmem:[#allocation2 + $0xd0] sm:$0xff]
    %v78 = vld [vmem:[#allocation2 + $0xd8] sm:$0xff]
    %v79 = vld [vmem:[#allocation2 + $0xe0] sm:$0xff]
    %v80 = vld [vmem:[#allocation2 + $0xe8] sm:$0xff]
    %v81 = vld [vmem:[#allocation2 + $0xf0] sm:$0xff]
    %v82 = vld [vmem:[#allocation2 + $0xf8] sm:$0xff]
    %v83 = vld [vmem:[#allocation2 + $0x100] sm:$0xff]
    %v84 = vld [vmem:[#allocation2 + $0x108] sm:$0xff]
    %v85 = vld [vmem:[#allocation2 + $0x110] sm:$0xff]
    %v86 = vld [vmem:[#allocation2 + $0x118] sm:$0xff]
    %v87 = vld [vmem:[#allocation2 + $0x120] sm:$0xff]
    %v88 = vld [vmem:[#allocation2 + $0x128] sm:$0xff]
    %v89 = vld [vmem:[#allocation2 + $0x130] sm:$0xff]
    %v90 = vld [vmem:[#allocation2 + $0x138] sm:$0xff]
    %v91 = vld [vmem:[#allocation2 + $0x140] sm:$0xff]
    %v92 = vld [vmem:[#allocation2 + $0x148] sm:$0xff]
    %v93 = vld [vmem:[#allocation2 + $0x150] sm:$0xff]
    %v94 = vld [vmem:[#allocation2 + $0x158] sm:$0xff]
    %v95 = vld [vmem:[#allocation2 + $0x160] sm:$0xff]
    %v96 = vld [vmem:[#allocation2 + $0x168] sm:$0xff]
    %v97 = vld [vmem:[#allocation2 + $0x170] sm:$0xff]
    %v98 = vld [vmem:[#allocation2 + $0x178] sm:$0xff]
    %v99 = vld [vmem:[#allocation2 + $0x180] sm:$0xff]
    %v100 = vld [vmem:[#allocation2 + $0x188] sm:$0xff]
    %v101 = vld [vmem:[#allocation2 + $0x190] sm:$0xff]
    %v102 = vld [vmem:[#allocation2 + $0x198] sm:$0xff]
    %v103 = vld [vmem:[#allocation2 + $0x1a0] sm:$0xff]
    %v104 = vld [vmem:[#allocation2 + $0x1a8] sm:$0xff]
    %v105 = vld [vmem:[#allocation2 + $0x1b0] sm:$0xff]
    %v106 = vld [vmem:[#allocation2 + $0x1b8] sm:$0xff]
    %v107 = vld [vmem:[#allocation2 + $0x1c0] sm:$0xff]
    %v108 = vld [vmem:[#allocation2 + $0x1c8] sm:$0xff]
    %v109 = vld [vmem:[#allocation2 + $0x1d0] sm:$0xff]
    %v110 = vld [vmem:[#allocation2 + $0x1d8] sm:$0xff]
    %v111 = vld [vmem:[#allocation2 + $0x1e0] sm:$0xff]
    %v112 = vld [vmem:[#allocation2 + $0x1e8] sm:$0xff]
    %v113 = vld [vmem:[#allocation2 + $0x1f0] sm:$0xff]
    %v114 = vld [vmem:[#allocation2 + $0x1f8] sm:$0xff]
    %v115 = vld [vmem:[#allocation4] sm:$0x1]
    %v116 = vlaneseq
    %v117 = vshrl.u32 %v116, 7
    %v118 = vsub.s32 0, %v117
    %v119 = vrot.slane %v115, %v118
    %v121 = vcombine.high %v50, %v50
    %v123 = vunpack.c.l.s4 1983009808
    %v124 = vunpack.c.0.s8 %v123
    %v125 = vlaneseq
    %v126 = vshrl.u32 %v125, 7
    %v127 = vsub.s32 %v124, %v126
    %v128 = vrot.slane %v50, %v127
    %v130 = vunpack.c.l.s4 1983009808
    %v131 = vunpack.c.0.s8 %v130
    %v132 = vlaneseq
    %v133 = vshrl.u32 %v132, 7
    %v134 = vsub.s32 %v131, %v133
    %v135 = vrot.slane %v121, %v134
    %v136 = vcombine.high %v128, %v128
    %v137 = vcombine.high %v135, %v135
    %142 = vmatprep.subr.mxu0 0.0
    %143 = vmatpush1.msra.mxu0 %v51
    %144 = vmatprep.subr.mxu0 0.0
    %145 = vmatpush1.msra.mxu0 %v52
    %146 = vmatprep.subr.mxu0 0.0
    %147 = vmatpush1.msra.mxu0 %v53
    %148 = vmatprep.subr.mxu0 0.0
    %149 = vmatpush1.msra.mxu0 %v54
    %150 = vmatprep.subr.mxu0 0.0
    %151 = vmatpush1.msra.mxu0 %v55
    %152 = vmatprep.subr.mxu0 0.0
    %153 = vmatpush1.msra.mxu0 %v56
    %154 = vmatprep.subr.mxu0 0.0
    %155 = vmatpush1.msra.mxu0 %v57
    %156 = vmatprep.subr.mxu0 0.0
    %157 = vmatpush1.msra.mxu0 %v58
    %158 = vmatprep.subr.mxu0 0.0
    %159 = vmatpush1.msra.mxu0 %v59
    %160 = vmatprep.subr.mxu0 0.0
    %161 = vmatpush1.msra.mxu0 %v60
    %162 = vmatprep.subr.mxu0 0.0
    %163 = vmatpush1.msra.mxu0 %v61
    %164 = vmatprep.subr.mxu0 0.0
    %165 = vmatpush1.msra.mxu0 %v62
    %166 = vmatprep.subr.mxu0 0.0
    %167 = vmatpush1.msra.mxu0 %v63
    %168 = vmatprep.subr.mxu0 0.0
    %169 = vmatpush1.msra.mxu0 %v64
    %170 = vmatprep.subr.mxu0 0.0
    %171 = vmatpush1.msra.mxu0 %v65
    %172 = vmatprep.subr.mxu0 0.0
    %173 = vmatpush1.msra.mxu0 %v66
    %174 = vmatprep.subr.mxu0 0.0
    %175 = vmatpush1.msra.mxu0 %v67
    %176 = vmatprep.subr.mxu0 0.0
    %177 = vmatpush1.msra.mxu0 %v68
    %178 = vmatprep.subr.mxu0 0.0
    %179 = vmatpush1.msra.mxu0 %v69
    %180 = vmatprep.subr.mxu0 0.0
    %181 = vmatpush1.msra.mxu0 %v70
    %182 = vmatprep.subr.mxu0 0.0
    %183 = vmatpush1.msra.mxu0 %v71
    %184 = vmatprep.subr.mxu0 0.0
    %185 = vmatpush1.msra.mxu0 %v72
    %186 = vmatprep.subr.mxu0 0.0
    %187 = vmatpush1.msra.mxu0 %v73
    %188 = vmatprep.subr.mxu0 0.0
    %189 = vmatpush1.msra.mxu0 %v74
    %190 = vmatprep.subr.mxu0 0.0
    %191 = vmatpush1.msra.mxu0 %v75
    %192 = vmatprep.subr.mxu0 0.0
    %193 = vmatpush1.msra.mxu0 %v76
    %194 = vmatprep.subr.mxu0 0.0
    %195 = vmatpush1.msra.mxu0 %v77
    %196 = vmatprep.subr.mxu0 0.0
    %197 = vmatpush1.msra.mxu0 %v78
    %198 = vmatprep.subr.mxu0 0.0
    %199 = vmatpush1.msra.mxu0 %v79
    %200 = vmatprep.subr.mxu0 0.0
    %201 = vmatpush1.msra.mxu0 %v80
    %202 = vmatprep.subr.mxu0 0.0
    %203 = vmatpush1.msra.mxu0 %v81
    %204 = vmatprep.subr.mxu0 0.0
    %205 = vmatpush1.msra.mxu0 %v82
    %206 = vmatprep.mubr.f32.mxu0 %v136
    %207 = vmatmul.mubr.f32.gmra.mrb[0].mxu0 %v128
    %v208 = vpop.f32.mrb[0].mxu0
    %v209 = vadd.f32 %v119, %v208
    %v210 = vpop.f32.mrb[0].mxu0
    %211 = vdwg.mxu0
    %212 = vmatprep.subr.mxu0 0.0
    %213 = vmatpush1.msra.mxu0 %v83
    %214 = vmatprep.subr.mxu0 0.0
    %215 = vmatpush1.msra.mxu0 %v84
    %216 = vmatprep.subr.mxu0 0.0
    %217 = vmatpush1.msra.mxu0 %v85
    %218 = vmatprep.subr.mxu0 0.0
    %219 = vmatpush1.msra.mxu0 %v86
    %220 = vmatprep.subr.mxu0 0.0
    %221 = vmatpush1.msra.mxu0 %v87
    %222 = vmatprep.subr.mxu0 0.0
    %223 = vmatpush1.msra.mxu0 %v88
    %224 = vmatprep.subr.mxu0 0.0
    %225 = vmatpush1.msra.mxu0 %v89
    %226 = vmatprep.subr.mxu0 0.0
    %227 = vmatpush1.msra.mxu0 %v90
    %228 = vmatprep.subr.mxu0 0.0
    %229 = vmatpush1.msra.mxu0 %v91
    %230 = vmatprep.subr.mxu0 0.0
    %231 = vmatpush1.msra.mxu0 %v92
    %232 = vmatprep.subr.mxu0 0.0
    %233 = vmatpush1.msra.mxu0 %v93
    %234 = vmatprep.subr.mxu0 0.0
    %235 = vmatpush1.msra.mxu0 %v94
    %236 = vmatprep.subr.mxu0 0.0
    %237 = vmatpush1.msra.mxu0 %v95
    %238 = vmatprep.subr.mxu0 0.0
    %239 = vmatpush1.msra.mxu0 %v96
    %240 = vmatprep.subr.mxu0 0.0
    %241 = vmatpush1.msra.mxu0 %v97
    %242 = vmatprep.subr.mxu0 0.0
    %243 = vmatpush1.msra.mxu0 %v98
    %244 = vmatprep.subr.mxu0 0.0
    %245 = vmatpush1.msra.mxu0 %v99
    %246 = vmatprep.subr.mxu0 0.0
    %247 = vmatpush1.msra.mxu0 %v100
    %248 = vmatprep.subr.mxu0 0.0
    %249 = vmatpush1.msra.mxu0 %v101
    %250 = vmatprep.subr.mxu0 0.0
    %251 = vmatpush1.msra.mxu0 %v102
    %252 = vmatprep.subr.mxu0 0.0
    %253 = vmatpush1.msra.mxu0 %v103
    %254 = vmatprep.subr.mxu0 0.0
    %255 = vmatpush1.msra.mxu0 %v104
    %256 = vmatprep.subr.mxu0 0.0
    %257 = vmatpush1.msra.mxu0 %v105
    %258 = vmatprep.subr.mxu0 0.0
    %259 = vmatpush1.msra.mxu0 %v106
    %260 = vmatprep.subr.mxu0 0.0
    %261 = vmatpush1.msra.mxu0 %v107
    %262 = vmatprep.subr.mxu0 0.0
    %263 = vmatpush1.msra.mxu0 %v108
    %264 = vmatprep.subr.mxu0 0.0
    %265 = vmatpush1.msra.mxu0 %v109
    %266 = vmatprep.subr.mxu0 0.0
    %267 = vmatpush1.msra.mxu0 %v110
    %268 = vmatprep.subr.mxu0 0.0
    %269 = vmatpush1.msra.mxu0 %v111
    %270 = vmatprep.subr.mxu0 0.0
    %271 = vmatpush1.msra.mxu0 %v112
    %272 = vmatprep.subr.mxu0 0.0
    %273 = vmatpush1.msra.mxu0 %v113
    %274 = vmatprep.subr.mxu0 0.0
    %275 = vmatpush1.msra.mxu0 %v114
    %276 = vmatprep.mubr.f32.mxu0 %v137
    %277 = vmatmul.mubr.f32.gmra.mrb[0].mxu0 %v135
    %v278 = vpop.f32.mrb[0].mxu0
    %v279 = vadd.f32 %v209, %v278
    %v280 = vpop.f32.mrb[0].mxu0
    %281 = vdwg.mxu0
    %v282 = vlaneseq
    %v283 = vand.u32 %v282, 127
    %v284 = vcvt.s32.f32 %v283
    %vm285 = vcmp.gt.f32.partialorder 1.0, 0.0
    %v286 = vsel %vm285, %v279, -1e+30
    %vm287 = vcmask 115712
    %v288 = vsel %vm287, %v286, -inf
    %289 = vmax.xlane.f32.xlu0 %v288
    %v290 = vpop.xlane.xlu0 %289
    %vm291 = vcmp.ge.f32.partialorder %v286, %v290
    %vm292 = vmand %vm291, %vm285
    %v293 = vsel %vm292, %v284, 15.0
    %v294 = vsel %vm287, %v293, inf
    %295 = vmin.xlane.f32.xlu0 %v294
    %v296 = vpop.xlane.xlu0 %295
    %vm297 = vcmp.eq.f32.partialorder %v284, %v296
    %v298 = vsel %vm297, 1, 0
    %v299 = vcvt.s32.f32 %v298
    %v300 = vsub.f32 1.0, %v299
    %vm301 = vcmp.gt.f32.partialorder %v300, 0.0
    %v302 = vsel %vm301, %v279, -1e+30
    %v303 = vsel %vm287, %v302, -inf
    %304 = vmax.xlane.f32.xlu0 %v303
    %v305 = vpop.xlane.xlu0 %304
    %vm306 = vcmp.ge.f32.partialorder %v302, %v305
    %vm307 = vmand %vm306, %vm301
    %v308 = vsel %vm307, %v284, 15.0
    %v309 = vsel %vm287, %v308, inf
    %310 = vmin.xlane.f32.xlu0 %v309
    %v311 = vpop.xlane.xlu0 %310
    %vm312 = vcmp.eq.f32.partialorder %v284, %v311
    %v313 = vsel %vm312, 1, 0
    %v314 = vcvt.s32.f32 %v313
    %v315 = vsub.f32 %v300, %v314
    %vm316 = vcmp.gt.f32.partialorder %v315, 0.0
    %v317 = vsel %vm316, %v279, -1e+30
    %v318 = vsel %vm287, %v317, -inf
    %319 = vmax.xlane.f32.xlu0 %v318
    %v320 = vpop.xlane.xlu0 %319
    %vm321 = vcmp.ge.f32.partialorder %v317, %v320
    %vm322 = vmand %vm321, %vm316
    %v323 = vsel %vm322, %v284, 15.0
    %v324 = vsel %vm287, %v323, inf
    %325 = vmin.xlane.f32.xlu0 %v324
    %v326 = vpop.xlane.xlu0 %325
    %vm327 = vcmp.eq.f32.partialorder %v284, %v326
    %v328 = vsel %vm327, 1, 0
    %v329 = vcvt.s32.f32 %v328
    %v330 = vsub.f32 %v315, %v329
    %vm331 = vcmp.gt.f32.partialorder %v330, 0.0
    %v332 = vsel %vm331, %v279, -1e+30
    %v333 = vsel %vm287, %v332, -inf
    %334 = vmax.xlane.f32.xlu0 %v333
    %v335 = vpop.xlane.xlu0 %334
    %vm336 = vcmp.ge.f32.partialorder %v332, %v335
    %vm337 = vmand %vm336, %vm331
    %v338 = vsel %vm337, %v284, 15.0
    %v339 = vsel %vm287, %v338, inf
    %340 = vmin.xlane.f32.xlu0 %v339
    %v341 = vpop.xlane.xlu0 %340
    %vm342 = vcmp.eq.f32.partialorder %v284, %v341
    %v343 = vsel %vm342, 1, 0
    %v344 = vcvt.s32.f32 %v343
    %v345 = vsub.f32 %v330, %v344
    %vm346 = vcmp.gt.f32.partialorder %v345, 0.0
    %v347 = vsel %vm346, %v279, -1e+30
    %v348 = vsel %vm287, %v347, -inf
    %349 = vmax.xlane.f32.xlu0 %v348
    %v350 = vpop.xlane.xlu0 %349
    %vm351 = vcmp.ge.f32.partialorder %v347, %v350
    %vm352 = vmand %vm351, %vm346
    %v353 = vsel %vm352, %v284, 15.0
    %v354 = vsel %vm287, %v353, inf
    %355 = vmin.xlane.f32.xlu0 %v354
    %v356 = vpop.xlane.xlu0 %355
    %vm357 = vcmp.eq.f32.partialorder %v284, %v356
    %v358 = vsel %vm357, 1, 0
    %v359 = vcvt.s32.f32 %v358
    %v361 = vrot.slane %v314, 6
    %v364 = vrot.slane %v329, 4
    %v367 = vrot.slane %v344, 2
    %vm369 = vcmask 1041408
    %v370 = vsel %vm369, %v299, %v361
    %vm371 = vcmask 1043456
    %v372 = vsel %vm371, %v370, %v364
    %vm373 = vcmask 1045504
    %v374 = vsel %vm373, %v372, %v367
    %v375 = vld [vmem:[#allocation2 + $0x260] sm:$0xff]
    %v376 = vld [vmem:[#allocation2 + $0x268] sm:$0x7f]
    %vm377 = vcmask 121856
    %v379 = vsel %vm377, %v374, 0
    %v382 = vsel %vm377, %v359, 0
    %vm384 = vcmask 1046528
    %v386 = vsel %vm384, %v376, 0
    %388 = vmatprep.subr.mxu0 0.0
    %389 = vmatpush1.msra.mxu0 %v375
    %390 = vmatprep.subr.mxu0 0.0
    %391 = vmatpush1.msra.mxu0 %v386
    %392 = vmatprep.subr.mxu0 0.0
    %393 = vmatpush1.msra.mxu0 0.0
    %394 = vmatprep.subr.mxu0 0.0
    %395 = vmatpush1.msra.mxu0 0.0
    %396 = vmatprep.subr.mxu0 0.0
    %397 = vmatpush1.msra.mxu0 0.0
    %398 = vmatprep.subr.mxu0 0.0
    %399 = vmatpush1.msra.mxu0 0.0
    %400 = vmatprep.subr.mxu0 0.0
    %401 = vmatpush1.msra.mxu0 0.0
    %402 = vmatprep.subr.mxu0 0.0
    %403 = vmatpush1.msra.mxu0 0.0
    %404 = vmatprep.subr.mxu0 0.0
    %405 = vmatpush1.msra.mxu0 0.0
    %406 = vmatprep.subr.mxu0 0.0
    %407 = vmatpush1.msra.mxu0 0.0
    %408 = vmatprep.subr.mxu0 0.0
    %409 = vmatpush1.msra.mxu0 0.0
    %410 = vmatprep.subr.mxu0 0.0
    %411 = vmatpush1.msra.mxu0 0.0
    %412 = vmatprep.subr.mxu0 0.0
    %413 = vmatpush1.msra.mxu0 0.0
    %414 = vmatprep.subr.mxu0 0.0
    %415 = vmatpush1.msra.mxu0 0.0
    %416 = vmatprep.subr.mxu0 0.0
    %417 = vmatpush1.msra.mxu0 0.0
    %418 = vmatprep.subr.mxu0 0.0
    %419 = vmatpush1.msra.mxu0 0.0
    %420 = vmatprep.subr.mxu0 0.0
    %421 = vmatpush1.msra.mxu0 0.0
    %422 = vmatprep.subr.mxu0 0.0
    %423 = vmatpush1.msra.mxu0 0.0
    %424 = vmatprep.subr.mxu0 0.0
    %425 = vmatpush1.msra.mxu0 0.0
    %426 = vmatprep.subr.mxu0 0.0
    %427 = vmatpush1.msra.mxu0 0.0
    %428 = vmatprep.subr.mxu0 0.0
    %429 = vmatpush1.msra.mxu0 0.0
    %430 = vmatprep.subr.mxu0 0.0
    %431 = vmatpush1.msra.mxu0 0.0
    %432 = vmatprep.subr.mxu0 0.0
    %433 = vmatpush1.msra.mxu0 0.0
    %434 = vmatprep.subr.mxu0 0.0
    %435 = vmatpush1.msra.mxu0 0.0
    %436 = vmatprep.subr.mxu0 0.0
    %437 = vmatpush1.msra.mxu0 0.0
    %438 = vmatprep.subr.mxu0 0.0
    %439 = vmatpush1.msra.mxu0 0.0
    %440 = vmatprep.subr.mxu0 0.0
    %441 = vmatpush1.msra.mxu0 0.0
    %442 = vmatprep.subr.mxu0 0.0
    %443 = vmatpush1.msra.mxu0 0.0
    %444 = vmatprep.subr.mxu0 0.0
    %445 = vmatpush1.msra.mxu0 0.0
    %446 = vmatprep.subr.mxu0 0.0
    %447 = vmatpush1.msra.mxu0 0.0
    %448 = vmatprep.subr.mxu0 0.0
    %449 = vmatpush1.msra.mxu0 0.0
    %450 = vmatprep.subr.mxu0 0.0
    %451 = vmatpush1.msra.mxu0 0.0
    %452 = vmatprep.mubr.f32.mxu0 0.0
    %453 = vmatmul.mubr.f32.gmra.mrb[0].mxu0 %v379
    %v454 = vpop.f32.mrb[0].mxu0
    %v455 = vadd.f32 0.0, %v454
    %v456 = vpop.f32.mrb[0].mxu0
    %457 = vmatprep.mubr.f32.mxu0 0.0
    %458 = vmatmul.mubr.f32.gmra.mrb[0].mxu0 %v382
    %v459 = vpop.f32.mrb[0].mxu0
    %v460 = vadd.f32 0.0, %v459
    %v461 = vpop.f32.mrb[0].mxu0
    %462 = vdwg.mxu0
    %v463 = vld [vmem:[#allocation2 + $0x200] sm:$0xff]
    %v464 = vld [vmem:[#allocation2 + $0x208] sm:$0xff]
    %v465 = vld [vmem:[#allocation2 + $0x210] sm:$0xff]
    %v466 = vld [vmem:[#allocation2 + $0x218] sm:$0xff]
    %v467 = vld [vmem:[#allocation4 + $0x1] sm:$0x1]
    %v468 = vlaneseq
    %v469 = vshrl.u32 %v468, 7
    %v470 = vsub.s32 0, %v469
    %v471 = vrot.slane %v467, %v470
    %vm472 = vcmask 261120
    %v474 = vsel %vm472, %v46, 0
    %v477 = vsel %vm472, %v47, 0
    %v480 = vsel %vm472, %v48, 0
    %v483 = vsel %vm472, %v49, 0
    %485 = vmatprep.subr.mxu0 0.0
    %486 = vmatpush1.msra.mxu0 %v463
    %487 = vmatprep.subr.mxu0 0.0
    %488 = vmatpush1.msra.mxu0 %v464
    %489 = vmatprep.subr.mxu0 0.0
    %490 = vmatpush1.msra.mxu0 %v465
    %491 = vmatprep.subr.mxu0 0.0
    %492 = vmatpush1.msra.mxu0 %v466
    %493 = vmatprep.subr.mxu0 0.0
    %494 = vmatpush1.msra.mxu0 0.0
    %495 = vmatprep.subr.mxu0 0.0
    %496 = vmatpush1.msra.mxu0 0.0
    %497 = vmatprep.subr.mxu0 0.0
    %498 = vmatpush1.msra.mxu0 0.0
    %499 = vmatprep.subr.mxu0 0.0
    %500 = vmatpush1.msra.mxu0 0.0
    %501 = vmatprep.subr.mxu0 0.0
    %502 = vmatpush1.msra.mxu0 0.0
    %503 = vmatprep.subr.mxu0 0.0
    %504 = vmatpush1.msra.mxu0 0.0
    %505 = vmatprep.subr.mxu0 0.0
    %506 = vmatpush1.msra.mxu0 0.0
    %507 = vmatprep.subr.mxu0 0.0
    %508 = vmatpush1.msra.mxu0 0.0
    %509 = vmatprep.subr.mxu0 0.0
    %510 = vmatpush1.msra.mxu0 0.0
    %511 = vmatprep.subr.mxu0 0.0
    %512 = vmatpush1.msra.mxu0 0.0
    %513 = vmatprep.subr.mxu0 0.0
    %514 = vmatpush1.msra.mxu0 0.0
    %515 = vmatprep.subr.mxu0 0.0
    %516 = vmatpush1.msra.mxu0 0.0
    %517 = vmatprep.subr.mxu0 0.0
    %518 = vmatpush1.msra.mxu0 0.0
    %519 = vmatprep.subr.mxu0 0.0
    %520 = vmatpush1.msra.mxu0 0.0
    %521 = vmatprep.subr.mxu0 0.0
    %522 = vmatpush1.msra.mxu0 0.0
    %523 = vmatprep.subr.mxu0 0.0
    %524 = vmatpush1.msra.mxu0 0.0
    %525 = vmatprep.subr.mxu0 0.0
    %526 = vmatpush1.msra.mxu0 0.0
    %527 = vmatprep.subr.mxu0 0.0
    %528 = vmatpush1.msra.mxu0 0.0
    %529 = vmatprep.subr.mxu0 0.0
    %530 = vmatpush1.msra.mxu0 0.0
    %531 = vmatprep.subr.mxu0 0.0
    %532 = vmatpush1.msra.mxu0 0.0
    %533 = vmatprep.subr.mxu0 0.0
    %534 = vmatpush1.msra.mxu0 0.0
    %535 = vmatprep.subr.mxu0 0.0
    %536 = vmatpush1.msra.mxu0 0.0
    %537 = vmatprep.subr.mxu0 0.0
    %538 = vmatpush1.msra.mxu0 0.0
    %539 = vmatprep.subr.mxu0 0.0
    %540 = vmatpush1.msra.mxu0 0.0
    %541 = vmatprep.subr.mxu0 0.0
    %542 = vmatpush1.msra.mxu0 0.0
    %543 = vmatprep.subr.mxu0 0.0
    %544 = vmatpush1.msra.mxu0 0.0
    %545 = vmatprep.subr.mxu0 0.0
    %546 = vmatpush1.msra.mxu0 0.0
    %547 = vmatprep.subr.mxu0 0.0
    %548 = vmatpush1.msra.mxu0 0.0
    %549 = vmatprep.mubr.f32.mxu0 0.0
    %550 = vmatmul.mubr.f32.gmra.mrb[0].mxu0 %v474
    %v551 = vpop.f32.mrb[0].mxu0
    %v552 = vadd.f32 %v471, %v551
    %v553 = vpop.f32.mrb[0].mxu0
    %554 = vmatprep.mubr.f32.mxu0 0.0
    %555 = vmatmul.mubr.f32.gmra.mrb[0].mxu0 %v477
    %v556 = vpop.f32.mrb[0].mxu0
    %v557 = vadd.f32 %v471, %v556
    %v558 = vpop.f32.mrb[0].mxu0
    %559 = vmatprep.mubr.f32.mxu0 0.0
    %560 = vmatmul.mubr.f32.gmra.mrb[0].mxu0 %v480
    %v561 = vpop.f32.mrb[0].mxu0
    %v562 = vadd.f32 %v471, %v561
    %v563 = vpop.f32.mrb[0].mxu0
    %564 = vmatprep.mubr.f32.mxu0 0.0
    %565 = vmatmul.mubr.f32.gmra.mrb[0].mxu0 %v483
    %v566 = vpop.f32.mrb[0].mxu0
    %v567 = vadd.f32 %v471, %v566
    %v568 = vpop.f32.mrb[0].mxu0
    %569 = vdwg.mxu0
    %v570 = vld [vmem:[#allocation2 + $0x220] sm:$0xff]
    %v571 = vld [vmem:[#allocation2 + $0x228] sm:$0xff]
    %v572 = vld [vmem:[#allocation2 + $0x230] sm:$0xff]
    %v573 = vld [vmem:[#allocation2 + $0x238] sm:$0xff]
    %v574 = vld [vmem:[#allocation4 + $0x2] sm:$0x1]
    %v575 = vld [vmem:[#allocation2 + $0x240] sm:$0xff]
    %v576 = vld [vmem:[#allocation2 + $0x248] sm:$0xff]
    %v577 = vld [vmem:[#allocation2 + $0x250] sm:$0xff]
    %v578 = vld [vmem:[#allocation2 + $0x258] sm:$0xff]
    %v579 = vld [vmem:[#allocation4 + $0x3] sm:$0x1]
    %v580 = vld [vmem:[#allocation4 + $0x4] sm:$0x1]
    %v581 = vld [vmem:[#allocation4 + $0x5] sm:$0x1]
    %v582 = vld [vmem:[#allocation4 + $0x6] sm:$0x1]
    %v583 = vld [vmem:[#allocation4 + $0x7] sm:$0x1]
    %v584 = vld [vmem:[#allocation4 + $0x8] sm:$0x1]
    %v585 = vld [vmem:[#allocation4 + $0x9] sm:$0x1]
    %v586 = vld [vmem:[#allocation4 + $0xa] sm:$0x1]
    %v587 = vld [vmem:[#allocation2 + $0x340] sm:$0xff]
    %v588 = vld [vmem:[#allocation2 + $0x348] sm:$0x3]
    %v589 = vld [vmem:[#allocation4 + $0xb] sm:$0x1]
    %v590 = vlaneseq
    %v591 = vshrl.u32 %v590, 7
    %v592 = vsub.s32 0, %v591
    %v593 = vrot.slane %v574, %v592
    %v595 = vsel %vm472, 0.0, 0
    %597 = vmatprep.subr.mxu0 0.0
    %598 = vmatpush1.msra.mxu0 %v570
    %599 = vmatprep.subr.mxu0 0.0
    %600 = vmatpush1.msra.mxu0 %v571
    %601 = vmatprep.subr.mxu0 0.0
    %602 = vmatpush1.msra.mxu0 %v572
    %603 = vmatprep.subr.mxu0 0.0
    %604 = vmatpush1.msra.mxu0 %v573
    %605 = vmatprep.subr.mxu0 0.0
    %606 = vmatpush1.msra.mxu0 0.0
    %607 = vmatprep.subr.mxu0 0.0
    %608 = vmatpush1.msra.mxu0 0.0
    %609 = vmatprep.subr.mxu0 0.0
    %610 = vmatpush1.msra.mxu0 0.0
    %611 = vmatprep.subr.mxu0 0.0
    %612 = vmatpush1.msra.mxu0 0.0
    %613 = vmatprep.subr.mxu0 0.0
    %614 = vmatpush1.msra.mxu0 0.0
    %615 = vmatprep.subr.mxu0 0.0
    %616 = vmatpush1.msra.mxu0 0.0
    %617 = vmatprep.subr.mxu0 0.0
    %618 = vmatpush1.msra.mxu0 0.0
    %619 = vmatprep.subr.mxu0 0.0
    %620 = vmatpush1.msra.mxu0 0.0
    %621 = vmatprep.subr.mxu0 0.0
    %622 = vmatpush1.msra.mxu0 0.0
    %623 = vmatprep.subr.mxu0 0.0
    %624 = vmatpush1.msra.mxu0 0.0
    %625 = vmatprep.subr.mxu0 0.0
    %626 = vmatpush1.msra.mxu0 0.0
    %627 = vmatprep.subr.mxu0 0.0
    %628 = vmatpush1.msra.mxu0 0.0
    %629 = vmatprep.subr.mxu0 0.0
    %630 = vmatpush1.msra.mxu0 0.0
    %631 = vmatprep.subr.mxu0 0.0
    %632 = vmatpush1.msra.mxu0 0.0
    %633 = vmatprep.subr.mxu0 0.0
    %634 = vmatpush1.msra.mxu0 0.0
    %635 = vmatprep.subr.mxu0 0.0
    %636 = vmatpush1.msra.mxu0 0.0
    %637 = vmatprep.subr.mxu0 0.0
    %638 = vmatpush1.msra.mxu0 0.0
    %639 = vmatprep.subr.mxu0 0.0
    %640 = vmatpush1.msra.mxu0 0.0
    %641 = vmatprep.subr.mxu0 0.0
    %642 = vmatpush1.msra.mxu0 0.0
    %643 = vmatprep.subr.mxu0 0.0
    %644 = vmatpush1.msra.mxu0 0.0
    %645 = vmatprep.subr.mxu0 0.0
    %646 = vmatpush1.msra.mxu0 0.0
    %647 = vmatprep.subr.mxu0 0.0
    %648 = vmatpush1.msra.mxu0 0.0
    %649 = vmatprep.subr.mxu0 0.0
    %650 = vmatpush1.msra.mxu0 0.0
    %651 = vmatprep.subr.mxu0 0.0
    %652 = vmatpush1.msra.mxu0 0.0
    %653 = vmatprep.subr.mxu0 0.0
    %654 = vmatpush1.msra.mxu0 0.0
    %655 = vmatprep.subr.mxu0 0.0
    %656 = vmatpush1.msra.mxu0 0.0
    %657 = vmatprep.subr.mxu0 0.0
    %658 = vmatpush1.msra.mxu0 0.0
    %659 = vmatprep.subr.mxu0 0.0
    %660 = vmatpush1.msra.mxu0 0.0
    %661 = vmatprep.mubr.f32.mxu0 0.0
    %662 = vmatmul.mubr.f32.gmra.mrb[0].mxu0 %v595
    %v663 = vpop.f32.mrb[0].mxu0
    %v664 = vadd.f32 %v593, %v663
    %v665 = vpop.f32.mrb[0].mxu0
    %666 = vdwg.mxu0
    %v667 = vlaneseq
    %v668 = vshrl.u32 %v667, 7
    %v669 = vsub.s32 0, %v668
    %v670 = vrot.slane %v579, %v669
    %671 = vmatprep.subr.mxu0 0.0
    %672 = vmatpush1.msra.mxu0 %v575
    %673 = vmatprep.subr.mxu0 0.0
    %674 = vmatpush1.msra.mxu0 %v576
    %675 = vmatprep.subr.mxu0 0.0
    %676 = vmatpush1.msra.mxu0 %v577
    %677 = vmatprep.subr.mxu0 0.0
    %678 = vmatpush1.msra.mxu0 %v578
    %679 = vmatprep.subr.mxu0 0.0
    %680 = vmatpush1.msra.mxu0 0.0
    %681 = vmatprep.subr.mxu0 0.0
    %682 = vmatpush1.msra.mxu0 0.0
    %683 = vmatprep.subr.mxu0 0.0
    %684 = vmatpush1.msra.mxu0 0.0
    %685 = vmatprep.subr.mxu0 0.0
    %686 = vmatpush1.msra.mxu0 0.0
    %687 = vmatprep.subr.mxu0 0.0
    %688 = vmatpush1.msra.mxu0 0.0
    %689 = vmatprep.subr.mxu0 0.0
    %690 = vmatpush1.msra.mxu0 0.0
    %691 = vmatprep.subr.mxu0 0.0
    %692 = vmatpush1.msra.mxu0 0.0
    %693 = vmatprep.subr.mxu0 0.0
    %694 = vmatpush1.msra.mxu0 0.0
    %695 = vmatprep.subr.mxu0 0.0
    %696 = vmatpush1.msra.mxu0 0.0
    %697 = vmatprep.subr.mxu0 0.0
    %698 = vmatpush1.msra.mxu0 0.0
    %699 = vmatprep.subr.mxu0 0.0
    %700 = vmatpush1.msra.mxu0 0.0
    %701 = vmatprep.subr.mxu0 0.0
    %702 = vmatpush1.msra.mxu0 0.0
    %703 = vmatprep.subr.mxu0 0.0
    %704 = vmatpush1.msra.mxu0 0.0
    %705 = vmatprep.subr.mxu0 0.0
    %706 = vmatpush1.msra.mxu0 0.0
    %707 = vmatprep.subr.mxu0 0.0
    %708 = vmatpush1.msra.mxu0 0.0
    %709 = vmatprep.subr.mxu0 0.0
    %710 = vmatpush1.msra.mxu0 0.0
    %711 = vmatprep.subr.mxu0 0.0
    %712 = vmatpush1.msra.mxu0 0.0
    %713 = vmatprep.subr.mxu0 0.0
    %714 = vmatpush1.msra.mxu0 0.0
    %715 = vmatprep.subr.mxu0 0.0
    %716 = vmatpush1.msra.mxu0 0.0
    %717 = vmatprep.subr.mxu0 0.0
    %718 = vmatpush1.msra.mxu0 0.0
    %719 = vmatprep.subr.mxu0 0.0
    %720 = vmatpush1.msra.mxu0 0.0
    %721 = vmatprep.subr.mxu0 0.0
    %722 = vmatpush1.msra.mxu0 0.0
    %723 = vmatprep.subr.mxu0 0.0
    %724 = vmatpush1.msra.mxu0 0.0
    %725 = vmatprep.subr.mxu0 0.0
    %726 = vmatpush1.msra.mxu0 0.0
    %727 = vmatprep.subr.mxu0 0.0
    %728 = vmatpush1.msra.mxu0 0.0
    %729 = vmatprep.subr.mxu0 0.0
    %730 = vmatpush1.msra.mxu0 0.0
    %731 = vmatprep.subr.mxu0 0.0
    %732 = vmatpush1.msra.mxu0 0.0
    %733 = vmatprep.subr.mxu0 0.0
    %734 = vmatpush1.msra.mxu0 0.0
    %735 = vmatprep.mubr.f32.mxu0 0.0
    %736 = vmatmul.mubr.f32.gmra.mrb[0].mxu0 %v595
    %v737 = vpop.f32.mrb[0].mxu0
    %v738 = vadd.f32 %v670, %v737
    %v739 = vpop.f32.mrb[0].mxu0
    %740 = vdwg.mxu0
    %v743 = vunpack.c.l.s4 1966171168
    %v744 = vunpack.c.0.s8 %v743
    %v745 = vlaneseq
    %v746 = vshrl.u32 %v745, 7
    %v747 = vsub.s32 %v744, %v746
    %v748 = vrot.slane %v664, %v747
    %v749 = vcombine.high %v748, %v748
    %v751 = vunpack.c.l.s4 1966171168
    %v752 = vunpack.c.0.s8 %v751
    %v753 = vlaneseq
    %v754 = vshrl.u32 %v753, 7
    %v755 = vsub.s32 %v752, %v754
    %v756 = vrot.slane %v748, %v755
    %v758 = vunpack.c.l.s4 1966171168
    %v759 = vunpack.c.0.s8 %v758
    %v760 = vlaneseq
    %v761 = vshrl.u32 %v760, 7
    %v762 = vsub.s32 %v759, %v761
    %v763 = vrot.slane %v749, %v762
    %v764 = vlaneseq
    %v765 = vshrl.u32 %v764, 7
    %v766 = vsub.s32 0, %v765
    %v767 = vrot.slane %v756, %v766
    %v768 = vlaneseq
    %v769 = vshrl.u32 %v768, 7
    %v770 = vsub.s32 0, %v769
    %v771 = vrot.slane %v763, %v770
    %v774 = vadd.f32 %v552, %v767
    %v775 = vadd.f32 %v557, %v767
    %v776 = vadd.f32 %v562, %v771
    %v777 = vadd.f32 %v567, %v771
    %v778 = vtanh.pop %v774
    %v779 = vtanh.pop %v775
    %v780 = vtanh.pop %v776
    %v781 = vtanh.pop %v777
    %v782 = vlaneseq
    %v783 = vshrl.u32 %v782, 7
    %v784 = vsub.s32 0, %v783
    %v785 = vrot.slane %v580, %v784
    %v786 = vmul.f32 %v778, %v785
    %v787 = vmul.f32 %v779, %v785
    %v788 = vmul.f32 %v780, %v785
    %v789 = vmul.f32 %v781, %v785
    %vm790 = vcmask 195584
    %v791 = vsel %vm790, %v786, 0.0
    %792 = vadd.xlane.f32.xlu0 %v791
    %v793 = vpop.xlane.xlu0 %792
    %v794 = vsel %vm790, %v787, 0.0
    %795 = vadd.xlane.f32.xlu0 %v794
    %v796 = vpop.xlane.xlu0 %795
    %v797 = vsel %vm790, %v788, 0.0
    %798 = vadd.xlane.f32.xlu0 %v797
    %v799 = vpop.xlane.xlu0 %798
    %v800 = vsel %vm790, %v789, 0.0
    %801 = vadd.xlane.f32.xlu0 %v800
    %v802 = vpop.xlane.xlu0 %801
    %v803 = vlaneseq
    %v804 = vshrl.u32 %v803, 7
    %v805 = vsub.s32 0, %v804
    %v806 = vrot.slane %v581, %v805
    %v807 = vadd.f32 %v793, %v806
    %v808 = vadd.f32 %v796, %v806
    %v809 = vadd.f32 %v799, %v806
    %v810 = vadd.f32 %v802, %v806
    %vm811 = vcmask 7168
    %v812 = vsel %vm811, %v807, -inf
    %v813 = vsel %vm811, %v808, -inf
    %v814 = vmax.f32 %v812, %v813
    %v815 = vrot.slane %v814, 4
    %v816 = vmax.f32 %v814, %v815
    %v817 = vrot.slane %v816, 2
    %v818 = vmax.f32 %v816, %v817
    %v819 = vrot.slane %v818, 1
    %v820 = vmax.f32 %v818, %v819
    %v821 = vsel %vm811, %v809, -inf
    %v822 = vsel %vm811, %v810, -inf
    %v823 = vmax.f32 %v821, %v822
    %v824 = vrot.slane %v823, 4
    %v825 = vmax.f32 %v823, %v824
    %v826 = vrot.slane %v825, 2
    %v827 = vmax.f32 %v825, %v826
    %v828 = vrot.slane %v827, 1
    %v829 = vmax.f32 %v827, %v828
    %v830 = vsub.f32 %v807, %v820
    %v831 = vsub.f32 %v808, %v820
    %v832 = vsub.f32 %v809, %v829
    %v833 = vsub.f32 %v810, %v829
    %v834 = vmul.f32 %v830, 1.442695
    %v835 = vpow.pop %v834
    %v836 = vmul.f32 %v831, 1.442695
    %v837 = vpow.pop %v836
    %v838 = vmul.f32 %v832, 1.442695
    %v839 = vpow.pop %v838
    %v840 = vmul.f32 %v833, 1.442695
    %v841 = vpow.pop %v840
    %v842 = vsel %vm811, %v835, 0.0
    %v843 = vsel %vm811, %v837, 0.0
    %v844 = vadd.f32 %v842, %v843
    %v845 = vrot.slane %v844, 4
    %v846 = vadd.f32 %v844, %v845
    %v847 = vrot.slane %v846, 2
    %v848 = vadd.f32 %v846, %v847
    %v849 = vrot.slane %v848, 1
    %v850 = vadd.f32 %v848, %v849
    %v851 = vsel %vm811, %v839, 0.0
    %v852 = vsel %vm811, %v841, 0.0
    %v853 = vadd.f32 %v851, %v852
    %v854 = vrot.slane %v853, 4
    %v855 = vadd.f32 %v853, %v854
    %v856 = vrot.slane %v855, 2
    %v857 = vadd.f32 %v855, %v856
    %v858 = vrot.slane %v857, 1
    %v859 = vadd.f32 %v857, %v858
    %v860 = vrcp.pop %v850
    %v861 = vrcp.pop %v859
    %v862 = vmul.f32 %v835, %v860
    %v863 = vmul.f32 %v837, %v860
    %v864 = vmul.f32 %v839, %v861
    %v865 = vmul.f32 %v841, %v861
    %867 = vset.pattern.permute.xlu0 0
    %868 = vperm.xlu0 %867, %v862
    %v869 = vpop.permute.xlu0 %868
    %872 = vset.pattern.permute.xlu0 0
    %873 = vperm.xlu0 %872, %v863
    %v874 = vpop.permute.xlu0 %873
    %877 = vset.pattern.permute.xlu0 0
    %878 = vperm.xlu0 %877, %v864
    %v879 = vpop.permute.xlu0 %878
    %882 = vset.pattern.permute.xlu0 0
    %883 = vperm.xlu0 %882, %v865
    %v884 = vpop.permute.xlu0 %883
    %v886 = vmul.f32 %v46, %v869
    %v887 = vmul.f32 %v47, %v874
    %v888 = vmul.f32 %v48, %v879
    %v889 = vmul.f32 %v49, %v884
    %v890 = vsel %vm472, %v886, 0.0
    %v891 = vsel %vm472, %v887, 0.0
    %v892 = vadd.f32 %v890, %v891
    %v893 = vrot.slane %v892, 4
    %v894 = vadd.f32 %v892, %v893
    %v895 = vrot.slane %v894, 2
    %v896 = vadd.f32 %v894, %v895
    %v897 = vrot.slane %v896, 1
    %v898 = vadd.f32 %v896, %v897
    %v899 = vsel %vm472, %v888, 0.0
    %v900 = vsel %vm472, %v889, 0.0
    %v901 = vadd.f32 %v899, %v900
    %v902 = vrot.slane %v901, 4
    %v903 = vadd.f32 %v901, %v902
    %v904 = vrot.slane %v903, 2
    %v905 = vadd.f32 %v903, %v904
    %v906 = vrot.slane %v905, 1
    %v907 = vadd.f32 %v905, %v906
    %909 = vrot.lane.b32.xlu0 %v738, 16
    %v910 = vpop.permute.xlu0 %909
    %v912 = vadd.f32 %v455, %v910
    %v913 = vtanh.pop %v912
    %v914 = vlaneseq
    %v915 = vshrl.u32 %v914, 7
    %v916 = vsub.s32 0, %v915
    %v917 = vrot.slane %v582, %v916
    %919 = vrot.lane.b32.xlu0 %v917, 16
    %v920 = vpop.permute.xlu0 %919
    %v922 = vmul.f32 %v913, %v920
    %924 = vrot.lane.b32.xlu0 %v922, 112
    %v925 = vpop.permute.xlu0 %924
    %vm927 = vcmask 189440
    %v928 = vsel %vm927, %v925, 0.0
    %929 = vadd.xlane.f32.xlu0 %v928
    %v930 = vpop.xlane.xlu0 %929
    %v931 = vlaneseq
    %v932 = vshrl.u32 %v931, 7
    %v933 = vsub.s32 0, %v932
    %v934 = vrot.slane %v583, %v933
    %v935 = vadd.f32 %v930, %v934
    %v936 = vrot.slane %v738, 6
    %937 = vrot.lane.b32.xlu0 %v936, 16
    %v938 = vpop.permute.xlu0 %937
    %v940 = vadd.f32 %v455, %v938
    %v941 = vtanh.pop %v940
    %v942 = vmul.f32 %v941, %v920
    %944 = vrot.lane.b32.xlu0 %v942, 112
    %v945 = vpop.permute.xlu0 %944
    %vm947 = vcmask 191490
    %v948 = vsel %vm947, %v945, 0.0
    %949 = vadd.xlane.f32.xlu0 %v948
    %v950 = vpop.xlane.xlu0 %949
    %v951 = vadd.f32 %v950, %v934
    %v952 = vrot.slane %v738, 4
    %953 = vrot.lane.b32.xlu0 %v952, 16
    %v954 = vpop.permute.xlu0 %953
    %v956 = vadd.f32 %v455, %v954
    %v957 = vtanh.pop %v956
    %v958 = vmul.f32 %v957, %v920
    %960 = vrot.lane.b32.xlu0 %v958, 112
    %v961 = vpop.permute.xlu0 %960
    %vm963 = vcmask 193540
    %v964 = vsel %vm963, %v961, 0.0
    %965 = vadd.xlane.f32.xlu0 %v964
    %v966 = vpop.xlane.xlu0 %965
    %v967 = vadd.f32 %v966, %v934
    %v968 = vrot.slane %v738, 2
    %969 = vrot.lane.b32.xlu0 %v968, 16
    %v970 = vpop.permute.xlu0 %969
    %v972 = vadd.f32 %v455, %v970
    %v973 = vtanh.pop %v972
    %v974 = vmul.f32 %v973, %v920
    %976 = vrot.lane.b32.xlu0 %v974, 112
    %v977 = vpop.permute.xlu0 %976
    %vm979 = vcmask 195590
    %v980 = vsel %vm979, %v977, 0.0
    %981 = vadd.xlane.f32.xlu0 %v980
    %v982 = vpop.xlane.xlu0 %981
    %v983 = vadd.f32 %v982, %v934
    %v984 = vadd.f32 %v460, %v910
    %v985 = vtanh.pop %v984
    %v986 = vmul.f32 %v985, %v920
    %988 = vrot.lane.b32.xlu0 %v986, 112
    %v989 = vpop.permute.xlu0 %988
    %v991 = vsel %vm927, %v989, 0.0
    %992 = vadd.xlane.f32.xlu0 %v991
    %v993 = vpop.xlane.xlu0 %992
    %v994 = vadd.f32 %v993, %v934
    %v996 = vrot.slane %v951, 2
    %v998 = vmax.f32 %v935, %v996
    %v1000 = vrot.slane %v967, 4
    %v1002 = vmax.f32 %v998, %v1000
    %v1004 = vrot.slane %v983, 6
    %v1006 = vmax.f32 %v1002, %v1004
    %v1007 = vmax.f32 %v1006, %v994
    %v1008 = vsub.f32 %v935, %v1007
    %v1009 = vmul.f32 %v1008, 1.442695
    %v1010 = vpow.pop %v1009
    %v1012 = vrot.slane %v1007, 6
    %v1014 = vsub.f32 %v951, %v1012
    %v1015 = vmul.f32 %v1014, 1.442695
    %v1016 = vpow.pop %v1015
    %v1017 = vrot.slane %v1007, 4
    %v1019 = vsub.f32 %v967, %v1017
    %v1020 = vmul.f32 %v1019, 1.442695
    %v1021 = vpow.pop %v1020
    %v1022 = vrot.slane %v1007, 2
    %v1024 = vsub.f32 %v983, %v1022
    %v1025 = vmul.f32 %v1024, 1.442695
    %v1026 = vpow.pop %v1025
    %v1027 = vsub.f32 %v994, %v1007
    %v1028 = vmul.f32 %v1027, 1.442695
    %v1029 = vpow.pop %v1028
    %v1031 = vrot.slane %v1016, 2
    %v1033 = vadd.f32 %v1010, %v1031
    %v1035 = vrot.slane %v1021, 4
    %v1037 = vadd.f32 %v1033, %v1035
    %v1039 = vrot.slane %v1026, 6
    %v1041 = vadd.f32 %v1037, %v1039
    %v1042 = vadd.f32 %v1041, %v1029
    %v1043 = vrcp.pop %v1042
    %v1044 = vmul.f32 %v1010, %v1043
    %1046 = vset.pattern.permute.xlu0 0
    %1047 = vperm.xlu0 %1046, %v1044
    %v1048 = vpop.permute.xlu0 %1047
    %v1050 = vmul.f32 %v1048, %v455
    %v1052 = vrot.slane %v1043, 6
    %v1054 = vmul.f32 %v1016, %v1052
    %1056 = vset.pattern.permute.xlu0 0
    %1057 = vperm.xlu0 %1056, %v1054
    %v1058 = vpop.permute.xlu0 %1057
    %v1060 = vmul.f32 %v1058, %v455
    %v1062 = vrot.slane %v1060, 2
    %v1064 = vadd.f32 %v1050, %v1062
    %v1065 = vrot.slane %v1043, 4
    %v1067 = vmul.f32 %v1021, %v1065
    %1069 = vset.pattern.permute.xlu0 0
    %1070 = vperm.xlu0 %1069, %v1067
    %v1071 = vpop.permute.xlu0 %1070
    %v1073 = vmul.f32 %v1071, %v455
    %v1075 = vrot.slane %v1073, 4
    %v1077 = vadd.f32 %v1064, %v1075
    %v1078 = vrot.slane %v1043, 2
    %v1080 = vmul.f32 %v1026, %v1078
    %1082 = vset.pattern.permute.xlu0 0
    %1083 = vperm.xlu0 %1082, %v1080
    %v1084 = vpop.permute.xlu0 %1083
    %v1086 = vmul.f32 %v1084, %v455
    %v1088 = vrot.slane %v1086, 6
    %v1090 = vadd.f32 %v1077, %v1088
    %v1091 = vmul.f32 %v1029, %v1043
    %1093 = vset.pattern.permute.xlu0 0
    %1094 = vperm.xlu0 %1093, %v1091
    %v1095 = vpop.permute.xlu0 %1094
    %v1097 = vmul.f32 %v1095, %v460
    %v1098 = vadd.f32 %v1090, %v1097
    %v1099 = vld [vmem:[#allocation2 + $0x2a0] sm:$0xff]
    %v1100 = vld [vmem:[#allocation2 + $0x2a8] sm:$0xff]
    %v1101 = vld [vmem:[#allocation2 + $0x2b0] sm:$0xff]
    %v1102 = vld [vmem:[#allocation2 + $0x2b8] sm:$0xff]
    %v1103 = vld [vmem:[#allocation2 + $0x2c0] sm:$0xff]
    %v1104 = vld [vmem:[#allocation2 + $0x2c8] sm:$0xff]
    %vm1105 = vcmask 130048
    %v1107 = vsel %vm1105, %v1098, 0
    %1109 = vmatprep.subr.mxu0 0.0
    %1110 = vmatpush1.msra.mxu0 %v1103
    %1111 = vmatprep.subr.mxu0 0.0
    %1112 = vmatpush1.msra.mxu0 %v1104
    %1113 = vmatprep.subr.mxu0 0.0
    %1114 = vmatpush1.msra.mxu0 0.0
    %1115 = vmatprep.subr.mxu0 0.0
    %1116 = vmatpush1.msra.mxu0 0.0
    %1117 = vmatprep.subr.mxu0 0.0
    %1118 = vmatpush1.msra.mxu0 0.0
    %1119 = vmatprep.subr.mxu0 0.0
    %1120 = vmatpush1.msra.mxu0 0.0
    %1121 = vmatprep.subr.mxu0 0.0
    %1122 = vmatpush1.msra.mxu0 0.0
    %1123 = vmatprep.subr.mxu0 0.0
    %1124 = vmatpush1.msra.mxu0 0.0
    %1125 = vmatprep.subr.mxu0 0.0
    %1126 = vmatpush1.msra.mxu0 0.0
    %1127 = vmatprep.subr.mxu0 0.0
    %1128 = vmatpush1.msra.mxu0 0.0
    %1129 = vmatprep.subr.mxu0 0.0
    %1130 = vmatpush1.msra.mxu0 0.0
    %1131 = vmatprep.subr.mxu0 0.0
    %1132 = vmatpush1.msra.mxu0 0.0
    %1133 = vmatprep.subr.mxu0 0.0
    %1134 = vmatpush1.msra.mxu0 0.0
    %1135 = vmatprep.subr.mxu0 0.0
    %1136 = vmatpush1.msra.mxu0 0.0
    %1137 = vmatprep.subr.mxu0 0.0
    %1138 = vmatpush1.msra.mxu0 0.0
    %1139 = vmatprep.subr.mxu0 0.0
    %1140 = vmatpush1.msra.mxu0 0.0
    %1141 = vmatprep.subr.mxu0 0.0
    %1142 = vmatpush1.msra.mxu0 0.0
    %1143 = vmatprep.subr.mxu0 0.0
    %1144 = vmatpush1.msra.mxu0 0.0
    %1145 = vmatprep.subr.mxu0 0.0
    %1146 = vmatpush1.msra.mxu0 0.0
    %1147 = vmatprep.subr.mxu0 0.0
    %1148 = vmatpush1.msra.mxu0 0.0
    %1149 = vmatprep.subr.mxu0 0.0
    %1150 = vmatpush1.msra.mxu0 0.0
    %1151 = vmatprep.subr.mxu0 0.0
    %1152 = vmatpush1.msra.mxu0 0.0
    %1153 = vmatprep.subr.mxu0 0.0
    %1154 = vmatpush1.msra.mxu0 0.0
    %1155 = vmatprep.subr.mxu0 0.0
    %1156 = vmatpush1.msra.mxu0 0.0
    %1157 = vmatprep.subr.mxu0 0.0
    %1158 = vmatpush1.msra.mxu0 0.0
    %1159 = vmatprep.subr.mxu0 0.0
    %1160 = vmatpush1.msra.mxu0 0.0
    %1161 = vmatprep.subr.mxu0 0.0
    %1162 = vmatpush1.msra.mxu0 0.0
    %1163 = vmatprep.subr.mxu0 0.0
    %1164 = vmatpush1.msra.mxu0 0.0
    %1165 = vmatprep.subr.mxu0 0.0
    %1166 = vmatpush1.msra.mxu0 0.0
    %1167 = vmatprep.subr.mxu0 0.0
    %1168 = vmatpush1.msra.mxu0 0.0
    %1169 = vmatprep.subr.mxu0 0.0
    %1170 = vmatpush1.msra.mxu0 0.0
    %1171 = vmatprep.subr.mxu0 0.0
    %1172 = vmatpush1.msra.mxu0 0.0
    %1173 = vmatprep.mubr.f32.mxu0 0.0
    %1174 = vmatmul.mubr.f32.gmra.mrb[0].mxu0 %v1107
    %v1175 = vpop.f32.mrb[0].mxu0
    %v1176 = vadd.f32 0.0, %v1175
    %v1177 = vpop.f32.mrb[0].mxu0
    %1178 = vdwg.mxu0
    %vm1181 = vcmask 1041409
    %v1182 = vsel %vm1181, %v907, %v898
    %v1183 = vsel %vm472, %v1182, 0
    %1185 = vmatprep.subr.mxu0 0.0
    %1186 = vmatpush1.msra.mxu0 %v1099
    %1187 = vmatprep.subr.mxu0 0.0
    %1188 = vmatpush1.msra.mxu0 %v1100
    %1189 = vmatprep.subr.mxu0 0.0
    %1190 = vmatpush1.msra.mxu0 %v1101
    %1191 = vmatprep.subr.mxu0 0.0
    %1192 = vmatpush1.msra.mxu0 %v1102
    %1193 = vmatprep.subr.mxu0 0.0
    %1194 = vmatpush1.msra.mxu0 0.0
    %1195 = vmatprep.subr.mxu0 0.0
    %1196 = vmatpush1.msra.mxu0 0.0
    %1197 = vmatprep.subr.mxu0 0.0
    %1198 = vmatpush1.msra.mxu0 0.0
    %1199 = vmatprep.subr.mxu0 0.0
    %1200 = vmatpush1.msra.mxu0 0.0
    %1201 = vmatprep.subr.mxu0 0.0
    %1202 = vmatpush1.msra.mxu0 0.0
    %1203 = vmatprep.subr.mxu0 0.0
    %1204 = vmatpush1.msra.mxu0 0.0
    %1205 = vmatprep.subr.mxu0 0.0
    %1206 = vmatpush1.msra.mxu0 0.0
    %1207 = vmatprep.subr.mxu0 0.0
    %1208 = vmatpush1.msra.mxu0 0.0
    %1209 = vmatprep.subr.mxu0 0.0
    %1210 = vmatpush1.msra.mxu0 0.0
    %1211 = vmatprep.subr.mxu0 0.0
    %1212 = vmatpush1.msra.mxu0 0.0
    %1213 = vmatprep.subr.mxu0 0.0
    %1214 = vmatpush1.msra.mxu0 0.0
    %1215 = vmatprep.subr.mxu0 0.0
    %1216 = vmatpush1.msra.mxu0 0.0
    %1217 = vmatprep.subr.mxu0 0.0
    %1218 = vmatpush1.msra.mxu0 0.0
    %1219 = vmatprep.subr.mxu0 0.0
    %1220 = vmatpush1.msra.mxu0 0.0
    %1221 = vmatprep.subr.mxu0 0.0
    %1222 = vmatpush1.msra.mxu0 0.0
    %1223 = vmatprep.subr.mxu0 0.0
    %1224 = vmatpush1.msra.mxu0 0.0
    %1225 = vmatprep.subr.mxu0 0.0
    %1226 = vmatpush1.msra.mxu0 0.0
    %1227 = vmatprep.subr.mxu0 0.0
    %1228 = vmatpush1.msra.mxu0 0.0
    %1229 = vmatprep.subr.mxu0 0.0
    %1230 = vmatpush1.msra.mxu0 0.0
    %1231 = vmatprep.subr.mxu0 0.0
    %1232 = vmatpush1.msra.mxu0 0.0
    %1233 = vmatprep.subr.mxu0 0.0
    %1234 = vmatpush1.msra.mxu0 0.0
    %1235 = vmatprep.subr.mxu0 0.0
    %1236 = vmatpush1.msra.mxu0 0.0
    %1237 = vmatprep.subr.mxu0 0.0
    %1238 = vmatpush1.msra.mxu0 0.0
    %1239 = vmatprep.subr.mxu0 0.0
    %1240 = vmatpush1.msra.mxu0 0.0
    %1241 = vmatprep.subr.mxu0 0.0
    %1242 = vmatpush1.msra.mxu0 0.0
    %1243 = vmatprep.subr.mxu0 0.0
    %1244 = vmatpush1.msra.mxu0 0.0
    %1245 = vmatprep.subr.mxu0 0.0
    %1246 = vmatpush1.msra.mxu0 0.0
    %1247 = vmatprep.subr.mxu0 0.0
    %1248 = vmatpush1.msra.mxu0 0.0
    %1249 = vmatprep.mubr.f32.mxu0 0.0
    %1250 = vmatmul.mubr.f32.gmra.mrb[0].mxu0 %v1183
    %v1251 = vpop.f32.mrb[0].mxu0
    %v1252 = vadd.f32 %v1176, %v1251
    %v1253 = vpop.f32.mrb[0].mxu0
    %1254 = vdwg.mxu0
    %v1255 = vld [vmem:[#allocation2 + $0x2d0] sm:$0xff]
    %v1256 = vld [vmem:[#allocation2 + $0x2d8] sm:$0xff]
    %v1257 = vld [vmem:[#allocation2 + $0x2e0] sm:$0xff]
    %v1258 = vld [vmem:[#allocation2 + $0x2e8] sm:$0xff]
    %1259 = vmatprep.subr.mxu0 0.0
    %1260 = vmatpush1.msra.mxu0 %v1255
    %1261 = vmatprep.subr.mxu0 0.0
    %1262 = vmatpush1.msra.mxu0 %v1256
    %1263 = vmatprep.subr.mxu0 0.0
    %1264 = vmatpush1.msra.mxu0 %v1257
    %1265 = vmatprep.subr.mxu0 0.0
    %1266 = vmatpush1.msra.mxu0 %v1258
    %1267 = vmatprep.subr.mxu0 0.0
    %1268 = vmatpush1.msra.mxu0 0.0
    %1269 = vmatprep.subr.mxu0 0.0
    %1270 = vmatpush1.msra.mxu0 0.0
    %1271 = vmatprep.subr.mxu0 0.0
    %1272 = vmatpush1.msra.mxu0 0.0
    %1273 = vmatprep.subr.mxu0 0.0
    %1274 = vmatpush1.msra.mxu0 0.0
    %1275 = vmatprep.subr.mxu0 0.0
    %1276 = vmatpush1.msra.mxu0 0.0
    %1277 = vmatprep.subr.mxu0 0.0
    %1278 = vmatpush1.msra.mxu0 0.0
    %1279 = vmatprep.subr.mxu0 0.0
    %1280 = vmatpush1.msra.mxu0 0.0
    %1281 = vmatprep.subr.mxu0 0.0
    %1282 = vmatpush1.msra.mxu0 0.0
    %1283 = vmatprep.subr.mxu0 0.0
    %1284 = vmatpush1.msra.mxu0 0.0
    %1285 = vmatprep.subr.mxu0 0.0
    %1286 = vmatpush1.msra.mxu0 0.0
    %1287 = vmatprep.subr.mxu0 0.0
    %1288 = vmatpush1.msra.mxu0 0.0
    %1289 = vmatprep.subr.mxu0 0.0
    %1290 = vmatpush1.msra.mxu0 0.0
    %1291 = vmatprep.subr.mxu0 0.0
    %1292 = vmatpush1.msra.mxu0 0.0
    %1293 = vmatprep.subr.mxu0 0.0
    %1294 = vmatpush1.msra.mxu0 0.0
    %1295 = vmatprep.subr.mxu0 0.0
    %1296 = vmatpush1.msra.mxu0 0.0
    %1297 = vmatprep.subr.mxu0 0.0
    %1298 = vmatpush1.msra.mxu0 0.0
    %1299 = vmatprep.subr.mxu0 0.0
    %1300 = vmatpush1.msra.mxu0 0.0
    %1301 = vmatprep.subr.mxu0 0.0
    %1302 = vmatpush1.msra.mxu0 0.0
    %1303 = vmatprep.subr.mxu0 0.0
    %1304 = vmatpush1.msra.mxu0 0.0
    %1305 = vmatprep.subr.mxu0 0.0
    %1306 = vmatpush1.msra.mxu0 0.0
    %1307 = vmatprep.subr.mxu0 0.0
    %1308 = vmatpush1.msra.mxu0 0.0
    %1309 = vmatprep.subr.mxu0 0.0
    %1310 = vmatpush1.msra.mxu0 0.0
    %1311 = vmatprep.subr.mxu0 0.0
    %1312 = vmatpush1.msra.mxu0 0.0
    %1313 = vmatprep.subr.mxu0 0.0
    %1314 = vmatpush1.msra.mxu0 0.0
    %1315 = vmatprep.subr.mxu0 0.0
    %1316 = vmatpush1.msra.mxu0 0.0
    %1317 = vmatprep.subr.mxu0 0.0
    %1318 = vmatpush1.msra.mxu0 0.0
    %1319 = vmatprep.subr.mxu0 0.0
    %1320 = vmatpush1.msra.mxu0 0.0
    %1321 = vmatprep.subr.mxu0 0.0
    %1322 = vmatpush1.msra.mxu0 0.0
    %1323 = vmatprep.mubr.f32.mxu0 0.0
    %1324 = vmatmul.mubr.f32.gmra.mrb[0].mxu0 %v595
    %v1325 = vpop.f32.mrb[0].mxu0
    %v1326 = vadd.f32 0.0, %v1325
    %v1327 = vpop.f32.mrb[0].mxu0
    %1328 = vdwg.mxu0
    %v1329 = vadd.f32 %v1252, %v1326
    %v1330 = vlaneseq
    %v1331 = vshrl.u32 %v1330, 7
    %v1332 = vsub.s32 0, %v1331
    %v1333 = vrot.slane %v585, %v1332
    %v1334 = vadd.f32 %v1329, %v1333
    %v1335 = vxor.u32 %v1334, 2147483648
    %v1336 = vmul.f32 %v1335, 1.442695
    %v1337 = vpow.pop %v1336
    %v1338 = vadd.f32 %v1337, 1.0
    %v1339 = vrcp.pop %v1338
    %v1340 = vmul.f32 1.0, %v1339
    %v1341 = vtanh.pop %v1334
    %v1342 = vmul.f32 %v1340, 0.0
    %1344 = vrot.lane.b32.xlu0 %v1341, 64
    %v1345 = vpop.permute.xlu0 %1344
    %v1347 = vmul.f32 %v1340, %v1345
    %1349 = vrot.lane.b32.xlu0 %v1347, 32
    %v1350 = vpop.permute.xlu0 %1349
    %v1352 = vadd.f32 %v1342, %v1350
    %v1353 = vtanh.pop %v1352
    %1355 = vrot.lane.b32.xlu0 %v1353, 64
    %v1356 = vpop.permute.xlu0 %1355
    %v1358 = vmul.f32 %v1340, %v1356
    %v1359 = vld [vmem:[#allocation2 + $0x270] sm:$0xff]
    %v1360 = vld [vmem:[#allocation2 + $0x278] sm:$0xff]
    %v1361 = vld [vmem:[#allocation2 + $0x280] sm:$0xff]
    %v1362 = vld [vmem:[#allocation2 + $0x288] sm:$0xff]
    %v1363 = vld [vmem:[#allocation2 + $0x290] sm:$0xff]
    %v1364 = vld [vmem:[#allocation2 + $0x298] sm:$0xff]
    %1365 = vmatprep.subr.mxu0 0.0
    %1366 = vmatpush1.msra.mxu0 %v1363
    %1367 = vmatprep.subr.mxu0 0.0
    %1368 = vmatpush1.msra.mxu0 %v1364
    %1369 = vmatprep.subr.mxu0 0.0
    %1370 = vmatpush1.msra.mxu0 0.0
    %1371 = vmatprep.subr.mxu0 0.0
    %1372 = vmatpush1.msra.mxu0 0.0
    %1373 = vmatprep.subr.mxu0 0.0
    %1374 = vmatpush1.msra.mxu0 0.0
    %1375 = vmatprep.subr.mxu0 0.0
    %1376 = vmatpush1.msra.mxu0 0.0
    %1377 = vmatprep.subr.mxu0 0.0
    %1378 = vmatpush1.msra.mxu0 0.0
    %1379 = vmatprep.subr.mxu0 0.0
    %1380 = vmatpush1.msra.mxu0 0.0
    %1381 = vmatprep.subr.mxu0 0.0
    %1382 = vmatpush1.msra.mxu0 0.0
    %1383 = vmatprep.subr.mxu0 0.0
    %1384 = vmatpush1.msra.mxu0 0.0
    %1385 = vmatprep.subr.mxu0 0.0
    %1386 = vmatpush1.msra.mxu0 0.0
    %1387 = vmatprep.subr.mxu0 0.0
    %1388 = vmatpush1.msra.mxu0 0.0
    %1389 = vmatprep.subr.mxu0 0.0
    %1390 = vmatpush1.msra.mxu0 0.0
    %1391 = vmatprep.subr.mxu0 0.0
    %1392 = vmatpush1.msra.mxu0 0.0
    %1393 = vmatprep.subr.mxu0 0.0
    %1394 = vmatpush1.msra.mxu0 0.0
    %1395 = vmatprep.subr.mxu0 0.0
    %1396 = vmatpush1.msra.mxu0 0.0
    %1397 = vmatprep.subr.mxu0 0.0
    %1398 = vmatpush1.msra.mxu0 0.0
    %1399 = vmatprep.subr.mxu0 0.0
    %1400 = vmatpush1.msra.mxu0 0.0
    %1401 = vmatprep.subr.mxu0 0.0
    %1402 = vmatpush1.msra.mxu0 0.0
    %1403 = vmatprep.subr.mxu0 0.0
    %1404 = vmatpush1.msra.mxu0 0.0
    %1405 = vmatprep.subr.mxu0 0.0
    %1406 = vmatpush1.msra.mxu0 0.0
    %1407 = vmatprep.subr.mxu0 0.0
    %1408 = vmatpush1.msra.mxu0 0.0
    %1409 = vmatprep.subr.mxu0 0.0
    %1410 = vmatpush1.msra.mxu0 0.0
    %1411 = vmatprep.subr.mxu0 0.0
    %1412 = vmatpush1.msra.mxu0 0.0
    %1413 = vmatprep.subr.mxu0 0.0
    %1414 = vmatpush1.msra.mxu0 0.0
    %1415 = vmatprep.subr.mxu0 0.0
    %1416 = vmatpush1.msra.mxu0 0.0
    %1417 = vmatprep.subr.mxu0 0.0
    %1418 = vmatpush1.msra.mxu0 0.0
    %1419 = vmatprep.subr.mxu0 0.0
    %1420 = vmatpush1.msra.mxu0 0.0
    %1421 = vmatprep.subr.mxu0 0.0
    %1422 = vmatpush1.msra.mxu0 0.0
    %1423 = vmatprep.subr.mxu0 0.0
    %1424 = vmatpush1.msra.mxu0 0.0
    %1425 = vmatprep.subr.mxu0 0.0
    %1426 = vmatpush1.msra.mxu0 0.0
    %1427 = vmatprep.subr.mxu0 0.0
    %1428 = vmatpush1.msra.mxu0 0.0
    %1429 = vmatprep.mubr.f32.mxu0 0.0
    %1430 = vmatmul.mubr.f32.gmra.mrb[0].mxu0 %v1107
    %v1431 = vpop.f32.mrb[0].mxu0
    %v1432 = vadd.f32 0.0, %v1431
    %v1433 = vpop.f32.mrb[0].mxu0
    %1434 = vdwg.mxu0
    %1435 = vmatprep.subr.mxu0 0.0
    %1436 = vmatpush1.msra.mxu0 %v1359
    %1437 = vmatprep.subr.mxu0 0.0
    %1438 = vmatpush1.msra.mxu0 %v1360
    %1439 = vmatprep.subr.mxu0 0.0
    %1440 = vmatpush1.msra.mxu0 %v1361
    %1441 = vmatprep.subr.mxu0 0.0
    %1442 = vmatpush1.msra.mxu0 %v1362
    %1443 = vmatprep.subr.mxu0 0.0
    %1444 = vmatpush1.msra.mxu0 0.0
    %1445 = vmatprep.subr.mxu0 0.0
    %1446 = vmatpush1.msra.mxu0 0.0
    %1447 = vmatprep.subr.mxu0 0.0
    %1448 = vmatpush1.msra.mxu0 0.0
    %1449 = vmatprep.subr.mxu0 0.0
    %1450 = vmatpush1.msra.mxu0 0.0
    %1451 = vmatprep.subr.mxu0 0.0
    %1452 = vmatpush1.msra.mxu0 0.0
    %1453 = vmatprep.subr.mxu0 0.0
    %1454 = vmatpush1.msra.mxu0 0.0
    %1455 = vmatprep.subr.mxu0 0.0
    %1456 = vmatpush1.msra.mxu0 0.0
    %1457 = vmatprep.subr.mxu0 0.0
    %1458 = vmatpush1.msra.mxu0 0.0
    %1459 = vmatprep.subr.mxu0 0.0
    %1460 = vmatpush1.msra.mxu0 0.0
    %1461 = vmatprep.subr.mxu0 0.0
    %1462 = vmatpush1.msra.mxu0 0.0
    %1463 = vmatprep.subr.mxu0 0.0
    %1464 = vmatpush1.msra.mxu0 0.0
    %1465 = vmatprep.subr.mxu0 0.0
    %1466 = vmatpush1.msra.mxu0 0.0
    %1467 = vmatprep.subr.mxu0 0.0
    %1468 = vmatpush1.msra.mxu0 0.0
    %1469 = vmatprep.subr.mxu0 0.0
    %1470 = vmatpush1.msra.mxu0 0.0
    %1471 = vmatprep.subr.mxu0 0.0
    %1472 = vmatpush1.msra.mxu0 0.0
    %1473 = vmatprep.subr.mxu0 0.0
    %1474 = vmatpush1.msra.mxu0 0.0
    %1475 = vmatprep.subr.mxu0 0.0
    %1476 = vmatpush1.msra.mxu0 0.0
    %1477 = vmatprep.subr.mxu0 0.0
    %1478 = vmatpush1.msra.mxu0 0.0
    %1479 = vmatprep.subr.mxu0 0.0
    %1480 = vmatpush1.msra.mxu0 0.0
    %1481 = vmatprep.subr.mxu0 0.0
    %1482 = vmatpush1.msra.mxu0 0.0
    %1483 = vmatprep.subr.mxu0 0.0
    %1484 = vmatpush1.msra.mxu0 0.0
    %1485 = vmatprep.subr.mxu0 0.0
    %1486 = vmatpush1.msra.mxu0 0.0
    %1487 = vmatprep.subr.mxu0 0.0
    %1488 = vmatpush1.msra.mxu0 0.0
    %1489 = vmatprep.subr.mxu0 0.0
    %1490 = vmatpush1.msra.mxu0 0.0
    %1491 = vmatprep.subr.mxu0 0.0
    %1492 = vmatpush1.msra.mxu0 0.0
    %1493 = vmatprep.subr.mxu0 0.0
    %1494 = vmatpush1.msra.mxu0 0.0
    %1495 = vmatprep.subr.mxu0 0.0
    %1496 = vmatpush1.msra.mxu0 0.0
    %1497 = vmatprep.subr.mxu0 0.0
    %1498 = vmatpush1.msra.mxu0 0.0
    %1499 = vmatprep.mubr.f32.mxu0 0.0
    %1500 = vmatmul.mubr.f32.gmra.mrb[0].mxu0 %v1183
    %v1501 = vpop.f32.mrb[0].mxu0
    %v1502 = vadd.f32 %v1432, %v1501
    %v1503 = vpop.f32.mrb[0].mxu0
    %1504 = vdwg.mxu0
    %v1505 = vlaneseq
    %v1506 = vshrl.u32 %v1505, 7
    %v1507 = vsub.s32 0, %v1506
    %v1508 = vrot.slane %v584, %v1507
    %v1509 = vadd.f32 %v1502, %v1508
    %v1510 = vld [vmem:[#allocation2 + $0x2f0] sm:$0xff]
    %v1511 = vld [vmem:[#allocation2 + $0x2f8] sm:$0xff]
    %v1512 = vld [vmem:[#allocation2 + $0x300] sm:$0xff]
    %v1513 = vld [vmem:[#allocation2 + $0x308] sm:$0xff]
    %v1514 = vld [vmem:[#allocation2 + $0x310] sm:$0xff]
    %v1515 = vld [vmem:[#allocation2 + $0x318] sm:$0xff]
    %v1516 = vld [vmem:[#allocation2 + $0x320] sm:$0xff]
    %v1517 = vld [vmem:[#allocation2 + $0x328] sm:$0xff]
    %1519 = vrot.lane.b32.xlu0 %v1358, 32
    %v1520 = vpop.permute.xlu0 %1519
    %v1521 = vsel %vm472, %v1520, 0
    %1523 = vmatprep.subr.mxu0 0.0
    %1524 = vmatpush1.msra.mxu0 %v1514
    %1525 = vmatprep.subr.mxu0 0.0
    %1526 = vmatpush1.msra.mxu0 %v1515
    %1527 = vmatprep.subr.mxu0 0.0
    %1528 = vmatpush1.msra.mxu0 %v1516
    %1529 = vmatprep.subr.mxu0 0.0
    %1530 = vmatpush1.msra.mxu0 %v1517
    %1531 = vmatprep.subr.mxu0 0.0
    %1532 = vmatpush1.msra.mxu0 0.0
    %1533 = vmatprep.subr.mxu0 0.0
    %1534 = vmatpush1.msra.mxu0 0.0
    %1535 = vmatprep.subr.mxu0 0.0
    %1536 = vmatpush1.msra.mxu0 0.0
    %1537 = vmatprep.subr.mxu0 0.0
    %1538 = vmatpush1.msra.mxu0 0.0
    %1539 = vmatprep.subr.mxu0 0.0
    %1540 = vmatpush1.msra.mxu0 0.0
    %1541 = vmatprep.subr.mxu0 0.0
    %1542 = vmatpush1.msra.mxu0 0.0
    %1543 = vmatprep.subr.mxu0 0.0
    %1544 = vmatpush1.msra.mxu0 0.0
    %1545 = vmatprep.subr.mxu0 0.0
    %1546 = vmatpush1.msra.mxu0 0.0
    %1547 = vmatprep.subr.mxu0 0.0
    %1548 = vmatpush1.msra.mxu0 0.0
    %1549 = vmatprep.subr.mxu0 0.0
    %1550 = vmatpush1.msra.mxu0 0.0
    %1551 = vmatprep.subr.mxu0 0.0
    %1552 = vmatpush1.msra.mxu0 0.0
    %1553 = vmatprep.subr.mxu0 0.0
    %1554 = vmatpush1.msra.mxu0 0.0
    %1555 = vmatprep.subr.mxu0 0.0
    %1556 = vmatpush1.msra.mxu0 0.0
    %1557 = vmatprep.subr.mxu0 0.0
    %1558 = vmatpush1.msra.mxu0 0.0
    %1559 = vmatprep.subr.mxu0 0.0
    %1560 = vmatpush1.msra.mxu0 0.0
    %1561 = vmatprep.subr.mxu0 0.0
    %1562 = vmatpush1.msra.mxu0 0.0
    %1563 = vmatprep.subr.mxu0 0.0
    %1564 = vmatpush1.msra.mxu0 0.0
    %1565 = vmatprep.subr.mxu0 0.0
    %1566 = vmatpush1.msra.mxu0 0.0
    %1567 = vmatprep.subr.mxu0 0.0
    %1568 = vmatpush1.msra.mxu0 0.0
    %1569 = vmatprep.subr.mxu0 0.0
    %1570 = vmatpush1.msra.mxu0 0.0
    %1571 = vmatprep.subr.mxu0 0.0
    %1572 = vmatpush1.msra.mxu0 0.0
    %1573 = vmatprep.subr.mxu0 0.0
    %1574 = vmatpush1.msra.mxu0 0.0
    %1575 = vmatprep.subr.mxu0 0.0
    %1576 = vmatpush1.msra.mxu0 0.0
    %1577 = vmatprep.subr.mxu0 0.0
    %1578 = vmatpush1.msra.mxu0 0.0
    %1579 = vmatprep.subr.mxu0 0.0
    %1580 = vmatpush1.msra.mxu0 0.0
    %1581 = vmatprep.subr.mxu0 0.0
    %1582 = vmatpush1.msra.mxu0 0.0
    %1583 = vmatprep.subr.mxu0 0.0
    %1584 = vmatpush1.msra.mxu0 0.0
    %1585 = vmatprep.subr.mxu0 0.0
    %1586 = vmatpush1.msra.mxu0 0.0
    %1587 = vmatprep.mubr.f32.mxu0 0.0
    %1588 = vmatmul.mubr.f32.gmra.mrb[0].mxu0 %v1521
    %v1589 = vpop.f32.mrb[0].mxu0
    %v1590 = vadd.f32 0.0, %v1589
    %v1591 = vpop.f32.mrb[0].mxu0
    %1592 = vdwg.mxu0
    %1593 = vmatprep.subr.mxu0 0.0
    %1594 = vmatpush1.msra.mxu0 %v1510
    %1595 = vmatprep.subr.mxu0 0.0
    %1596 = vmatpush1.msra.mxu0 %v1511
    %1597 = vmatprep.subr.mxu0 0.0
    %1598 = vmatpush1.msra.mxu0 %v1512
    %1599 = vmatprep.subr.mxu0 0.0
    %1600 = vmatpush1.msra.mxu0 %v1513
    %1601 = vmatprep.subr.mxu0 0.0
    %1602 = vmatpush1.msra.mxu0 0.0
    %1603 = vmatprep.subr.mxu0 0.0
    %1604 = vmatpush1.msra.mxu0 0.0
    %1605 = vmatprep.subr.mxu0 0.0
    %1606 = vmatpush1.msra.mxu0 0.0
    %1607 = vmatprep.subr.mxu0 0.0
    %1608 = vmatpush1.msra.mxu0 0.0
    %1609 = vmatprep.subr.mxu0 0.0
    %1610 = vmatpush1.msra.mxu0 0.0
    %1611 = vmatprep.subr.mxu0 0.0
    %1612 = vmatpush1.msra.mxu0 0.0
    %1613 = vmatprep.subr.mxu0 0.0
    %1614 = vmatpush1.msra.mxu0 0.0
    %1615 = vmatprep.subr.mxu0 0.0
    %1616 = vmatpush1.msra.mxu0 0.0
    %1617 = vmatprep.subr.mxu0 0.0
    %1618 = vmatpush1.msra.mxu0 0.0
    %1619 = vmatprep.subr.mxu0 0.0
    %1620 = vmatpush1.msra.mxu0 0.0
    %1621 = vmatprep.subr.mxu0 0.0
    %1622 = vmatpush1.msra.mxu0 0.0
    %1623 = vmatprep.subr.mxu0 0.0
    %1624 = vmatpush1.msra.mxu0 0.0
    %1625 = vmatprep.subr.mxu0 0.0
    %1626 = vmatpush1.msra.mxu0 0.0
    %1627 = vmatprep.subr.mxu0 0.0
    %1628 = vmatpush1.msra.mxu0 0.0
    %1629 = vmatprep.subr.mxu0 0.0
    %1630 = vmatpush1.msra.mxu0 0.0
    %1631 = vmatprep.subr.mxu0 0.0
    %1632 = vmatpush1.msra.mxu0 0.0
    %1633 = vmatprep.subr.mxu0 0.0
    %1634 = vmatpush1.msra.mxu0 0.0
    %1635 = vmatprep.subr.mxu0 0.0
    %1636 = vmatpush1.msra.mxu0 0.0
    %1637 = vmatprep.subr.mxu0 0.0
    %1638 = vmatpush1.msra.mxu0 0.0
    %1639 = vmatprep.subr.mxu0 0.0
    %1640 = vmatpush1.msra.mxu0 0.0
    %1641 = vmatprep.subr.mxu0 0.0
    %1642 = vmatpush1.msra.mxu0 0.0
    %1643 = vmatprep.subr.mxu0 0.0
    %1644 = vmatpush1.msra.mxu0 0.0
    %1645 = vmatprep.subr.mxu0 0.0
    %1646 = vmatpush1.msra.mxu0 0.0
    %1647 = vmatprep.subr.mxu0 0.0
    %1648 = vmatpush1.msra.mxu0 0.0
    %1649 = vmatprep.subr.mxu0 0.0
    %1650 = vmatpush1.msra.mxu0 0.0
    %1651 = vmatprep.subr.mxu0 0.0
    %1652 = vmatpush1.msra.mxu0 0.0
    %1653 = vmatprep.subr.mxu0 0.0
    %1654 = vmatpush1.msra.mxu0 0.0
    %1655 = vmatprep.subr.mxu0 0.0
    %1656 = vmatpush1.msra.mxu0 0.0
    %1657 = vmatprep.mubr.f32.mxu0 0.0
    %1658 = vmatmul.mubr.f32.gmra.mrb[0].mxu0 %v595
    %v1659 = vpop.f32.mrb[0].mxu0
    %v1660 = vadd.f32 %v1590, %v1659
    %v1661 = vpop.f32.mrb[0].mxu0
    %1662 = vdwg.mxu0
    %v1663 = vld [vmem:[#allocation2 + $0x330] sm:$0xff]
    %v1664 = vld [vmem:[#allocation2 + $0x338] sm:$0xff]
    %v1666 = vsel %vm1105, %v1509, 0
    %1668 = vmatprep.subr.mxu0 0.0
    %1669 = vmatpush1.msra.mxu0 %v1663
    %1670 = vmatprep.subr.mxu0 0.0
    %1671 = vmatpush1.msra.mxu0 %v1664
    %1672 = vmatprep.subr.mxu0 0.0
    %1673 = vmatpush1.msra.mxu0 0.0
    %1674 = vmatprep.subr.mxu0 0.0
    %1675 = vmatpush1.msra.mxu0 0.0
    %1676 = vmatprep.subr.mxu0 0.0
    %1677 = vmatpush1.msra.mxu0 0.0
    %1678 = vmatprep.subr.mxu0 0.0
    %1679 = vmatpush1.msra.mxu0 0.0
    %1680 = vmatprep.subr.mxu0 0.0
    %1681 = vmatpush1.msra.mxu0 0.0
    %1682 = vmatprep.subr.mxu0 0.0
    %1683 = vmatpush1.msra.mxu0 0.0
    %1684 = vmatprep.subr.mxu0 0.0
    %1685 = vmatpush1.msra.mxu0 0.0
    %1686 = vmatprep.subr.mxu0 0.0
    %1687 = vmatpush1.msra.mxu0 0.0
    %1688 = vmatprep.subr.mxu0 0.0
    %1689 = vmatpush1.msra.mxu0 0.0
    %1690 = vmatprep.subr.mxu0 0.0
    %1691 = vmatpush1.msra.mxu0 0.0
    %1692 = vmatprep.subr.mxu0 0.0
    %1693 = vmatpush1.msra.mxu0 0.0
    %1694 = vmatprep.subr.mxu0 0.0
    %1695 = vmatpush1.msra.mxu0 0.0
    %1696 = vmatprep.subr.mxu0 0.0
    %1697 = vmatpush1.msra.mxu0 0.0
    %1698 = vmatprep.subr.mxu0 0.0
    %1699 = vmatpush1.msra.mxu0 0.0
    %1700 = vmatprep.subr.mxu0 0.0
    %1701 = vmatpush1.msra.mxu0 0.0
    %1702 = vmatprep.subr.mxu0 0.0
    %1703 = vmatpush1.msra.mxu0 0.0
    %1704 = vmatprep.subr.mxu0 0.0
    %1705 = vmatpush1.msra.mxu0 0.0
    %1706 = vmatprep.subr.mxu0 0.0
    %1707 = vmatpush1.msra.mxu0 0.0
    %1708 = vmatprep.subr.mxu0 0.0
    %1709 = vmatpush1.msra.mxu0 0.0
    %1710 = vmatprep.subr.mxu0 0.0
    %1711 = vmatpush1.msra.mxu0 0.0
    %1712 = vmatprep.subr.mxu0 0.0
    %1713 = vmatpush1.msra.mxu0 0.0
    %1714 = vmatprep.subr.mxu0 0.0
    %1715 = vmatpush1.msra.mxu0 0.0
    %1716 = vmatprep.subr.mxu0 0.0
    %1717 = vmatpush1.msra.mxu0 0.0
    %1718 = vmatprep.subr.mxu0 0.0
    %1719 = vmatpush1.msra.mxu0 0.0
    %1720 = vmatprep.subr.mxu0 0.0
    %1721 = vmatpush1.msra.mxu0 0.0
    %1722 = vmatprep.subr.mxu0 0.0
    %1723 = vmatpush1.msra.mxu0 0.0
    %1724 = vmatprep.subr.mxu0 0.0
    %1725 = vmatpush1.msra.mxu0 0.0
    %1726 = vmatprep.subr.mxu0 0.0
    %1727 = vmatpush1.msra.mxu0 0.0
    %1728 = vmatprep.subr.mxu0 0.0
    %1729 = vmatpush1.msra.mxu0 0.0
    %1730 = vmatprep.subr.mxu0 0.0
    %1731 = vmatpush1.msra.mxu0 0.0
    %1732 = vmatprep.mubr.f32.mxu0 0.0
    %1733 = vmatmul.mubr.f32.gmra.mrb[0].mxu0 %v1666
    %v1734 = vpop.f32.mrb[0].mxu0
    %v1735 = vadd.f32 0.0, %v1734
    %v1736 = vpop.f32.mrb[0].mxu0
    %1737 = vdwg.mxu0
    %v1738 = vadd.f32 %v1660, %v1735
    %v1739 = vlaneseq
    %v1740 = vshrl.u32 %v1739, 7
    %v1741 = vsub.s32 0, %v1740
    %v1742 = vrot.slane %v586, %v1741
    %v1743 = vadd.f32 %v1738, %v1742
    %v1744 = vtanh.pop %v1743
    %v1745 = vlaneseq
    %v1746 = vshrl.u32 %v1745, 7
    %v1747 = vsub.s32 0, %v1746
    %v1748 = vrot.slane %v589, %v1747
    %vm1749 = vcmask 80896
    %v1751 = vsel %vm1749, %v1743, 0
    %v1754 = vsel %vm369, %v588, 0
    %1756 = vmatprep.subr.mxu0 0.0
    %1757 = vmatpush1.msra.mxu0 %v587
    %1758 = vmatprep.subr.mxu0 0.0
    %1759 = vmatpush1.msra.mxu0 %v1754
    %1760 = vmatprep.subr.mxu0 0.0
    %1761 = vmatpush1.msra.mxu0 0.0
    %1762 = vmatprep.subr.mxu0 0.0
    %1763 = vmatpush1.msra.mxu0 0.0
    %1764 = vmatprep.subr.mxu0 0.0
    %1765 = vmatpush1.msra.mxu0 0.0
    %1766 = vmatprep.subr.mxu0 0.0
    %1767 = vmatpush1.msra.mxu0 0.0
    %1768 = vmatprep.subr.mxu0 0.0
    %1769 = vmatpush1.msra.mxu0 0.0
    %1770 = vmatprep.subr.mxu0 0.0
    %1771 = vmatpush1.msra.mxu0 0.0
    %1772 = vmatprep.subr.mxu0 0.0
    %1773 = vmatpush1.msra.mxu0 0.0
    %1774 = vmatprep.subr.mxu0 0.0
    %1775 = vmatpush1.msra.mxu0 0.0
    %1776 = vmatprep.subr.mxu0 0.0
    %1777 = vmatpush1.msra.mxu0 0.0
    %1778 = vmatprep.subr.mxu0 0.0
    %1779 = vmatpush1.msra.mxu0 0.0
    %1780 = vmatprep.subr.mxu0 0.0
    %1781 = vmatpush1.msra.mxu0 0.0
    %1782 = vmatprep.subr.mxu0 0.0
    %1783 = vmatpush1.msra.mxu0 0.0
    %1784 = vmatprep.subr.mxu0 0.0
    %1785 = vmatpush1.msra.mxu0 0.0
    %1786 = vmatprep.subr.mxu0 0.0
    %1787 = vmatpush1.msra.mxu0 0.0
    %1788 = vmatprep.subr.mxu0 0.0
    %1789 = vmatpush1.msra.mxu0 0.0
    %1790 = vmatprep.subr.mxu0 0.0
    %1791 = vmatpush1.msra.mxu0 0.0
    %1792 = vmatprep.subr.mxu0 0.0
    %1793 = vmatpush1.msra.mxu0 0.0
    %1794 = vmatprep.subr.mxu0 0.0
    %1795 = vmatpush1.msra.mxu0 0.0
    %1796 = vmatprep.subr.mxu0 0.0
    %1797 = vmatpush1.msra.mxu0 0.0
    %1798 = vmatprep.subr.mxu0 0.0
    %1799 = vmatpush1.msra.mxu0 0.0
    %1800 = vmatprep.subr.mxu0 0.0
    %1801 = vmatpush1.msra.mxu0 0.0
    %1802 = vmatprep.subr.mxu0 0.0
    %1803 = vmatpush1.msra.mxu0 0.0
    %1804 = vmatprep.subr.mxu0 0.0
    %1805 = vmatpush1.msra.mxu0 0.0
    %1806 = vmatprep.subr.mxu0 0.0
    %1807 = vmatpush1.msra.mxu0 0.0
    %1808 = vmatprep.subr.mxu0 0.0
    %1809 = vmatpush1.msra.mxu0 0.0
    %1810 = vmatprep.subr.mxu0 0.0
    %1811 = vmatpush1.msra.mxu0 0.0
    %1812 = vmatprep.subr.mxu0 0.0
    %1813 = vmatpush1.msra.mxu0 0.0
    %1814 = vmatprep.subr.mxu0 0.0
    %1815 = vmatpush1.msra.mxu0 0.0
    %1816 = vmatprep.subr.mxu0 0.0
    %1817 = vmatpush1.msra.mxu0 0.0
    %1818 = vmatprep.subr.mxu0 0.0
    %1819 = vmatpush1.msra.mxu0 0.0
    %1820 = vmatprep.mubr.f32.mxu0 0.0
    %1821 = vmatmul.mubr.f32.gmra.mrb[0].mxu0 %v1751
    %v1822 = vpop.f32.mrb[0].mxu0
    %v1823 = vadd.f32 %v1748, %v1822
    %v1824 = vpop.f32.mrb[0].mxu0
    %1825 = vdwg.mxu0
    %v1826 = vtanh.pop %v1823
    %vm1827 = vcmask 9216
    %v1828 = vsel %vm1827, %v1826, -inf
    %1829 = vmax.xlane.f32.xlu0 %v1828
    %v1830 = vpop.xlane.xlu0 %1829
    %v1831 = vsub.f32 %v1826, %v1830
    %v1832 = vmul.f32 %v1831, 1.442695
    %v1833 = vpow.pop %v1832
    %v1834 = vsel %vm1827, %v1833, 0.0
    %1835 = vadd.xlane.f32.xlu0 %v1834
    %v1836 = vpop.xlane.xlu0 %1835
    %v1837 = vrcp.pop %v1836
    %v1838 = vmul.f32 %v1833, %v1837
    %1840 = vrot.lane.b32.xlu0 %v1744, 118
    %v1841 = vpop.permute.xlu0 %1840
    %vm1843 = vcmask 91136
    %1844 = vst.msk [vmem:[%s4] sm:$0x3] %vm1843, %v1841
    %1846 = vrot.lane.b32.xlu0 %v1838, 12
    %v1847 = vpop.permute.xlu0 %1846
    %vm1849 = vcmask 107616
    %1850 = vst.msk [vmem:[%s4] sm:$0x3] %vm1849, %v1847
    %1851 = vmatprep.subr.mxu0 0.0
    %1852 = vmatpush1.msra.mxu0 %v570
    %1853 = vmatprep.subr.mxu0 0.0
    %1854 = vmatpush1.msra.mxu0 %v571
    %1855 = vmatprep.subr.mxu0 0.0
    %1856 = vmatpush1.msra.mxu0 %v572
    %1857 = vmatprep.subr.mxu0 0.0
    %1858 = vmatpush1.msra.mxu0 %v573
    %1859 = vmatprep.subr.mxu0 0.0
    %1860 = vmatpush1.msra.mxu0 0.0
    %1861 = vmatprep.subr.mxu0 0.0
    %1862 = vmatpush1.msra.mxu0 0.0
    %1863 = vmatprep.subr.mxu0 0.0
    %1864 = vmatpush1.msra.mxu0 0.0
    %1865 = vmatprep.subr.mxu0 0.0
    %1866 = vmatpush1.msra.mxu0 0.0
    %1867 = vmatprep.subr.mxu0 0.0
    %1868 = vmatpush1.msra.mxu0 0.0
    %1869 = vmatprep.subr.mxu0 0.0
    %1870 = vmatpush1.msra.mxu0 0.0
    %1871 = vmatprep.subr.mxu0 0.0
    %1872 = vmatpush1.msra.mxu0 0.0
    %1873 = vmatprep.subr.mxu0 0.0
    %1874 = vmatpush1.msra.mxu0 0.0
    %1875 = vmatprep.subr.mxu0 0.0
    %1876 = vmatpush1.msra.mxu0 0.0
    %1877 = vmatprep.subr.mxu0 0.0
    %1878 = vmatpush1.msra.mxu0 0.0
    %1879 = vmatprep.subr.mxu0 0.0
    %1880 = vmatpush1.msra.mxu0 0.0
    %1881 = vmatprep.subr.mxu0 0.0
    %1882 = vmatpush1.msra.mxu0 0.0
    %1883 = vmatprep.subr.mxu0 0.0
    %1884 = vmatpush1.msra.mxu0 0.0
    %1885 = vmatprep.subr.mxu0 0.0
    %1886 = vmatpush1.msra.mxu0 0.0
    %1887 = vmatprep.subr.mxu0 0.0
    %1888 = vmatpush1.msra.mxu0 0.0
    %1889 = vmatprep.subr.mxu0 0.0
    %1890 = vmatpush1.msra.mxu0 0.0
    %1891 = vmatprep.subr.mxu0 0.0
    %1892 = vmatpush1.msra.mxu0 0.0
    %1893 = vmatprep.subr.mxu0 0.0
    %1894 = vmatpush1.msra.mxu0 0.0
    %1895 = vmatprep.subr.mxu0 0.0
    %1896 = vmatpush1.msra.mxu0 0.0
    %1897 = vmatprep.subr.mxu0 0.0
    %1898 = vmatpush1.msra.mxu0 0.0
    %1899 = vmatprep.subr.mxu0 0.0
    %1900 = vmatpush1.msra.mxu0 0.0
    %1901 = vmatprep.subr.mxu0 0.0
    %1902 = vmatpush1.msra.mxu0 0.0
    %1903 = vmatprep.subr.mxu0 0.0
    %1904 = vmatpush1.msra.mxu0 0.0
    %1905 = vmatprep.subr.mxu0 0.0
    %1906 = vmatpush1.msra.mxu0 0.0
    %1907 = vmatprep.subr.mxu0 0.0
    %1908 = vmatpush1.msra.mxu0 0.0
    %1909 = vmatprep.subr.mxu0 0.0
    %1910 = vmatpush1.msra.mxu0 0.0
    %1911 = vmatprep.subr.mxu0 0.0
    %1912 = vmatpush1.msra.mxu0 0.0
    %1913 = vmatprep.subr.mxu0 0.0
    %1914 = vmatpush1.msra.mxu0 0.0
    %1915 = vmatprep.mubr.f32.mxu0 0.0
    %1916 = vmatmul.mubr.f32.gmra.mrb[0].mxu0 %v1521
    %v1917 = vpop.f32.mrb[0].mxu0
    %v1918 = vadd.f32 %v593, %v1917
    %v1919 = vpop.f32.mrb[0].mxu0
    %1920 = vdwg.mxu0
    %1921 = vmatprep.subr.mxu0 0.0
    %1922 = vmatpush1.msra.mxu0 %v575
    %1923 = vmatprep.subr.mxu0 0.0
    %1924 = vmatpush1.msra.mxu0 %v576
    %1925 = vmatprep.subr.mxu0 0.0
    %1926 = vmatpush1.msra.mxu0 %v577
    %1927 = vmatprep.subr.mxu0 0.0
    %1928 = vmatpush1.msra.mxu0 %v578
    %1929 = vmatprep.subr.mxu0 0.0
    %1930 = vmatpush1.msra.mxu0 0.0
    %1931 = vmatprep.subr.mxu0 0.0
    %1932 = vmatpush1.msra.mxu0 0.0
    %1933 = vmatprep.subr.mxu0 0.0
    %1934 = vmatpush1.msra.mxu0 0.0
    %1935 = vmatprep.subr.mxu0 0.0
    %1936 = vmatpush1.msra.mxu0 0.0
    %1937 = vmatprep.subr.mxu0 0.0
    %1938 = vmatpush1.msra.mxu0 0.0
    %1939 = vmatprep.subr.mxu0 0.0
    %1940 = vmatpush1.msra.mxu0 0.0
    %1941 = vmatprep.subr.mxu0 0.0
    %1942 = vmatpush1.msra.mxu0 0.0
    %1943 = vmatprep.subr.mxu0 0.0
    %1944 = vmatpush1.msra.mxu0 0.0
    %1945 = vmatprep.subr.mxu0 0.0
    %1946 = vmatpush1.msra.mxu0 0.0
    %1947 = vmatprep.subr.mxu0 0.0
    %1948 = vmatpush1.msra.mxu0 0.0
    %1949 = vmatprep.subr.mxu0 0.0
    %1950 = vmatpush1.msra.mxu0 0.0
    %1951 = vmatprep.subr.mxu0 0.0
    %1952 = vmatpush1.msra.mxu0 0.0
    %1953 = vmatprep.subr.mxu0 0.0
    %1954 = vmatpush1.msra.mxu0 0.0
    %1955 = vmatprep.subr.mxu0 0.0
    %1956 = vmatpush1.msra.mxu0 0.0
    %1957 = vmatprep.subr.mxu0 0.0
    %1958 = vmatpush1.msra.mxu0 0.0
    %1959 = vmatprep.subr.mxu0 0.0
    %1960 = vmatpush1.msra.mxu0 0.0
    %1961 = vmatprep.subr.mxu0 0.0
    %1962 = vmatpush1.msra.mxu0 0.0
    %1963 = vmatprep.subr.mxu0 0.0
    %1964 = vmatpush1.msra.mxu0 0.0
    %1965 = vmatprep.subr.mxu0 0.0
    %1966 = vmatpush1.msra.mxu0 0.0
    %1967 = vmatprep.subr.mxu0 0.0
    %1968 = vmatpush1.msra.mxu0 0.0
    %1969 = vmatprep.subr.mxu0 0.0
    %1970 = vmatpush1.msra.mxu0 0.0
    %1971 = vmatprep.subr.mxu0 0.0
    %1972 = vmatpush1.msra.mxu0 0.0
    %1973 = vmatprep.subr.mxu0 0.0
    %1974 = vmatpush1.msra.mxu0 0.0
    %1975 = vmatprep.subr.mxu0 0.0
    %1976 = vmatpush1.msra.mxu0 0.0
    %1977 = vmatprep.subr.mxu0 0.0
    %1978 = vmatpush1.msra.mxu0 0.0
    %1979 = vmatprep.subr.mxu0 0.0
    %1980 = vmatpush1.msra.mxu0 0.0
    %1981 = vmatprep.subr.mxu0 0.0
    %1982 = vmatpush1.msra.mxu0 0.0
    %1983 = vmatprep.subr.mxu0 0.0
    %1984 = vmatpush1.msra.mxu0 0.0
    %1985 = vmatprep.mubr.f32.mxu0 0.0
    %1986 = vmatmul.mubr.f32.gmra.mrb[0].mxu0 %v1521
    %v1987 = vpop.f32.mrb[0].mxu0
    %v1988 = vadd.f32 %v670, %v1987
    %v1989 = vpop.f32.mrb[0].mxu0
    %1990 = vdwg.mxu0
    %v1993 = vunpack.c.l.s4 1966171168
    %v1994 = vunpack.c.0.s8 %v1993
    %v1995 = vlaneseq
    %v1996 = vshrl.u32 %v1995, 7
    %v1997 = vsub.s32 %v1994, %v1996
    %v1998 = vrot.slane %v1918, %v1997
    %v1999 = vcombine.high %v1998, %v1998
    %v2001 = vunpack.c.l.s4 1966171168
    %v2002 = vunpack.c.0.s8 %v2001
    %v2003 = vlaneseq
    %v2004 = vshrl.u32 %v2003, 7
    %v2005 = vsub.s32 %v2002, %v2004
    %v2006 = vrot.slane %v1998, %v2005
    %v2008 = vunpack.c.l.s4 1966171168
    %v2009 = vunpack.c.0.s8 %v2008
    %v2010 = vlaneseq
    %v2011 = vshrl.u32 %v2010, 7
    %v2012 = vsub.s32 %v2009, %v2011
    %v2013 = vrot.slane %v1999, %v2012
    %v2014 = vlaneseq
    %v2015 = vshrl.u32 %v2014, 7
    %v2016 = vsub.s32 0, %v2015
    %v2017 = vrot.slane %v2006, %v2016
    %v2018 = vlaneseq
    %v2019 = vshrl.u32 %v2018, 7
    %v2020 = vsub.s32 0, %v2019
    %v2021 = vrot.slane %v2013, %v2020
    %v2024 = vadd.f32 %v552, %v2017
    %v2025 = vadd.f32 %v557, %v2017
    %v2026 = vadd.f32 %v562, %v2021
    %v2027 = vadd.f32 %v567, %v2021
    %v2028 = vtanh.pop %v2024
    %v2029 = vtanh.pop %v2025
    %v2030 = vtanh.pop %v2026
    %v2031 = vtanh.pop %v2027
    %v2032 = vmul.f32 %v2028, %v785
    %v2033 = vmul.f32 %v2029, %v785
    %v2034 = vmul.f32 %v2030, %v785
    %v2035 = vmul.f32 %v2031, %v785
    %v2036 = vsel %vm790, %v2032, 0.0
    %2037 = vadd.xlane.f32.xlu0 %v2036
    %v2038 = vpop.xlane.xlu0 %2037
    %v2039 = vsel %vm790, %v2033, 0.0
    %2040 = vadd.xlane.f32.xlu0 %v2039
    %v2041 = vpop.xlane.xlu0 %2040
    %v2042 = vsel %vm790, %v2034, 0.0
    %2043 = vadd.xlane.f32.xlu0 %v2042
    %v2044 = vpop.xlane.xlu0 %2043
    %v2045 = vsel %vm790, %v2035, 0.0
    %2046 = vadd.xlane.f32.xlu0 %v2045
    %v2047 = vpop.xlane.xlu0 %2046
    %v2048 = vadd.f32 %v2038, %v806
    %v2049 = vadd.f32 %v2041, %v806
    %v2050 = vadd.f32 %v2044, %v806
    %v2051 = vadd.f32 %v2047, %v806
    %v2052 = vsel %vm811, %v2048, -inf
    %v2053 = vsel %vm811, %v2049, -inf
    %v2054 = vmax.f32 %v2052, %v2053
    %v2055 = vrot.slane %v2054, 4
    %v2056 = vmax.f32 %v2054, %v2055
    %v2057 = vrot.slane %v2056, 2
    %v2058 = vmax.f32 %v2056, %v2057
    %v2059 = vrot.slane %v2058, 1
    %v2060 = vmax.f32 %v2058, %v2059
    %v2061 = vsel %vm811, %v2050, -inf
    %v2062 = vsel %vm811, %v2051, -inf
    %v2063 = vmax.f32 %v2061, %v2062
    %v2064 = vrot.slane %v2063, 4
    %v2065 = vmax.f32 %v2063, %v2064
    %v2066 = vrot.slane %v2065, 2
    %v2067 = vmax.f32 %v2065, %v2066
    %v2068 = vrot.slane %v2067, 1
    %v2069 = vmax.f32 %v2067, %v2068
    %v2070 = vsub.f32 %v2048, %v2060
    %v2071 = vsub.f32 %v2049, %v2060
    %v2072 = vsub.f32 %v2050, %v2069
    %v2073 = vsub.f32 %v2051, %v2069
    %v2074 = vmul.f32 %v2070, 1.442695
    %v2075 = vpow.pop %v2074
    %v2076 = vmul.f32 %v2071, 1.442695
    %v2077 = vpow.pop %v2076
    %v2078 = vmul.f32 %v2072, 1.442695
    %v2079 = vpow.pop %v2078
    %v2080 = vmul.f32 %v2073, 1.442695
    %v2081 = vpow.pop %v2080
    %v2082 = vsel %vm811, %v2075, 0.0
    %v2083 = vsel %vm811, %v2077, 0.0
    %v2084 = vadd.f32 %v2082, %v2083
    %v2085 = vrot.slane %v2084, 4
    %v2086 = vadd.f32 %v2084, %v2085
    %v2087 = vrot.slane %v2086, 2
    %v2088 = vadd.f32 %v2086, %v2087
    %v2089 = vrot.slane %v2088, 1
    %v2090 = vadd.f32 %v2088, %v2089
    %v2091 = vsel %vm811, %v2079, 0.0
    %v2092 = vsel %vm811, %v2081, 0.0
    %v2093 = vadd.f32 %v2091, %v2092
    %v2094 = vrot.slane %v2093, 4
    %v2095 = vadd.f32 %v2093, %v2094
    %v2096 = vrot.slane %v2095, 2
    %v2097 = vadd.f32 %v2095, %v2096
    %v2098 = vrot.slane %v2097, 1
    %v2099 = vadd.f32 %v2097, %v2098
    %v2100 = vrcp.pop %v2090
    %v2101 = vrcp.pop %v2099
    %v2102 = vmul.f32 %v2075, %v2100
    %v2103 = vmul.f32 %v2077, %v2100
    %v2104 = vmul.f32 %v2079, %v2101
    %v2105 = vmul.f32 %v2081, %v2101
    %2107 = vset.pattern.permute.xlu0 0
    %2108 = vperm.xlu0 %2107, %v2102
    %v2109 = vpop.permute.xlu0 %2108
    %2112 = vset.pattern.permute.xlu0 0
    %2113 = vperm.xlu0 %2112, %v2103
    %v2114 = vpop.permute.xlu0 %2113
    %2117 = vset.pattern.permute.xlu0 0
    %2118 = vperm.xlu0 %2117, %v2104
    %v2119 = vpop.permute.xlu0 %2118
    %2122 = vset.pattern.permute.xlu0 0
    %2123 = vperm.xlu0 %2122, %v2105
    %v2124 = vpop.permute.xlu0 %2123
    %v2126 = vmul.f32 %v46, %v2109
    %v2127 = vmul.f32 %v47, %v2114
    %v2128 = vmul.f32 %v48, %v2119
    %v2129 = vmul.f32 %v49, %v2124
    %v2130 = vsel %vm472, %v2126, 0.0
    %v2131 = vsel %vm472, %v2127, 0.0
    %v2132 = vadd.f32 %v2130, %v2131
    %v2133 = vrot.slane %v2132, 4
    %v2134 = vadd.f32 %v2132, %v2133
    %v2135 = vrot.slane %v2134, 2
    %v2136 = vadd.f32 %v2134, %v2135
    %v2137 = vrot.slane %v2136, 1
    %v2138 = vadd.f32 %v2136, %v2137
    %v2139 = vsel %vm472, %v2128, 0.0
    %v2140 = vsel %vm472, %v2129, 0.0
    %v2141 = vadd.f32 %v2139, %v2140
    %v2142 = vrot.slane %v2141, 4
    %v2143 = vadd.f32 %v2141, %v2142
    %v2144 = vrot.slane %v2143, 2
    %v2145 = vadd.f32 %v2143, %v2144
    %v2146 = vrot.slane %v2145, 1
    %v2147 = vadd.f32 %v2145, %v2146
    %2149 = vrot.lane.b32.xlu0 %v1988, 16
    %v2150 = vpop.permute.xlu0 %2149
    %v2152 = vadd.f32 %v455, %v2150
    %v2153 = vtanh.pop %v2152
    %v2154 = vmul.f32 %v2153, %v920
    %2156 = vrot.lane.b32.xlu0 %v2154, 112
    %v2157 = vpop.permute.xlu0 %2156
    %v2159 = vsel %vm927, %v2157, 0.0
    %2160 = vadd.xlane.f32.xlu0 %v2159
    %v2161 = vpop.xlane.xlu0 %2160
    %v2162 = vadd.f32 %v2161, %v934
    %v2163 = vrot.slane %v1988, 6
    %2164 = vrot.lane.b32.xlu0 %v2163, 16
    %v2165 = vpop.permute.xlu0 %2164
    %v2167 = vadd.f32 %v455, %v2165
    %v2168 = vtanh.pop %v2167
    %v2169 = vmul.f32 %v2168, %v920
    %2171 = vrot.lane.b32.xlu0 %v2169, 112
    %v2172 = vpop.permute.xlu0 %2171
    %v2174 = vsel %vm947, %v2172, 0.0
    %2175 = vadd.xlane.f32.xlu0 %v2174
    %v2176 = vpop.xlane.xlu0 %2175
    %v2177 = vadd.f32 %v2176, %v934
    %v2178 = vrot.slane %v1988, 4
    %2179 = vrot.lane.b32.xlu0 %v2178, 16
    %v2180 = vpop.permute.xlu0 %2179
    %v2182 = vadd.f32 %v455, %v2180
    %v2183 = vtanh.pop %v2182
    %v2184 = vmul.f32 %v2183, %v920
    %2186 = vrot.lane.b32.xlu0 %v2184, 112
    %v2187 = vpop.permute.xlu0 %2186
    %v2189 = vsel %vm963, %v2187, 0.0
    %2190 = vadd.xlane.f32.xlu0 %v2189
    %v2191 = vpop.xlane.xlu0 %2190
    %v2192 = vadd.f32 %v2191, %v934
    %v2193 = vrot.slane %v1988, 2
    %2194 = vrot.lane.b32.xlu0 %v2193, 16
    %v2195 = vpop.permute.xlu0 %2194
    %v2197 = vadd.f32 %v455, %v2195
    %v2198 = vtanh.pop %v2197
    %v2199 = vmul.f32 %v2198, %v920
    %2201 = vrot.lane.b32.xlu0 %v2199, 112
    %v2202 = vpop.permute.xlu0 %2201
    %v2204 = vsel %vm979, %v2202, 0.0
    %2205 = vadd.xlane.f32.xlu0 %v2204
    %v2206 = vpop.xlane.xlu0 %2205
    %v2207 = vadd.f32 %v2206, %v934
    %v2208 = vadd.f32 %v460, %v2150
    %v2209 = vtanh.pop %v2208
    %v2210 = vmul.f32 %v2209, %v920
    %2212 = vrot.lane.b32.xlu0 %v2210, 112
    %v2213 = vpop.permute.xlu0 %2212
    %v2215 = vsel %vm927, %v2213, 0.0
    %2216 = vadd.xlane.f32.xlu0 %v2215
    %v2217 = vpop.xlane.xlu0 %2216
    %v2218 = vadd.f32 %v2217, %v934
    %v2220 = vrot.slane %v2177, 2
    %v2222 = vmax.f32 %v2162, %v2220
    %v2224 = vrot.slane %v2192, 4
    %v2226 = vmax.f32 %v2222, %v2224
    %v2228 = vrot.slane %v2207, 6
    %v2230 = vmax.f32 %v2226, %v2228
    %v2231 = vmax.f32 %v2230, %v2218
    %v2232 = vsub.f32 %v2162, %v2231
    %v2233 = vmul.f32 %v2232, 1.442695
    %v2234 = vpow.pop %v2233
    %v2236 = vrot.slane %v2231, 6
    %v2238 = vsub.f32 %v2177, %v2236
    %v2239 = vmul.f32 %v2238, 1.442695
    %v2240 = vpow.pop %v2239
    %v2241 = vrot.slane %v2231, 4
    %v2243 = vsub.f32 %v2192, %v2241
    %v2244 = vmul.f32 %v2243, 1.442695
    %v2245 = vpow.pop %v2244
    %v2246 = vrot.slane %v2231, 2
    %v2248 = vsub.f32 %v2207, %v2246
    %v2249 = vmul.f32 %v2248, 1.442695
    %v2250 = vpow.pop %v2249
    %v2251 = vsub.f32 %v2218, %v2231
    %v2252 = vmul.f32 %v2251, 1.442695
    %v2253 = vpow.pop %v2252
    %v2255 = vrot.slane %v2240, 2
    %v2257 = vadd.f32 %v2234, %v2255
    %v2259 = vrot.slane %v2245, 4
    %v2261 = vadd.f32 %v2257, %v2259
    %v2263 = vrot.slane %v2250, 6
    %v2265 = vadd.f32 %v2261, %v2263
    %v2266 = vadd.f32 %v2265, %v2253
    %v2267 = vrcp.pop %v2266
    %v2268 = vmul.f32 %v2234, %v2267
    %2270 = vset.pattern.permute.xlu0 0
    %2271 = vperm.xlu0 %2270, %v2268
    %v2272 = vpop.permute.xlu0 %2271
    %v2274 = vmul.f32 %v2272, %v455
    %v2276 = vrot.slane %v2267, 6
    %v2278 = vmul.f32 %v2240, %v2276
    %2280 = vset.pattern.permute.xlu0 0
    %2281 = vperm.xlu0 %2280, %v2278
    %v2282 = vpop.permute.xlu0 %2281
    %v2284 = vmul.f32 %v2282, %v455
    %v2286 = vrot.slane %v2284, 2
    %v2288 = vadd.f32 %v2274, %v2286
    %v2289 = vrot.slane %v2267, 4
    %v2291 = vmul.f32 %v2245, %v2289
    %2293 = vset.pattern.permute.xlu0 0
    %2294 = vperm.xlu0 %2293, %v2291
    %v2295 = vpop.permute.xlu0 %2294
    %v2297 = vmul.f32 %v2295, %v455
    %v2299 = vrot.slane %v2297, 4
    %v2301 = vadd.f32 %v2288, %v2299
    %v2302 = vrot.slane %v2267, 2
    %v2304 = vmul.f32 %v2250, %v2302
    %2306 = vset.pattern.permute.xlu0 0
    %2307 = vperm.xlu0 %2306, %v2304
    %v2308 = vpop.permute.xlu0 %2307
    %v2310 = vmul.f32 %v2308, %v455
    %v2312 = vrot.slane %v2310, 6
    %v2314 = vadd.f32 %v2301, %v2312
    %v2315 = vmul.f32 %v2253, %v2267
    %2317 = vset.pattern.permute.xlu0 0
    %2318 = vperm.xlu0 %2317, %v2315
    %v2319 = vpop.permute.xlu0 %2318
    %v2321 = vmul.f32 %v2319, %v460
    %v2322 = vadd.f32 %v2314, %v2321
    %v2323 = vld [vmem:[#allocation2 + $0x2a0] sm:$0xff]
    %v2324 = vld [vmem:[#allocation2 + $0x2a8] sm:$0xff]
    %v2325 = vld [vmem:[#allocation2 + $0x2b0] sm:$0xff]
    %v2326 = vld [vmem:[#allocation2 + $0x2b8] sm:$0xff]
    %v2327 = vld [vmem:[#allocation2 + $0x2c0] sm:$0xff]
    %v2328 = vld [vmem:[#allocation2 + $0x2c8] sm:$0xff]
    %v2330 = vsel %vm1105, %v2322, 0
    %2332 = vmatprep.subr.mxu0 0.0
    %2333 = vmatpush1.msra.mxu0 %v2327
    %2334 = vmatprep.subr.mxu0 0.0
    %2335 = vmatpush1.msra.mxu0 %v2328
    %2336 = vmatprep.subr.mxu0 0.0
    %2337 = vmatpush1.msra.mxu0 0.0
    %2338 = vmatprep.subr.mxu0 0.0
    %2339 = vmatpush1.msra.mxu0 0.0
    %2340 = vmatprep.subr.mxu0 0.0
    %2341 = vmatpush1.msra.mxu0 0.0
    %2342 = vmatprep.subr.mxu0 0.0
    %2343 = vmatpush1.msra.mxu0 0.0
    %2344 = vmatprep.subr.mxu0 0.0
    %2345 = vmatpush1.msra.mxu0 0.0
    %2346 = vmatprep.subr.mxu0 0.0
    %2347 = vmatpush1.msra.mxu0 0.0
    %2348 = vmatprep.subr.mxu0 0.0
    %2349 = vmatpush1.msra.mxu0 0.0
    %2350 = vmatprep.subr.mxu0 0.0
    %2351 = vmatpush1.msra.mxu0 0.0
    %2352 = vmatprep.subr.mxu0 0.0
    %2353 = vmatpush1.msra.mxu0 0.0
    %2354 = vmatprep.subr.mxu0 0.0
    %2355 = vmatpush1.msra.mxu0 0.0
    %2356 = vmatprep.subr.mxu0 0.0
    %2357 = vmatpush1.msra.mxu0 0.0
    %2358 = vmatprep.subr.mxu0 0.0
    %2359 = vmatpush1.msra.mxu0 0.0
    %2360 = vmatprep.subr.mxu0 0.0
    %2361 = vmatpush1.msra.mxu0 0.0
    %2362 = vmatprep.subr.mxu0 0.0
    %2363 = vmatpush1.msra.mxu0 0.0
    %2364 = vmatprep.subr.mxu0 0.0
    %2365 = vmatpush1.msra.mxu0 0.0
    %2366 = vmatprep.subr.mxu0 0.0
    %2367 = vmatpush1.msra.mxu0 0.0
    %2368 = vmatprep.subr.mxu0 0.0
    %2369 = vmatpush1.msra.mxu0 0.0
    %2370 = vmatprep.subr.mxu0 0.0
    %2371 = vmatpush1.msra.mxu0 0.0
    %2372 = vmatprep.subr.mxu0 0.0
    %2373 = vmatpush1.msra.mxu0 0.0
    %2374 = vmatprep.subr.mxu0 0.0
    %2375 = vmatpush1.msra.mxu0 0.0
    %2376 = vmatprep.subr.mxu0 0.0
    %2377 = vmatpush1.msra.mxu0 0.0
    %2378 = vmatprep.subr.mxu0 0.0
    %2379 = vmatpush1.msra.mxu0 0.0
    %2380 = vmatprep.subr.mxu0 0.0
    %2381 = vmatpush1.msra.mxu0 0.0
    %2382 = vmatprep.subr.mxu0 0.0
    %2383 = vmatpush1.msra.mxu0 0.0
    %2384 = vmatprep.subr.mxu0 0.0
    %2385 = vmatpush1.msra.mxu0 0.0
    %2386 = vmatprep.subr.mxu0 0.0
    %2387 = vmatpush1.msra.mxu0 0.0
    %2388 = vmatprep.subr.mxu0 0.0
    %2389 = vmatpush1.msra.mxu0 0.0
    %2390 = vmatprep.subr.mxu0 0.0
    %2391 = vmatpush1.msra.mxu0 0.0
    %2392 = vmatprep.subr.mxu0 0.0
    %2393 = vmatpush1.msra.mxu0 0.0
    %2394 = vmatprep.subr.mxu0 0.0
    %2395 = vmatpush1.msra.mxu0 0.0
    %2396 = vmatprep.mubr.f32.mxu0 0.0
    %2397 = vmatmul.mubr.f32.gmra.mrb[0].mxu0 %v2330
    %v2398 = vpop.f32.mrb[0].mxu0
    %v2399 = vadd.f32 0.0, %v2398
    %v2400 = vpop.f32.mrb[0].mxu0
    %2401 = vdwg.mxu0
    %v2404 = vsel %vm1181, %v2147, %v2138
    %v2405 = vsel %vm472, %v2404, 0
    %2407 = vmatprep.subr.mxu0 0.0
    %2408 = vmatpush1.msra.mxu0 %v2323
    %2409 = vmatprep.subr.mxu0 0.0
    %2410 = vmatpush1.msra.mxu0 %v2324
    %2411 = vmatprep.subr.mxu0 0.0
    %2412 = vmatpush1.msra.mxu0 %v2325
    %2413 = vmatprep.subr.mxu0 0.0
    %2414 = vmatpush1.msra.mxu0 %v2326
    %2415 = vmatprep.subr.mxu0 0.0
    %2416 = vmatpush1.msra.mxu0 0.0
    %2417 = vmatprep.subr.mxu0 0.0
    %2418 = vmatpush1.msra.mxu0 0.0
    %2419 = vmatprep.subr.mxu0 0.0
    %2420 = vmatpush1.msra.mxu0 0.0
    %2421 = vmatprep.subr.mxu0 0.0
    %2422 = vmatpush1.msra.mxu0 0.0
    %2423 = vmatprep.subr.mxu0 0.0
    %2424 = vmatpush1.msra.mxu0 0.0
    %2425 = vmatprep.subr.mxu0 0.0
    %2426 = vmatpush1.msra.mxu0 0.0
    %2427 = vmatprep.subr.mxu0 0.0
    %2428 = vmatpush1.msra.mxu0 0.0
    %2429 = vmatprep.subr.mxu0 0.0
    %2430 = vmatpush1.msra.mxu0 0.0
    %2431 = vmatprep.subr.mxu0 0.0
    %2432 = vmatpush1.msra.mxu0 0.0
    %2433 = vmatprep.subr.mxu0 0.0
    %2434 = vmatpush1.msra.mxu0 0.0
    %2435 = vmatprep.subr.mxu0 0.0
    %2436 = vmatpush1.msra.mxu0 0.0
    %2437 = vmatprep.subr.mxu0 0.0
    %2438 = vmatpush1.msra.mxu0 0.0
    %2439 = vmatprep.subr.mxu0 0.0
    %2440 = vmatpush1.msra.mxu0 0.0
    %2441 = vmatprep.subr.mxu0 0.0
    %2442 = vmatpush1.msra.mxu0 0.0
    %2443 = vmatprep.subr.mxu0 0.0
    %2444 = vmatpush1.msra.mxu0 0.0
    %2445 = vmatprep.subr.mxu0 0.0
    %2446 = vmatpush1.msra.mxu0 0.0
    %2447 = vmatprep.subr.mxu0 0.0
    %2448 = vmatpush1.msra.mxu0 0.0
    %2449 = vmatprep.subr.mxu0 0.0
    %2450 = vmatpush1.msra.mxu0 0.0
    %2451 = vmatprep.subr.mxu0 0.0
    %2452 = vmatpush1.msra.mxu0 0.0
    %2453 = vmatprep.subr.mxu0 0.0
    %2454 = vmatpush1.msra.mxu0 0.0
    %2455 = vmatprep.subr.mxu0 0.0
    %2456 = vmatpush1.msra.mxu0 0.0
    %2457 = vmatprep.subr.mxu0 0.0
    %2458 = vmatpush1.msra.mxu0 0.0
    %2459 = vmatprep.subr.mxu0 0.0
    %2460 = vmatpush1.msra.mxu0 0.0
    %2461 = vmatprep.subr.mxu0 0.0
    %2462 = vmatpush1.msra.mxu0 0.0
    %2463 = vmatprep.subr.mxu0 0.0
    %2464 = vmatpush1.msra.mxu0 0.0
    %2465 = vmatprep.subr.mxu0 0.0
    %2466 = vmatpush1.msra.mxu0 0.0
    %2467 = vmatprep.subr.mxu0 0.0
    %2468 = vmatpush1.msra.mxu0 0.0
    %2469 = vmatprep.subr.mxu0 0.0
    %2470 = vmatpush1.msra.mxu0 0.0
    %2471 = vmatprep.mubr.f32.mxu0 0.0
    %2472 = vmatmul.mubr.f32.gmra.mrb[0].mxu0 %v2405
    %v2473 = vpop.f32.mrb[0].mxu0
    %v2474 = vadd.f32 %v2399, %v2473
    %v2475 = vpop.f32.mrb[0].mxu0
    %2476 = vdwg.mxu0
    %v2477 = vld [vmem:[#allocation2 + $0x2d0] sm:$0xff]
    %v2478 = vld [vmem:[#allocation2 + $0x2d8] sm:$0xff]
    %v2479 = vld [vmem:[#allocation2 + $0x2e0] sm:$0xff]
    %v2480 = vld [vmem:[#allocation2 + $0x2e8] sm:$0xff]
    %2481 = vmatprep.subr.mxu0 0.0
    %2482 = vmatpush1.msra.mxu0 %v2477
    %2483 = vmatprep.subr.mxu0 0.0
    %2484 = vmatpush1.msra.mxu0 %v2478
    %2485 = vmatprep.subr.mxu0 0.0
    %2486 = vmatpush1.msra.mxu0 %v2479
    %2487 = vmatprep.subr.mxu0 0.0
    %2488 = vmatpush1.msra.mxu0 %v2480
    %2489 = vmatprep.subr.mxu0 0.0
    %2490 = vmatpush1.msra.mxu0 0.0
    %2491 = vmatprep.subr.mxu0 0.0
    %2492 = vmatpush1.msra.mxu0 0.0
    %2493 = vmatprep.subr.mxu0 0.0
    %2494 = vmatpush1.msra.mxu0 0.0
    %2495 = vmatprep.subr.mxu0 0.0
    %2496 = vmatpush1.msra.mxu0 0.0
    %2497 = vmatprep.subr.mxu0 0.0
    %2498 = vmatpush1.msra.mxu0 0.0
    %2499 = vmatprep.subr.mxu0 0.0
    %2500 = vmatpush1.msra.mxu0 0.0
    %2501 = vmatprep.subr.mxu0 0.0
    %2502 = vmatpush1.msra.mxu0 0.0
    %2503 = vmatprep.subr.mxu0 0.0
    %2504 = vmatpush1.msra.mxu0 0.0
    %2505 = vmatprep.subr.mxu0 0.0
    %2506 = vmatpush1.msra.mxu0 0.0
    %2507 = vmatprep.subr.mxu0 0.0
    %2508 = vmatpush1.msra.mxu0 0.0
    %2509 = vmatprep.subr.mxu0 0.0
    %2510 = vmatpush1.msra.mxu0 0.0
    %2511 = vmatprep.subr.mxu0 0.0
    %2512 = vmatpush1.msra.mxu0 0.0
    %2513 = vmatprep.subr.mxu0 0.0
    %2514 = vmatpush1.msra.mxu0 0.0
    %2515 = vmatprep.subr.mxu0 0.0
    %2516 = vmatpush1.msra.mxu0 0.0
    %2517 = vmatprep.subr.mxu0 0.0
    %2518 = vmatpush1.msra.mxu0 0.0
    %2519 = vmatprep.subr.mxu0 0.0
    %2520 = vmatpush1.msra.mxu0 0.0
    %2521 = vmatprep.subr.mxu0 0.0
    %2522 = vmatpush1.msra.mxu0 0.0
    %2523 = vmatprep.subr.mxu0 0.0
    %2524 = vmatpush1.msra.mxu0 0.0
    %2525 = vmatprep.subr.mxu0 0.0
    %2526 = vmatpush1.msra.mxu0 0.0
    %2527 = vmatprep.subr.mxu0 0.0
    %2528 = vmatpush1.msra.mxu0 0.0
    %2529 = vmatprep.subr.mxu0 0.0
    %2530 = vmatpush1.msra.mxu0 0.0
    %2531 = vmatprep.subr.mxu0 0.0
    %2532 = vmatpush1.msra.mxu0 0.0
    %2533 = vmatprep.subr.mxu0 0.0
    %2534 = vmatpush1.msra.mxu0 0.0
    %2535 = vmatprep.subr.mxu0 0.0
    %2536 = vmatpush1.msra.mxu0 0.0
    %2537 = vmatprep.subr.mxu0 0.0
    %2538 = vmatpush1.msra.mxu0 0.0
    %2539 = vmatprep.subr.mxu0 0.0
    %2540 = vmatpush1.msra.mxu0 0.0
    %2541 = vmatprep.subr.mxu0 0.0
    %2542 = vmatpush1.msra.mxu0 0.0
    %2543 = vmatprep.subr.mxu0 0.0
    %2544 = vmatpush1.msra.mxu0 0.0
    %2545 = vmatprep.mubr.f32.mxu0 0.0
    %2546 = vmatmul.mubr.f32.gmra.mrb[0].mxu0 %v1521
    %v2547 = vpop.f32.mrb[0].mxu0
    %v2548 = vadd.f32 0.0, %v2547
    %v2549 = vpop.f32.mrb[0].mxu0
    %2550 = vdwg.mxu0
    %v2551 = vadd.f32 %v2474, %v2548
    %v2552 = vadd.f32 %v2551, %v1333
    %v2553 = vxor.u32 %v2552, 2147483648
    %v2554 = vmul.f32 %v2553, 1.442695
    %v2555 = vpow.pop %v2554
    %v2556 = vadd.f32 %v2555, 1.0
    %v2557 = vrcp.pop %v2556
    %v2558 = vmul.f32 1.0, %v2557
    %v2559 = vtanh.pop %v2552
    %v2560 = vmul.f32 %v2558, %v1352
    %2562 = vrot.lane.b32.xlu0 %v2559, 64
    %v2563 = vpop.permute.xlu0 %2562
    %v2565 = vmul.f32 %v2558, %v2563
    %2567 = vrot.lane.b32.xlu0 %v2565, 32
    %v2568 = vpop.permute.xlu0 %2567
    %v2570 = vadd.f32 %v2560, %v2568
    %v2571 = vtanh.pop %v2570
    %2573 = vrot.lane.b32.xlu0 %v2571, 64
    %v2574 = vpop.permute.xlu0 %2573
    %v2576 = vmul.f32 %v2558, %v2574
    %v2577 = vld [vmem:[#allocation2 + $0x270] sm:$0xff]
    %v2578 = vld [vmem:[#allocation2 + $0x278] sm:$0xff]
    %v2579 = vld [vmem:[#allocation2 + $0x280] sm:$0xff]
    %v2580 = vld [vmem:[#allocation2 + $0x288] sm:$0xff]
    %v2581 = vld [vmem:[#allocation2 + $0x290] sm:$0xff]
    %v2582 = vld [vmem:[#allocation2 + $0x298] sm:$0xff]
    %2583 = vmatprep.subr.mxu0 0.0
    %2584 = vmatpush1.msra.mxu0 %v2581
    %2585 = vmatprep.subr.mxu0 0.0
    %2586 = vmatpush1.msra.mxu0 %v2582
    %2587 = vmatprep.subr.mxu0 0.0
    %2588 = vmatpush1.msra.mxu0 0.0
    %2589 = vmatprep.subr.mxu0 0.0
    %2590 = vmatpush1.msra.mxu0 0.0
    %2591 = vmatprep.subr.mxu0 0.0
    %2592 = vmatpush1.msra.mxu0 0.0
    %2593 = vmatprep.subr.mxu0 0.0
    %2594 = vmatpush1.msra.mxu0 0.0
    %2595 = vmatprep.subr.mxu0 0.0
    %2596 = vmatpush1.msra.mxu0 0.0
    %2597 = vmatprep.subr.mxu0 0.0
    %2598 = vmatpush1.msra.mxu0 0.0
    %2599 = vmatprep.subr.mxu0 0.0
    %2600 = vmatpush1.msra.mxu0 0.0
    %2601 = vmatprep.subr.mxu0 0.0
    %2602 = vmatpush1.msra.mxu0 0.0
    %2603 = vmatprep.subr.mxu0 0.0
    %2604 = vmatpush1.msra.mxu0 0.0
    %2605 = vmatprep.subr.mxu0 0.0
    %2606 = vmatpush1.msra.mxu0 0.0
    %2607 = vmatprep.subr.mxu0 0.0
    %2608 = vmatpush1.msra.mxu0 0.0
    %2609 = vmatprep.subr.mxu0 0.0
    %2610 = vmatpush1.msra.mxu0 0.0
    %2611 = vmatprep.subr.mxu0 0.0
    %2612 = vmatpush1.msra.mxu0 0.0
    %2613 = vmatprep.subr.mxu0 0.0
    %2614 = vmatpush1.msra.mxu0 0.0
    %2615 = vmatprep.subr.mxu0 0.0
    %2616 = vmatpush1.msra.mxu0 0.0
    %2617 = vmatprep.subr.mxu0 0.0
    %2618 = vmatpush1.msra.mxu0 0.0
    %2619 = vmatprep.subr.mxu0 0.0
    %2620 = vmatpush1.msra.mxu0 0.0
    %2621 = vmatprep.subr.mxu0 0.0
    %2622 = vmatpush1.msra.mxu0 0.0
    %2623 = vmatprep.subr.mxu0 0.0
    %2624 = vmatpush1.msra.mxu0 0.0
    %2625 = vmatprep.subr.mxu0 0.0
    %2626 = vmatpush1.msra.mxu0 0.0
    %2627 = vmatprep.subr.mxu0 0.0
    %2628 = vmatpush1.msra.mxu0 0.0
    %2629 = vmatprep.subr.mxu0 0.0
    %2630 = vmatpush1.msra.mxu0 0.0
    %2631 = vmatprep.subr.mxu0 0.0
    %2632 = vmatpush1.msra.mxu0 0.0
    %2633 = vmatprep.subr.mxu0 0.0
    %2634 = vmatpush1.msra.mxu0 0.0
    %2635 = vmatprep.subr.mxu0 0.0
    %2636 = vmatpush1.msra.mxu0 0.0
    %2637 = vmatprep.subr.mxu0 0.0
    %2638 = vmatpush1.msra.mxu0 0.0
    %2639 = vmatprep.subr.mxu0 0.0
    %2640 = vmatpush1.msra.mxu0 0.0
    %2641 = vmatprep.subr.mxu0 0.0
    %2642 = vmatpush1.msra.mxu0 0.0
    %2643 = vmatprep.subr.mxu0 0.0
    %2644 = vmatpush1.msra.mxu0 0.0
    %2645 = vmatprep.subr.mxu0 0.0
    %2646 = vmatpush1.msra.mxu0 0.0
    %2647 = vmatprep.mubr.f32.mxu0 0.0
    %2648 = vmatmul.mubr.f32.gmra.mrb[0].mxu0 %v2330
    %v2649 = vpop.f32.mrb[0].mxu0
    %v2650 = vadd.f32 0.0, %v2649
    %v2651 = vpop.f32.mrb[0].mxu0
    %2652 = vdwg.mxu0
    %2653 = vmatprep.subr.mxu0 0.0
    %2654 = vmatpush1.msra.mxu0 %v2577
    %2655 = vmatprep.subr.mxu0 0.0
    %2656 = vmatpush1.msra.mxu0 %v2578
    %2657 = vmatprep.subr.mxu0 0.0
    %2658 = vmatpush1.msra.mxu0 %v2579
    %2659 = vmatprep.subr.mxu0 0.0
    %2660 = vmatpush1.msra.mxu0 %v2580
    %2661 = vmatprep.subr.mxu0 0.0
    %2662 = vmatpush1.msra.mxu0 0.0
    %2663 = vmatprep.subr.mxu0 0.0
    %2664 = vmatpush1.msra.mxu0 0.0
    %2665 = vmatprep.subr.mxu0 0.0
    %2666 = vmatpush1.msra.mxu0 0.0
    %2667 = vmatprep.subr.mxu0 0.0
    %2668 = vmatpush1.msra.mxu0 0.0
    %2669 = vmatprep.subr.mxu0 0.0
    %2670 = vmatpush1.msra.mxu0 0.0
    %2671 = vmatprep.subr.mxu0 0.0
    %2672 = vmatpush1.msra.mxu0 0.0
    %2673 = vmatprep.subr.mxu0 0.0
    %2674 = vmatpush1.msra.mxu0 0.0
    %2675 = vmatprep.subr.mxu0 0.0
    %2676 = vmatpush1.msra.mxu0 0.0
    %2677 = vmatprep.subr.mxu0 0.0
    %2678 = vmatpush1.msra.mxu0 0.0
    %2679 = vmatprep.subr.mxu0 0.0
    %2680 = vmatpush1.msra.mxu0 0.0
    %2681 = vmatprep.subr.mxu0 0.0
    %2682 = vmatpush1.msra.mxu0 0.0
    %2683 = vmatprep.subr.mxu0 0.0
    %2684 = vmatpush1.msra.mxu0 0.0
    %2685 = vmatprep.subr.mxu0 0.0
    %2686 = vmatpush1.msra.mxu0 0.0
    %2687 = vmatprep.subr.mxu0 0.0
    %2688 = vmatpush1.msra.mxu0 0.0
    %2689 = vmatprep.subr.mxu0 0.0
    %2690 = vmatpush1.msra.mxu0 0.0
    %2691 = vmatprep.subr.mxu0 0.0
    %2692 = vmatpush1.msra.mxu0 0.0
    %2693 = vmatprep.subr.mxu0 0.0
    %2694 = vmatpush1.msra.mxu0 0.0
    %2695 = vmatprep.subr.mxu0 0.0
    %2696 = vmatpush1.msra.mxu0 0.0
    %2697 = vmatprep.subr.mxu0 0.0
    %2698 = vmatpush1.msra.mxu0 0.0
    %2699 = vmatprep.subr.mxu0 0.0
    %2700 = vmatpush1.msra.mxu0 0.0
    %2701 = vmatprep.subr.mxu0 0.0
    %2702 = vmatpush1.msra.mxu0 0.0
    %2703 = vmatprep.subr.mxu0 0.0
    %2704 = vmatpush1.msra.mxu0 0.0
    %2705 = vmatprep.subr.mxu0 0.0
    %2706 = vmatpush1.msra.mxu0 0.0
    %2707 = vmatprep.subr.mxu0 0.0
    %2708 = vmatpush1.msra.mxu0 0.0
    %2709 = vmatprep.subr.mxu0 0.0
    %2710 = vmatpush1.msra.mxu0 0.0
    %2711 = vmatprep.subr.mxu0 0.0
    %2712 = vmatpush1.msra.mxu0 0.0
    %2713 = vmatprep.subr.mxu0 0.0
    %2714 = vmatpush1.msra.mxu0 0.0
    %2715 = vmatprep.subr.mxu0 0.0
    %2716 = vmatpush1.msra.mxu0 0.0
    %2717 = vmatprep.mubr.f32.mxu0 0.0
    %2718 = vmatmul.mubr.f32.gmra.mrb[0].mxu0 %v2405
    %v2719 = vpop.f32.mrb[0].mxu0
    %v2720 = vadd.f32 %v2650, %v2719
    %v2721 = vpop.f32.mrb[0].mxu0
    %2722 = vdwg.mxu0
    %v2723 = vadd.f32 %v2720, %v1508
    %v2724 = vld [vmem:[#allocation2 + $0x2f0] sm:$0xff]
    %v2725 = vld [vmem:[#allocation2 + $0x2f8] sm:$0xff]
    %v2726 = vld [vmem:[#allocation2 + $0x300] sm:$0xff]
    %v2727 = vld [vmem:[#allocation2 + $0x308] sm:$0xff]
    %v2728 = vld [vmem:[#allocation2 + $0x310] sm:$0xff]
    %v2729 = vld [vmem:[#allocation2 + $0x318] sm:$0xff]
    %v2730 = vld [vmem:[#allocation2 + $0x320] sm:$0xff]
    %v2731 = vld [vmem:[#allocation2 + $0x328] sm:$0xff]
    %2733 = vrot.lane.b32.xlu0 %v2576, 32
    %v2734 = vpop.permute.xlu0 %2733
    %v2735 = vsel %vm472, %v2734, 0
    %2737 = vmatprep.subr.mxu0 0.0
    %2738 = vmatpush1.msra.mxu0 %v2728
    %2739 = vmatprep.subr.mxu0 0.0
    %2740 = vmatpush1.msra.mxu0 %v2729
    %2741 = vmatprep.subr.mxu0 0.0
    %2742 = vmatpush1.msra.mxu0 %v2730
    %2743 = vmatprep.subr.mxu0 0.0
    %2744 = vmatpush1.msra.mxu0 %v2731
    %2745 = vmatprep.subr.mxu0 0.0
    %2746 = vmatpush1.msra.mxu0 0.0
    %2747 = vmatprep.subr.mxu0 0.0
    %2748 = vmatpush1.msra.mxu0 0.0
    %2749 = vmatprep.subr.mxu0 0.0
    %2750 = vmatpush1.msra.mxu0 0.0
    %2751 = vmatprep.subr.mxu0 0.0
    %2752 = vmatpush1.msra.mxu0 0.0
    %2753 = vmatprep.subr.mxu0 0.0
    %2754 = vmatpush1.msra.mxu0 0.0
    %2755 = vmatprep.subr.mxu0 0.0
    %2756 = vmatpush1.msra.mxu0 0.0
    %2757 = vmatprep.subr.mxu0 0.0
    %2758 = vmatpush1.msra.mxu0 0.0
    %2759 = vmatprep.subr.mxu0 0.0
    %2760 = vmatpush1.msra.mxu0 0.0
    %2761 = vmatprep.subr.mxu0 0.0
    %2762 = vmatpush1.msra.mxu0 0.0
    %2763 = vmatprep.subr.mxu0 0.0
    %2764 = vmatpush1.msra.mxu0 0.0
    %2765 = vmatprep.subr.mxu0 0.0
    %2766 = vmatpush1.msra.mxu0 0.0
    %2767 = vmatprep.subr.mxu0 0.0
    %2768 = vmatpush1.msra.mxu0 0.0
    %2769 = vmatprep.subr.mxu0 0.0
    %2770 = vmatpush1.msra.mxu0 0.0
    %2771 = vmatprep.subr.mxu0 0.0
    %2772 = vmatpush1.msra.mxu0 0.0
    %2773 = vmatprep.subr.mxu0 0.0
    %2774 = vmatpush1.msra.mxu0 0.0
    %2775 = vmatprep.subr.mxu0 0.0
    %2776 = vmatpush1.msra.mxu0 0.0
    %2777 = vmatprep.subr.mxu0 0.0
    %2778 = vmatpush1.msra.mxu0 0.0
    %2779 = vmatprep.subr.mxu0 0.0
    %2780 = vmatpush1.msra.mxu0 0.0
    %2781 = vmatprep.subr.mxu0 0.0
    %2782 = vmatpush1.msra.mxu0 0.0
    %2783 = vmatprep.subr.mxu0 0.0
    %2784 = vmatpush1.msra.mxu0 0.0
    %2785 = vmatprep.subr.mxu0 0.0
    %2786 = vmatpush1.msra.mxu0 0.0
    %2787 = vmatprep.subr.mxu0 0.0
    %2788 = vmatpush1.msra.mxu0 0.0
    %2789 = vmatprep.subr.mxu0 0.0
    %2790 = vmatpush1.msra.mxu0 0.0
    %2791 = vmatprep.subr.mxu0 0.0
    %2792 = vmatpush1.msra.mxu0 0.0
    %2793 = vmatprep.subr.mxu0 0.0
    %2794 = vmatpush1.msra.mxu0 0.0
    %2795 = vmatprep.subr.mxu0 0.0
    %2796 = vmatpush1.msra.mxu0 0.0
    %2797 = vmatprep.subr.mxu0 0.0
    %2798 = vmatpush1.msra.mxu0 0.0
    %2799 = vmatprep.subr.mxu0 0.0
    %2800 = vmatpush1.msra.mxu0 0.0
    %2801 = vmatprep.mubr.f32.mxu0 0.0
    %2802 = vmatmul.mubr.f32.gmra.mrb[0].mxu0 %v2735
    %v2803 = vpop.f32.mrb[0].mxu0
    %v2804 = vadd.f32 0.0, %v2803
    %v2805 = vpop.f32.mrb[0].mxu0
    %2806 = vdwg.mxu0
    %2807 = vmatprep.subr.mxu0 0.0
    %2808 = vmatpush1.msra.mxu0 %v2724
    %2809 = vmatprep.subr.mxu0 0.0
    %2810 = vmatpush1.msra.mxu0 %v2725
    %2811 = vmatprep.subr.mxu0 0.0
    %2812 = vmatpush1.msra.mxu0 %v2726
    %2813 = vmatprep.subr.mxu0 0.0
    %2814 = vmatpush1.msra.mxu0 %v2727
    %2815 = vmatprep.subr.mxu0 0.0
    %2816 = vmatpush1.msra.mxu0 0.0
    %2817 = vmatprep.subr.mxu0 0.0
    %2818 = vmatpush1.msra.mxu0 0.0
    %2819 = vmatprep.subr.mxu0 0.0
    %2820 = vmatpush1.msra.mxu0 0.0
    %2821 = vmatprep.subr.mxu0 0.0
    %2822 = vmatpush1.msra.mxu0 0.0
    %2823 = vmatprep.subr.mxu0 0.0
    %2824 = vmatpush1.msra.mxu0 0.0
    %2825 = vmatprep.subr.mxu0 0.0
    %2826 = vmatpush1.msra.mxu0 0.0
    %2827 = vmatprep.subr.mxu0 0.0
    %2828 = vmatpush1.msra.mxu0 0.0
    %2829 = vmatprep.subr.mxu0 0.0
    %2830 = vmatpush1.msra.mxu0 0.0
    %2831 = vmatprep.subr.mxu0 0.0
    %2832 = vmatpush1.msra.mxu0 0.0
    %2833 = vmatprep.subr.mxu0 0.0
    %2834 = vmatpush1.msra.mxu0 0.0
    %2835 = vmatprep.subr.mxu0 0.0
    %2836 = vmatpush1.msra.mxu0 0.0
    %2837 = vmatprep.subr.mxu0 0.0
    %2838 = vmatpush1.msra.mxu0 0.0
    %2839 = vmatprep.subr.mxu0 0.0
    %2840 = vmatpush1.msra.mxu0 0.0
    %2841 = vmatprep.subr.mxu0 0.0
    %2842 = vmatpush1.msra.mxu0 0.0
    %2843 = vmatprep.subr.mxu0 0.0
    %2844 = vmatpush1.msra.mxu0 0.0
    %2845 = vmatprep.subr.mxu0 0.0
    %2846 = vmatpush1.msra.mxu0 0.0
    %2847 = vmatprep.subr.mxu0 0.0
    %2848 = vmatpush1.msra.mxu0 0.0
    %2849 = vmatprep.subr.mxu0 0.0
    %2850 = vmatpush1.msra.mxu0 0.0
    %2851 = vmatprep.subr.mxu0 0.0
    %2852 = vmatpush1.msra.mxu0 0.0
    %2853 = vmatprep.subr.mxu0 0.0
    %2854 = vmatpush1.msra.mxu0 0.0
    %2855 = vmatprep.subr.mxu0 0.0
    %2856 = vmatpush1.msra.mxu0 0.0
    %2857 = vmatprep.subr.mxu0 0.0
    %2858 = vmatpush1.msra.mxu0 0.0
    %2859 = vmatprep.subr.mxu0 0.0
    %2860 = vmatpush1.msra.mxu0 0.0
    %2861 = vmatprep.subr.mxu0 0.0
    %2862 = vmatpush1.msra.mxu0 0.0
    %2863 = vmatprep.subr.mxu0 0.0
    %2864 = vmatpush1.msra.mxu0 0.0
    %2865 = vmatprep.subr.mxu0 0.0
    %2866 = vmatpush1.msra.mxu0 0.0
    %2867 = vmatprep.subr.mxu0 0.0
    %2868 = vmatpush1.msra.mxu0 0.0
    %2869 = vmatprep.subr.mxu0 0.0
    %2870 = vmatpush1.msra.mxu0 0.0
    %2871 = vmatprep.mubr.f32.mxu0 0.0
    %2872 = vmatmul.mubr.f32.gmra.mrb[0].mxu0 %v1521
    %v2873 = vpop.f32.mrb[0].mxu0
    %v2874 = vadd.f32 %v2804, %v2873
    %v2875 = vpop.f32.mrb[0].mxu0
    %2876 = vdwg.mxu0
    %v2877 = vld [vmem:[#allocation2 + $0x330] sm:$0xff]
    %v2878 = vld [vmem:[#allocation2 + $0x338] sm:$0xff]
    %v2880 = vsel %vm1105, %v2723, 0
    %2882 = vmatprep.subr.mxu0 0.0
    %2883 = vmatpush1.msra.mxu0 %v2877
    %2884 = vmatprep.subr.mxu0 0.0
    %2885 = vmatpush1.msra.mxu0 %v2878
    %2886 = vmatprep.subr.mxu0 0.0
    %2887 = vmatpush1.msra.mxu0 0.0
    %2888 = vmatprep.subr.mxu0 0.0
    %2889 = vmatpush1.msra.mxu0 0.0
    %2890 = vmatprep.subr.mxu0 0.0
    %2891 = vmatpush1.msra.mxu0 0.0
    %2892 = vmatprep.subr.mxu0 0.0
    %2893 = vmatpush1.msra.mxu0 0.0
    %2894 = vmatprep.subr.mxu0 0.0
    %2895 = vmatpush1.msra.mxu0 0.0
    %2896 = vmatprep.subr.mxu0 0.0
    %2897 = vmatpush1.msra.mxu0 0.0
    %2898 = vmatprep.subr.mxu0 0.0
    %2899 = vmatpush1.msra.mxu0 0.0
    %2900 = vmatprep.subr.mxu0 0.0
    %2901 = vmatpush1.msra.mxu0 0.0
    %2902 = vmatprep.subr.mxu0 0.0
    %2903 = vmatpush1.msra.mxu0 0.0
    %2904 = vmatprep.subr.mxu0 0.0
    %2905 = vmatpush1.msra.mxu0 0.0
    %2906 = vmatprep.subr.mxu0 0.0
    %2907 = vmatpush1.msra.mxu0 0.0
    %2908 = vmatprep.subr.mxu0 0.0
    %2909 = vmatpush1.msra.mxu0 0.0
    %2910 = vmatprep.subr.mxu0 0.0
    %2911 = vmatpush1.msra.mxu0 0.0
    %2912 = vmatprep.subr.mxu0 0.0
    %2913 = vmatpush1.msra.mxu0 0.0
    %2914 = vmatprep.subr.mxu0 0.0
    %2915 = vmatpush1.msra.mxu0 0.0
    %2916 = vmatprep.subr.mxu0 0.0
    %2917 = vmatpush1.msra.mxu0 0.0
    %2918 = vmatprep.subr.mxu0 0.0
    %2919 = vmatpush1.msra.mxu0 0.0
    %2920 = vmatprep.subr.mxu0 0.0
    %2921 = vmatpush1.msra.mxu0 0.0
    %2922 = vmatprep.subr.mxu0 0.0
    %2923 = vmatpush1.msra.mxu0 0.0
    %2924 = vmatprep.subr.mxu0 0.0
    %2925 = vmatpush1.msra.mxu0 0.0
    %2926 = vmatprep.subr.mxu0 0.0
    %2927 = vmatpush1.msra.mxu0 0.0
    %2928 = vmatprep.subr.mxu0 0.0
    %2929 = vmatpush1.msra.mxu0 0.0
    %2930 = vmatprep.subr.mxu0 0.0
    %2931 = vmatpush1.msra.mxu0 0.0
    %2932 = vmatprep.subr.mxu0 0.0
    %2933 = vmatpush1.msra.mxu0 0.0
    %2934 = vmatprep.subr.mxu0 0.0
    %2935 = vmatpush1.msra.mxu0 0.0
    %2936 = vmatprep.subr.mxu0 0.0
    %2937 = vmatpush1.msra.mxu0 0.0
    %2938 = vmatprep.subr.mxu0 0.0
    %2939 = vmatpush1.msra.mxu0 0.0
    %2940 = vmatprep.subr.mxu0 0.0
    %2941 = vmatpush1.msra.mxu0 0.0
    %2942 = vmatprep.subr.mxu0 0.0
    %2943 = vmatpush1.msra.mxu0 0.0
    %2944 = vmatprep.subr.mxu0 0.0
    %2945 = vmatpush1.msra.mxu0 0.0
    %2946 = vmatprep.mubr.f32.mxu0 0.0
    %2947 = vmatmul.mubr.f32.gmra.mrb[0].mxu0 %v2880
    %v2948 = vpop.f32.mrb[0].mxu0
    %v2949 = vadd.f32 0.0, %v2948
    %v2950 = vpop.f32.mrb[0].mxu0
    %2951 = vdwg.mxu0
    %v2952 = vadd.f32 %v2874, %v2949
    %v2953 = vadd.f32 %v2952, %v1742
    %v2954 = vtanh.pop %v2953
    %v2956 = vsel %vm1749, %v2953, 0
    %2958 = vmatprep.subr.mxu0 0.0
    %2959 = vmatpush1.msra.mxu0 %v587
    %2960 = vmatprep.subr.mxu0 0.0
    %2961 = vmatpush1.msra.mxu0 %v1754
    %2962 = vmatprep.subr.mxu0 0.0
    %2963 = vmatpush1.msra.mxu0 0.0
    %2964 = vmatprep.subr.mxu0 0.0
    %2965 = vmatpush1.msra.mxu0 0.0
    %2966 = vmatprep.subr.mxu0 0.0
    %2967 = vmatpush1.msra.mxu0 0.0
    %2968 = vmatprep.subr.mxu0 0.0
    %2969 = vmatpush1.msra.mxu0 0.0
    %2970 = vmatprep.subr.mxu0 0.0
    %2971 = vmatpush1.msra.mxu0 0.0
    %2972 = vmatprep.subr.mxu0 0.0
    %2973 = vmatpush1.msra.mxu0 0.0
    %2974 = vmatprep.subr.mxu0 0.0
    %2975 = vmatpush1.msra.mxu0 0.0
    %2976 = vmatprep.subr.mxu0 0.0
    %2977 = vmatpush1.msra.mxu0 0.0
    %2978 = vmatprep.subr.mxu0 0.0
    %2979 = vmatpush1.msra.mxu0 0.0
    %2980 = vmatprep.subr.mxu0 0.0
    %2981 = vmatpush1.msra.mxu0 0.0
    %2982 = vmatprep.subr.mxu0 0.0
    %2983 = vmatpush1.msra.mxu0 0.0
    %2984 = vmatprep.subr.mxu0 0.0
    %2985 = vmatpush1.msra.mxu0 0.0
    %2986 = vmatprep.subr.mxu0 0.0
    %2987 = vmatpush1.msra.mxu0 0.0
    %2988 = vmatprep.subr.mxu0 0.0
    %2989 = vmatpush1.msra.mxu0 0.0
    %2990 = vmatprep.subr.mxu0 0.0
    %2991 = vmatpush1.msra.mxu0 0.0
    %2992 = vmatprep.subr.mxu0 0.0
    %2993 = vmatpush1.msra.mxu0 0.0
    %2994 = vmatprep.subr.mxu0 0.0
    %2995 = vmatpush1.msra.mxu0 0.0
    %2996 = vmatprep.subr.mxu0 0.0
    %2997 = vmatpush1.msra.mxu0 0.0
    %2998 = vmatprep.subr.mxu0 0.0
    %2999 = vmatpush1.msra.mxu0 0.0
    %3000 = vmatprep.subr.mxu0 0.0
    %3001 = vmatpush1.msra.mxu0 0.0
    %3002 = vmatprep.subr.mxu0 0.0
    %3003 = vmatpush1.msra.mxu0 0.0
    %3004 = vmatprep.subr.mxu0 0.0
    %3005 = vmatpush1.msra.mxu0 0.0
    %3006 = vmatprep.subr.mxu0 0.0
    %3007 = vmatpush1.msra.mxu0 0.0
    %3008 = vmatprep.subr.mxu0 0.0
    %3009 = vmatpush1.msra.mxu0 0.0
    %3010 = vmatprep.subr.mxu0 0.0
    %3011 = vmatpush1.msra.mxu0 0.0
    %3012 = vmatprep.subr.mxu0 0.0
    %3013 = vmatpush1.msra.mxu0 0.0
    %3014 = vmatprep.subr.mxu0 0.0
    %3015 = vmatpush1.msra.mxu0 0.0
    %3016 = vmatprep.subr.mxu0 0.0
    %3017 = vmatpush1.msra.mxu0 0.0
    %3018 = vmatprep.subr.mxu0 0.0
    %3019 = vmatpush1.msra.mxu0 0.0
    %3020 = vmatprep.subr.mxu0 0.0
    %3021 = vmatpush1.msra.mxu0 0.0
    %3022 = vmatprep.mubr.f32.mxu0 0.0
    %3023 = vmatmul.mubr.f32.gmra.mrb[0].mxu0 %v2956
    %v3024 = vpop.f32.mrb[0].mxu0
    %v3025 = vadd.f32 %v1748, %v3024
    %v3026 = vpop.f32.mrb[0].mxu0
    %3027 = vdwg.mxu0
    %v3028 = vtanh.pop %v3025
    %v3029 = vsel %vm1827, %v3028, -inf
    %3030 = vmax.xlane.f32.xlu0 %v3029
    %v3031 = vpop.xlane.xlu0 %3030
    %v3032 = vsub.f32 %v3028, %v3031
    %v3033 = vmul.f32 %v3032, 1.442695
    %v3034 = vpow.pop %v3033
    %v3035 = vsel %vm1827, %v3034, 0.0
    %3036 = vadd.xlane.f32.xlu0 %v3035
    %v3037 = vpop.xlane.xlu0 %3036
    %v3038 = vrcp.pop %v3037
    %v3039 = vmul.f32 %v3034, %v3038
    %3041 = vrot.lane.b32.xlu0 %v2954, 118
    %v3042 = vpop.permute.xlu0 %3041
    %3044 = vst.msk [vmem:[%s4 + $0x2] sm:$0x3] %vm1843, %v3042
    %3046 = vrot.lane.b32.xlu0 %v3039, 12
    %v3047 = vpop.permute.xlu0 %3046
    %3049 = vst.msk [vmem:[%s4 + $0x2] sm:$0x3] %vm1849, %v3047
    %3050 = vmatprep.subr.mxu0 0.0
    %3051 = vmatpush1.msra.mxu0 %v570
    %3052 = vmatprep.subr.mxu0 0.0
    %3053 = vmatpush1.msra.mxu0 %v571
    %3054 = vmatprep.subr.mxu0 0.0
    %3055 = vmatpush1.msra.mxu0 %v572
    %3056 = vmatprep.subr.mxu0 0.0
    %3057 = vmatpush1.msra.mxu0 %v573
    %3058 = vmatprep.subr.mxu0 0.0
    %3059 = vmatpush1.msra.mxu0 0.0
    %3060 = vmatprep.subr.mxu0 0.0
    %3061 = vmatpush1.msra.mxu0 0.0
    %3062 = vmatprep.subr.mxu0 0.0
    %3063 = vmatpush1.msra.mxu0 0.0
    %3064 = vmatprep.subr.mxu0 0.0
    %3065 = vmatpush1.msra.mxu0 0.0
    %3066 = vmatprep.subr.mxu0 0.0
    %3067 = vmatpush1.msra.mxu0 0.0
    %3068 = vmatprep.subr.mxu0 0.0
    %3069 = vmatpush1.msra.mxu0 0.0
    %3070 = vmatprep.subr.mxu0 0.0
    %3071 = vmatpush1.msra.mxu0 0.0
    %3072 = vmatprep.subr.mxu0 0.0
    %3073 = vmatpush1.msra.mxu0 0.0
    %3074 = vmatprep.subr.mxu0 0.0
    %3075 = vmatpush1.msra.mxu0 0.0
    %3076 = vmatprep.subr.mxu0 0.0
    %3077 = vmatpush1.msra.mxu0 0.0
    %3078 = vmatprep.subr.mxu0 0.0
    %3079 = vmatpush1.msra.mxu0 0.0
    %3080 = vmatprep.subr.mxu0 0.0
    %3081 = vmatpush1.msra.mxu0 0.0
    %3082 = vmatprep.subr.mxu0 0.0
    %3083 = vmatpush1.msra.mxu0 0.0
    %3084 = vmatprep.subr.mxu0 0.0
    %3085 = vmatpush1.msra.mxu0 0.0
    %3086 = vmatprep.subr.mxu0 0.0
    %3087 = vmatpush1.msra.mxu0 0.0
    %3088 = vmatprep.subr.mxu0 0.0
    %3089 = vmatpush1.msra.mxu0 0.0
    %3090 = vmatprep.subr.mxu0 0.0
    %3091 = vmatpush1.msra.mxu0 0.0
    %3092 = vmatprep.subr.mxu0 0.0
    %3093 = vmatpush1.msra.mxu0 0.0
    %3094 = vmatprep.subr.mxu0 0.0
    %3095 = vmatpush1.msra.mxu0 0.0
    %3096 = vmatprep.subr.mxu0 0.0
    %3097 = vmatpush1.msra.mxu0 0.0
    %3098 = vmatprep.subr.mxu0 0.0
    %3099 = vmatpush1.msra.mxu0 0.0
    %3100 = vmatprep.subr.mxu0 0.0
    %3101 = vmatpush1.msra.mxu0 0.0
    %3102 = vmatprep.subr.mxu0 0.0
    %3103 = vmatpush1.msra.mxu0 0.0
    %3104 = vmatprep.subr.mxu0 0.0
    %3105 = vmatpush1.msra.mxu0 0.0
    %3106 = vmatprep.subr.mxu0 0.0
    %3107 = vmatpush1.msra.mxu0 0.0
    %3108 = vmatprep.subr.mxu0 0.0
    %3109 = vmatpush1.msra.mxu0 0.0
    %3110 = vmatprep.subr.mxu0 0.0
    %3111 = vmatpush1.msra.mxu0 0.0
    %3112 = vmatprep.subr.mxu0 0.0
    %3113 = vmatpush1.msra.mxu0 0.0
    %3114 = vmatprep.mubr.f32.mxu0 0.0
    %3115 = vmatmul.mubr.f32.gmra.mrb[0].mxu0 %v2735
    %v3116 = vpop.f32.mrb[0].mxu0
    %v3117 = vadd.f32 %v593, %v3116
    %v3118 = vpop.f32.mrb[0].mxu0
    %3119 = vdwg.mxu0
    %3120 = vmatprep.subr.mxu0 0.0
    %3121 = vmatpush1.msra.mxu0 %v575
    %3122 = vmatprep.subr.mxu0 0.0
    %3123 = vmatpush1.msra.mxu0 %v576
    %3124 = vmatprep.subr.mxu0 0.0
    %3125 = vmatpush1.msra.mxu0 %v577
    %3126 = vmatprep.subr.mxu0 0.0
    %3127 = vmatpush1.msra.mxu0 %v578
    %3128 = vmatprep.subr.mxu0 0.0
    %3129 = vmatpush1.msra.mxu0 0.0
    %3130 = vmatprep.subr.mxu0 0.0
    %3131 = vmatpush1.msra.mxu0 0.0
    %3132 = vmatprep.subr.mxu0 0.0
    %3133 = vmatpush1.msra.mxu0 0.0
    %3134 = vmatprep.subr.mxu0 0.0
    %3135 = vmatpush1.msra.mxu0 0.0
    %3136 = vmatprep.subr.mxu0 0.0
    %3137 = vmatpush1.msra.mxu0 0.0
    %3138 = vmatprep.subr.mxu0 0.0
    %3139 = vmatpush1.msra.mxu0 0.0
    %3140 = vmatprep.subr.mxu0 0.0
    %3141 = vmatpush1.msra.mxu0 0.0
    %3142 = vmatprep.subr.mxu0 0.0
    %3143 = vmatpush1.msra.mxu0 0.0
    %3144 = vmatprep.subr.mxu0 0.0
    %3145 = vmatpush1.msra.mxu0 0.0
    %3146 = vmatprep.subr.mxu0 0.0
    %3147 = vmatpush1.msra.mxu0 0.0
    %3148 = vmatprep.subr.mxu0 0.0
    %3149 = vmatpush1.msra.mxu0 0.0
    %3150 = vmatprep.subr.mxu0 0.0
    %3151 = vmatpush1.msra.mxu0 0.0
    %3152 = vmatprep.subr.mxu0 0.0
    %3153 = vmatpush1.msra.mxu0 0.0
    %3154 = vmatprep.subr.mxu0 0.0
    %3155 = vmatpush1.msra.mxu0 0.0
    %3156 = vmatprep.subr.mxu0 0.0
    %3157 = vmatpush1.msra.mxu0 0.0
    %3158 = vmatprep.subr.mxu0 0.0
    %3159 = vmatpush1.msra.mxu0 0.0
    %3160 = vmatprep.subr.mxu0 0.0
    %3161 = vmatpush1.msra.mxu0 0.0
    %3162 = vmatprep.subr.mxu0 0.0
    %3163 = vmatpush1.msra.mxu0 0.0
    %3164 = vmatprep.subr.mxu0 0.0
    %3165 = vmatpush1.msra.mxu0 0.0
    %3166 = vmatprep.subr.mxu0 0.0
    %3167 = vmatpush1.msra.mxu0 0.0
    %3168 = vmatprep.subr.mxu0 0.0
    %3169 = vmatpush1.msra.mxu0 0.0
    %3170 = vmatprep.subr.mxu0 0.0
    %3171 = vmatpush1.msra.mxu0 0.0
    %3172 = vmatprep.subr.mxu0 0.0
    %3173 = vmatpush1.msra.mxu0 0.0
    %3174 = vmatprep.subr.mxu0 0.0
    %3175 = vmatpush1.msra.mxu0 0.0
    %3176 = vmatprep.subr.mxu0 0.0
    %3177 = vmatpush1.msra.mxu0 0.0
    %3178 = vmatprep.subr.mxu0 0.0
    %3179 = vmatpush1.msra.mxu0 0.0
    %3180 = vmatprep.subr.mxu0 0.0
    %3181 = vmatpush1.msra.mxu0 0.0
    %3182 = vmatprep.subr.mxu0 0.0
    %3183 = vmatpush1.msra.mxu0 0.0
    %3184 = vmatprep.mubr.f32.mxu0 0.0
    %3185 = vmatmul.mubr.f32.gmra.mrb[0].mxu0 %v2735
    %v3186 = vpop.f32.mrb[0].mxu0
    %v3187 = vadd.f32 %v670, %v3186
    %v3188 = vpop.f32.mrb[0].mxu0
    %3189 = vdwg.mxu0
    %v3192 = vunpack.c.l.s4 1966171168
    %v3193 = vunpack.c.0.s8 %v3192
    %v3194 = vlaneseq
    %v3195 = vshrl.u32 %v3194, 7
    %v3196 = vsub.s32 %v3193, %v3195
    %v3197 = vrot.slane %v3117, %v3196
    %v3198 = vcombine.high %v3197, %v3197
    %v3200 = vunpack.c.l.s4 1966171168
    %v3201 = vunpack.c.0.s8 %v3200
    %v3202 = vlaneseq
    %v3203 = vshrl.u32 %v3202, 7
    %v3204 = vsub.s32 %v3201, %v3203
    %v3205 = vrot.slane %v3197, %v3204
    %v3207 = vunpack.c.l.s4 1966171168
    %v3208 = vunpack.c.0.s8 %v3207
    %v3209 = vlaneseq
    %v3210 = vshrl.u32 %v3209, 7
    %v3211 = vsub.s32 %v3208, %v3210
    %v3212 = vrot.slane %v3198, %v3211
    %v3213 = vlaneseq
    %v3214 = vshrl.u32 %v3213, 7
    %v3215 = vsub.s32 0, %v3214
    %v3216 = vrot.slane %v3205, %v3215
    %v3217 = vlaneseq
    %v3218 = vshrl.u32 %v3217, 7
    %v3219 = vsub.s32 0, %v3218
    %v3220 = vrot.slane %v3212, %v3219
    %v3223 = vadd.f32 %v552, %v3216
    %v3224 = vadd.f32 %v557, %v3216
    %v3225 = vadd.f32 %v562, %v3220
    %v3226 = vadd.f32 %v567, %v3220
    %v3227 = vtanh.pop %v3223
    %v3228 = vtanh.pop %v3224
    %v3229 = vtanh.pop %v3225
    %v3230 = vtanh.pop %v3226
    %v3231 = vmul.f32 %v3227, %v785
    %v3232 = vmul.f32 %v3228, %v785
    %v3233 = vmul.f32 %v3229, %v785
    %v3234 = vmul.f32 %v3230, %v785
    %v3235 = vsel %vm790, %v3231, 0.0
    %3236 = vadd.xlane.f32.xlu0 %v3235
    %v3237 = vpop.xlane.xlu0 %3236
    %v3238 = vsel %vm790, %v3232, 0.0
    %3239 = vadd.xlane.f32.xlu0 %v3238
    %v3240 = vpop.xlane.xlu0 %3239
    %v3241 = vsel %vm790, %v3233, 0.0
    %3242 = vadd.xlane.f32.xlu0 %v3241
    %v3243 = vpop.xlane.xlu0 %3242
    %v3244 = vsel %vm790, %v3234, 0.0
    %3245 = vadd.xlane.f32.xlu0 %v3244
    %v3246 = vpop.xlane.xlu0 %3245
    %v3247 = vadd.f32 %v3237, %v806
    %v3248 = vadd.f32 %v3240, %v806
    %v3249 = vadd.f32 %v3243, %v806
    %v3250 = vadd.f32 %v3246, %v806
    %v3251 = vsel %vm811, %v3247, -inf
    %v3252 = vsel %vm811, %v3248, -inf
    %v3253 = vmax.f32 %v3251, %v3252
    %v3254 = vrot.slane %v3253, 4
    %v3255 = vmax.f32 %v3253, %v3254
    %v3256 = vrot.slane %v3255, 2
    %v3257 = vmax.f32 %v3255, %v3256
    %v3258 = vrot.slane %v3257, 1
    %v3259 = vmax.f32 %v3257, %v3258
    %v3260 = vsel %vm811, %v3249, -inf
    %v3261 = vsel %vm811, %v3250, -inf
    %v3262 = vmax.f32 %v3260, %v3261
    %v3263 = vrot.slane %v3262, 4
    %v3264 = vmax.f32 %v3262, %v3263
    %v3265 = vrot.slane %v3264, 2
    %v3266 = vmax.f32 %v3264, %v3265
    %v3267 = vrot.slane %v3266, 1
    %v3268 = vmax.f32 %v3266, %v3267
    %v3269 = vsub.f32 %v3247, %v3259
    %v3270 = vsub.f32 %v3248, %v3259
    %v3271 = vsub.f32 %v3249, %v3268
    %v3272 = vsub.f32 %v3250, %v3268
    %v3273 = vmul.f32 %v3269, 1.442695
    %v3274 = vpow.pop %v3273
    %v3275 = vmul.f32 %v3270, 1.442695
    %v3276 = vpow.pop %v3275
    %v3277 = vmul.f32 %v3271, 1.442695
    %v3278 = vpow.pop %v3277
    %v3279 = vmul.f32 %v3272, 1.442695
    %v3280 = vpow.pop %v3279
    %v3281 = vsel %vm811, %v3274, 0.0
    %v3282 = vsel %vm811, %v3276, 0.0
    %v3283 = vadd.f32 %v3281, %v3282
    %v3284 = vrot.slane %v3283, 4
    %v3285 = vadd.f32 %v3283, %v3284
    %v3286 = vrot.slane %v3285, 2
    %v3287 = vadd.f32 %v3285, %v3286
    %v3288 = vrot.slane %v3287, 1
    %v3289 = vadd.f32 %v3287, %v3288
    %v3290 = vsel %vm811, %v3278, 0.0
    %v3291 = vsel %vm811, %v3280, 0.0
    %v3292 = vadd.f32 %v3290, %v3291
    %v3293 = vrot.slane %v3292, 4
    %v3294 = vadd.f32 %v3292, %v3293
    %v3295 = vrot.slane %v3294, 2
    %v3296 = vadd.f32 %v3294, %v3295
    %v3297 = vrot.slane %v3296, 1
    %v3298 = vadd.f32 %v3296, %v3297
    %v3299 = vrcp.pop %v3289
    %v3300 = vrcp.pop %v3298
    %v3301 = vmul.f32 %v3274, %v3299
    %v3302 = vmul.f32 %v3276, %v3299
    %v3303 = vmul.f32 %v3278, %v3300
    %v3304 = vmul.f32 %v3280, %v3300
    %3306 = vset.pattern.permute.xlu0 0
    %3307 = vperm.xlu0 %3306, %v3301
    %v3308 = vpop.permute.xlu0 %3307
    %3311 = vset.pattern.permute.xlu0 0
    %3312 = vperm.xlu0 %3311, %v3302
    %v3313 = vpop.permute.xlu0 %3312
    %3316 = vset.pattern.permute.xlu0 0
    %3317 = vperm.xlu0 %3316, %v3303
    %v3318 = vpop.permute.xlu0 %3317
    %3321 = vset.pattern.permute.xlu0 0
    %3322 = vperm.xlu0 %3321, %v3304
    %v3323 = vpop.permute.xlu0 %3322
    %v3325 = vmul.f32 %v46, %v3308
    %v3326 = vmul.f32 %v47, %v3313
    %v3327 = vmul.f32 %v48, %v3318
    %v3328 = vmul.f32 %v49, %v3323
    %v3329 = vsel %vm472, %v3325, 0.0
    %v3330 = vsel %vm472, %v3326, 0.0
    %v3331 = vadd.f32 %v3329, %v3330
    %v3332 = vrot.slane %v3331, 4
    %v3333 = vadd.f32 %v3331, %v3332
    %v3334 = vrot.slane %v3333, 2
    %v3335 = vadd.f32 %v3333, %v3334
    %v3336 = vrot.slane %v3335, 1
    %v3337 = vadd.f32 %v3335, %v3336
    %v3338 = vsel %vm472, %v3327, 0.0
    %v3339 = vsel %vm472, %v3328, 0.0
    %v3340 = vadd.f32 %v3338, %v3339
    %v3341 = vrot.slane %v3340, 4
    %v3342 = vadd.f32 %v3340, %v3341
    %v3343 = vrot.slane %v3342, 2
    %v3344 = vadd.f32 %v3342, %v3343
    %v3345 = vrot.slane %v3344, 1
    %v3346 = vadd.f32 %v3344, %v3345
    %3348 = vrot.lane.b32.xlu0 %v3187, 16
    %v3349 = vpop.permute.xlu0 %3348
    %v3351 = vadd.f32 %v455, %v3349
    %v3352 = vtanh.pop %v3351
    %v3353 = vmul.f32 %v3352, %v920
    %3355 = vrot.lane.b32.xlu0 %v3353, 112
    %v3356 = vpop.permute.xlu0 %3355
    %v3358 = vsel %vm927, %v3356, 0.0
    %3359 = vadd.xlane.f32.xlu0 %v3358
    %v3360 = vpop.xlane.xlu0 %3359
    %v3361 = vadd.f32 %v3360, %v934
    %v3362 = vrot.slane %v3187, 6
    %3363 = vrot.lane.b32.xlu0 %v3362, 16
    %v3364 = vpop.permute.xlu0 %3363
    %v3366 = vadd.f32 %v455, %v3364
    %v3367 = vtanh.pop %v3366
    %v3368 = vmul.f32 %v3367, %v920
    %3370 = vrot.lane.b32.xlu0 %v3368, 112
    %v3371 = vpop.permute.xlu0 %3370
    %v3373 = vsel %vm947, %v3371, 0.0
    %3374 = vadd.xlane.f32.xlu0 %v3373
    %v3375 = vpop.xlane.xlu0 %3374
    %v3376 = vadd.f32 %v3375, %v934
    %v3377 = vrot.slane %v3187, 4
    %3378 = vrot.lane.b32.xlu0 %v3377, 16
    %v3379 = vpop.permute.xlu0 %3378
    %v3381 = vadd.f32 %v455, %v3379
    %v3382 = vtanh.pop %v3381
    %v3383 = vmul.f32 %v3382, %v920
    %3385 = vrot.lane.b32.xlu0 %v3383, 112
    %v3386 = vpop.permute.xlu0 %3385
    %v3388 = vsel %vm963, %v3386, 0.0
    %3389 = vadd.xlane.f32.xlu0 %v3388
    %v3390 = vpop.xlane.xlu0 %3389
    %v3391 = vadd.f32 %v3390, %v934
    %v3392 = vrot.slane %v3187, 2
    %3393 = vrot.lane.b32.xlu0 %v3392, 16
    %v3394 = vpop.permute.xlu0 %3393
    %v3396 = vadd.f32 %v455, %v3394
    %v3397 = vtanh.pop %v3396
    %v3398 = vmul.f32 %v3397, %v920
    %3400 = vrot.lane.b32.xlu0 %v3398, 112
    %v3401 = vpop.permute.xlu0 %3400
    %v3403 = vsel %vm979, %v3401, 0.0
    %3404 = vadd.xlane.f32.xlu0 %v3403
    %v3405 = vpop.xlane.xlu0 %3404
    %v3406 = vadd.f32 %v3405, %v934
    %v3407 = vadd.f32 %v460, %v3349
    %v3408 = vtanh.pop %v3407
    %v3409 = vmul.f32 %v3408, %v920
    %3411 = vrot.lane.b32.xlu0 %v3409, 112
    %v3412 = vpop.permute.xlu0 %3411
    %v3414 = vsel %vm927, %v3412, 0.0
    %3415 = vadd.xlane.f32.xlu0 %v3414
    %v3416 = vpop.xlane.xlu0 %3415
    %v3417 = vadd.f32 %v3416, %v934
    %v3419 = vrot.slane %v3376, 2
    %v3421 = vmax.f32 %v3361, %v3419
    %v3423 = vrot.slane %v3391, 4
    %v3425 = vmax.f32 %v3421, %v3423
    %v3427 = vrot.slane %v3406, 6
    %v3429 = vmax.f32 %v3425, %v3427
    %v3430 = vmax.f32 %v3429, %v3417
    %v3431 = vsub.f32 %v3361, %v3430
    %v3432 = vmul.f32 %v3431, 1.442695
    %v3433 = vpow.pop %v3432
    %v3435 = vrot.slane %v3430, 6
    %v3437 = vsub.f32 %v3376, %v3435
    %v3438 = vmul.f32 %v3437, 1.442695
    %v3439 = vpow.pop %v3438
    %v3440 = vrot.slane %v3430, 4
    %v3442 = vsub.f32 %v3391, %v3440
    %v3443 = vmul.f32 %v3442, 1.442695
    %v3444 = vpow.pop %v3443
    %v3445 = vrot.slane %v3430, 2
    %v3447 = vsub.f32 %v3406, %v3445
    %v3448 = vmul.f32 %v3447, 1.442695
    %v3449 = vpow.pop %v3448
    %v3450 = vsub.f32 %v3417, %v3430
    %v3451 = vmul.f32 %v3450, 1.442695
    %v3452 = vpow.pop %v3451
    %v3454 = vrot.slane %v3439, 2
    %v3456 = vadd.f32 %v3433, %v3454
    %v3458 = vrot.slane %v3444, 4
    %v3460 = vadd.f32 %v3456, %v3458
    %v3462 = vrot.slane %v3449, 6
    %v3464 = vadd.f32 %v3460, %v3462
    %v3465 = vadd.f32 %v3464, %v3452
    %v3466 = vrcp.pop %v3465
    %v3467 = vmul.f32 %v3433, %v3466
    %3469 = vset.pattern.permute.xlu0 0
    %3470 = vperm.xlu0 %3469, %v3467
    %v3471 = vpop.permute.xlu0 %3470
    %v3473 = vmul.f32 %v3471, %v455
    %v3475 = vrot.slane %v3466, 6
    %v3477 = vmul.f32 %v3439, %v3475
    %3479 = vset.pattern.permute.xlu0 0
    %3480 = vperm.xlu0 %3479, %v3477
    %v3481 = vpop.permute.xlu0 %3480
    %v3483 = vmul.f32 %v3481, %v455
    %v3485 = vrot.slane %v3483, 2
    %v3487 = vadd.f32 %v3473, %v3485
    %v3488 = vrot.slane %v3466, 4
    %v3490 = vmul.f32 %v3444, %v3488
    %3492 = vset.pattern.permute.xlu0 0
    %3493 = vperm.xlu0 %3492, %v3490
    %v3494 = vpop.permute.xlu0 %3493
    %v3496 = vmul.f32 %v3494, %v455
    %v3498 = vrot.slane %v3496, 4
    %v3500 = vadd.f32 %v3487, %v3498
    %v3501 = vrot.slane %v3466, 2
    %v3503 = vmul.f32 %v3449, %v3501
    %3505 = vset.pattern.permute.xlu0 0
    %3506 = vperm.xlu0 %3505, %v3503
    %v3507 = vpop.permute.xlu0 %3506
    %v3509 = vmul.f32 %v3507, %v455
    %v3511 = vrot.slane %v3509, 6
    %v3513 = vadd.f32 %v3500, %v3511
    %v3514 = vmul.f32 %v3452, %v3466
    %3516 = vset.pattern.permute.xlu0 0
    %3517 = vperm.xlu0 %3516, %v3514
    %v3518 = vpop.permute.xlu0 %3517
    %v3520 = vmul.f32 %v3518, %v460
    %v3521 = vadd.f32 %v3513, %v3520
    %v3522 = vld [vmem:[#allocation2 + $0x2a0] sm:$0xff]
    %v3523 = vld [vmem:[#allocation2 + $0x2a8] sm:$0xff]
    %v3524 = vld [vmem:[#allocation2 + $0x2b0] sm:$0xff]
    %v3525 = vld [vmem:[#allocation2 + $0x2b8] sm:$0xff]
    %v3526 = vld [vmem:[#allocation2 + $0x2c0] sm:$0xff]
    %v3527 = vld [vmem:[#allocation2 + $0x2c8] sm:$0xff]
    %v3529 = vsel %vm1105, %v3521, 0
    %3531 = vmatprep.subr.mxu0 0.0
    %3532 = vmatpush1.msra.mxu0 %v3526
    %3533 = vmatprep.subr.mxu0 0.0
    %3534 = vmatpush1.msra.mxu0 %v3527
    %3535 = vmatprep.subr.mxu0 0.0
    %3536 = vmatpush1.msra.mxu0 0.0
    %3537 = vmatprep.subr.mxu0 0.0
    %3538 = vmatpush1.msra.mxu0 0.0
    %3539 = vmatprep.subr.mxu0 0.0
    %3540 = vmatpush1.msra.mxu0 0.0
    %3541 = vmatprep.subr.mxu0 0.0
    %3542 = vmatpush1.msra.mxu0 0.0
    %3543 = vmatprep.subr.mxu0 0.0
    %3544 = vmatpush1.msra.mxu0 0.0
    %3545 = vmatprep.subr.mxu0 0.0
    %3546 = vmatpush1.msra.mxu0 0.0
    %3547 = vmatprep.subr.mxu0 0.0
    %3548 = vmatpush1.msra.mxu0 0.0
    %3549 = vmatprep.subr.mxu0 0.0
    %3550 = vmatpush1.msra.mxu0 0.0
    %3551 = vmatprep.subr.mxu0 0.0
    %3552 = vmatpush1.msra.mxu0 0.0
    %3553 = vmatprep.subr.mxu0 0.0
    %3554 = vmatpush1.msra.mxu0 0.0
    %3555 = vmatprep.subr.mxu0 0.0
    %3556 = vmatpush1.msra.mxu0 0.0
    %3557 = vmatprep.subr.mxu0 0.0
    %3558 = vmatpush1.msra.mxu0 0.0
    %3559 = vmatprep.subr.mxu0 0.0
    %3560 = vmatpush1.msra.mxu0 0.0
    %3561 = vmatprep.subr.mxu0 0.0
    %3562 = vmatpush1.msra.mxu0 0.0
    %3563 = vmatprep.subr.mxu0 0.0
    %3564 = vmatpush1.msra.mxu0 0.0
    %3565 = vmatprep.subr.mxu0 0.0
    %3566 = vmatpush1.msra.mxu0 0.0
    %3567 = vmatprep.subr.mxu0 0.0
    %3568 = vmatpush1.msra.mxu0 0.0
    %3569 = vmatprep.subr.mxu0 0.0
    %3570 = vmatpush1.msra.mxu0 0.0
    %3571 = vmatprep.subr.mxu0 0.0
    %3572 = vmatpush1.msra.mxu0 0.0
    %3573 = vmatprep.subr.mxu0 0.0
    %3574 = vmatpush1.msra.mxu0 0.0
    %3575 = vmatprep.subr.mxu0 0.0
    %3576 = vmatpush1.msra.mxu0 0.0
    %3577 = vmatprep.subr.mxu0 0.0
    %3578 = vmatpush1.msra.mxu0 0.0
    %3579 = vmatprep.subr.mxu0 0.0
    %3580 = vmatpush1.msra.mxu0 0.0
    %3581 = vmatprep.subr.mxu0 0.0
    %3582 = vmatpush1.msra.mxu0 0.0
    %3583 = vmatprep.subr.mxu0 0.0
    %3584 = vmatpush1.msra.mxu0 0.0
    %3585 = vmatprep.subr.mxu0 0.0
    %3586 = vmatpush1.msra.mxu0 0.0
    %3587 = vmatprep.subr.mxu0 0.0
    %3588 = vmatpush1.msra.mxu0 0.0
    %3589 = vmatprep.subr.mxu0 0.0
    %3590 = vmatpush1.msra.mxu0 0.0
    %3591 = vmatprep.subr.mxu0 0.0
    %3592 = vmatpush1.msra.mxu0 0.0
    %3593 = vmatprep.subr.mxu0 0.0
    %3594 = vmatpush1.msra.mxu0 0.0
    %3595 = vmatprep.mubr.f32.mxu0 0.0
    %3596 = vmatmul.mubr.f32.gmra.mrb[0].mxu0 %v3529
    %v3597 = vpop.f32.mrb[0].mxu0
    %v3598 = vadd.f32 0.0, %v3597
    %v3599 = vpop.f32.mrb[0].mxu0
    %3600 = vdwg.mxu0
    %v3603 = vsel %vm1181, %v3346, %v3337
    %v3604 = vsel %vm472, %v3603, 0
    %3606 = vmatprep.subr.mxu0 0.0
    %3607 = vmatpush1.msra.mxu0 %v3522
    %3608 = vmatprep.subr.mxu0 0.0
    %3609 = vmatpush1.msra.mxu0 %v3523
    %3610 = vmatprep.subr.mxu0 0.0
    %3611 = vmatpush1.msra.mxu0 %v3524
    %3612 = vmatprep.subr.mxu0 0.0
    %3613 = vmatpush1.msra.mxu0 %v3525
    %3614 = vmatprep.subr.mxu0 0.0
    %3615 = vmatpush1.msra.mxu0 0.0
    %3616 = vmatprep.subr.mxu0 0.0
    %3617 = vmatpush1.msra.mxu0 0.0
    %3618 = vmatprep.subr.mxu0 0.0
    %3619 = vmatpush1.msra.mxu0 0.0
    %3620 = vmatprep.subr.mxu0 0.0
    %3621 = vmatpush1.msra.mxu0 0.0
    %3622 = vmatprep.subr.mxu0 0.0
    %3623 = vmatpush1.msra.mxu0 0.0
    %3624 = vmatprep.subr.mxu0 0.0
    %3625 = vmatpush1.msra.mxu0 0.0
    %3626 = vmatprep.subr.mxu0 0.0
    %3627 = vmatpush1.msra.mxu0 0.0
    %3628 = vmatprep.subr.mxu0 0.0
    %3629 = vmatpush1.msra.mxu0 0.0
    %3630 = vmatprep.subr.mxu0 0.0
    %3631 = vmatpush1.msra.mxu0 0.0
    %3632 = vmatprep.subr.mxu0 0.0
    %3633 = vmatpush1.msra.mxu0 0.0
    %3634 = vmatprep.subr.mxu0 0.0
    %3635 = vmatpush1.msra.mxu0 0.0
    %3636 = vmatprep.subr.mxu0 0.0
    %3637 = vmatpush1.msra.mxu0 0.0
    %3638 = vmatprep.subr.mxu0 0.0
    %3639 = vmatpush1.msra.mxu0 0.0
    %3640 = vmatprep.subr.mxu0 0.0
    %3641 = vmatpush1.msra.mxu0 0.0
    %3642 = vmatprep.subr.mxu0 0.0
    %3643 = vmatpush1.msra.mxu0 0.0
    %3644 = vmatprep.subr.mxu0 0.0
    %3645 = vmatpush1.msra.mxu0 0.0
    %3646 = vmatprep.subr.mxu0 0.0
    %3647 = vmatpush1.msra.mxu0 0.0
    %3648 = vmatprep.subr.mxu0 0.0
    %3649 = vmatpush1.msra.mxu0 0.0
    %3650 = vmatprep.subr.mxu0 0.0
    %3651 = vmatpush1.msra.mxu0 0.0
    %3652 = vmatprep.subr.mxu0 0.0
    %3653 = vmatpush1.msra.mxu0 0.0
    %3654 = vmatprep.subr.mxu0 0.0
    %3655 = vmatpush1.msra.mxu0 0.0
    %3656 = vmatprep.subr.mxu0 0.0
    %3657 = vmatpush1.msra.mxu0 0.0
    %3658 = vmatprep.subr.mxu0 0.0
    %3659 = vmatpush1.msra.mxu0 0.0
    %3660 = vmatprep.subr.mxu0 0.0
    %3661 = vmatpush1.msra.mxu0 0.0
    %3662 = vmatprep.subr.mxu0 0.0
    %3663 = vmatpush1.msra.mxu0 0.0
    %3664 = vmatprep.subr.mxu0 0.0
    %3665 = vmatpush1.msra.mxu0 0.0
    %3666 = vmatprep.subr.mxu0 0.0
    %3667 = vmatpush1.msra.mxu0 0.0
    %3668 = vmatprep.subr.mxu0 0.0
    %3669 = vmatpush1.msra.mxu0 0.0
    %3670 = vmatprep.mubr.f32.mxu0 0.0
    %3671 = vmatmul.mubr.f32.gmra.mrb[0].mxu0 %v3604
    %v3672 = vpop.f32.mrb[0].mxu0
    %v3673 = vadd.f32 %v3598, %v3672
    %v3674 = vpop.f32.mrb[0].mxu0
    %3675 = vdwg.mxu0
    %v3676 = vld [vmem:[#allocation2 + $0x2d0] sm:$0xff]
    %v3677 = vld [vmem:[#allocation2 + $0x2d8] sm:$0xff]
    %v3678 = vld [vmem:[#allocation2 + $0x2e0] sm:$0xff]
    %v3679 = vld [vmem:[#allocation2 + $0x2e8] sm:$0xff]
    %3680 = vmatprep.subr.mxu0 0.0
    %3681 = vmatpush1.msra.mxu0 %v3676
    %3682 = vmatprep.subr.mxu0 0.0
    %3683 = vmatpush1.msra.mxu0 %v3677
    %3684 = vmatprep.subr.mxu0 0.0
    %3685 = vmatpush1.msra.mxu0 %v3678
    %3686 = vmatprep.subr.mxu0 0.0
    %3687 = vmatpush1.msra.mxu0 %v3679
    %3688 = vmatprep.subr.mxu0 0.0
    %3689 = vmatpush1.msra.mxu0 0.0
    %3690 = vmatprep.subr.mxu0 0.0
    %3691 = vmatpush1.msra.mxu0 0.0
    %3692 = vmatprep.subr.mxu0 0.0
    %3693 = vmatpush1.msra.mxu0 0.0
    %3694 = vmatprep.subr.mxu0 0.0
    %3695 = vmatpush1.msra.mxu0 0.0
    %3696 = vmatprep.subr.mxu0 0.0
    %3697 = vmatpush1.msra.mxu0 0.0
    %3698 = vmatprep.subr.mxu0 0.0
    %3699 = vmatpush1.msra.mxu0 0.0
    %3700 = vmatprep.subr.mxu0 0.0
    %3701 = vmatpush1.msra.mxu0 0.0
    %3702 = vmatprep.subr.mxu0 0.0
    %3703 = vmatpush1.msra.mxu0 0.0
    %3704 = vmatprep.subr.mxu0 0.0
    %3705 = vmatpush1.msra.mxu0 0.0
    %3706 = vmatprep.subr.mxu0 0.0
    %3707 = vmatpush1.msra.mxu0 0.0
    %3708 = vmatprep.subr.mxu0 0.0
    %3709 = vmatpush1.msra.mxu0 0.0
    %3710 = vmatprep.subr.mxu0 0.0
    %3711 = vmatpush1.msra.mxu0 0.0
    %3712 = vmatprep.subr.mxu0 0.0
    %3713 = vmatpush1.msra.mxu0 0.0
    %3714 = vmatprep.subr.mxu0 0.0
    %3715 = vmatpush1.msra.mxu0 0.0
    %3716 = vmatprep.subr.mxu0 0.0
    %3717 = vmatpush1.msra.mxu0 0.0
    %3718 = vmatprep.subr.mxu0 0.0
    %3719 = vmatpush1.msra.mxu0 0.0
    %3720 = vmatprep.subr.mxu0 0.0
    %3721 = vmatpush1.msra.mxu0 0.0
    %3722 = vmatprep.subr.mxu0 0.0
    %3723 = vmatpush1.msra.mxu0 0.0
    %3724 = vmatprep.subr.mxu0 0.0
    %3725 = vmatpush1.msra.mxu0 0.0
    %3726 = vmatprep.subr.mxu0 0.0
    %3727 = vmatpush1.msra.mxu0 0.0
    %3728 = vmatprep.subr.mxu0 0.0
    %3729 = vmatpush1.msra.mxu0 0.0
    %3730 = vmatprep.subr.mxu0 0.0
    %3731 = vmatpush1.msra.mxu0 0.0
    %3732 = vmatprep.subr.mxu0 0.0
    %3733 = vmatpush1.msra.mxu0 0.0
    %3734 = vmatprep.subr.mxu0 0.0
    %3735 = vmatpush1.msra.mxu0 0.0
    %3736 = vmatprep.subr.mxu0 0.0
    %3737 = vmatpush1.msra.mxu0 0.0
    %3738 = vmatprep.subr.mxu0 0.0
    %3739 = vmatpush1.msra.mxu0 0.0
    %3740 = vmatprep.subr.mxu0 0.0
    %3741 = vmatpush1.msra.mxu0 0.0
    %3742 = vmatprep.subr.mxu0 0.0
    %3743 = vmatpush1.msra.mxu0 0.0
    %3744 = vmatprep.mubr.f32.mxu0 0.0
    %3745 = vmatmul.mubr.f32.gmra.mrb[0].mxu0 %v2735
    %v3746 = vpop.f32.mrb[0].mxu0
    %v3747 = vadd.f32 0.0, %v3746
    %v3748 = vpop.f32.mrb[0].mxu0
    %3749 = vdwg.mxu0
    %v3750 = vadd.f32 %v3673, %v3747
    %v3751 = vadd.f32 %v3750, %v1333
    %v3752 = vxor.u32 %v3751, 2147483648
    %v3753 = vmul.f32 %v3752, 1.442695
    %v3754 = vpow.pop %v3753
    %v3755 = vadd.f32 %v3754, 1.0
    %v3756 = vrcp.pop %v3755
    %v3757 = vmul.f32 1.0, %v3756
    %v3758 = vtanh.pop %v3751
    %v3759 = vmul.f32 %v3757, %v2570
    %3761 = vrot.lane.b32.xlu0 %v3758, 64
    %v3762 = vpop.permute.xlu0 %3761
    %v3764 = vmul.f32 %v3757, %v3762
    %3766 = vrot.lane.b32.xlu0 %v3764, 32
    %v3767 = vpop.permute.xlu0 %3766
    %v3769 = vadd.f32 %v3759, %v3767
    %v3770 = vtanh.pop %v3769
    %3772 = vrot.lane.b32.xlu0 %v3770, 64
    %v3773 = vpop.permute.xlu0 %3772
    %v3775 = vmul.f32 %v3757, %v3773
    %v3776 = vld [vmem:[#allocation2 + $0x270] sm:$0xff]
    %v3777 = vld [vmem:[#allocation2 + $0x278] sm:$0xff]
    %v3778 = vld [vmem:[#allocation2 + $0x280] sm:$0xff]
    %v3779 = vld [vmem:[#allocation2 + $0x288] sm:$0xff]
    %v3780 = vld [vmem:[#allocation2 + $0x290] sm:$0xff]
    %v3781 = vld [vmem:[#allocation2 + $0x298] sm:$0xff]
    %3782 = vmatprep.subr.mxu0 0.0
    %3783 = vmatpush1.msra.mxu0 %v3780
    %3784 = vmatprep.subr.mxu0 0.0
    %3785 = vmatpush1.msra.mxu0 %v3781
    %3786 = vmatprep.subr.mxu0 0.0
    %3787 = vmatpush1.msra.mxu0 0.0
    %3788 = vmatprep.subr.mxu0 0.0
    %3789 = vmatpush1.msra.mxu0 0.0
    %3790 = vmatprep.subr.mxu0 0.0
    %3791 = vmatpush1.msra.mxu0 0.0
    %3792 = vmatprep.subr.mxu0 0.0
    %3793 = vmatpush1.msra.mxu0 0.0
    %3794 = vmatprep.subr.mxu0 0.0
    %3795 = vmatpush1.msra.mxu0 0.0
    %3796 = vmatprep.subr.mxu0 0.0
    %3797 = vmatpush1.msra.mxu0 0.0
    %3798 = vmatprep.subr.mxu0 0.0
    %3799 = vmatpush1.msra.mxu0 0.0
    %3800 = vmatprep.subr.mxu0 0.0
    %3801 = vmatpush1.msra.mxu0 0.0
    %3802 = vmatprep.subr.mxu0 0.0
    %3803 = vmatpush1.msra.mxu0 0.0
    %3804 = vmatprep.subr.mxu0 0.0
    %3805 = vmatpush1.msra.mxu0 0.0
    %3806 = vmatprep.subr.mxu0 0.0
    %3807 = vmatpush1.msra.mxu0 0.0
    %3808 = vmatprep.subr.mxu0 0.0
    %3809 = vmatpush1.msra.mxu0 0.0
    %3810 = vmatprep.subr.mxu0 0.0
    %3811 = vmatpush1.msra.mxu0 0.0
    %3812 = vmatprep.subr.mxu0 0.0
    %3813 = vmatpush1.msra.mxu0 0.0
    %3814 = vmatprep.subr.mxu0 0.0
    %3815 = vmatpush1.msra.mxu0 0.0
    %3816 = vmatprep.subr.mxu0 0.0
    %3817 = vmatpush1.msra.mxu0 0.0
    %3818 = vmatprep.subr.mxu0 0.0
    %3819 = vmatpush1.msra.mxu0 0.0
    %3820 = vmatprep.subr.mxu0 0.0
    %3821 = vmatpush1.msra.mxu0 0.0
    %3822 = vmatprep.subr.mxu0 0.0
    %3823 = vmatpush1.msra.mxu0 0.0
    %3824 = vmatprep.subr.mxu0 0.0
    %3825 = vmatpush1.msra.mxu0 0.0
    %3826 = vmatprep.subr.mxu0 0.0
    %3827 = vmatpush1.msra.mxu0 0.0
    %3828 = vmatprep.subr.mxu0 0.0
    %3829 = vmatpush1.msra.mxu0 0.0
    %3830 = vmatprep.subr.mxu0 0.0
    %3831 = vmatpush1.msra.mxu0 0.0
    %3832 = vmatprep.subr.mxu0 0.0
    %3833 = vmatpush1.msra.mxu0 0.0
    %3834 = vmatprep.subr.mxu0 0.0
    %3835 = vmatpush1.msra.mxu0 0.0
    %3836 = vmatprep.subr.mxu0 0.0
    %3837 = vmatpush1.msra.mxu0 0.0
    %3838 = vmatprep.subr.mxu0 0.0
    %3839 = vmatpush1.msra.mxu0 0.0
    %3840 = vmatprep.subr.mxu0 0.0
    %3841 = vmatpush1.msra.mxu0 0.0
    %3842 = vmatprep.subr.mxu0 0.0
    %3843 = vmatpush1.msra.mxu0 0.0
    %3844 = vmatprep.subr.mxu0 0.0
    %3845 = vmatpush1.msra.mxu0 0.0
    %3846 = vmatprep.mubr.f32.mxu0 0.0
    %3847 = vmatmul.mubr.f32.gmra.mrb[0].mxu0 %v3529
    %v3848 = vpop.f32.mrb[0].mxu0
    %v3849 = vadd.f32 0.0, %v3848
    %v3850 = vpop.f32.mrb[0].mxu0
    %3851 = vdwg.mxu0
    %3852 = vmatprep.subr.mxu0 0.0
    %3853 = vmatpush1.msra.mxu0 %v3776
    %3854 = vmatprep.subr.mxu0 0.0
    %3855 = vmatpush1.msra.mxu0 %v3777
    %3856 = vmatprep.subr.mxu0 0.0
    %3857 = vmatpush1.msra.mxu0 %v3778
    %3858 = vmatprep.subr.mxu0 0.0
    %3859 = vmatpush1.msra.mxu0 %v3779
    %3860 = vmatprep.subr.mxu0 0.0
    %3861 = vmatpush1.msra.mxu0 0.0
    %3862 = vmatprep.subr.mxu0 0.0
    %3863 = vmatpush1.msra.mxu0 0.0
    %3864 = vmatprep.subr.mxu0 0.0
    %3865 = vmatpush1.msra.mxu0 0.0
    %3866 = vmatprep.subr.mxu0 0.0
    %3867 = vmatpush1.msra.mxu0 0.0
    %3868 = vmatprep.subr.mxu0 0.0
    %3869 = vmatpush1.msra.mxu0 0.0
    %3870 = vmatprep.subr.mxu0 0.0
    %3871 = vmatpush1.msra.mxu0 0.0
    %3872 = vmatprep.subr.mxu0 0.0
    %3873 = vmatpush1.msra.mxu0 0.0
    %3874 = vmatprep.subr.mxu0 0.0
    %3875 = vmatpush1.msra.mxu0 0.0
    %3876 = vmatprep.subr.mxu0 0.0
    %3877 = vmatpush1.msra.mxu0 0.0
    %3878 = vmatprep.subr.mxu0 0.0
    %3879 = vmatpush1.msra.mxu0 0.0
    %3880 = vmatprep.subr.mxu0 0.0
    %3881 = vmatpush1.msra.mxu0 0.0
    %3882 = vmatprep.subr.mxu0 0.0
    %3883 = vmatpush1.msra.mxu0 0.0
    %3884 = vmatprep.subr.mxu0 0.0
    %3885 = vmatpush1.msra.mxu0 0.0
    %3886 = vmatprep.subr.mxu0 0.0
    %3887 = vmatpush1.msra.mxu0 0.0
    %3888 = vmatprep.subr.mxu0 0.0
    %3889 = vmatpush1.msra.mxu0 0.0
    %3890 = vmatprep.subr.mxu0 0.0
    %3891 = vmatpush1.msra.mxu0 0.0
    %3892 = vmatprep.subr.mxu0 0.0
    %3893 = vmatpush1.msra.mxu0 0.0
    %3894 = vmatprep.subr.mxu0 0.0
    %3895 = vmatpush1.msra.mxu0 0.0
    %3896 = vmatprep.subr.mxu0 0.0
    %3897 = vmatpush1.msra.mxu0 0.0
    %3898 = vmatprep.subr.mxu0 0.0
    %3899 = vmatpush1.msra.mxu0 0.0
    %3900 = vmatprep.subr.mxu0 0.0
    %3901 = vmatpush1.msra.mxu0 0.0
    %3902 = vmatprep.subr.mxu0 0.0
    %3903 = vmatpush1.msra.mxu0 0.0
    %3904 = vmatprep.subr.mxu0 0.0
    %3905 = vmatpush1.msra.mxu0 0.0
    %3906 = vmatprep.subr.mxu0 0.0
    %3907 = vmatpush1.msra.mxu0 0.0
    %3908 = vmatprep.subr.mxu0 0.0
    %3909 = vmatpush1.msra.mxu0 0.0
    %3910 = vmatprep.subr.mxu0 0.0
    %3911 = vmatpush1.msra.mxu0 0.0
    %3912 = vmatprep.subr.mxu0 0.0
    %3913 = vmatpush1.msra.mxu0 0.0
    %3914 = vmatprep.subr.mxu0 0.0
    %3915 = vmatpush1.msra.mxu0 0.0
    %3916 = vmatprep.mubr.f32.mxu0 0.0
    %3917 = vmatmul.mubr.f32.gmra.mrb[0].mxu0 %v3604
    %v3918 = vpop.f32.mrb[0].mxu0
    %v3919 = vadd.f32 %v3849, %v3918
    %v3920 = vpop.f32.mrb[0].mxu0
    %3921 = vdwg.mxu0
    %v3922 = vadd.f32 %v3919, %v1508
    %v3923 = vld [vmem:[#allocation2 + $0x2f0] sm:$0xff]
    %v3924 = vld [vmem:[#allocation2 + $0x2f8] sm:$0xff]
    %v3925 = vld [vmem:[#allocation2 + $0x300] sm:$0xff]
    %v3926 = vld [vmem:[#allocation2 + $0x308] sm:$0xff]
    %v3927 = vld [vmem:[#allocation2 + $0x310] sm:$0xff]
    %v3928 = vld [vmem:[#allocation2 + $0x318] sm:$0xff]
    %v3929 = vld [vmem:[#allocation2 + $0x320] sm:$0xff]
    %v3930 = vld [vmem:[#allocation2 + $0x328] sm:$0xff]
    %3932 = vrot.lane.b32.xlu0 %v3775, 32
    %v3933 = vpop.permute.xlu0 %3932
    %v3934 = vsel %vm472, %v3933, 0
    %3936 = vmatprep.subr.mxu0 0.0
    %3937 = vmatpush1.msra.mxu0 %v3927
    %3938 = vmatprep.subr.mxu0 0.0
    %3939 = vmatpush1.msra.mxu0 %v3928
    %3940 = vmatprep.subr.mxu0 0.0
    %3941 = vmatpush1.msra.mxu0 %v3929
    %3942 = vmatprep.subr.mxu0 0.0
    %3943 = vmatpush1.msra.mxu0 %v3930
    %3944 = vmatprep.subr.mxu0 0.0
    %3945 = vmatpush1.msra.mxu0 0.0
    %3946 = vmatprep.subr.mxu0 0.0
    %3947 = vmatpush1.msra.mxu0 0.0
    %3948 = vmatprep.subr.mxu0 0.0
    %3949 = vmatpush1.msra.mxu0 0.0
    %3950 = vmatprep.subr.mxu0 0.0
    %3951 = vmatpush1.msra.mxu0 0.0
    %3952 = vmatprep.subr.mxu0 0.0
    %3953 = vmatpush1.msra.mxu0 0.0
    %3954 = vmatprep.subr.mxu0 0.0
    %3955 = vmatpush1.msra.mxu0 0.0
    %3956 = vmatprep.subr.mxu0 0.0
    %3957 = vmatpush1.msra.mxu0 0.0
    %3958 = vmatprep.subr.mxu0 0.0
    %3959 = vmatpush1.msra.mxu0 0.0
    %3960 = vmatprep.subr.mxu0 0.0
    %3961 = vmatpush1.msra.mxu0 0.0
    %3962 = vmatprep.subr.mxu0 0.0
    %3963 = vmatpush1.msra.mxu0 0.0
    %3964 = vmatprep.subr.mxu0 0.0
    %3965 = vmatpush1.msra.mxu0 0.0
    %3966 = vmatprep.subr.mxu0 0.0
    %3967 = vmatpush1.msra.mxu0 0.0
    %3968 = vmatprep.subr.mxu0 0.0
    %3969 = vmatpush1.msra.mxu0 0.0
    %3970 = vmatprep.subr.mxu0 0.0
    %3971 = vmatpush1.msra.mxu0 0.0
    %3972 = vmatprep.subr.mxu0 0.0
    %3973 = vmatpush1.msra.mxu0 0.0
    %3974 = vmatprep.subr.mxu0 0.0
    %3975 = vmatpush1.msra.mxu0 0.0
    %3976 = vmatprep.subr.mxu0 0.0
    %3977 = vmatpush1.msra.mxu0 0.0
    %3978 = vmatprep.subr.mxu0 0.0
    %3979 = vmatpush1.msra.mxu0 0.0
    %3980 = vmatprep.subr.mxu0 0.0
    %3981 = vmatpush1.msra.mxu0 0.0
    %3982 = vmatprep.subr.mxu0 0.0
    %3983 = vmatpush1.msra.mxu0 0.0
    %3984 = vmatprep.subr.mxu0 0.0
    %3985 = vmatpush1.msra.mxu0 0.0
    %3986 = vmatprep.subr.mxu0 0.0
    %3987 = vmatpush1.msra.mxu0 0.0
    %3988 = vmatprep.subr.mxu0 0.0
    %3989 = vmatpush1.msra.mxu0 0.0
    %3990 = vmatprep.subr.mxu0 0.0
    %3991 = vmatpush1.msra.mxu0 0.0
    %3992 = vmatprep.subr.mxu0 0.0
    %3993 = vmatpush1.msra.mxu0 0.0
    %3994 = vmatprep.subr.mxu0 0.0
    %3995 = vmatpush1.msra.mxu0 0.0
    %3996 = vmatprep.subr.mxu0 0.0
    %3997 = vmatpush1.msra.mxu0 0.0
    %3998 = vmatprep.subr.mxu0 0.0
    %3999 = vmatpush1.msra.mxu0 0.0
    %4000 = vmatprep.mubr.f32.mxu0 0.0
    %4001 = vmatmul.mubr.f32.gmra.mrb[0].mxu0 %v3934
    %v4002 = vpop.f32.mrb[0].mxu0
    %v4003 = vadd.f32 0.0, %v4002
    %v4004 = vpop.f32.mrb[0].mxu0
    %4005 = vdwg.mxu0
    %4006 = vmatprep.subr.mxu0 0.0
    %4007 = vmatpush1.msra.mxu0 %v3923
    %4008 = vmatprep.subr.mxu0 0.0
    %4009 = vmatpush1.msra.mxu0 %v3924
    %4010 = vmatprep.subr.mxu0 0.0
    %4011 = vmatpush1.msra.mxu0 %v3925
    %4012 = vmatprep.subr.mxu0 0.0
    %4013 = vmatpush1.msra.mxu0 %v3926
    %4014 = vmatprep.subr.mxu0 0.0
    %4015 = vmatpush1.msra.mxu0 0.0
    %4016 = vmatprep.subr.mxu0 0.0
    %4017 = vmatpush1.msra.mxu0 0.0
    %4018 = vmatprep.subr.mxu0 0.0
    %4019 = vmatpush1.msra.mxu0 0.0
    %4020 = vmatprep.subr.mxu0 0.0
    %4021 = vmatpush1.msra.mxu0 0.0
    %4022 = vmatprep.subr.mxu0 0.0
    %4023 = vmatpush1.msra.mxu0 0.0
    %4024 = vmatprep.subr.mxu0 0.0
    %4025 = vmatpush1.msra.mxu0 0.0
    %4026 = vmatprep.subr.mxu0 0.0
    %4027 = vmatpush1.msra.mxu0 0.0
    %4028 = vmatprep.subr.mxu0 0.0
    %4029 = vmatpush1.msra.mxu0 0.0
    %4030 = vmatprep.subr.mxu0 0.0
    %4031 = vmatpush1.msra.mxu0 0.0
    %4032 = vmatprep.subr.mxu0 0.0
    %4033 = vmatpush1.msra.mxu0 0.0
    %4034 = vmatprep.subr.mxu0 0.0
    %4035 = vmatpush1.msra.mxu0 0.0
    %4036 = vmatprep.subr.mxu0 0.0
    %4037 = vmatpush1.msra.mxu0 0.0
    %4038 = vmatprep.subr.mxu0 0.0
    %4039 = vmatpush1.msra.mxu0 0.0
    %4040 = vmatprep.subr.mxu0 0.0
    %4041 = vmatpush1.msra.mxu0 0.0
    %4042 = vmatprep.subr.mxu0 0.0
    %4043 = vmatpush1.msra.mxu0 0.0
    %4044 = vmatprep.subr.mxu0 0.0
    %4045 = vmatpush1.msra.mxu0 0.0
    %4046 = vmatprep.subr.mxu0 0.0
    %4047 = vmatpush1.msra.mxu0 0.0
    %4048 = vmatprep.subr.mxu0 0.0
    %4049 = vmatpush1.msra.mxu0 0.0
    %4050 = vmatprep.subr.mxu0 0.0
    %4051 = vmatpush1.msra.mxu0 0.0
    %4052 = vmatprep.subr.mxu0 0.0
    %4053 = vmatpush1.msra.mxu0 0.0
    %4054 = vmatprep.subr.mxu0 0.0
    %4055 = vmatpush1.msra.mxu0 0.0
    %4056 = vmatprep.subr.mxu0 0.0
    %4057 = vmatpush1.msra.mxu0 0.0
    %4058 = vmatprep.subr.mxu0 0.0
    %4059 = vmatpush1.msra.mxu0 0.0
    %4060 = vmatprep.subr.mxu0 0.0
    %4061 = vmatpush1.msra.mxu0 0.0
    %4062 = vmatprep.subr.mxu0 0.0
    %4063 = vmatpush1.msra.mxu0 0.0
    %4064 = vmatprep.subr.mxu0 0.0
    %4065 = vmatpush1.msra.mxu0 0.0
    %4066 = vmatprep.subr.mxu0 0.0
    %4067 = vmatpush1.msra.mxu0 0.0
    %4068 = vmatprep.subr.mxu0 0.0
    %4069 = vmatpush1.msra.mxu0 0.0
    %4070 = vmatprep.mubr.f32.mxu0 0.0
    %4071 = vmatmul.mubr.f32.gmra.mrb[0].mxu0 %v2735
    %v4072 = vpop.f32.mrb[0].mxu0
    %v4073 = vadd.f32 %v4003, %v4072
    %v4074 = vpop.f32.mrb[0].mxu0
    %4075 = vdwg.mxu0
    %v4076 = vld [vmem:[#allocation2 + $0x330] sm:$0xff]
    %v4077 = vld [vmem:[#allocation2 + $0x338] sm:$0xff]
    %v4079 = vsel %vm1105, %v3922, 0
    %4081 = vmatprep.subr.mxu0 0.0
    %4082 = vmatpush1.msra.mxu0 %v4076
    %4083 = vmatprep.subr.mxu0 0.0
    %4084 = vmatpush1.msra.mxu0 %v4077
    %4085 = vmatprep.subr.mxu0 0.0
    %4086 = vmatpush1.msra.mxu0 0.0
    %4087 = vmatprep.subr.mxu0 0.0
    %4088 = vmatpush1.msra.mxu0 0.0
    %4089 = vmatprep.subr.mxu0 0.0
    %4090 = vmatpush1.msra.mxu0 0.0
    %4091 = vmatprep.subr.mxu0 0.0
    %4092 = vmatpush1.msra.mxu0 0.0
    %4093 = vmatprep.subr.mxu0 0.0
    %4094 = vmatpush1.msra.mxu0 0.0
    %4095 = vmatprep.subr.mxu0 0.0
    %4096 = vmatpush1.msra.mxu0 0.0
    %4097 = vmatprep.subr.mxu0 0.0
    %4098 = vmatpush1.msra.mxu0 0.0
    %4099 = vmatprep.subr.mxu0 0.0
    %4100 = vmatpush1.msra.mxu0 0.0
    %4101 = vmatprep.subr.mxu0 0.0
    %4102 = vmatpush1.msra.mxu0 0.0
    %4103 = vmatprep.subr.mxu0 0.0
    %4104 = vmatpush1.msra.mxu0 0.0
    %4105 = vmatprep.subr.mxu0 0.0
    %4106 = vmatpush1.msra.mxu0 0.0
    %4107 = vmatprep.subr.mxu0 0.0
    %4108 = vmatpush1.msra.mxu0 0.0
    %4109 = vmatprep.subr.mxu0 0.0
    %4110 = vmatpush1.msra.mxu0 0.0
    %4111 = vmatprep.subr.mxu0 0.0
    %4112 = vmatpush1.msra.mxu0 0.0
    %4113 = vmatprep.subr.mxu0 0.0
    %4114 = vmatpush1.msra.mxu0 0.0
    %4115 = vmatprep.subr.mxu0 0.0
    %4116 = vmatpush1.msra.mxu0 0.0
    %4117 = vmatprep.subr.mxu0 0.0
    %4118 = vmatpush1.msra.mxu0 0.0
    %4119 = vmatprep.subr.mxu0 0.0
    %4120 = vmatpush1.msra.mxu0 0.0
    %4121 = vmatprep.subr.mxu0 0.0
    %4122 = vmatpush1.msra.mxu0 0.0
    %4123 = vmatprep.subr.mxu0 0.0
    %4124 = vmatpush1.msra.mxu0 0.0
    %4125 = vmatprep.subr.mxu0 0.0
    %4126 = vmatpush1.msra.mxu0 0.0
    %4127 = vmatprep.subr.mxu0 0.0
    %4128 = vmatpush1.msra.mxu0 0.0
    %4129 = vmatprep.subr.mxu0 0.0
    %4130 = vmatpush1.msra.mxu0 0.0
    %4131 = vmatprep.subr.mxu0 0.0
    %4132 = vmatpush1.msra.mxu0 0.0
    %4133 = vmatprep.subr.mxu0 0.0
    %4134 = vmatpush1.msra.mxu0 0.0
    %4135 = vmatprep.subr.mxu0 0.0
    %4136 = vmatpush1.msra.mxu0 0.0
    %4137 = vmatprep.subr.mxu0 0.0
    %4138 = vmatpush1.msra.mxu0 0.0
    %4139 = vmatprep.subr.mxu0 0.0
    %4140 = vmatpush1.msra.mxu0 0.0
    %4141 = vmatprep.subr.mxu0 0.0
    %4142 = vmatpush1.msra.mxu0 0.0
    %4143 = vmatprep.subr.mxu0 0.0
    %4144 = vmatpush1.msra.mxu0 0.0
    %4145 = vmatprep.mubr.f32.mxu0 0.0
    %4146 = vmatmul.mubr.f32.gmra.mrb[0].mxu0 %v4079
    %v4147 = vpop.f32.mrb[0].mxu0
    %v4148 = vadd.f32 0.0, %v4147
    %v4149 = vpop.f32.mrb[0].mxu0
    %4150 = vdwg.mxu0
    %v4151 = vadd.f32 %v4073, %v4148
    %v4152 = vadd.f32 %v4151, %v1742
    %v4153 = vtanh.pop %v4152
    %v4155 = vsel %vm1749, %v4152, 0
    %4157 = vmatprep.subr.mxu0 0.0
    %4158 = vmatpush1.msra.mxu0 %v587
    %4159 = vmatprep.subr.mxu0 0.0
    %4160 = vmatpush1.msra.mxu0 %v1754
    %4161 = vmatprep.subr.mxu0 0.0
    %4162 = vmatpush1.msra.mxu0 0.0
    %4163 = vmatprep.subr.mxu0 0.0
    %4164 = vmatpush1.msra.mxu0 0.0
    %4165 = vmatprep.subr.mxu0 0.0
    %4166 = vmatpush1.msra.mxu0 0.0
    %4167 = vmatprep.subr.mxu0 0.0
    %4168 = vmatpush1.msra.mxu0 0.0
    %4169 = vmatprep.subr.mxu0 0.0
    %4170 = vmatpush1.msra.mxu0 0.0
    %4171 = vmatprep.subr.mxu0 0.0
    %4172 = vmatpush1.msra.mxu0 0.0
    %4173 = vmatprep.subr.mxu0 0.0
    %4174 = vmatpush1.msra.mxu0 0.0
    %4175 = vmatprep.subr.mxu0 0.0
    %4176 = vmatpush1.msra.mxu0 0.0
    %4177 = vmatprep.subr.mxu0 0.0
    %4178 = vmatpush1.msra.mxu0 0.0
    %4179 = vmatprep.subr.mxu0 0.0
    %4180 = vmatpush1.msra.mxu0 0.0
    %4181 = vmatprep.subr.mxu0 0.0
    %4182 = vmatpush1.msra.mxu0 0.0
    %4183 = vmatprep.subr.mxu0 0.0
    %4184 = vmatpush1.msra.mxu0 0.0
    %4185 = vmatprep.subr.mxu0 0.0
    %4186 = vmatpush1.msra.mxu0 0.0
    %4187 = vmatprep.subr.mxu0 0.0
    %4188 = vmatpush1.msra.mxu0 0.0
    %4189 = vmatprep.subr.mxu0 0.0
    %4190 = vmatpush1.msra.mxu0 0.0
    %4191 = vmatprep.subr.mxu0 0.0
    %4192 = vmatpush1.msra.mxu0 0.0
    %4193 = vmatprep.subr.mxu0 0.0
    %4194 = vmatpush1.msra.mxu0 0.0
    %4195 = vmatprep.subr.mxu0 0.0
    %4196 = vmatpush1.msra.mxu0 0.0
    %4197 = vmatprep.subr.mxu0 0.0
    %4198 = vmatpush1.msra.mxu0 0.0
    %4199 = vmatprep.subr.mxu0 0.0
    %4200 = vmatpush1.msra.mxu0 0.0
    %4201 = vmatprep.subr.mxu0 0.0
    %4202 = vmatpush1.msra.mxu0 0.0
    %4203 = vmatprep.subr.mxu0 0.0
    %4204 = vmatpush1.msra.mxu0 0.0
    %4205 = vmatprep.subr.mxu0 0.0
    %4206 = vmatpush1.msra.mxu0 0.0
    %4207 = vmatprep.subr.mxu0 0.0
    %4208 = vmatpush1.msra.mxu0 0.0
    %4209 = vmatprep.subr.mxu0 0.0
    %4210 = vmatpush1.msra.mxu0 0.0
    %4211 = vmatprep.subr.mxu0 0.0
    %4212 = vmatpush1.msra.mxu0 0.0
    %4213 = vmatprep.subr.mxu0 0.0
    %4214 = vmatpush1.msra.mxu0 0.0
    %4215 = vmatprep.subr.mxu0 0.0
    %4216 = vmatpush1.msra.mxu0 0.0
    %4217 = vmatprep.subr.mxu0 0.0
    %4218 = vmatpush1.msra.mxu0 0.0
    %4219 = vmatprep.subr.mxu0 0.0
    %4220 = vmatpush1.msra.mxu0 0.0
    %4221 = vmatprep.mubr.f32.mxu0 0.0
    %4222 = vmatmul.mubr.f32.gmra.mrb[0].mxu0 %v4155
    %v4223 = vpop.f32.mrb[0].mxu0
    %v4224 = vadd.f32 %v1748, %v4223
    %v4225 = vpop.f32.mrb[0].mxu0
    %4226 = vdwg.mxu0
    %v4227 = vtanh.pop %v4224
    %v4228 = vsel %vm1827, %v4227, -inf
    %4229 = vmax.xlane.f32.xlu0 %v4228
    %v4230 = vpop.xlane.xlu0 %4229
    %v4231 = vsub.f32 %v4227, %v4230
    %v4232 = vmul.f32 %v4231, 1.442695
    %v4233 = vpow.pop %v4232
    %v4234 = vsel %vm1827, %v4233, 0.0
    %4235 = vadd.xlane.f32.xlu0 %v4234
    %v4236 = vpop.xlane.xlu0 %4235
    %v4237 = vrcp.pop %v4236
    %v4238 = vmul.f32 %v4233, %v4237
    %4240 = vrot.lane.b32.xlu0 %v4153, 118
    %v4241 = vpop.permute.xlu0 %4240
    %4243 = vst.msk [vmem:[%s4 + $0x4] sm:$0x3] %vm1843, %v4241
    %4245 = vrot.lane.b32.xlu0 %v4238, 12
    %v4246 = vpop.permute.xlu0 %4245
    %4248 = vst.msk [vmem:[%s4 + $0x4] sm:$0x3] %vm1849, %v4246
    %4249 = vmatprep.subr.mxu0 0.0
    %4250 = vmatpush1.msra.mxu0 %v570
    %4251 = vmatprep.subr.mxu0 0.0
    %4252 = vmatpush1.msra.mxu0 %v571
    %4253 = vmatprep.subr.mxu0 0.0
    %4254 = vmatpush1.msra.mxu0 %v572
    %4255 = vmatprep.subr.mxu0 0.0
    %4256 = vmatpush1.msra.mxu0 %v573
    %4257 = vmatprep.subr.mxu0 0.0
    %4258 = vmatpush1.msra.mxu0 0.0
    %4259 = vmatprep.subr.mxu0 0.0
    %4260 = vmatpush1.msra.mxu0 0.0
    %4261 = vmatprep.subr.mxu0 0.0
    %4262 = vmatpush1.msra.mxu0 0.0
    %4263 = vmatprep.subr.mxu0 0.0
    %4264 = vmatpush1.msra.mxu0 0.0
    %4265 = vmatprep.subr.mxu0 0.0
    %4266 = vmatpush1.msra.mxu0 0.0
    %4267 = vmatprep.subr.mxu0 0.0
    %4268 = vmatpush1.msra.mxu0 0.0
    %4269 = vmatprep.subr.mxu0 0.0
    %4270 = vmatpush1.msra.mxu0 0.0
    %4271 = vmatprep.subr.mxu0 0.0
    %4272 = vmatpush1.msra.mxu0 0.0
    %4273 = vmatprep.subr.mxu0 0.0
    %4274 = vmatpush1.msra.mxu0 0.0
    %4275 = vmatprep.subr.mxu0 0.0
    %4276 = vmatpush1.msra.mxu0 0.0
    %4277 = vmatprep.subr.mxu0 0.0
    %4278 = vmatpush1.msra.mxu0 0.0
    %4279 = vmatprep.subr.mxu0 0.0
    %4280 = vmatpush1.msra.mxu0 0.0
    %4281 = vmatprep.subr.mxu0 0.0
    %4282 = vmatpush1.msra.mxu0 0.0
    %4283 = vmatprep.subr.mxu0 0.0
    %4284 = vmatpush1.msra.mxu0 0.0
    %4285 = vmatprep.subr.mxu0 0.0
    %4286 = vmatpush1.msra.mxu0 0.0
    %4287 = vmatprep.subr.mxu0 0.0
    %4288 = vmatpush1.msra.mxu0 0.0
    %4289 = vmatprep.subr.mxu0 0.0
    %4290 = vmatpush1.msra.mxu0 0.0
    %4291 = vmatprep.subr.mxu0 0.0
    %4292 = vmatpush1.msra.mxu0 0.0
    %4293 = vmatprep.subr.mxu0 0.0
    %4294 = vmatpush1.msra.mxu0 0.0
    %4295 = vmatprep.subr.mxu0 0.0
    %4296 = vmatpush1.msra.mxu0 0.0
    %4297 = vmatprep.subr.mxu0 0.0
    %4298 = vmatpush1.msra.mxu0 0.0
    %4299 = vmatprep.subr.mxu0 0.0
    %4300 = vmatpush1.msra.mxu0 0.0
    %4301 = vmatprep.subr.mxu0 0.0
    %4302 = vmatpush1.msra.mxu0 0.0
    %4303 = vmatprep.subr.mxu0 0.0
    %4304 = vmatpush1.msra.mxu0 0.0
    %4305 = vmatprep.subr.mxu0 0.0
    %4306 = vmatpush1.msra.mxu0 0.0
    %4307 = vmatprep.subr.mxu0 0.0
    %4308 = vmatpush1.msra.mxu0 0.0
    %4309 = vmatprep.subr.mxu0 0.0
    %4310 = vmatpush1.msra.mxu0 0.0
    %4311 = vmatprep.subr.mxu0 0.0
    %4312 = vmatpush1.msra.mxu0 0.0
    %4313 = vmatprep.mubr.f32.mxu0 0.0
    %4314 = vmatmul.mubr.f32.gmra.mrb[0].mxu0 %v3934
    %v4315 = vpop.f32.mrb[0].mxu0
    %v4316 = vadd.f32 %v593, %v4315
    %v4317 = vpop.f32.mrb[0].mxu0
    %4318 = vdwg.mxu0
    %4319 = vmatprep.subr.mxu0 0.0
    %4320 = vmatpush1.msra.mxu0 %v575
    %4321 = vmatprep.subr.mxu0 0.0
    %4322 = vmatpush1.msra.mxu0 %v576
    %4323 = vmatprep.subr.mxu0 0.0
    %4324 = vmatpush1.msra.mxu0 %v577
    %4325 = vmatprep.subr.mxu0 0.0
    %4326 = vmatpush1.msra.mxu0 %v578
    %4327 = vmatprep.subr.mxu0 0.0
    %4328 = vmatpush1.msra.mxu0 0.0
    %4329 = vmatprep.subr.mxu0 0.0
    %4330 = vmatpush1.msra.mxu0 0.0
    %4331 = vmatprep.subr.mxu0 0.0
    %4332 = vmatpush1.msra.mxu0 0.0
    %4333 = vmatprep.subr.mxu0 0.0
    %4334 = vmatpush1.msra.mxu0 0.0
    %4335 = vmatprep.subr.mxu0 0.0
    %4336 = vmatpush1.msra.mxu0 0.0
    %4337 = vmatprep.subr.mxu0 0.0
    %4338 = vmatpush1.msra.mxu0 0.0
    %4339 = vmatprep.subr.mxu0 0.0
    %4340 = vmatpush1.msra.mxu0 0.0
    %4341 = vmatprep.subr.mxu0 0.0
    %4342 = vmatpush1.msra.mxu0 0.0
    %4343 = vmatprep.subr.mxu0 0.0
    %4344 = vmatpush1.msra.mxu0 0.0
    %4345 = vmatprep.subr.mxu0 0.0
    %4346 = vmatpush1.msra.mxu0 0.0
    %4347 = vmatprep.subr.mxu0 0.0
    %4348 = vmatpush1.msra.mxu0 0.0
    %4349 = vmatprep.subr.mxu0 0.0
    %4350 = vmatpush1.msra.mxu0 0.0
    %4351 = vmatprep.subr.mxu0 0.0
    %4352 = vmatpush1.msra.mxu0 0.0
    %4353 = vmatprep.subr.mxu0 0.0
    %4354 = vmatpush1.msra.mxu0 0.0
    %4355 = vmatprep.subr.mxu0 0.0
    %4356 = vmatpush1.msra.mxu0 0.0
    %4357 = vmatprep.subr.mxu0 0.0
    %4358 = vmatpush1.msra.mxu0 0.0
    %4359 = vmatprep.subr.mxu0 0.0
    %4360 = vmatpush1.msra.mxu0 0.0
    %4361 = vmatprep.subr.mxu0 0.0
    %4362 = vmatpush1.msra.mxu0 0.0
    %4363 = vmatprep.subr.mxu0 0.0
    %4364 = vmatpush1.msra.mxu0 0.0
    %4365 = vmatprep.subr.mxu0 0.0
    %4366 = vmatpush1.msra.mxu0 0.0
    %4367 = vmatprep.subr.mxu0 0.0
    %4368 = vmatpush1.msra.mxu0 0.0
    %4369 = vmatprep.subr.mxu0 0.0
    %4370 = vmatpush1.msra.mxu0 0.0
    %4371 = vmatprep.subr.mxu0 0.0
    %4372 = vmatpush1.msra.mxu0 0.0
    %4373 = vmatprep.subr.mxu0 0.0
    %4374 = vmatpush1.msra.mxu0 0.0
    %4375 = vmatprep.subr.mxu0 0.0
    %4376 = vmatpush1.msra.mxu0 0.0
    %4377 = vmatprep.subr.mxu0 0.0
    %4378 = vmatpush1.msra.mxu0 0.0
    %4379 = vmatprep.subr.mxu0 0.0
    %4380 = vmatpush1.msra.mxu0 0.0
    %4381 = vmatprep.subr.mxu0 0.0
    %4382 = vmatpush1.msra.mxu0 0.0
    %4383 = vmatprep.mubr.f32.mxu0 0.0
    %4384 = vmatmul.mubr.f32.gmra.mrb[0].mxu0 %v3934
    %v4385 = vpop.f32.mrb[0].mxu0
    %v4386 = vadd.f32 %v670, %v4385
    %v4387 = vpop.f32.mrb[0].mxu0
    %4388 = vdwg.mxu0
    %v4391 = vunpack.c.l.s4 1966171168
    %v4392 = vunpack.c.0.s8 %v4391
    %v4393 = vlaneseq
    %v4394 = vshrl.u32 %v4393, 7
    %v4395 = vsub.s32 %v4392, %v4394
    %v4396 = vrot.slane %v4316, %v4395
    %v4397 = vcombine.high %v4396, %v4396
    %v4399 = vunpack.c.l.s4 1966171168
    %v4400 = vunpack.c.0.s8 %v4399
    %v4401 = vlaneseq
    %v4402 = vshrl.u32 %v4401, 7
    %v4403 = vsub.s32 %v4400, %v4402
    %v4404 = vrot.slane %v4396, %v4403
    %v4406 = vunpack.c.l.s4 1966171168
    %v4407 = vunpack.c.0.s8 %v4406
    %v4408 = vlaneseq
    %v4409 = vshrl.u32 %v4408, 7
    %v4410 = vsub.s32 %v4407, %v4409
    %v4411 = vrot.slane %v4397, %v4410
    %v4412 = vlaneseq
    %v4413 = vshrl.u32 %v4412, 7
    %v4414 = vsub.s32 0, %v4413
    %v4415 = vrot.slane %v4404, %v4414
    %v4416 = vlaneseq
    %v4417 = vshrl.u32 %v4416, 7
    %v4418 = vsub.s32 0, %v4417
    %v4419 = vrot.slane %v4411, %v4418
    %v4422 = vadd.f32 %v552, %v4415
    %v4423 = vadd.f32 %v557, %v4415
    %v4424 = vadd.f32 %v562, %v4419
    %v4425 = vadd.f32 %v567, %v4419
    %v4426 = vtanh.pop %v4422
    %v4427 = vtanh.pop %v4423
    %v4428 = vtanh.pop %v4424
    %v4429 = vtanh.pop %v4425
    %v4430 = vmul.f32 %v4426, %v785
    %v4431 = vmul.f32 %v4427, %v785
    %v4432 = vmul.f32 %v4428, %v785
    %v4433 = vmul.f32 %v4429, %v785
    %v4434 = vsel %vm790, %v4430, 0.0
    %4435 = vadd.xlane.f32.xlu0 %v4434
    %v4436 = vpop.xlane.xlu0 %4435
    %v4437 = vsel %vm790, %v4431, 0.0
    %4438 = vadd.xlane.f32.xlu0 %v4437
    %v4439 = vpop.xlane.xlu0 %4438
    %v4440 = vsel %vm790, %v4432, 0.0
    %4441 = vadd.xlane.f32.xlu0 %v4440
    %v4442 = vpop.xlane.xlu0 %4441
    %v4443 = vsel %vm790, %v4433, 0.0
    %4444 = vadd.xlane.f32.xlu0 %v4443
    %v4445 = vpop.xlane.xlu0 %4444
    %v4446 = vadd.f32 %v4436, %v806
    %v4447 = vadd.f32 %v4439, %v806
    %v4448 = vadd.f32 %v4442, %v806
    %v4449 = vadd.f32 %v4445, %v806
    %v4450 = vsel %vm811, %v4446, -inf
    %v4451 = vsel %vm811, %v4447, -inf
    %v4452 = vmax.f32 %v4450, %v4451
    %v4453 = vrot.slane %v4452, 4
    %v4454 = vmax.f32 %v4452, %v4453
    %v4455 = vrot.slane %v4454, 2
    %v4456 = vmax.f32 %v4454, %v4455
    %v4457 = vrot.slane %v4456, 1
    %v4458 = vmax.f32 %v4456, %v4457
    %v4459 = vsel %vm811, %v4448, -inf
    %v4460 = vsel %vm811, %v4449, -inf
    %v4461 = vmax.f32 %v4459, %v4460
    %v4462 = vrot.slane %v4461, 4
    %v4463 = vmax.f32 %v4461, %v4462
    %v4464 = vrot.slane %v4463, 2
    %v4465 = vmax.f32 %v4463, %v4464
    %v4466 = vrot.slane %v4465, 1
    %v4467 = vmax.f32 %v4465, %v4466
    %v4468 = vsub.f32 %v4446, %v4458
    %v4469 = vsub.f32 %v4447, %v4458
    %v4470 = vsub.f32 %v4448, %v4467
    %v4471 = vsub.f32 %v4449, %v4467
    %v4472 = vmul.f32 %v4468, 1.442695
    %v4473 = vpow.pop %v4472
    %v4474 = vmul.f32 %v4469, 1.442695
    %v4475 = vpow.pop %v4474
    %v4476 = vmul.f32 %v4470, 1.442695
    %v4477 = vpow.pop %v4476
    %v4478 = vmul.f32 %v4471, 1.442695
    %v4479 = vpow.pop %v4478
    %v4480 = vsel %vm811, %v4473, 0.0
    %v4481 = vsel %vm811, %v4475, 0.0
    %v4482 = vadd.f32 %v4480, %v4481
    %v4483 = vrot.slane %v4482, 4
    %v4484 = vadd.f32 %v4482, %v4483
    %v4485 = vrot.slane %v4484, 2
    %v4486 = vadd.f32 %v4484, %v4485
    %v4487 = vrot.slane %v4486, 1
    %v4488 = vadd.f32 %v4486, %v4487
    %v4489 = vsel %vm811, %v4477, 0.0
    %v4490 = vsel %vm811, %v4479, 0.0
    %v4491 = vadd.f32 %v4489, %v4490
    %v4492 = vrot.slane %v4491, 4
    %v4493 = vadd.f32 %v4491, %v4492
    %v4494 = vrot.slane %v4493, 2
    %v4495 = vadd.f32 %v4493, %v4494
    %v4496 = vrot.slane %v4495, 1
    %v4497 = vadd.f32 %v4495, %v4496
    %v4498 = vrcp.pop %v4488
    %v4499 = vrcp.pop %v4497
    %v4500 = vmul.f32 %v4473, %v4498
    %v4501 = vmul.f32 %v4475, %v4498
    %v4502 = vmul.f32 %v4477, %v4499
    %v4503 = vmul.f32 %v4479, %v4499
    %4505 = vset.pattern.permute.xlu0 0
    %4506 = vperm.xlu0 %4505, %v4500
    %v4507 = vpop.permute.xlu0 %4506
    %4510 = vset.pattern.permute.xlu0 0
    %4511 = vperm.xlu0 %4510, %v4501
    %v4512 = vpop.permute.xlu0 %4511
    %4515 = vset.pattern.permute.xlu0 0
    %4516 = vperm.xlu0 %4515, %v4502
    %v4517 = vpop.permute.xlu0 %4516
    %4520 = vset.pattern.permute.xlu0 0
    %4521 = vperm.xlu0 %4520, %v4503
    %v4522 = vpop.permute.xlu0 %4521
    %v4524 = vmul.f32 %v46, %v4507
    %v4525 = vmul.f32 %v47, %v4512
    %v4526 = vmul.f32 %v48, %v4517
    %v4527 = vmul.f32 %v49, %v4522
    %v4528 = vsel %vm472, %v4524, 0.0
    %v4529 = vsel %vm472, %v4525, 0.0
    %v4530 = vadd.f32 %v4528, %v4529
    %v4531 = vrot.slane %v4530, 4
    %v4532 = vadd.f32 %v4530, %v4531
    %v4533 = vrot.slane %v4532, 2
    %v4534 = vadd.f32 %v4532, %v4533
    %v4535 = vrot.slane %v4534, 1
    %v4536 = vadd.f32 %v4534, %v4535
    %v4537 = vsel %vm472, %v4526, 0.0
    %v4538 = vsel %vm472, %v4527, 0.0
    %v4539 = vadd.f32 %v4537, %v4538
    %v4540 = vrot.slane %v4539, 4
    %v4541 = vadd.f32 %v4539, %v4540
    %v4542 = vrot.slane %v4541, 2
    %v4543 = vadd.f32 %v4541, %v4542
    %v4544 = vrot.slane %v4543, 1
    %v4545 = vadd.f32 %v4543, %v4544
    %4547 = vrot.lane.b32.xlu0 %v4386, 16
    %v4548 = vpop.permute.xlu0 %4547
    %v4550 = vadd.f32 %v455, %v4548
    %v4551 = vtanh.pop %v4550
    %v4552 = vmul.f32 %v4551, %v920
    %4554 = vrot.lane.b32.xlu0 %v4552, 112
    %v4555 = vpop.permute.xlu0 %4554
    %v4557 = vsel %vm927, %v4555, 0.0
    %4558 = vadd.xlane.f32.xlu0 %v4557
    %v4559 = vpop.xlane.xlu0 %4558
    %v4560 = vadd.f32 %v4559, %v934
    %v4561 = vrot.slane %v4386, 6
    %4562 = vrot.lane.b32.xlu0 %v4561, 16
    %v4563 = vpop.permute.xlu0 %4562
    %v4565 = vadd.f32 %v455, %v4563
    %v4566 = vtanh.pop %v4565
    %v4567 = vmul.f32 %v4566, %v920
    %4569 = vrot.lane.b32.xlu0 %v4567, 112
    %v4570 = vpop.permute.xlu0 %4569
    %v4572 = vsel %vm947, %v4570, 0.0
    %4573 = vadd.xlane.f32.xlu0 %v4572
    %v4574 = vpop.xlane.xlu0 %4573
    %v4575 = vadd.f32 %v4574, %v934
    %v4576 = vrot.slane %v4386, 4
    %4577 = vrot.lane.b32.xlu0 %v4576, 16
    %v4578 = vpop.permute.xlu0 %4577
    %v4580 = vadd.f32 %v455, %v4578
    %v4581 = vtanh.pop %v4580
    %v4582 = vmul.f32 %v4581, %v920
    %4584 = vrot.lane.b32.xlu0 %v4582, 112
    %v4585 = vpop.permute.xlu0 %4584
    %v4587 = vsel %vm963, %v4585, 0.0
    %4588 = vadd.xlane.f32.xlu0 %v4587
    %v4589 = vpop.xlane.xlu0 %4588
    %v4590 = vadd.f32 %v4589, %v934
    %v4591 = vrot.slane %v4386, 2
    %4592 = vrot.lane.b32.xlu0 %v4591, 16
    %v4593 = vpop.permute.xlu0 %4592
    %v4595 = vadd.f32 %v455, %v4593
    %v4596 = vtanh.pop %v4595
    %v4597 = vmul.f32 %v4596, %v920
    %4599 = vrot.lane.b32.xlu0 %v4597, 112
    %v4600 = vpop.permute.xlu0 %4599
    %v4602 = vsel %vm979, %v4600, 0.0
    %4603 = vadd.xlane.f32.xlu0 %v4602
    %v4604 = vpop.xlane.xlu0 %4603
    %v4605 = vadd.f32 %v4604, %v934
    %v4606 = vadd.f32 %v460, %v4548
    %v4607 = vtanh.pop %v4606
    %v4608 = vmul.f32 %v4607, %v920
    %4610 = vrot.lane.b32.xlu0 %v4608, 112
    %v4611 = vpop.permute.xlu0 %4610
    %v4613 = vsel %vm927, %v4611, 0.0
    %4614 = vadd.xlane.f32.xlu0 %v4613
    %v4615 = vpop.xlane.xlu0 %4614
    %v4616 = vadd.f32 %v4615, %v934
    %v4618 = vrot.slane %v4575, 2
    %v4620 = vmax.f32 %v4560, %v4618
    %v4622 = vrot.slane %v4590, 4
    %v4624 = vmax.f32 %v4620, %v4622
    %v4626 = vrot.slane %v4605, 6
    %v4628 = vmax.f32 %v4624, %v4626
    %v4629 = vmax.f32 %v4628, %v4616
    %v4630 = vsub.f32 %v4560, %v4629
    %v4631 = vmul.f32 %v4630, 1.442695
    %v4632 = vpow.pop %v4631
    %v4634 = vrot.slane %v4629, 6
    %v4636 = vsub.f32 %v4575, %v4634
    %v4637 = vmul.f32 %v4636, 1.442695
    %v4638 = vpow.pop %v4637
    %v4639 = vrot.slane %v4629, 4
    %v4641 = vsub.f32 %v4590, %v4639
    %v4642 = vmul.f32 %v4641, 1.442695
    %v4643 = vpow.pop %v4642
    %v4644 = vrot.slane %v4629, 2
    %v4646 = vsub.f32 %v4605, %v4644
    %v4647 = vmul.f32 %v4646, 1.442695
    %v4648 = vpow.pop %v4647
    %v4649 = vsub.f32 %v4616, %v4629
    %v4650 = vmul.f32 %v4649, 1.442695
    %v4651 = vpow.pop %v4650
    %v4653 = vrot.slane %v4638, 2
    %v4655 = vadd.f32 %v4632, %v4653
    %v4657 = vrot.slane %v4643, 4
    %v4659 = vadd.f32 %v4655, %v4657
    %v4661 = vrot.slane %v4648, 6
    %v4663 = vadd.f32 %v4659, %v4661
    %v4664 = vadd.f32 %v4663, %v4651
    %v4665 = vrcp.pop %v4664
    %v4666 = vmul.f32 %v4632, %v4665
    %4668 = vset.pattern.permute.xlu0 0
    %4669 = vperm.xlu0 %4668, %v4666
    %v4670 = vpop.permute.xlu0 %4669
    %v4672 = vmul.f32 %v4670, %v455
    %v4674 = vrot.slane %v4665, 6
    %v4676 = vmul.f32 %v4638, %v4674
    %4678 = vset.pattern.permute.xlu0 0
    %4679 = vperm.xlu0 %4678, %v4676
    %v4680 = vpop.permute.xlu0 %4679
    %v4682 = vmul.f32 %v4680, %v455
    %v4684 = vrot.slane %v4682, 2
    %v4686 = vadd.f32 %v4672, %v4684
    %v4687 = vrot.slane %v4665, 4
    %v4689 = vmul.f32 %v4643, %v4687
    %4691 = vset.pattern.permute.xlu0 0
    %4692 = vperm.xlu0 %4691, %v4689
    %v4693 = vpop.permute.xlu0 %4692
    %v4695 = vmul.f32 %v4693, %v455
    %v4697 = vrot.slane %v4695, 4
    %v4699 = vadd.f32 %v4686, %v4697
    %v4700 = vrot.slane %v4665, 2
    %v4702 = vmul.f32 %v4648, %v4700
    %4704 = vset.pattern.permute.xlu0 0
    %4705 = vperm.xlu0 %4704, %v4702
    %v4706 = vpop.permute.xlu0 %4705
    %v4708 = vmul.f32 %v4706, %v455
    %v4710 = vrot.slane %v4708, 6
    %v4712 = vadd.f32 %v4699, %v4710
    %v4713 = vmul.f32 %v4651, %v4665
    %4715 = vset.pattern.permute.xlu0 0
    %4716 = vperm.xlu0 %4715, %v4713
    %v4717 = vpop.permute.xlu0 %4716
    %v4719 = vmul.f32 %v4717, %v460
    %v4720 = vadd.f32 %v4712, %v4719
    %v4721 = vld [vmem:[#allocation2 + $0x2a0] sm:$0xff]
    %v4722 = vld [vmem:[#allocation2 + $0x2a8] sm:$0xff]
    %v4723 = vld [vmem:[#allocation2 + $0x2b0] sm:$0xff]
    %v4724 = vld [vmem:[#allocation2 + $0x2b8] sm:$0xff]
    %v4725 = vld [vmem:[#allocation2 + $0x2c0] sm:$0xff]
    %v4726 = vld [vmem:[#allocation2 + $0x2c8] sm:$0xff]
    %v4728 = vsel %vm1105, %v4720, 0
    %4730 = vmatprep.subr.mxu0 0.0
    %4731 = vmatpush1.msra.mxu0 %v4725
    %4732 = vmatprep.subr.mxu0 0.0
    %4733 = vmatpush1.msra.mxu0 %v4726
    %4734 = vmatprep.subr.mxu0 0.0
    %4735 = vmatpush1.msra.mxu0 0.0
    %4736 = vmatprep.subr.mxu0 0.0
    %4737 = vmatpush1.msra.mxu0 0.0
    %4738 = vmatprep.subr.mxu0 0.0
    %4739 = vmatpush1.msra.mxu0 0.0
    %4740 = vmatprep.subr.mxu0 0.0
    %4741 = vmatpush1.msra.mxu0 0.0
    %4742 = vmatprep.subr.mxu0 0.0
    %4743 = vmatpush1.msra.mxu0 0.0
    %4744 = vmatprep.subr.mxu0 0.0
    %4745 = vmatpush1.msra.mxu0 0.0
    %4746 = vmatprep.subr.mxu0 0.0
    %4747 = vmatpush1.msra.mxu0 0.0
    %4748 = vmatprep.subr.mxu0 0.0
    %4749 = vmatpush1.msra.mxu0 0.0
    %4750 = vmatprep.subr.mxu0 0.0
    %4751 = vmatpush1.msra.mxu0 0.0
    %4752 = vmatprep.subr.mxu0 0.0
    %4753 = vmatpush1.msra.mxu0 0.0
    %4754 = vmatprep.subr.mxu0 0.0
    %4755 = vmatpush1.msra.mxu0 0.0
    %4756 = vmatprep.subr.mxu0 0.0
    %4757 = vmatpush1.msra.mxu0 0.0
    %4758 = vmatprep.subr.mxu0 0.0
    %4759 = vmatpush1.msra.mxu0 0.0
    %4760 = vmatprep.subr.mxu0 0.0
    %4761 = vmatpush1.msra.mxu0 0.0
    %4762 = vmatprep.subr.mxu0 0.0
    %4763 = vmatpush1.msra.mxu0 0.0
    %4764 = vmatprep.subr.mxu0 0.0
    %4765 = vmatpush1.msra.mxu0 0.0
    %4766 = vmatprep.subr.mxu0 0.0
    %4767 = vmatpush1.msra.mxu0 0.0
    %4768 = vmatprep.subr.mxu0 0.0
    %4769 = vmatpush1.msra.mxu0 0.0
    %4770 = vmatprep.subr.mxu0 0.0
    %4771 = vmatpush1.msra.mxu0 0.0
    %4772 = vmatprep.subr.mxu0 0.0
    %4773 = vmatpush1.msra.mxu0 0.0
    %4774 = vmatprep.subr.mxu0 0.0
    %4775 = vmatpush1.msra.mxu0 0.0
    %4776 = vmatprep.subr.mxu0 0.0
    %4777 = vmatpush1.msra.mxu0 0.0
    %4778 = vmatprep.subr.mxu0 0.0
    %4779 = vmatpush1.msra.mxu0 0.0
    %4780 = vmatprep.subr.mxu0 0.0
    %4781 = vmatpush1.msra.mxu0 0.0
    %4782 = vmatprep.subr.mxu0 0.0
    %4783 = vmatpush1.msra.mxu0 0.0
    %4784 = vmatprep.subr.mxu0 0.0
    %4785 = vmatpush1.msra.mxu0 0.0
    %4786 = vmatprep.subr.mxu0 0.0
    %4787 = vmatpush1.msra.mxu0 0.0
    %4788 = vmatprep.subr.mxu0 0.0
    %4789 = vmatpush1.msra.mxu0 0.0
    %4790 = vmatprep.subr.mxu0 0.0
    %4791 = vmatpush1.msra.mxu0 0.0
    %4792 = vmatprep.subr.mxu0 0.0
    %4793 = vmatpush1.msra.mxu0 0.0
    %4794 = vmatprep.mubr.f32.mxu0 0.0
    %4795 = vmatmul.mubr.f32.gmra.mrb[0].mxu0 %v4728
    %v4796 = vpop.f32.mrb[0].mxu0
    %v4797 = vadd.f32 0.0, %v4796
    %v4798 = vpop.f32.mrb[0].mxu0
    %4799 = vdwg.mxu0
    %v4802 = vsel %vm1181, %v4545, %v4536
    %v4803 = vsel %vm472, %v4802, 0
    %4805 = vmatprep.subr.mxu0 0.0
    %4806 = vmatpush1.msra.mxu0 %v4721
    %4807 = vmatprep.subr.mxu0 0.0
    %4808 = vmatpush1.msra.mxu0 %v4722
    %4809 = vmatprep.subr.mxu0 0.0
    %4810 = vmatpush1.msra.mxu0 %v4723
    %4811 = vmatprep.subr.mxu0 0.0
    %4812 = vmatpush1.msra.mxu0 %v4724
    %4813 = vmatprep.subr.mxu0 0.0
    %4814 = vmatpush1.msra.mxu0 0.0
    %4815 = vmatprep.subr.mxu0 0.0
    %4816 = vmatpush1.msra.mxu0 0.0
    %4817 = vmatprep.subr.mxu0 0.0
    %4818 = vmatpush1.msra.mxu0 0.0
    %4819 = vmatprep.subr.mxu0 0.0
    %4820 = vmatpush1.msra.mxu0 0.0
    %4821 = vmatprep.subr.mxu0 0.0
    %4822 = vmatpush1.msra.mxu0 0.0
    %4823 = vmatprep.subr.mxu0 0.0
    %4824 = vmatpush1.msra.mxu0 0.0
    %4825 = vmatprep.subr.mxu0 0.0
    %4826 = vmatpush1.msra.mxu0 0.0
    %4827 = vmatprep.subr.mxu0 0.0
    %4828 = vmatpush1.msra.mxu0 0.0
    %4829 = vmatprep.subr.mxu0 0.0
    %4830 = vmatpush1.msra.mxu0 0.0
    %4831 = vmatprep.subr.mxu0 0.0
    %4832 = vmatpush1.msra.mxu0 0.0
    %4833 = vmatprep.subr.mxu0 0.0
    %4834 = vmatpush1.msra.mxu0 0.0
    %4835 = vmatprep.subr.mxu0 0.0
    %4836 = vmatpush1.msra.mxu0 0.0
    %4837 = vmatprep.subr.mxu0 0.0
    %4838 = vmatpush1.msra.mxu0 0.0
    %4839 = vmatprep.subr.mxu0 0.0
    %4840 = vmatpush1.msra.mxu0 0.0
    %4841 = vmatprep.subr.mxu0 0.0
    %4842 = vmatpush1.msra.mxu0 0.0
    %4843 = vmatprep.subr.mxu0 0.0
    %4844 = vmatpush1.msra.mxu0 0.0
    %4845 = vmatprep.subr.mxu0 0.0
    %4846 = vmatpush1.msra.mxu0 0.0
    %4847 = vmatprep.subr.mxu0 0.0
    %4848 = vmatpush1.msra.mxu0 0.0
    %4849 = vmatprep.subr.mxu0 0.0
    %4850 = vmatpush1.msra.mxu0 0.0
    %4851 = vmatprep.subr.mxu0 0.0
    %4852 = vmatpush1.msra.mxu0 0.0
    %4853 = vmatprep.subr.mxu0 0.0
    %4854 = vmatpush1.msra.mxu0 0.0
    %4855 = vmatprep.subr.mxu0 0.0
    %4856 = vmatpush1.msra.mxu0 0.0
    %4857 = vmatprep.subr.mxu0 0.0
    %4858 = vmatpush1.msra.mxu0 0.0
    %4859 = vmatprep.subr.mxu0 0.0
    %4860 = vmatpush1.msra.mxu0 0.0
    %4861 = vmatprep.subr.mxu0 0.0
    %4862 = vmatpush1.msra.mxu0 0.0
    %4863 = vmatprep.subr.mxu0 0.0
    %4864 = vmatpush1.msra.mxu0 0.0
    %4865 = vmatprep.subr.mxu0 0.0
    %4866 = vmatpush1.msra.mxu0 0.0
    %4867 = vmatprep.subr.mxu0 0.0
    %4868 = vmatpush1.msra.mxu0 0.0
    %4869 = vmatprep.mubr.f32.mxu0 0.0
    %4870 = vmatmul.mubr.f32.gmra.mrb[0].mxu0 %v4803
    %v4871 = vpop.f32.mrb[0].mxu0
    %v4872 = vadd.f32 %v4797, %v4871
    %v4873 = vpop.f32.mrb[0].mxu0
    %4874 = vdwg.mxu0
    %v4875 = vld [vmem:[#allocation2 + $0x2d0] sm:$0xff]
    %v4876 = vld [vmem:[#allocation2 + $0x2d8] sm:$0xff]
    %v4877 = vld [vmem:[#allocation2 + $0x2e0] sm:$0xff]
    %v4878 = vld [vmem:[#allocation2 + $0x2e8] sm:$0xff]
    %4879 = vmatprep.subr.mxu0 0.0
    %4880 = vmatpush1.msra.mxu0 %v4875
    %4881 = vmatprep.subr.mxu0 0.0
    %4882 = vmatpush1.msra.mxu0 %v4876
    %4883 = vmatprep.subr.mxu0 0.0
    %4884 = vmatpush1.msra.mxu0 %v4877
    %4885 = vmatprep.subr.mxu0 0.0
    %4886 = vmatpush1.msra.mxu0 %v4878
    %4887 = vmatprep.subr.mxu0 0.0
    %4888 = vmatpush1.msra.mxu0 0.0
    %4889 = vmatprep.subr.mxu0 0.0
    %4890 = vmatpush1.msra.mxu0 0.0
    %4891 = vmatprep.subr.mxu0 0.0
    %4892 = vmatpush1.msra.mxu0 0.0
    %4893 = vmatprep.subr.mxu0 0.0
    %4894 = vmatpush1.msra.mxu0 0.0
    %4895 = vmatprep.subr.mxu0 0.0
    %4896 = vmatpush1.msra.mxu0 0.0
    %4897 = vmatprep.subr.mxu0 0.0
    %4898 = vmatpush1.msra.mxu0 0.0
    %4899 = vmatprep.subr.mxu0 0.0
    %4900 = vmatpush1.msra.mxu0 0.0
    %4901 = vmatprep.subr.mxu0 0.0
    %4902 = vmatpush1.msra.mxu0 0.0
    %4903 = vmatprep.subr.mxu0 0.0
    %4904 = vmatpush1.msra.mxu0 0.0
    %4905 = vmatprep.subr.mxu0 0.0
    %4906 = vmatpush1.msra.mxu0 0.0
    %4907 = vmatprep.subr.mxu0 0.0
    %4908 = vmatpush1.msra.mxu0 0.0
    %4909 = vmatprep.subr.mxu0 0.0
    %4910 = vmatpush1.msra.mxu0 0.0
    %4911 = vmatprep.subr.mxu0 0.0
    %4912 = vmatpush1.msra.mxu0 0.0
    %4913 = vmatprep.subr.mxu0 0.0
    %4914 = vmatpush1.msra.mxu0 0.0
    %4915 = vmatprep.subr.mxu0 0.0
    %4916 = vmatpush1.msra.mxu0 0.0
    %4917 = vmatprep.subr.mxu0 0.0
    %4918 = vmatpush1.msra.mxu0 0.0
    %4919 = vmatprep.subr.mxu0 0.0
    %4920 = vmatpush1.msra.mxu0 0.0
    %4921 = vmatprep.subr.mxu0 0.0
    %4922 = vmatpush1.msra.mxu0 0.0
    %4923 = vmatprep.subr.mxu0 0.0
    %4924 = vmatpush1.msra.mxu0 0.0
    %4925 = vmatprep.subr.mxu0 0.0
    %4926 = vmatpush1.msra.mxu0 0.0
    %4927 = vmatprep.subr.mxu0 0.0
    %4928 = vmatpush1.msra.mxu0 0.0
    %4929 = vmatprep.subr.mxu0 0.0
    %4930 = vmatpush1.msra.mxu0 0.0
    %4931 = vmatprep.subr.mxu0 0.0
    %4932 = vmatpush1.msra.mxu0 0.0
    %4933 = vmatprep.subr.mxu0 0.0
    %4934 = vmatpush1.msra.mxu0 0.0
    %4935 = vmatprep.subr.mxu0 0.0
    %4936 = vmatpush1.msra.mxu0 0.0
    %4937 = vmatprep.subr.mxu0 0.0
    %4938 = vmatpush1.msra.mxu0 0.0
    %4939 = vmatprep.subr.mxu0 0.0
    %4940 = vmatpush1.msra.mxu0 0.0
    %4941 = vmatprep.subr.mxu0 0.0
    %4942 = vmatpush1.msra.mxu0 0.0
    %4943 = vmatprep.mubr.f32.mxu0 0.0
    %4944 = vmatmul.mubr.f32.gmra.mrb[0].mxu0 %v3934
    %v4945 = vpop.f32.mrb[0].mxu0
    %v4946 = vadd.f32 0.0, %v4945
    %v4947 = vpop.f32.mrb[0].mxu0
    %4948 = vdwg.mxu0
    %v4949 = vadd.f32 %v4872, %v4946
    %v4950 = vadd.f32 %v4949, %v1333
    %v4951 = vxor.u32 %v4950, 2147483648
    %v4952 = vmul.f32 %v4951, 1.442695
    %v4953 = vpow.pop %v4952
    %v4954 = vadd.f32 %v4953, 1.0
    %v4955 = vrcp.pop %v4954
    %v4956 = vmul.f32 1.0, %v4955
    %v4957 = vtanh.pop %v4950
    %v4958 = vmul.f32 %v4956, %v3769
    %4960 = vrot.lane.b32.xlu0 %v4957, 64
    %v4961 = vpop.permute.xlu0 %4960
    %v4963 = vmul.f32 %v4956, %v4961
    %4965 = vrot.lane.b32.xlu0 %v4963, 32
    %v4966 = vpop.permute.xlu0 %4965
    %v4968 = vadd.f32 %v4958, %v4966
    %v4969 = vtanh.pop %v4968
    %4971 = vrot.lane.b32.xlu0 %v4969, 64
    %v4972 = vpop.permute.xlu0 %4971
    %v4974 = vmul.f32 %v4956, %v4972
    %v4975 = vld [vmem:[#allocation2 + $0x270] sm:$0xff]
    %v4976 = vld [vmem:[#allocation2 + $0x278] sm:$0xff]
    %v4977 = vld [vmem:[#allocation2 + $0x280] sm:$0xff]
    %v4978 = vld [vmem:[#allocation2 + $0x288] sm:$0xff]
    %v4979 = vld [vmem:[#allocation2 + $0x290] sm:$0xff]
    %v4980 = vld [vmem:[#allocation2 + $0x298] sm:$0xff]
    %4981 = vmatprep.subr.mxu0 0.0
    %4982 = vmatpush1.msra.mxu0 %v4979
    %4983 = vmatprep.subr.mxu0 0.0
    %4984 = vmatpush1.msra.mxu0 %v4980
    %4985 = vmatprep.subr.mxu0 0.0
    %4986 = vmatpush1.msra.mxu0 0.0
    %4987 = vmatprep.subr.mxu0 0.0
    %4988 = vmatpush1.msra.mxu0 0.0
    %4989 = vmatprep.subr.mxu0 0.0
    %4990 = vmatpush1.msra.mxu0 0.0
    %4991 = vmatprep.subr.mxu0 0.0
    %4992 = vmatpush1.msra.mxu0 0.0
    %4993 = vmatprep.subr.mxu0 0.0
    %4994 = vmatpush1.msra.mxu0 0.0
    %4995 = vmatprep.subr.mxu0 0.0
    %4996 = vmatpush1.msra.mxu0 0.0
    %4997 = vmatprep.subr.mxu0 0.0
    %4998 = vmatpush1.msra.mxu0 0.0
    %4999 = vmatprep.subr.mxu0 0.0
    %5000 = vmatpush1.msra.mxu0 0.0
    %5001 = vmatprep.subr.mxu0 0.0
    %5002 = vmatpush1.msra.mxu0 0.0
    %5003 = vmatprep.subr.mxu0 0.0
    %5004 = vmatpush1.msra.mxu0 0.0
    %5005 = vmatprep.subr.mxu0 0.0
    %5006 = vmatpush1.msra.mxu0 0.0
    %5007 = vmatprep.subr.mxu0 0.0
    %5008 = vmatpush1.msra.mxu0 0.0
    %5009 = vmatprep.subr.mxu0 0.0
    %5010 = vmatpush1.msra.mxu0 0.0
    %5011 = vmatprep.subr.mxu0 0.0
    %5012 = vmatpush1.msra.mxu0 0.0
    %5013 = vmatprep.subr.mxu0 0.0
    %5014 = vmatpush1.msra.mxu0 0.0
    %5015 = vmatprep.subr.mxu0 0.0
    %5016 = vmatpush1.msra.mxu0 0.0
    %5017 = vmatprep.subr.mxu0 0.0
    %5018 = vmatpush1.msra.mxu0 0.0
    %5019 = vmatprep.subr.mxu0 0.0
    %5020 = vmatpush1.msra.mxu0 0.0
    %5021 = vmatprep.subr.mxu0 0.0
    %5022 = vmatpush1.msra.mxu0 0.0
    %5023 = vmatprep.subr.mxu0 0.0
    %5024 = vmatpush1.msra.mxu0 0.0
    %5025 = vmatprep.subr.mxu0 0.0
    %5026 = vmatpush1.msra.mxu0 0.0
    %5027 = vmatprep.subr.mxu0 0.0
    %5028 = vmatpush1.msra.mxu0 0.0
    %5029 = vmatprep.subr.mxu0 0.0
    %5030 = vmatpush1.msra.mxu0 0.0
    %5031 = vmatprep.subr.mxu0 0.0
    %5032 = vmatpush1.msra.mxu0 0.0
    %5033 = vmatprep.subr.mxu0 0.0
    %5034 = vmatpush1.msra.mxu0 0.0
    %5035 = vmatprep.subr.mxu0 0.0
    %5036 = vmatpush1.msra.mxu0 0.0
    %5037 = vmatprep.subr.mxu0 0.0
    %5038 = vmatpush1.msra.mxu0 0.0
    %5039 = vmatprep.subr.mxu0 0.0
    %5040 = vmatpush1.msra.mxu0 0.0
    %5041 = vmatprep.subr.mxu0 0.0
    %5042 = vmatpush1.msra.mxu0 0.0
    %5043 = vmatprep.subr.mxu0 0.0
    %5044 = vmatpush1.msra.mxu0 0.0
    %5045 = vmatprep.mubr.f32.mxu0 0.0
    %5046 = vmatmul.mubr.f32.gmra.mrb[0].mxu0 %v4728
    %v5047 = vpop.f32.mrb[0].mxu0
    %v5048 = vadd.f32 0.0, %v5047
    %v5049 = vpop.f32.mrb[0].mxu0
    %5050 = vdwg.mxu0
    %5051 = vmatprep.subr.mxu0 0.0
    %5052 = vmatpush1.msra.mxu0 %v4975
    %5053 = vmatprep.subr.mxu0 0.0
    %5054 = vmatpush1.msra.mxu0 %v4976
    %5055 = vmatprep.subr.mxu0 0.0
    %5056 = vmatpush1.msra.mxu0 %v4977
    %5057 = vmatprep.subr.mxu0 0.0
    %5058 = vmatpush1.msra.mxu0 %v4978
    %5059 = vmatprep.subr.mxu0 0.0
    %5060 = vmatpush1.msra.mxu0 0.0
    %5061 = vmatprep.subr.mxu0 0.0
    %5062 = vmatpush1.msra.mxu0 0.0
    %5063 = vmatprep.subr.mxu0 0.0
    %5064 = vmatpush1.msra.mxu0 0.0
    %5065 = vmatprep.subr.mxu0 0.0
    %5066 = vmatpush1.msra.mxu0 0.0
    %5067 = vmatprep.subr.mxu0 0.0
    %5068 = vmatpush1.msra.mxu0 0.0
    %5069 = vmatprep.subr.mxu0 0.0
    %5070 = vmatpush1.msra.mxu0 0.0
    %5071 = vmatprep.subr.mxu0 0.0
    %5072 = vmatpush1.msra.mxu0 0.0
    %5073 = vmatprep.subr.mxu0 0.0
    %5074 = vmatpush1.msra.mxu0 0.0
    %5075 = vmatprep.subr.mxu0 0.0
    %5076 = vmatpush1.msra.mxu0 0.0
    %5077 = vmatprep.subr.mxu0 0.0
    %5078 = vmatpush1.msra.mxu0 0.0
    %5079 = vmatprep.subr.mxu0 0.0
    %5080 = vmatpush1.msra.mxu0 0.0
    %5081 = vmatprep.subr.mxu0 0.0
    %5082 = vmatpush1.msra.mxu0 0.0
    %5083 = vmatprep.subr.mxu0 0.0
    %5084 = vmatpush1.msra.mxu0 0.0
    %5085 = vmatprep.subr.mxu0 0.0
    %5086 = vmatpush1.msra.mxu0 0.0
    %5087 = vmatprep.subr.mxu0 0.0
    %5088 = vmatpush1.msra.mxu0 0.0
    %5089 = vmatprep.subr.mxu0 0.0
    %5090 = vmatpush1.msra.mxu0 0.0
    %5091 = vmatprep.subr.mxu0 0.0
    %5092 = vmatpush1.msra.mxu0 0.0
    %5093 = vmatprep.subr.mxu0 0.0
    %5094 = vmatpush1.msra.mxu0 0.0
    %5095 = vmatprep.subr.mxu0 0.0
    %5096 = vmatpush1.msra.mxu0 0.0
    %5097 = vmatprep.subr.mxu0 0.0
    %5098 = vmatpush1.msra.mxu0 0.0
    %5099 = vmatprep.subr.mxu0 0.0
    %5100 = vmatpush1.msra.mxu0 0.0
    %5101 = vmatprep.subr.mxu0 0.0
    %5102 = vmatpush1.msra.mxu0 0.0
    %5103 = vmatprep.subr.mxu0 0.0
    %5104 = vmatpush1.msra.mxu0 0.0
    %5105 = vmatprep.subr.mxu0 0.0
    %5106 = vmatpush1.msra.mxu0 0.0
    %5107 = vmatprep.subr.mxu0 0.0
    %5108 = vmatpush1.msra.mxu0 0.0
    %5109 = vmatprep.subr.mxu0 0.0
    %5110 = vmatpush1.msra.mxu0 0.0
    %5111 = vmatprep.subr.mxu0 0.0
    %5112 = vmatpush1.msra.mxu0 0.0
    %5113 = vmatprep.subr.mxu0 0.0
    %5114 = vmatpush1.msra.mxu0 0.0
    %5115 = vmatprep.mubr.f32.mxu0 0.0
    %5116 = vmatmul.mubr.f32.gmra.mrb[0].mxu0 %v4803
    %v5117 = vpop.f32.mrb[0].mxu0
    %v5118 = vadd.f32 %v5048, %v5117
    %v5119 = vpop.f32.mrb[0].mxu0
    %5120 = vdwg.mxu0
    %v5121 = vadd.f32 %v5118, %v1508
    %v5122 = vld [vmem:[#allocation2 + $0x2f0] sm:$0xff]
    %v5123 = vld [vmem:[#allocation2 + $0x2f8] sm:$0xff]
    %v5124 = vld [vmem:[#allocation2 + $0x300] sm:$0xff]
    %v5125 = vld [vmem:[#allocation2 + $0x308] sm:$0xff]
    %v5126 = vld [vmem:[#allocation2 + $0x310] sm:$0xff]
    %v5127 = vld [vmem:[#allocation2 + $0x318] sm:$0xff]
    %v5128 = vld [vmem:[#allocation2 + $0x320] sm:$0xff]
    %v5129 = vld [vmem:[#allocation2 + $0x328] sm:$0xff]
    %5131 = vrot.lane.b32.xlu0 %v4974, 32
    %v5132 = vpop.permute.xlu0 %5131
    %v5133 = vsel %vm472, %v5132, 0
    %5135 = vmatprep.subr.mxu0 0.0
    %5136 = vmatpush1.msra.mxu0 %v5126
    %5137 = vmatprep.subr.mxu0 0.0
    %5138 = vmatpush1.msra.mxu0 %v5127
    %5139 = vmatprep.subr.mxu0 0.0
    %5140 = vmatpush1.msra.mxu0 %v5128
    %5141 = vmatprep.subr.mxu0 0.0
    %5142 = vmatpush1.msra.mxu0 %v5129
    %5143 = vmatprep.subr.mxu0 0.0
    %5144 = vmatpush1.msra.mxu0 0.0
    %5145 = vmatprep.subr.mxu0 0.0
    %5146 = vmatpush1.msra.mxu0 0.0
    %5147 = vmatprep.subr.mxu0 0.0
    %5148 = vmatpush1.msra.mxu0 0.0
    %5149 = vmatprep.subr.mxu0 0.0
    %5150 = vmatpush1.msra.mxu0 0.0
    %5151 = vmatprep.subr.mxu0 0.0
    %5152 = vmatpush1.msra.mxu0 0.0
    %5153 = vmatprep.subr.mxu0 0.0
    %5154 = vmatpush1.msra.mxu0 0.0
    %5155 = vmatprep.subr.mxu0 0.0
    %5156 = vmatpush1.msra.mxu0 0.0
    %5157 = vmatprep.subr.mxu0 0.0
    %5158 = vmatpush1.msra.mxu0 0.0
    %5159 = vmatprep.subr.mxu0 0.0
    %5160 = vmatpush1.msra.mxu0 0.0
    %5161 = vmatprep.subr.mxu0 0.0
    %5162 = vmatpush1.msra.mxu0 0.0
    %5163 = vmatprep.subr.mxu0 0.0
    %5164 = vmatpush1.msra.mxu0 0.0
    %5165 = vmatprep.subr.mxu0 0.0
    %5166 = vmatpush1.msra.mxu0 0.0
    %5167 = vmatprep.subr.mxu0 0.0
    %5168 = vmatpush1.msra.mxu0 0.0
    %5169 = vmatprep.subr.mxu0 0.0
    %5170 = vmatpush1.msra.mxu0 0.0
    %5171 = vmatprep.subr.mxu0 0.0
    %5172 = vmatpush1.msra.mxu0 0.0
    %5173 = vmatprep.subr.mxu0 0.0
    %5174 = vmatpush1.msra.mxu0 0.0
    %5175 = vmatprep.subr.mxu0 0.0
    %5176 = vmatpush1.msra.mxu0 0.0
    %5177 = vmatprep.subr.mxu0 0.0
    %5178 = vmatpush1.msra.mxu0 0.0
    %5179 = vmatprep.subr.mxu0 0.0
    %5180 = vmatpush1.msra.mxu0 0.0
    %5181 = vmatprep.subr.mxu0 0.0
    %5182 = vmatpush1.msra.mxu0 0.0
    %5183 = vmatprep.subr.mxu0 0.0
    %5184 = vmatpush1.msra.mxu0 0.0
    %5185 = vmatprep.subr.mxu0 0.0
    %5186 = vmatpush1.msra.mxu0 0.0
    %5187 = vmatprep.subr.mxu0 0.0
    %5188 = vmatpush1.msra.mxu0 0.0
    %5189 = vmatprep.subr.mxu0 0.0
    %5190 = vmatpush1.msra.mxu0 0.0
    %5191 = vmatprep.subr.mxu0 0.0
    %5192 = vmatpush1.msra.mxu0 0.0
    %5193 = vmatprep.subr.mxu0 0.0
    %5194 = vmatpush1.msra.mxu0 0.0
    %5195 = vmatprep.subr.mxu0 0.0
    %5196 = vmatpush1.msra.mxu0 0.0
    %5197 = vmatprep.subr.mxu0 0.0
    %5198 = vmatpush1.msra.mxu0 0.0
    %5199 = vmatprep.mubr.f32.mxu0 0.0
    %5200 = vmatmul.mubr.f32.gmra.mrb[0].mxu0 %v5133
    %v5201 = vpop.f32.mrb[0].mxu0
    %v5202 = vadd.f32 0.0, %v5201
    %v5203 = vpop.f32.mrb[0].mxu0
    %5204 = vdwg.mxu0
    %5205 = vmatprep.subr.mxu0 0.0
    %5206 = vmatpush1.msra.mxu0 %v5122
    %5207 = vmatprep.subr.mxu0 0.0
    %5208 = vmatpush1.msra.mxu0 %v5123
    %5209 = vmatprep.subr.mxu0 0.0
    %5210 = vmatpush1.msra.mxu0 %v5124
    %5211 = vmatprep.subr.mxu0 0.0
    %5212 = vmatpush1.msra.mxu0 %v5125
    %5213 = vmatprep.subr.mxu0 0.0
    %5214 = vmatpush1.msra.mxu0 0.0
    %5215 = vmatprep.subr.mxu0 0.0
    %5216 = vmatpush1.msra.mxu0 0.0
    %5217 = vmatprep.subr.mxu0 0.0
    %5218 = vmatpush1.msra.mxu0 0.0
    %5219 = vmatprep.subr.mxu0 0.0
    %5220 = vmatpush1.msra.mxu0 0.0
    %5221 = vmatprep.subr.mxu0 0.0
    %5222 = vmatpush1.msra.mxu0 0.0
    %5223 = vmatprep.subr.mxu0 0.0
    %5224 = vmatpush1.msra.mxu0 0.0
    %5225 = vmatprep.subr.mxu0 0.0
    %5226 = vmatpush1.msra.mxu0 0.0
    %5227 = vmatprep.subr.mxu0 0.0
    %5228 = vmatpush1.msra.mxu0 0.0
    %5229 = vmatprep.subr.mxu0 0.0
    %5230 = vmatpush1.msra.mxu0 0.0
    %5231 = vmatprep.subr.mxu0 0.0
    %5232 = vmatpush1.msra.mxu0 0.0
    %5233 = vmatprep.subr.mxu0 0.0
    %5234 = vmatpush1.msra.mxu0 0.0
    %5235 = vmatprep.subr.mxu0 0.0
    %5236 = vmatpush1.msra.mxu0 0.0
    %5237 = vmatprep.subr.mxu0 0.0
    %5238 = vmatpush1.msra.mxu0 0.0
    %5239 = vmatprep.subr.mxu0 0.0
    %5240 = vmatpush1.msra.mxu0 0.0
    %5241 = vmatprep.subr.mxu0 0.0
    %5242 = vmatpush1.msra.mxu0 0.0
    %5243 = vmatprep.subr.mxu0 0.0
    %5244 = vmatpush1.msra.mxu0 0.0
    %5245 = vmatprep.subr.mxu0 0.0
    %5246 = vmatpush1.msra.mxu0 0.0
    %5247 = vmatprep.subr.mxu0 0.0
    %5248 = vmatpush1.msra.mxu0 0.0
    %5249 = vmatprep.subr.mxu0 0.0
    %5250 = vmatpush1.msra.mxu0 0.0
    %5251 = vmatprep.subr.mxu0 0.0
    %5252 = vmatpush1.msra.mxu0 0.0
    %5253 = vmatprep.subr.mxu0 0.0
    %5254 = vmatpush1.msra.mxu0 0.0
    %5255 = vmatprep.subr.mxu0 0.0
    %5256 = vmatpush1.msra.mxu0 0.0
    %5257 = vmatprep.subr.mxu0 0.0
    %5258 = vmatpush1.msra.mxu0 0.0
    %5259 = vmatprep.subr.mxu0 0.0
    %5260 = vmatpush1.msra.mxu0 0.0
    %5261 = vmatprep.subr.mxu0 0.0
    %5262 = vmatpush1.msra.mxu0 0.0
    %5263 = vmatprep.subr.mxu0 0.0
    %5264 = vmatpush1.msra.mxu0 0.0
    %5265 = vmatprep.subr.mxu0 0.0
    %5266 = vmatpush1.msra.mxu0 0.0
    %5267 = vmatprep.subr.mxu0 0.0
    %5268 = vmatpush1.msra.mxu0 0.0
    %5269 = vmatprep.mubr.f32.mxu0 0.0
    %5270 = vmatmul.mubr.f32.gmra.mrb[0].mxu0 %v3934
    %v5271 = vpop.f32.mrb[0].mxu0
    %v5272 = vadd.f32 %v5202, %v5271
    %v5273 = vpop.f32.mrb[0].mxu0
    %5274 = vdwg.mxu0
    %v5275 = vld [vmem:[#allocation2 + $0x330] sm:$0xff]
    %v5276 = vld [vmem:[#allocation2 + $0x338] sm:$0xff]
    %v5278 = vsel %vm1105, %v5121, 0
    %5280 = vmatprep.subr.mxu0 0.0
    %5281 = vmatpush1.msra.mxu0 %v5275
    %5282 = vmatprep.subr.mxu0 0.0
    %5283 = vmatpush1.msra.mxu0 %v5276
    %5284 = vmatprep.subr.mxu0 0.0
    %5285 = vmatpush1.msra.mxu0 0.0
    %5286 = vmatprep.subr.mxu0 0.0
    %5287 = vmatpush1.msra.mxu0 0.0
    %5288 = vmatprep.subr.mxu0 0.0
    %5289 = vmatpush1.msra.mxu0 0.0
    %5290 = vmatprep.subr.mxu0 0.0
    %5291 = vmatpush1.msra.mxu0 0.0
    %5292 = vmatprep.subr.mxu0 0.0
    %5293 = vmatpush1.msra.mxu0 0.0
    %5294 = vmatprep.subr.mxu0 0.0
    %5295 = vmatpush1.msra.mxu0 0.0
    %5296 = vmatprep.subr.mxu0 0.0
    %5297 = vmatpush1.msra.mxu0 0.0
    %5298 = vmatprep.subr.mxu0 0.0
    %5299 = vmatpush1.msra.mxu0 0.0
    %5300 = vmatprep.subr.mxu0 0.0
    %5301 = vmatpush1.msra.mxu0 0.0
    %5302 = vmatprep.subr.mxu0 0.0
    %5303 = vmatpush1.msra.mxu0 0.0
    %5304 = vmatprep.subr.mxu0 0.0
    %5305 = vmatpush1.msra.mxu0 0.0
    %5306 = vmatprep.subr.mxu0 0.0
    %5307 = vmatpush1.msra.mxu0 0.0
    %5308 = vmatprep.subr.mxu0 0.0
    %5309 = vmatpush1.msra.mxu0 0.0
    %5310 = vmatprep.subr.mxu0 0.0
    %5311 = vmatpush1.msra.mxu0 0.0
    %5312 = vmatprep.subr.mxu0 0.0
    %5313 = vmatpush1.msra.mxu0 0.0
    %5314 = vmatprep.subr.mxu0 0.0
    %5315 = vmatpush1.msra.mxu0 0.0
    %5316 = vmatprep.subr.mxu0 0.0
    %5317 = vmatpush1.msra.mxu0 0.0
    %5318 = vmatprep.subr.mxu0 0.0
    %5319 = vmatpush1.msra.mxu0 0.0
    %5320 = vmatprep.subr.mxu0 0.0
    %5321 = vmatpush1.msra.mxu0 0.0
    %5322 = vmatprep.subr.mxu0 0.0
    %5323 = vmatpush1.msra.mxu0 0.0
    %5324 = vmatprep.subr.mxu0 0.0
    %5325 = vmatpush1.msra.mxu0 0.0
    %5326 = vmatprep.subr.mxu0 0.0
    %5327 = vmatpush1.msra.mxu0 0.0
    %5328 = vmatprep.subr.mxu0 0.0
    %5329 = vmatpush1.msra.mxu0 0.0
    %5330 = vmatprep.subr.mxu0 0.0
    %5331 = vmatpush1.msra.mxu0 0.0
    %5332 = vmatprep.subr.mxu0 0.0
    %5333 = vmatpush1.msra.mxu0 0.0
    %5334 = vmatprep.subr.mxu0 0.0
    %5335 = vmatpush1.msra.mxu0 0.0
    %5336 = vmatprep.subr.mxu0 0.0
    %5337 = vmatpush1.msra.mxu0 0.0
    %5338 = vmatprep.subr.mxu0 0.0
    %5339 = vmatpush1.msra.mxu0 0.0
    %5340 = vmatprep.subr.mxu0 0.0
    %5341 = vmatpush1.msra.mxu0 0.0
    %5342 = vmatprep.subr.mxu0 0.0
    %5343 = vmatpush1.msra.mxu0 0.0
    %5344 = vmatprep.mubr.f32.mxu0 0.0
    %5345 = vmatmul.mubr.f32.gmra.mrb[0].mxu0 %v5278
    %v5346 = vpop.f32.mrb[0].mxu0
    %v5347 = vadd.f32 0.0, %v5346
    %v5348 = vpop.f32.mrb[0].mxu0
    %5349 = vdwg.mxu0
    %v5350 = vadd.f32 %v5272, %v5347
    %v5351 = vadd.f32 %v5350, %v1742
    %v5352 = vtanh.pop %v5351
    %v5354 = vsel %vm1749, %v5351, 0
    %5356 = vmatprep.subr.mxu0 0.0
    %5357 = vmatpush1.msra.mxu0 %v587
    %5358 = vmatprep.subr.mxu0 0.0
    %5359 = vmatpush1.msra.mxu0 %v1754
    %5360 = vmatprep.subr.mxu0 0.0
    %5361 = vmatpush1.msra.mxu0 0.0
    %5362 = vmatprep.subr.mxu0 0.0
    %5363 = vmatpush1.msra.mxu0 0.0
    %5364 = vmatprep.subr.mxu0 0.0
    %5365 = vmatpush1.msra.mxu0 0.0
    %5366 = vmatprep.subr.mxu0 0.0
    %5367 = vmatpush1.msra.mxu0 0.0
    %5368 = vmatprep.subr.mxu0 0.0
    %5369 = vmatpush1.msra.mxu0 0.0
    %5370 = vmatprep.subr.mxu0 0.0
    %5371 = vmatpush1.msra.mxu0 0.0
    %5372 = vmatprep.subr.mxu0 0.0
    %5373 = vmatpush1.msra.mxu0 0.0
    %5374 = vmatprep.subr.mxu0 0.0
    %5375 = vmatpush1.msra.mxu0 0.0
    %5376 = vmatprep.subr.mxu0 0.0
    %5377 = vmatpush1.msra.mxu0 0.0
    %5378 = vmatprep.subr.mxu0 0.0
    %5379 = vmatpush1.msra.mxu0 0.0
    %5380 = vmatprep.subr.mxu0 0.0
    %5381 = vmatpush1.msra.mxu0 0.0
    %5382 = vmatprep.subr.mxu0 0.0
    %5383 = vmatpush1.msra.mxu0 0.0
    %5384 = vmatprep.subr.mxu0 0.0
    %5385 = vmatpush1.msra.mxu0 0.0
    %5386 = vmatprep.subr.mxu0 0.0
    %5387 = vmatpush1.msra.mxu0 0.0
    %5388 = vmatprep.subr.mxu0 0.0
    %5389 = vmatpush1.msra.mxu0 0.0
    %5390 = vmatprep.subr.mxu0 0.0
    %5391 = vmatpush1.msra.mxu0 0.0
    %5392 = vmatprep.subr.mxu0 0.0
    %5393 = vmatpush1.msra.mxu0 0.0
    %5394 = vmatprep.subr.mxu0 0.0
    %5395 = vmatpush1.msra.mxu0 0.0
    %5396 = vmatprep.subr.mxu0 0.0
    %5397 = vmatpush1.msra.mxu0 0.0
    %5398 = vmatprep.subr.mxu0 0.0
    %5399 = vmatpush1.msra.mxu0 0.0
    %5400 = vmatprep.subr.mxu0 0.0
    %5401 = vmatpush1.msra.mxu0 0.0
    %5402 = vmatprep.subr.mxu0 0.0
    %5403 = vmatpush1.msra.mxu0 0.0
    %5404 = vmatprep.subr.mxu0 0.0
    %5405 = vmatpush1.msra.mxu0 0.0
    %5406 = vmatprep.subr.mxu0 0.0
    %5407 = vmatpush1.msra.mxu0 0.0
    %5408 = vmatprep.subr.mxu0 0.0
    %5409 = vmatpush1.msra.mxu0 0.0
    %5410 = vmatprep.subr.mxu0 0.0
    %5411 = vmatpush1.msra.mxu0 0.0
    %5412 = vmatprep.subr.mxu0 0.0
    %5413 = vmatpush1.msra.mxu0 0.0
    %5414 = vmatprep.subr.mxu0 0.0
    %5415 = vmatpush1.msra.mxu0 0.0
    %5416 = vmatprep.subr.mxu0 0.0
    %5417 = vmatpush1.msra.mxu0 0.0
    %5418 = vmatprep.subr.mxu0 0.0
    %5419 = vmatpush1.msra.mxu0 0.0
    %5420 = vmatprep.mubr.f32.mxu0 0.0
    %5421 = vmatmul.mubr.f32.gmra.mrb[0].mxu0 %v5354
    %v5422 = vpop.f32.mrb[0].mxu0
    %v5423 = vadd.f32 %v1748, %v5422
    %v5424 = vpop.f32.mrb[0].mxu0
    %5425 = vdwg.mxu0
    %v5426 = vtanh.pop %v5423
    %v5427 = vsel %vm1827, %v5426, -inf
    %5428 = vmax.xlane.f32.xlu0 %v5427
    %v5429 = vpop.xlane.xlu0 %5428
    %v5430 = vsub.f32 %v5426, %v5429
    %v5431 = vmul.f32 %v5430, 1.442695
    %v5432 = vpow.pop %v5431
    %v5433 = vsel %vm1827, %v5432, 0.0
    %5434 = vadd.xlane.f32.xlu0 %v5433
    %v5435 = vpop.xlane.xlu0 %5434
    %v5436 = vrcp.pop %v5435
    %v5437 = vmul.f32 %v5432, %v5436
    %5439 = vrot.lane.b32.xlu0 %v5352, 118
    %v5440 = vpop.permute.xlu0 %5439
    %5442 = vst.msk [vmem:[%s4 + $0x6] sm:$0x3] %vm1843, %v5440
    %5444 = vrot.lane.b32.xlu0 %v5437, 12
    %v5445 = vpop.permute.xlu0 %5444
    %5447 = vst.msk [vmem:[%s4 + $0x6] sm:$0x3] %vm1849, %v5445
    // Predicated region
    $region26: #{sentence_lstm_decoder_forward.1} parent=1 // pred_check
      _
    $region27: #{sentence_lstm_decoder_forward.1} parent=1 // pred_check_branch
      %5449 = sbr.rel (0) target = $region29
    $region28: #{sentence_lstm_decoder_forward.1} parent=1 // pred_region
      _
    $region29: #{sentence_lstm_decoder_forward.1} parent=1 // pred_fallthru
      _
    // Predicated region
    $region30: #{sentence_lstm_decoder_forward.1} parent=1 // pred_check
      _
    $region31: #{sentence_lstm_decoder_forward.1} parent=1 // pred_check_branch
      %5451 = sbr.rel (0) target = $region33
    $region32: #{sentence_lstm_decoder_forward.1} parent=1 // pred_region
      _
    $region33: #{sentence_lstm_decoder_forward.1} parent=1 // pred_fallthru
      _
    %5452 = vsyncpa [#allocation3], 1
    %5453 = vsyncpa [#allocation5], 1

</llo_original>
